<compile_context>
chip_gen: v5e
topology: v5e:2x2
jax: 0.10.0
libtpu: 0.0.40
codegen_flags: <defaults>
</compile_context>

<pallas_src>
import math
import functools

import jax
import jax.numpy as jnp
import numpy as np
from jax.experimental import pallas as pl
from jax.experimental.pallas import tpu as pltpu

# ----------------------------- configuration ---------------------------------
PATCH = 16          # iBOT uses patch_size=16
IMG_H = 32
IMG_W = 32
BATCH = 2
IN_CH = 3
EMBED_DIM = 32      # synthetic small "vit_base"-style dims
NUM_HEADS = 4
HEAD_DIM = EMBED_DIM // NUM_HEADS
MLP_DIM = 4 * EMBED_DIM
DEPTH = 4
LN_EPS = 1e-6
ATTN_SCALE = HEAD_DIM ** -0.5
CPP = IN_CH * PATCH * PATCH
NEG_INF = -1e30


# ------------------------------ fused Pallas kernel ---------------------------
def _ibot_fused_kernel(a_ref, waug_ref, add_ref, mask_ref,
                       ln1g_ref, ln1b_ref,
                       wq_ref, bq_ref, wk_ref, bk_ref, wv_ref, bv_ref,
                       wp_ref, pbias_ref, ln2g_ref, ln2b_ref,
                       fc1w_ref, fc1b_ref, fc2w_ref, fc2b_ref,
                       out_ref):
    f32 = jnp.float32

    def layer_norm(v, g, b):
        mu = jnp.mean(v, axis=-1, keepdims=True)
        vc = v - mu
        var = jnp.mean(vc * vc, axis=-1, keepdims=True)
        return vc * jax.lax.rsqrt(var + LN_EPS) * g + b

    def gelu(v):
        # exact (erf-based) GELU, matching torch.nn.GELU default
        return 0.5 * v * (1.0 + jax.lax.erf(v * (1.0 / math.sqrt(2.0))))

    # prepare_tokens: augmented patch-embed matmul already yields [cls; patches] rows;
    # add_ref carries pos_embed + patch bias.  x: (B*T, D), lives in VMEM/vregs.
    x = jnp.dot(a_ref[...], waug_ref[...], preferred_element_type=f32) + add_ref[...]
    mask = mask_ref[...]                       # (B*T, B*T) additive block-diag mask

    # contract last dims of q and k directly (q @ k^T) -- no explicit transpose.
    dn = (((1,), (1,)), ((), ()))

    for l in range(DEPTH):
        # ---------------- attention ----------------
        hln = layer_norm(x, ln1g_ref[l], ln1b_ref[l])
        ctx = jnp.zeros_like(x)
        for hh in range(NUM_HEADS):
            i = l * NUM_HEADS + hh
            q = jnp.dot(hln, wq_ref[i], preferred_element_type=f32) + bq_ref[i]
            k = jnp.dot(hln, wk_ref[i], preferred_element_type=f32) + bk_ref[i]
            v = jnp.dot(hln, wv_ref[i], preferred_element_type=f32) + bv_ref[i]
            s = jax.lax.dot_general(q, k, dn, preferred_element_type=f32)
            s = s * ATTN_SCALE + mask                      # mask kills cross-batch scores
            s = s - jnp.max(s, axis=-1, keepdims=True)
            p = jnp.exp(s)
            p = p / jnp.sum(p, axis=-1, keepdims=True)     # exact division (semantics parity)
            o = jnp.dot(p, v, preferred_element_type=f32)  # (B*T, Dh)
            # head-concat + projection fused: sum of per-head (Dh, D) projections
            ctx = ctx + jnp.dot(o, wp_ref[i], preferred_element_type=f32)
        x = x + ctx + pbias_ref[l]

        # ------------------ MLP --------------------
        h2 = layer_norm(x, ln2g_ref[l], ln2b_ref[l])
        m = gelu(jnp.dot(h2, fc1w_ref[l], preferred_element_type=f32) + fc1b_ref[l])
        y = jnp.dot(m, fc2w_ref[l], preferred_element_type=f32) + fc2b_ref[l]
        x = x + y

    out_ref[...] = x.astype(out_ref.dtype)


def _full_block(arr):
    nd = arr.ndim
    return pl.BlockSpec(arr.shape, lambda i, _nd=nd: (0,) * _nd)


def _fused_call(inputs, bt):
    return pl.pallas_call(
        _ibot_fused_kernel,
        out_shape=jax.ShapeDtypeStruct((bt, EMBED_DIM), jnp.float32),
        grid=(1,),
        in_specs=[_full_block(a) for a in inputs],
        out_specs=pl.BlockSpec((bt, EMBED_DIM), lambda i: (0, 0)),
        compiler_params=pltpu.CompilerParams(dimension_semantics=("arbitrary",)),
    )(*inputs)


# ------------------------------- JAX glue -------------------------------------
def center_padding(images, patch_size):
    # images: (B, C, H, W); pads (static) so H, W divisible by patch_size, centered.
    _, _, h, w = images.shape
    diff_h = h % patch_size
    diff_w = w % patch_size
    if diff_h == 0 and diff_w == 0:
        return images
    pad_h = (patch_size - diff_h) % patch_size
    pad_w = (patch_size - diff_w) % patch_size
    pad_t = pad_h // 2
    pad_b = pad_h - pad_t
    pad_l = pad_w // 2
    pad_r = pad_w - pad_l
    return jnp.pad(images, ((0, 0), (0, 0), (pad_t, pad_b), (pad_l, pad_r)))


def patchify(images, patch):
    # (B, C, H, W) -> (B, h*w, C*patch*patch) matching Conv2d(k=p, stride=p) im2col order.
    B, C, H, W = images.shape
    h, w = H // patch, W // patch
    x = images.reshape(B, C, h, patch, w, patch)
    x = jnp.transpose(x, (0, 2, 4, 1, 3, 5))      # (B, h, w, C, p, p)
    x = x.reshape(B, h * w, C * patch * patch)
    return x, h, w


def _pack_inputs(params, cols, B, N, T):
    """Build the 20 kernel inputs (layout/packing only; no hot-path compute)."""
    D, H, Dh = EMBED_DIM, NUM_HEADS, HEAD_DIM
    pw = params["patch_w"].reshape(D, CPP).T                    # (CPP, D)
    pb = params["patch_b"].reshape(1, D)
    cls = params["cls_token"].reshape(1, D)
    pos = params["pos_embed"].reshape(T, D)

    # Augmented im2col: extra indicator column selects the cls-token row of W_aug.
    patch_rows = jnp.concatenate([cols, jnp.zeros((B, N, 1), jnp.float32)], axis=-1)
    cls_rows = jnp.zeros((B, 1, CPP + 1), jnp.float32).at[:, :, CPP].set(1.0)
    a_mat = jnp.concatenate([cls_rows, patch_rows], axis=1).reshape(B * T, CPP + 1)
    w_aug = jnp.concatenate([pw, cls - pb], axis=0)             # (CPP+1, D)
    add = jnp.tile(pos, (B, 1)) + pb                            # pos_embed + patch bias

    # Block-diagonal additive attention mask separating batches.
    rid = jnp.arange(B * T, dtype=jnp.int32) // T
    mask = jnp.where(rid[:, None] == rid[None, :], 0.0, NEG_INF).astype(jnp.float32)

    blocks = params["blocks"]
    stack = lambda get: jnp.stack([get(bp) for bp in blocks], axis=0)

    ln1g = stack(lambda bp: bp["ln1_g"].reshape(1, D))
    ln1b = stack(lambda bp: bp["ln1_b"].reshape(1, D))
    ln2g = stack(lambda bp: bp["ln2_g"].reshape(1, D))
    ln2b = stack(lambda bp: bp["ln2_b"].reshape(1, D))
    pbias = stack(lambda bp: bp["proj_b"].reshape(1, D))
    fc1w = stack(lambda bp: bp["fc1_w"])                        # (DEPTH, D, MLP)
    fc1b = stack(lambda bp: bp["fc1_b"].reshape(1, MLP_DIM))
    fc2w = stack(lambda bp: bp["fc2_w"])                        # (DEPTH, MLP, D)
    fc2b = stack(lambda bp: bp["fc2_b"].reshape(1, D))

    def per_head_w(mat, which):                                 # (D, 3D) -> (H, D, Dh)
        m = mat[:, which * D:(which + 1) * D].reshape(D, H, Dh)
        return jnp.transpose(m, (1, 0, 2))

    def per_head_b(vec, which):                                 # (3D,) -> (H, 1, Dh)
        return vec[which * D:(which + 1) * D].reshape(H, 1, Dh)

    wq = jnp.concatenate([per_head_w(bp["qkv_w"], 0) for bp in blocks], axis=0)
    wk = jnp.concatenate([per_head_w(bp["qkv_w"], 1) for bp in blocks], axis=0)
    wv = jnp.concatenate([per_head_w(bp["qkv_w"], 2) for bp in blocks], axis=0)
    bq = jnp.concatenate([per_head_b(bp["qkv_b"], 0) for bp in blocks], axis=0)
    bk = jnp.concatenate([per_head_b(bp["qkv_b"], 1) for bp in blocks], axis=0)
    bv = jnp.concatenate([per_head_b(bp["qkv_b"], 2) for bp in blocks], axis=0)
    wp = jnp.concatenate([bp["proj_w"].reshape(H, Dh, D) for bp in blocks], axis=0)

    return (a_mat, w_aug, add, mask, ln1g, ln1b, wq, bq, wk, bk, wv, bv,
            wp, pbias, ln2g, ln2b, fc1w, fc1b, fc2w, fc2b)


def init_params(key):
    keys = jax.random.split(key, 6 + DEPTH)
    std = 0.02
    params = {
        # conv weight stored PyTorch-style (D, C, p, p) then flattened for matmul
        "patch_w": jax.random.normal(keys[0], (EMBED_DIM, IN_CH, PATCH, PATCH), jnp.float32) * std,
        "patch_b": jnp.zeros((EMBED_DIM,), jnp.float32),
        "cls_token": jax.random.normal(keys[1], (1, 1, EMBED_DIM), jnp.float32) * std,
        "pos_embed": jax.random.normal(
            keys[2], (1, 1 + (IMG_H // PATCH) * (IMG_W // PATCH), EMBED_DIM), jnp.float32) * std,
        "blocks": [],
    }
    for l in range(DEPTH):
        bk = jax.random.split(keys[6 + l], 4)
        params["blocks"].append({
            "ln1_g": jnp.ones((EMBED_DIM,), jnp.float32),
            "ln1_b": jnp.zeros((EMBED_DIM,), jnp.float32),
            "qkv_w": jax.random.normal(bk[0], (EMBED_DIM, 3 * EMBED_DIM), jnp.float32) * std,
            "qkv_b": jnp.zeros((3 * EMBED_DIM,), jnp.float32),
            "proj_w": jax.random.normal(bk[1], (EMBED_DIM, EMBED_DIM), jnp.float32) * std,
            "proj_b": jnp.zeros((EMBED_DIM,), jnp.float32),
            "ln2_g": jnp.ones((EMBED_DIM,), jnp.float32),
            "ln2_b": jnp.zeros((EMBED_DIM,), jnp.float32),
            "fc1_w": jax.random.normal(bk[2], (EMBED_DIM, MLP_DIM), jnp.float32) * std,
            "fc1_b": jnp.zeros((MLP_DIM,), jnp.float32),
            "fc2_w": jax.random.normal(bk[3], (MLP_DIM, EMBED_DIM), jnp.float32) * std,
            "fc2_b": jnp.zeros((EMBED_DIM,), jnp.float32),
        })
    return params


def ibot_forward_pallas(params, images):
    """iBOT forward, output='dense', layer=-1 (last block). images: (B, C, H, W)."""
    images = center_padding(images, PATCH)
    B = images.shape[0]
    h = images.shape[-2] // PATCH
    w = images.shape[-1] // PATCH
    cols, _, _ = patchify(images, PATCH)                         # (B, N, C*p*p)
    N = cols.shape[1]
    T = N + 1
    # TODO(synk): interpolate_pos_encoding for mismatched grids not implemented (sizes match here).
    inputs = _pack_inputs(params, cols, B, N, T)
    x = _fused_call(inputs, B * T)                               # (B*T, D)
    spatial = x.reshape(B, T, EMBED_DIM)[:, 1:]                  # drop cls token
    # tokens_to_output('dense', spatial, cls, (h, w)) -> (B, D, h, w)
    return jnp.transpose(spatial.reshape(B, h, w, EMBED_DIM), (0, 3, 1, 2))


# ---------------------- plain-JAX reference (module semantics) ----------------
def _ref_linear(x2d, w, b, act=None):
    y = x2d @ w + b
    if act == "gelu":
        y = 0.5 * y * (1.0 + jax.lax.erf(y * (1.0 / math.sqrt(2.0))))
    return y


def _ref_layernorm(x2d, gamma, beta, eps=LN_EPS):
    mu = jnp.mean(x2d, axis=-1, keepdims=True)
    xc = x2d - mu
    var = jnp.mean(xc * xc, axis=-1, keepdims=True)
    return xc * jax.lax.rsqrt(var + eps) * gamma + beta


def _ref_attention(q, k, v, scale=ATTN_SCALE):
    s = jnp.einsum("bhqd,bhkd->bhqk", q, k) * scale
    s = s - jnp.max(s, axis=-1, keepdims=True)
    p = jnp.exp(s)
    p = p / jnp.sum(p, axis=-1, keepdims=True)
    return jnp.einsum("bhqk,bhkd->bhqd", p, v)


def _ref_block(x, bp):
    B, T, D = x.shape
    h = _ref_layernorm(x.reshape(B * T, D), bp["ln1_g"], bp["ln1_b"])
    qkv = _ref_linear(h, bp["qkv_w"], bp["qkv_b"]).reshape(B, T, 3, NUM_HEADS, HEAD_DIM)
    qkv = jnp.transpose(qkv, (2, 0, 3, 1, 4))
    q, k, v = qkv[0], qkv[1], qkv[2]
    o = _ref_attention(q, k, v)
    o = jnp.transpose(o, (0, 2, 1, 3)).reshape(B * T, D)
    o = _ref_linear(o, bp["proj_w"], bp["proj_b"])
    x = x + o.reshape(B, T, D)
    h2 = _ref_layernorm(x.reshape(B * T, D), bp["ln2_g"], bp["ln2_b"])
    m = _ref_linear(h2, bp["fc1_w"], bp["fc1_b"], act="gelu")
    m = _ref_linear(m, bp["fc2_w"], bp["fc2_b"])
    return x + m.reshape(B, T, D)


def ibot_forward_ref(params, images):
    images = center_padding(images, PATCH)
    B = images.shape[0]
    h = images.shape[-2] // PATCH
    w = images.shape[-1] // PATCH
    cols, _, _ = patchify(images, PATCH)
    N = cols.shape[1]
    pw = params["patch_w"].reshape(EMBED_DIM, -1).T
    tok = (_ref_linear(cols.reshape(B * N, -1), pw, params["patch_b"])
           .reshape(B, N, EMBED_DIM))
    cls = jnp.broadcast_to(params["cls_token"], (B, 1, EMBED_DIM))
    x = jnp.concatenate([cls, tok], axis=1) + params["pos_embed"]
    for bp in params["blocks"]:
        x = _ref_block(x, bp)
    spatial = x[:, 1:]
    return jnp.transpose(spatial.reshape(B, h, w, EMBED_DIM), (0, 3, 1, 2))


# ----------------------------------- main --------------------------------------
if __name__ == "__main__":
    key = jax.random.PRNGKey(0)
    kp, kx = jax.random.split(key)
    params = init_params(kp)
    images = jax.random.normal(kx, (BATCH, IN_CH, IMG_H, IMG_W), jnp.float32)

    pallas_fwd = jax.jit(ibot_forward_pallas)
    ref_fwd = jax.jit(ibot_forward_ref)

    out = jax.block_until_ready(pallas_fwd(params, images))
    ref = jax.block_until_ready(ref_fwd(params, images))

    assert out.shape == (BATCH, EMBED_DIM, IMG_H // PATCH, IMG_W // PATCH), out.shape
    np.testing.assert_allclose(np.asarray(out), np.asarray(ref), rtol=1e-4, atol=1e-4)
    print("KERNEL_OK")
</pallas_src>

<mosaic_0001>
module attributes {stable_mosaic.version = 11 : i64} {
  func.func @_ibot_fused_kernel(%arg0: i32, %arg1: memref<10x769xf32, #tpu.memory_space<vmem>>, %arg2: memref<769x32xf32, #tpu.memory_space<vmem>>, %arg3: memref<10x32xf32, #tpu.memory_space<vmem>>, %arg4: memref<10x10xf32, #tpu.memory_space<vmem>>, %arg5: memref<4x1x32xf32, #tpu.memory_space<vmem>>, %arg6: memref<4x1x32xf32, #tpu.memory_space<vmem>>, %arg7: memref<16x32x8xf32, #tpu.memory_space<vmem>>, %arg8: memref<16x1x8xf32, #tpu.memory_space<vmem>>, %arg9: memref<16x32x8xf32, #tpu.memory_space<vmem>>, %arg10: memref<16x1x8xf32, #tpu.memory_space<vmem>>, %arg11: memref<16x32x8xf32, #tpu.memory_space<vmem>>, %arg12: memref<16x1x8xf32, #tpu.memory_space<vmem>>, %arg13: memref<16x8x32xf32, #tpu.memory_space<vmem>>, %arg14: memref<4x1x32xf32, #tpu.memory_space<vmem>>, %arg15: memref<4x1x32xf32, #tpu.memory_space<vmem>>, %arg16: memref<4x1x32xf32, #tpu.memory_space<vmem>>, %arg17: memref<4x32x128xf32, #tpu.memory_space<vmem>>, %arg18: memref<4x1x128xf32, #tpu.memory_space<vmem>>, %arg19: memref<4x128x32xf32, #tpu.memory_space<vmem>>, %arg20: memref<4x1x32xf32, #tpu.memory_space<vmem>>, %arg21: memref<10x32xf32, #tpu.memory_space<vmem>>) attributes {dimension_semantics = [#tpu.dimension_semantics<arbitrary>], iteration_bounds = array<i64: 1>, scalar_prefetch = 0 : i64, scratch_operands = 0 : i64, tpu.core_type = #tpu.core_type<tc>, window_params = [{pipeline_mode = #tpu.pipeline_mode<synchronous>, transform_indices = @transform_0, window_bounds = array<i64: 10, 769>}, {pipeline_mode = #tpu.pipeline_mode<synchronous>, transform_indices = @transform_1, window_bounds = array<i64: 769, 32>}, {pipeline_mode = #tpu.pipeline_mode<synchronous>, transform_indices = @transform_2, window_bounds = array<i64: 10, 32>}, {pipeline_mode = #tpu.pipeline_mode<synchronous>, transform_indices = @transform_3, window_bounds = array<i64: 10, 10>}, {pipeline_mode = #tpu.pipeline_mode<synchronous>, transform_indices = @transform_4, window_bounds = array<i64: 4, 1, 32>}, {pipeline_mode = #tpu.pipeline_mode<synchronous>, transform_indices = @transform_5, window_bounds = array<i64: 4, 1, 32>}, {pipeline_mode = #tpu.pipeline_mode<synchronous>, transform_indices = @transform_6, window_bounds = array<i64: 16, 32, 8>}, {pipeline_mode = #tpu.pipeline_mode<synchronous>, transform_indices = @transform_7, window_bounds = array<i64: 16, 1, 8>}, {pipeline_mode = #tpu.pipeline_mode<synchronous>, transform_indices = @transform_8, window_bounds = array<i64: 16, 32, 8>}, {pipeline_mode = #tpu.pipeline_mode<synchronous>, transform_indices = @transform_9, window_bounds = array<i64: 16, 1, 8>}, {pipeline_mode = #tpu.pipeline_mode<synchronous>, transform_indices = @transform_10, window_bounds = array<i64: 16, 32, 8>}, {pipeline_mode = #tpu.pipeline_mode<synchronous>, transform_indices = @transform_11, window_bounds = array<i64: 16, 1, 8>}, {pipeline_mode = #tpu.pipeline_mode<synchronous>, transform_indices = @transform_12, window_bounds = array<i64: 16, 8, 32>}, {pipeline_mode = #tpu.pipeline_mode<synchronous>, transform_indices = @transform_13, window_bounds = array<i64: 4, 1, 32>}, {pipeline_mode = #tpu.pipeline_mode<synchronous>, transform_indices = @transform_14, window_bounds = array<i64: 4, 1, 32>}, {pipeline_mode = #tpu.pipeline_mode<synchronous>, transform_indices = @transform_15, window_bounds = array<i64: 4, 1, 32>}, {pipeline_mode = #tpu.pipeline_mode<synchronous>, transform_indices = @transform_16, window_bounds = array<i64: 4, 32, 128>}, {pipeline_mode = #tpu.pipeline_mode<synchronous>, transform_indices = @transform_17, window_bounds = array<i64: 4, 1, 128>}, {pipeline_mode = #tpu.pipeline_mode<synchronous>, transform_indices = @transform_18, window_bounds = array<i64: 4, 128, 32>}, {pipeline_mode = #tpu.pipeline_mode<synchronous>, transform_indices = @transform_19, window_bounds = array<i64: 4, 1, 32>}, {pipeline_mode = #tpu.pipeline_mode<synchronous>, transform_indices = @transform_20, window_bounds = array<i64: 10, 32>}]} {
    %c0 = arith.constant 0 : index
    %c0_0 = arith.constant 0 : index
    %0 = vector.load %arg1[%c0, %c0_0] : memref<10x769xf32, #tpu.memory_space<vmem>>, vector<10x769xf32>
    %c0_1 = arith.constant 0 : index
    %c0_2 = arith.constant 0 : index
    %1 = vector.load %arg2[%c0_1, %c0_2] : memref<769x32xf32, #tpu.memory_space<vmem>>, vector<769x32xf32>
    %cst = arith.constant dense<0.000000e+00> : vector<10x32xf32>
    %2 = tpu.matmul %0, %1, %cst {dimension_numbers = #tpu.dot_dimension_numbers<[1], [0], [0], [1], [0, 0, 1, 1], [], []>} : vector<10x769xf32>, vector<769x32xf32>, vector<10x32xf32> -> vector<10x32xf32>
    %c0_3 = arith.constant 0 : index
    %c0_4 = arith.constant 0 : index
    %3 = vector.load %arg3[%c0_3, %c0_4] : memref<10x32xf32, #tpu.memory_space<vmem>>, vector<10x32xf32>
    %4 = arith.addf %2, %3 : vector<10x32xf32>
    %c0_5 = arith.constant 0 : index
    %c0_6 = arith.constant 0 : index
    %5 = vector.load %arg4[%c0_5, %c0_6] : memref<10x10xf32, #tpu.memory_space<vmem>>, vector<10x10xf32>
    %c0_7 = arith.constant 0 : index
    %c0_8 = arith.constant 0 : index
    %c0_9 = arith.constant 0 : index
    %6 = vector.load %arg5[%c0_7, %c0_8, %c0_9] : memref<4x1x32xf32, #tpu.memory_space<vmem>>, vector<1x1x32xf32>
    %7 = vector.shape_cast %6 : vector<1x1x32xf32> to vector<1x32xf32>
    %c0_10 = arith.constant 0 : index
    %c0_11 = arith.constant 0 : index
    %c0_12 = arith.constant 0 : index
    %8 = vector.load %arg6[%c0_10, %c0_11, %c0_12] : memref<4x1x32xf32, #tpu.memory_space<vmem>>, vector<1x1x32xf32>
    %9 = vector.shape_cast %8 : vector<1x1x32xf32> to vector<1x32xf32>
    %cst_13 = arith.constant dense<0.000000e+00> : vector<10xf32>
    %10 = vector.multi_reduction <add>, %4, %cst_13 [1] : vector<10x32xf32> to vector<10xf32>
    %11 = vector.shape_cast %10 : vector<10xf32> to vector<10x1xf32>
    %cst_14 = arith.constant 3.200000e+01 : f32
    %12 = vector.broadcast %cst_14 : f32 to vector<10x1xf32>
    %13 = arith.divf %11, %12 : vector<10x1xf32>
    %14 = vector.broadcast %13 : vector<10x1xf32> to vector<10x32xf32>
    %15 = arith.subf %4, %14 : vector<10x32xf32>
    %16 = arith.mulf %15, %15 : vector<10x32xf32>
    %cst_15 = arith.constant dense<0.000000e+00> : vector<10xf32>
    %17 = vector.multi_reduction <add>, %16, %cst_15 [1] : vector<10x32xf32> to vector<10xf32>
    %18 = vector.shape_cast %17 : vector<10xf32> to vector<10x1xf32>
    %cst_16 = arith.constant 3.200000e+01 : f32
    %19 = vector.broadcast %cst_16 : f32 to vector<10x1xf32>
    %20 = arith.divf %18, %19 : vector<10x1xf32>
    %cst_17 = arith.constant 9.99999997E-7 : f32
    %21 = vector.broadcast %cst_17 : f32 to vector<10x1xf32>
    %22 = arith.addf %20, %21 : vector<10x1xf32>
    %23 = math.rsqrt %22 : vector<10x1xf32>
    %24 = vector.broadcast %23 : vector<10x1xf32> to vector<10x32xf32>
    %25 = arith.mulf %15, %24 : vector<10x32xf32>
    %26 = vector.broadcast %7 : vector<1x32xf32> to vector<10x32xf32>
    %27 = arith.mulf %25, %26 : vector<10x32xf32>
    %28 = vector.broadcast %9 : vector<1x32xf32> to vector<10x32xf32>
    %29 = arith.addf %27, %28 : vector<10x32xf32>
    %cst_18 = arith.constant 0.000000e+00 : f32
    %30 = vector.broadcast %cst_18 : f32 to vector<10x32xf32>
    %c0_19 = arith.constant 0 : index
    %c0_20 = arith.constant 0 : index
    %c0_21 = arith.constant 0 : index
    %31 = vector.load %arg7[%c0_19, %c0_20, %c0_21] : memref<16x32x8xf32, #tpu.memory_space<vmem>>, vector<1x32x8xf32>
    %32 = vector.shape_cast %31 : vector<1x32x8xf32> to vector<32x8xf32>
    %cst_22 = arith.constant dense<0.000000e+00> : vector<10x8xf32>
    %33 = tpu.matmul %29, %32, %cst_22 {dimension_numbers = #tpu.dot_dimension_numbers<[1], [0], [0], [1], [0, 0, 1, 1], [], []>} : vector<10x32xf32>, vector<32x8xf32>, vector<10x8xf32> -> vector<10x8xf32>
    %c0_23 = arith.constant 0 : index
    %c0_24 = arith.constant 0 : index
    %c0_25 = arith.constant 0 : index
    %34 = vector.load %arg8[%c0_23, %c0_24, %c0_25] : memref<16x1x8xf32, #tpu.memory_space<vmem>>, vector<1x1x8xf32>
    %35 = vector.shape_cast %34 : vector<1x1x8xf32> to vector<1x8xf32>
    %36 = vector.broadcast %35 : vector<1x8xf32> to vector<10x8xf32>
    %37 = arith.addf %33, %36 : vector<10x8xf32>
    %c0_26 = arith.constant 0 : index
    %c0_27 = arith.constant 0 : index
    %c0_28 = arith.constant 0 : index
    %38 = vector.load %arg9[%c0_26, %c0_27, %c0_28] : memref<16x32x8xf32, #tpu.memory_space<vmem>>, vector<1x32x8xf32>
    %39 = vector.shape_cast %38 : vector<1x32x8xf32> to vector<32x8xf32>
    %cst_29 = arith.constant dense<0.000000e+00> : vector<10x8xf32>
    %40 = tpu.matmul %29, %39, %cst_29 {dimension_numbers = #tpu.dot_dimension_numbers<[1], [0], [0], [1], [0, 0, 1, 1], [], []>} : vector<10x32xf32>, vector<32x8xf32>, vector<10x8xf32> -> vector<10x8xf32>
    %c0_30 = arith.constant 0 : index
    %c0_31 = arith.constant 0 : index
    %c0_32 = arith.constant 0 : index
    %41 = vector.load %arg10[%c0_30, %c0_31, %c0_32] : memref<16x1x8xf32, #tpu.memory_space<vmem>>, vector<1x1x8xf32>
    %42 = vector.shape_cast %41 : vector<1x1x8xf32> to vector<1x8xf32>
    %43 = vector.broadcast %42 : vector<1x8xf32> to vector<10x8xf32>
    %44 = arith.addf %40, %43 : vector<10x8xf32>
    %c0_33 = arith.constant 0 : index
    %c0_34 = arith.constant 0 : index
    %c0_35 = arith.constant 0 : index
    %45 = vector.load %arg11[%c0_33, %c0_34, %c0_35] : memref<16x32x8xf32, #tpu.memory_space<vmem>>, vector<1x32x8xf32>
    %46 = vector.shape_cast %45 : vector<1x32x8xf32> to vector<32x8xf32>
    %cst_36 = arith.constant dense<0.000000e+00> : vector<10x8xf32>
    %47 = tpu.matmul %29, %46, %cst_36 {dimension_numbers = #tpu.dot_dimension_numbers<[1], [0], [0], [1], [0, 0, 1, 1], [], []>} : vector<10x32xf32>, vector<32x8xf32>, vector<10x8xf32> -> vector<10x8xf32>
    %c0_37 = arith.constant 0 : index
    %c0_38 = arith.constant 0 : index
    %c0_39 = arith.constant 0 : index
    %48 = vector.load %arg12[%c0_37, %c0_38, %c0_39] : memref<16x1x8xf32, #tpu.memory_space<vmem>>, vector<1x1x8xf32>
    %49 = vector.shape_cast %48 : vector<1x1x8xf32> to vector<1x8xf32>
    %50 = vector.broadcast %49 : vector<1x8xf32> to vector<10x8xf32>
    %51 = arith.addf %47, %50 : vector<10x8xf32>
    %cst_40 = arith.constant dense<0.000000e+00> : vector<10x10xf32>
    %52 = tpu.matmul %37, %44, %cst_40 {dimension_numbers = #tpu.dot_dimension_numbers<[1], [1], [0], [0], [0, 0, 1, 0], [], []>} : vector<10x8xf32>, vector<10x8xf32>, vector<10x10xf32> -> vector<10x10xf32>
    %cst_41 = arith.constant 0.353553385 : f32
    %53 = vector.broadcast %cst_41 : f32 to vector<10x10xf32>
    %54 = arith.mulf %52, %53 : vector<10x10xf32>
    %55 = arith.addf %54, %5 : vector<10x10xf32>
    %cst_42 = arith.constant dense<0xFF800000> : vector<10xf32>
    %56 = vector.multi_reduction <maximumf>, %55, %cst_42 [1] : vector<10x10xf32> to vector<10xf32>
    %57 = vector.shape_cast %56 : vector<10xf32> to vector<10x1xf32>
    %58 = vector.broadcast %57 : vector<10x1xf32> to vector<10x10xf32>
    %59 = arith.subf %55, %58 : vector<10x10xf32>
    %60 = math.exp %59 : vector<10x10xf32>
    %cst_43 = arith.constant dense<0.000000e+00> : vector<10xf32>
    %61 = vector.multi_reduction <add>, %60, %cst_43 [1] : vector<10x10xf32> to vector<10xf32>
    %62 = vector.shape_cast %61 : vector<10xf32> to vector<10x1xf32>
    %63 = vector.broadcast %62 : vector<10x1xf32> to vector<10x10xf32>
    %64 = arith.divf %60, %63 : vector<10x10xf32>
    %cst_44 = arith.constant dense<0.000000e+00> : vector<10x8xf32>
    %65 = tpu.matmul %64, %51, %cst_44 {dimension_numbers = #tpu.dot_dimension_numbers<[1], [0], [0], [1], [0, 0, 1, 1], [], []>} : vector<10x10xf32>, vector<10x8xf32>, vector<10x8xf32> -> vector<10x8xf32>
    %c0_45 = arith.constant 0 : index
    %c0_46 = arith.constant 0 : index
    %c0_47 = arith.constant 0 : index
    %66 = vector.load %arg13[%c0_45, %c0_46, %c0_47] : memref<16x8x32xf32, #tpu.memory_space<vmem>>, vector<1x8x32xf32>
    %67 = vector.shape_cast %66 : vector<1x8x32xf32> to vector<8x32xf32>
    %cst_48 = arith.constant dense<0.000000e+00> : vector<10x32xf32>
    %68 = tpu.matmul %65, %67, %cst_48 {dimension_numbers = #tpu.dot_dimension_numbers<[1], [0], [0], [1], [0, 0, 1, 1], [], []>} : vector<10x8xf32>, vector<8x32xf32>, vector<10x32xf32> -> vector<10x32xf32>
    %69 = arith.addf %30, %68 : vector<10x32xf32>
    %c1 = arith.constant 1 : index
    %c0_49 = arith.constant 0 : index
    %c0_50 = arith.constant 0 : index
    %70 = vector.load %arg7[%c1, %c0_49, %c0_50] : memref<16x32x8xf32, #tpu.memory_space<vmem>>, vector<1x32x8xf32>
    %71 = vector.shape_cast %70 : vector<1x32x8xf32> to vector<32x8xf32>
    %cst_51 = arith.constant dense<0.000000e+00> : vector<10x8xf32>
    %72 = tpu.matmul %29, %71, %cst_51 {dimension_numbers = #tpu.dot_dimension_numbers<[1], [0], [0], [1], [0, 0, 1, 1], [], []>} : vector<10x32xf32>, vector<32x8xf32>, vector<10x8xf32> -> vector<10x8xf32>
    %c1_52 = arith.constant 1 : index
    %c0_53 = arith.constant 0 : index
    %c0_54 = arith.constant 0 : index
    %73 = vector.load %arg8[%c1_52, %c0_53, %c0_54] : memref<16x1x8xf32, #tpu.memory_space<vmem>>, vector<1x1x8xf32>
    %74 = vector.shape_cast %73 : vector<1x1x8xf32> to vector<1x8xf32>
    %75 = vector.broadcast %74 : vector<1x8xf32> to vector<10x8xf32>
    %76 = arith.addf %72, %75 : vector<10x8xf32>
    %c1_55 = arith.constant 1 : index
    %c0_56 = arith.constant 0 : index
    %c0_57 = arith.constant 0 : index
    %77 = vector.load %arg9[%c1_55, %c0_56, %c0_57] : memref<16x32x8xf32, #tpu.memory_space<vmem>>, vector<1x32x8xf32>
    %78 = vector.shape_cast %77 : vector<1x32x8xf32> to vector<32x8xf32>
    %cst_58 = arith.constant dense<0.000000e+00> : vector<10x8xf32>
    %79 = tpu.matmul %29, %78, %cst_58 {dimension_numbers = #tpu.dot_dimension_numbers<[1], [0], [0], [1], [0, 0, 1, 1], [], []>} : vector<10x32xf32>, vector<32x8xf32>, vector<10x8xf32> -> vector<10x8xf32>
    %c1_59 = arith.constant 1 : index
    %c0_60 = arith.constant 0 : index
    %c0_61 = arith.constant 0 : index
    %80 = vector.load %arg10[%c1_59, %c0_60, %c0_61] : memref<16x1x8xf32, #tpu.memory_space<vmem>>, vector<1x1x8xf32>
    %81 = vector.shape_cast %80 : vector<1x1x8xf32> to vector<1x8xf32>
    %82 = vector.broadcast %81 : vector<1x8xf32> to vector<10x8xf32>
    %83 = arith.addf %79, %82 : vector<10x8xf32>
    %c1_62 = arith.constant 1 : index
    %c0_63 = arith.constant 0 : index
    %c0_64 = arith.constant 0 : index
    %84 = vector.load %arg11[%c1_62, %c0_63, %c0_64] : memref<16x32x8xf32, #tpu.memory_space<vmem>>, vector<1x32x8xf32>
    %85 = vector.shape_cast %84 : vector<1x32x8xf32> to vector<32x8xf32>
    %cst_65 = arith.constant dense<0.000000e+00> : vector<10x8xf32>
    %86 = tpu.matmul %29, %85, %cst_65 {dimension_numbers = #tpu.dot_dimension_numbers<[1], [0], [0], [1], [0, 0, 1, 1], [], []>} : vector<10x32xf32>, vector<32x8xf32>, vector<10x8xf32> -> vector<10x8xf32>
    %c1_66 = arith.constant 1 : index
    %c0_67 = arith.constant 0 : index
    %c0_68 = arith.constant 0 : index
    %87 = vector.load %arg12[%c1_66, %c0_67, %c0_68] : memref<16x1x8xf32, #tpu.memory_space<vmem>>, vector<1x1x8xf32>
    %88 = vector.shape_cast %87 : vector<1x1x8xf32> to vector<1x8xf32>
    %89 = vector.broadcast %88 : vector<1x8xf32> to vector<10x8xf32>
    %90 = arith.addf %86, %89 : vector<10x8xf32>
    %cst_69 = arith.constant dense<0.000000e+00> : vector<10x10xf32>
    %91 = tpu.matmul %76, %83, %cst_69 {dimension_numbers = #tpu.dot_dimension_numbers<[1], [1], [0], [0], [0, 0, 1, 0], [], []>} : vector<10x8xf32>, vector<10x8xf32>, vector<10x10xf32> -> vector<10x10xf32>
    %cst_70 = arith.constant 0.353553385 : f32
    %92 = vector.broadcast %cst_70 : f32 to vector<10x10xf32>
    %93 = arith.mulf %91, %92 : vector<10x10xf32>
    %94 = arith.addf %93, %5 : vector<10x10xf32>
    %cst_71 = arith.constant dense<0xFF800000> : vector<10xf32>
    %95 = vector.multi_reduction <maximumf>, %94, %cst_71 [1] : vector<10x10xf32> to vector<10xf32>
    %96 = vector.shape_cast %95 : vector<10xf32> to vector<10x1xf32>
    %97 = vector.broadcast %96 : vector<10x1xf32> to vector<10x10xf32>
    %98 = arith.subf %94, %97 : vector<10x10xf32>
    %99 = math.exp %98 : vector<10x10xf32>
    %cst_72 = arith.constant dense<0.000000e+00> : vector<10xf32>
    %100 = vector.multi_reduction <add>, %99, %cst_72 [1] : vector<10x10xf32> to vector<10xf32>
    %101 = vector.shape_cast %100 : vector<10xf32> to vector<10x1xf32>
    %102 = vector.broadcast %101 : vector<10x1xf32> to vector<10x10xf32>
    %103 = arith.divf %99, %102 : vector<10x10xf32>
    %cst_73 = arith.constant dense<0.000000e+00> : vector<10x8xf32>
    %104 = tpu.matmul %103, %90, %cst_73 {dimension_numbers = #tpu.dot_dimension_numbers<[1], [0], [0], [1], [0, 0, 1, 1], [], []>} : vector<10x10xf32>, vector<10x8xf32>, vector<10x8xf32> -> vector<10x8xf32>
    %c1_74 = arith.constant 1 : index
    %c0_75 = arith.constant 0 : index
    %c0_76 = arith.constant 0 : index
    %105 = vector.load %arg13[%c1_74, %c0_75, %c0_76] : memref<16x8x32xf32, #tpu.memory_space<vmem>>, vector<1x8x32xf32>
    %106 = vector.shape_cast %105 : vector<1x8x32xf32> to vector<8x32xf32>
    %cst_77 = arith.constant dense<0.000000e+00> : vector<10x32xf32>
    %107 = tpu.matmul %104, %106, %cst_77 {dimension_numbers = #tpu.dot_dimension_numbers<[1], [0], [0], [1], [0, 0, 1, 1], [], []>} : vector<10x8xf32>, vector<8x32xf32>, vector<10x32xf32> -> vector<10x32xf32>
    %108 = arith.addf %69, %107 : vector<10x32xf32>
    %c2 = arith.constant 2 : index
    %c0_78 = arith.constant 0 : index
    %c0_79 = arith.constant 0 : index
    %109 = vector.load %arg7[%c2, %c0_78, %c0_79] : memref<16x32x8xf32, #tpu.memory_space<vmem>>, vector<1x32x8xf32>
    %110 = vector.shape_cast %109 : vector<1x32x8xf32> to vector<32x8xf32>
    %cst_80 = arith.constant dense<0.000000e+00> : vector<10x8xf32>
    %111 = tpu.matmul %29, %110, %cst_80 {dimension_numbers = #tpu.dot_dimension_numbers<[1], [0], [0], [1], [0, 0, 1, 1], [], []>} : vector<10x32xf32>, vector<32x8xf32>, vector<10x8xf32> -> vector<10x8xf32>
    %c2_81 = arith.constant 2 : index
    %c0_82 = arith.constant 0 : index
    %c0_83 = arith.constant 0 : index
    %112 = vector.load %arg8[%c2_81, %c0_82, %c0_83] : memref<16x1x8xf32, #tpu.memory_space<vmem>>, vector<1x1x8xf32>
    %113 = vector.shape_cast %112 : vector<1x1x8xf32> to vector<1x8xf32>
    %114 = vector.broadcast %113 : vector<1x8xf32> to vector<10x8xf32>
    %115 = arith.addf %111, %114 : vector<10x8xf32>
    %c2_84 = arith.constant 2 : index
    %c0_85 = arith.constant 0 : index
    %c0_86 = arith.constant 0 : index
    %116 = vector.load %arg9[%c2_84, %c0_85, %c0_86] : memref<16x32x8xf32, #tpu.memory_space<vmem>>, vector<1x32x8xf32>
    %117 = vector.shape_cast %116 : vector<1x32x8xf32> to vector<32x8xf32>
    %cst_87 = arith.constant dense<0.000000e+00> : vector<10x8xf32>
    %118 = tpu.matmul %29, %117, %cst_87 {dimension_numbers = #tpu.dot_dimension_numbers<[1], [0], [0], [1], [0, 0, 1, 1], [], []>} : vector<10x32xf32>, vector<32x8xf32>, vector<10x8xf32> -> vector<10x8xf32>
    %c2_88 = arith.constant 2 : index
    %c0_89 = arith.constant 0 : index
    %c0_90 = arith.constant 0 : index
    %119 = vector.load %arg10[%c2_88, %c0_89, %c0_90] : memref<16x1x8xf32, #tpu.memory_space<vmem>>, vector<1x1x8xf32>
    %120 = vector.shape_cast %119 : vector<1x1x8xf32> to vector<1x8xf32>
    %121 = vector.broadcast %120 : vector<1x8xf32> to vector<10x8xf32>
    %122 = arith.addf %118, %121 : vector<10x8xf32>
    %c2_91 = arith.constant 2 : index
    %c0_92 = arith.constant 0 : index
    %c0_93 = arith.constant 0 : index
    %123 = vector.load %arg11[%c2_91, %c0_92, %c0_93] : memref<16x32x8xf32, #tpu.memory_space<vmem>>, vector<1x32x8xf32>
    %124 = vector.shape_cast %123 : vector<1x32x8xf32> to vector<32x8xf32>
    %cst_94 = arith.constant dense<0.000000e+00> : vector<10x8xf32>
    %125 = tpu.matmul %29, %124, %cst_94 {dimension_numbers = #tpu.dot_dimension_numbers<[1], [0], [0], [1], [0, 0, 1, 1], [], []>} : vector<10x32xf32>, vector<32x8xf32>, vector<10x8xf32> -> vector<10x8xf32>
    %c2_95 = arith.constant 2 : index
    %c0_96 = arith.constant 0 : index
    %c0_97 = arith.constant 0 : index
    %126 = vector.load %arg12[%c2_95, %c0_96, %c0_97] : memref<16x1x8xf32, #tpu.memory_space<vmem>>, vector<1x1x8xf32>
    %127 = vector.shape_cast %126 : vector<1x1x8xf32> to vector<1x8xf32>
    %128 = vector.broadcast %127 : vector<1x8xf32> to vector<10x8xf32>
    %129 = arith.addf %125, %128 : vector<10x8xf32>
    %cst_98 = arith.constant dense<0.000000e+00> : vector<10x10xf32>
    %130 = tpu.matmul %115, %122, %cst_98 {dimension_numbers = #tpu.dot_dimension_numbers<[1], [1], [0], [0], [0, 0, 1, 0], [], []>} : vector<10x8xf32>, vector<10x8xf32>, vector<10x10xf32> -> vector<10x10xf32>
    %cst_99 = arith.constant 0.353553385 : f32
    %131 = vector.broadcast %cst_99 : f32 to vector<10x10xf32>
    %132 = arith.mulf %130, %131 : vector<10x10xf32>
    %133 = arith.addf %132, %5 : vector<10x10xf32>
    %cst_100 = arith.constant dense<0xFF800000> : vector<10xf32>
    %134 = vector.multi_reduction <maximumf>, %133, %cst_100 [1] : vector<10x10xf32> to vector<10xf32>
    %135 = vector.shape_cast %134 : vector<10xf32> to vector<10x1xf32>
    %136 = vector.broadcast %135 : vector<10x1xf32> to vector<10x10xf32>
    %137 = arith.subf %133, %136 : vector<10x10xf32>
    %138 = math.exp %137 : vector<10x10xf32>
    %cst_101 = arith.constant dense<0.000000e+00> : vector<10xf32>
    %139 = vector.multi_reduction <add>, %138, %cst_101 [1] : vector<10x10xf32> to vector<10xf32>
    %140 = vector.shape_cast %139 : vector<10xf32> to vector<10x1xf32>
    %141 = vector.broadcast %140 : vector<10x1xf32> to vector<10x10xf32>
    %142 = arith.divf %138, %141 : vector<10x10xf32>
    %cst_102 = arith.constant dense<0.000000e+00> : vector<10x8xf32>
    %143 = tpu.matmul %142, %129, %cst_102 {dimension_numbers = #tpu.dot_dimension_numbers<[1], [0], [0], [1], [0, 0, 1, 1], [], []>} : vector<10x10xf32>, vector<10x8xf32>, vector<10x8xf32> -> vector<10x8xf32>
    %c2_103 = arith.constant 2 : index
    %c0_104 = arith.constant 0 : index
    %c0_105 = arith.constant 0 : index
    %144 = vector.load %arg13[%c2_103, %c0_104, %c0_105] : memref<16x8x32xf32, #tpu.memory_space<vmem>>, vector<1x8x32xf32>
    %145 = vector.shape_cast %144 : vector<1x8x32xf32> to vector<8x32xf32>
    %cst_106 = arith.constant dense<0.000000e+00> : vector<10x32xf32>
    %146 = tpu.matmul %143, %145, %cst_106 {dimension_numbers = #tpu.dot_dimension_numbers<[1], [0], [0], [1], [0, 0, 1, 1], [], []>} : vector<10x8xf32>, vector<8x32xf32>, vector<10x32xf32> -> vector<10x32xf32>
    %147 = arith.addf %108, %146 : vector<10x32xf32>
    %c3 = arith.constant 3 : index
    %c0_107 = arith.constant 0 : index
    %c0_108 = arith.constant 0 : index
    %148 = vector.load %arg7[%c3, %c0_107, %c0_108] : memref<16x32x8xf32, #tpu.memory_space<vmem>>, vector<1x32x8xf32>
    %149 = vector.shape_cast %148 : vector<1x32x8xf32> to vector<32x8xf32>
    %cst_109 = arith.constant dense<0.000000e+00> : vector<10x8xf32>
    %150 = tpu.matmul %29, %149, %cst_109 {dimension_numbers = #tpu.dot_dimension_numbers<[1], [0], [0], [1], [0, 0, 1, 1], [], []>} : vector<10x32xf32>, vector<32x8xf32>, vector<10x8xf32> -> vector<10x8xf32>
    %c3_110 = arith.constant 3 : index
    %c0_111 = arith.constant 0 : index
    %c0_112 = arith.constant 0 : index
    %151 = vector.load %arg8[%c3_110, %c0_111, %c0_112] : memref<16x1x8xf32, #tpu.memory_space<vmem>>, vector<1x1x8xf32>
    %152 = vector.shape_cast %151 : vector<1x1x8xf32> to vector<1x8xf32>
    %153 = vector.broadcast %152 : vector<1x8xf32> to vector<10x8xf32>
    %154 = arith.addf %150, %153 : vector<10x8xf32>
    %c3_113 = arith.constant 3 : index
    %c0_114 = arith.constant 0 : index
    %c0_115 = arith.constant 0 : index
    %155 = vector.load %arg9[%c3_113, %c0_114, %c0_115] : memref<16x32x8xf32, #tpu.memory_space<vmem>>, vector<1x32x8xf32>
    %156 = vector.shape_cast %155 : vector<1x32x8xf32> to vector<32x8xf32>
    %cst_116 = arith.constant dense<0.000000e+00> : vector<10x8xf32>
    %157 = tpu.matmul %29, %156, %cst_116 {dimension_numbers = #tpu.dot_dimension_numbers<[1], [0], [0], [1], [0, 0, 1, 1], [], []>} : vector<10x32xf32>, vector<32x8xf32>, vector<10x8xf32> -> vector<10x8xf32>
    %c3_117 = arith.constant 3 : index
    %c0_118 = arith.constant 0 : index
    %c0_119 = arith.constant 0 : index
    %158 = vector.load %arg10[%c3_117, %c0_118, %c0_119] : memref<16x1x8xf32, #tpu.memory_space<vmem>>, vector<1x1x8xf32>
    %159 = vector.shape_cast %158 : vector<1x1x8xf32> to vector<1x8xf32>
    %160 = vector.broadcast %159 : vector<1x8xf32> to vector<10x8xf32>
    %161 = arith.addf %157, %160 : vector<10x8xf32>
    %c3_120 = arith.constant 3 : index
    %c0_121 = arith.constant 0 : index
    %c0_122 = arith.constant 0 : index
    %162 = vector.load %arg11[%c3_120, %c0_121, %c0_122] : memref<16x32x8xf32, #tpu.memory_space<vmem>>, vector<1x32x8xf32>
    %163 = vector.shape_cast %162 : vector<1x32x8xf32> to vector<32x8xf32>
    %cst_123 = arith.constant dense<0.000000e+00> : vector<10x8xf32>
    %164 = tpu.matmul %29, %163, %cst_123 {dimension_numbers = #tpu.dot_dimension_numbers<[1], [0], [0], [1], [0, 0, 1, 1], [], []>} : vector<10x32xf32>, vector<32x8xf32>, vector<10x8xf32> -> vector<10x8xf32>
    %c3_124 = arith.constant 3 : index
    %c0_125 = arith.constant 0 : index
    %c0_126 = arith.constant 0 : index
    %165 = vector.load %arg12[%c3_124, %c0_125, %c0_126] : memref<16x1x8xf32, #tpu.memory_space<vmem>>, vector<1x1x8xf32>
    %166 = vector.shape_cast %165 : vector<1x1x8xf32> to vector<1x8xf32>
    %167 = vector.broadcast %166 : vector<1x8xf32> to vector<10x8xf32>
    %168 = arith.addf %164, %167 : vector<10x8xf32>
    %cst_127 = arith.constant dense<0.000000e+00> : vector<10x10xf32>
    %169 = tpu.matmul %154, %161, %cst_127 {dimension_numbers = #tpu.dot_dimension_numbers<[1], [1], [0], [0], [0, 0, 1, 0], [], []>} : vector<10x8xf32>, vector<10x8xf32>, vector<10x10xf32> -> vector<10x10xf32>
    %cst_128 = arith.constant 0.353553385 : f32
    %170 = vector.broadcast %cst_128 : f32 to vector<10x10xf32>
    %171 = arith.mulf %169, %170 : vector<10x10xf32>
    %172 = arith.addf %171, %5 : vector<10x10xf32>
    %cst_129 = arith.constant dense<0xFF800000> : vector<10xf32>
    %173 = vector.multi_reduction <maximumf>, %172, %cst_129 [1] : vector<10x10xf32> to vector<10xf32>
    %174 = vector.shape_cast %173 : vector<10xf32> to vector<10x1xf32>
    %175 = vector.broadcast %174 : vector<10x1xf32> to vector<10x10xf32>
    %176 = arith.subf %172, %175 : vector<10x10xf32>
    %177 = math.exp %176 : vector<10x10xf32>
    %cst_130 = arith.constant dense<0.000000e+00> : vector<10xf32>
    %178 = vector.multi_reduction <add>, %177, %cst_130 [1] : vector<10x10xf32> to vector<10xf32>
    %179 = vector.shape_cast %178 : vector<10xf32> to vector<10x1xf32>
    %180 = vector.broadcast %179 : vector<10x1xf32> to vector<10x10xf32>
    %181 = arith.divf %177, %180 : vector<10x10xf32>
    %cst_131 = arith.constant dense<0.000000e+00> : vector<10x8xf32>
    %182 = tpu.matmul %181, %168, %cst_131 {dimension_numbers = #tpu.dot_dimension_numbers<[1], [0], [0], [1], [0, 0, 1, 1], [], []>} : vector<10x10xf32>, vector<10x8xf32>, vector<10x8xf32> -> vector<10x8xf32>
    %c3_132 = arith.constant 3 : index
    %c0_133 = arith.constant 0 : index
    %c0_134 = arith.constant 0 : index
    %183 = vector.load %arg13[%c3_132, %c0_133, %c0_134] : memref<16x8x32xf32, #tpu.memory_space<vmem>>, vector<1x8x32xf32>
    %184 = vector.shape_cast %183 : vector<1x8x32xf32> to vector<8x32xf32>
    %cst_135 = arith.constant dense<0.000000e+00> : vector<10x32xf32>
    %185 = tpu.matmul %182, %184, %cst_135 {dimension_numbers = #tpu.dot_dimension_numbers<[1], [0], [0], [1], [0, 0, 1, 1], [], []>} : vector<10x8xf32>, vector<8x32xf32>, vector<10x32xf32> -> vector<10x32xf32>
    %186 = arith.addf %147, %185 : vector<10x32xf32>
    %187 = arith.addf %4, %186 : vector<10x32xf32>
    %c0_136 = arith.constant 0 : index
    %c0_137 = arith.constant 0 : index
    %c0_138 = arith.constant 0 : index
    %188 = vector.load %arg14[%c0_136, %c0_137, %c0_138] : memref<4x1x32xf32, #tpu.memory_space<vmem>>, vector<1x1x32xf32>
    %189 = vector.shape_cast %188 : vector<1x1x32xf32> to vector<1x32xf32>
    %190 = vector.broadcast %189 : vector<1x32xf32> to vector<10x32xf32>
    %191 = arith.addf %187, %190 : vector<10x32xf32>
    %c0_139 = arith.constant 0 : index
    %c0_140 = arith.constant 0 : index
    %c0_141 = arith.constant 0 : index
    %192 = vector.load %arg15[%c0_139, %c0_140, %c0_141] : memref<4x1x32xf32, #tpu.memory_space<vmem>>, vector<1x1x32xf32>
    %193 = vector.shape_cast %192 : vector<1x1x32xf32> to vector<1x32xf32>
    %c0_142 = arith.constant 0 : index
    %c0_143 = arith.constant 0 : index
    %c0_144 = arith.constant 0 : index
    %194 = vector.load %arg16[%c0_142, %c0_143, %c0_144] : memref<4x1x32xf32, #tpu.memory_space<vmem>>, vector<1x1x32xf32>
    %195 = vector.shape_cast %194 : vector<1x1x32xf32> to vector<1x32xf32>
    %cst_145 = arith.constant dense<0.000000e+00> : vector<10xf32>
    %196 = vector.multi_reduction <add>, %191, %cst_145 [1] : vector<10x32xf32> to vector<10xf32>
    %197 = vector.shape_cast %196 : vector<10xf32> to vector<10x1xf32>
    %cst_146 = arith.constant 3.200000e+01 : f32
    %198 = vector.broadcast %cst_146 : f32 to vector<10x1xf32>
    %199 = arith.divf %197, %198 : vector<10x1xf32>
    %200 = vector.broadcast %199 : vector<10x1xf32> to vector<10x32xf32>
    %201 = arith.subf %191, %200 : vector<10x32xf32>
    %202 = arith.mulf %201, %201 : vector<10x32xf32>
    %cst_147 = arith.constant dense<0.000000e+00> : vector<10xf32>
    %203 = vector.multi_reduction <add>, %202, %cst_147 [1] : vector<10x32xf32> to vector<10xf32>
    %204 = vector.shape_cast %203 : vector<10xf32> to vector<10x1xf32>
    %cst_148 = arith.constant 3.200000e+01 : f32
    %205 = vector.broadcast %cst_148 : f32 to vector<10x1xf32>
    %206 = arith.divf %204, %205 : vector<10x1xf32>
    %cst_149 = arith.constant 9.99999997E-7 : f32
    %207 = vector.broadcast %cst_149 : f32 to vector<10x1xf32>
    %208 = arith.addf %206, %207 : vector<10x1xf32>
    %209 = math.rsqrt %208 : vector<10x1xf32>
    %210 = vector.broadcast %209 : vector<10x1xf32> to vector<10x32xf32>
    %211 = arith.mulf %201, %210 : vector<10x32xf32>
    %212 = vector.broadcast %193 : vector<1x32xf32> to vector<10x32xf32>
    %213 = arith.mulf %211, %212 : vector<10x32xf32>
    %214 = vector.broadcast %195 : vector<1x32xf32> to vector<10x32xf32>
    %215 = arith.addf %213, %214 : vector<10x32xf32>
    %c0_150 = arith.constant 0 : index
    %c0_151 = arith.constant 0 : index
    %c0_152 = arith.constant 0 : index
    %216 = vector.load %arg17[%c0_150, %c0_151, %c0_152] : memref<4x32x128xf32, #tpu.memory_space<vmem>>, vector<1x32x128xf32>
    %217 = vector.shape_cast %216 : vector<1x32x128xf32> to vector<32x128xf32>
    %cst_153 = arith.constant dense<0.000000e+00> : vector<10x128xf32>
    %218 = tpu.matmul %215, %217, %cst_153 {dimension_numbers = #tpu.dot_dimension_numbers<[1], [0], [0], [1], [0, 0, 1, 1], [], []>} : vector<10x32xf32>, vector<32x128xf32>, vector<10x128xf32> -> vector<10x128xf32>
    %c0_154 = arith.constant 0 : index
    %c0_155 = arith.constant 0 : index
    %c0_156 = arith.constant 0 : index
    %219 = vector.load %arg18[%c0_154, %c0_155, %c0_156] : memref<4x1x128xf32, #tpu.memory_space<vmem>>, vector<1x1x128xf32>
    %220 = vector.shape_cast %219 : vector<1x1x128xf32> to vector<1x128xf32>
    %221 = vector.broadcast %220 : vector<1x128xf32> to vector<10x128xf32>
    %222 = arith.addf %218, %221 : vector<10x128xf32>
    %cst_157 = arith.constant 5.000000e-01 : f32
    %223 = vector.broadcast %cst_157 : f32 to vector<10x128xf32>
    %224 = arith.mulf %223, %222 : vector<10x128xf32>
    %cst_158 = arith.constant 0.707106769 : f32
    %225 = vector.broadcast %cst_158 : f32 to vector<10x128xf32>
    %226 = arith.mulf %222, %225 : vector<10x128xf32>
    %227 = math.erf %226 : vector<10x128xf32>
    %cst_159 = arith.constant 1.000000e+00 : f32
    %228 = vector.broadcast %cst_159 : f32 to vector<10x128xf32>
    %229 = arith.addf %228, %227 : vector<10x128xf32>
    %230 = arith.mulf %224, %229 : vector<10x128xf32>
    %c0_160 = arith.constant 0 : index
    %c0_161 = arith.constant 0 : index
    %c0_162 = arith.constant 0 : index
    %231 = vector.load %arg19[%c0_160, %c0_161, %c0_162] : memref<4x128x32xf32, #tpu.memory_space<vmem>>, vector<1x128x32xf32>
    %232 = vector.shape_cast %231 : vector<1x128x32xf32> to vector<128x32xf32>
    %cst_163 = arith.constant dense<0.000000e+00> : vector<10x32xf32>
    %233 = tpu.matmul %230, %232, %cst_163 {dimension_numbers = #tpu.dot_dimension_numbers<[1], [0], [0], [1], [0, 0, 1, 1], [], []>} : vector<10x128xf32>, vector<128x32xf32>, vector<10x32xf32> -> vector<10x32xf32>
    %c0_164 = arith.constant 0 : index
    %c0_165 = arith.constant 0 : index
    %c0_166 = arith.constant 0 : index
    %234 = vector.load %arg20[%c0_164, %c0_165, %c0_166] : memref<4x1x32xf32, #tpu.memory_space<vmem>>, vector<1x1x32xf32>
    %235 = vector.shape_cast %234 : vector<1x1x32xf32> to vector<1x32xf32>
    %236 = vector.broadcast %235 : vector<1x32xf32> to vector<10x32xf32>
    %237 = arith.addf %233, %236 : vector<10x32xf32>
    %238 = arith.addf %191, %237 : vector<10x32xf32>
    %c1_167 = arith.constant 1 : index
    %c0_168 = arith.constant 0 : index
    %c0_169 = arith.constant 0 : index
    %239 = vector.load %arg5[%c1_167, %c0_168, %c0_169] : memref<4x1x32xf32, #tpu.memory_space<vmem>>, vector<1x1x32xf32>
    %240 = vector.shape_cast %239 : vector<1x1x32xf32> to vector<1x32xf32>
    %c1_170 = arith.constant 1 : index
    %c0_171 = arith.constant 0 : index
    %c0_172 = arith.constant 0 : index
    %241 = vector.load %arg6[%c1_170, %c0_171, %c0_172] : memref<4x1x32xf32, #tpu.memory_space<vmem>>, vector<1x1x32xf32>
    %242 = vector.shape_cast %241 : vector<1x1x32xf32> to vector<1x32xf32>
    %cst_173 = arith.constant dense<0.000000e+00> : vector<10xf32>
    %243 = vector.multi_reduction <add>, %238, %cst_173 [1] : vector<10x32xf32> to vector<10xf32>
    %244 = vector.shape_cast %243 : vector<10xf32> to vector<10x1xf32>
    %cst_174 = arith.constant 3.200000e+01 : f32
    %245 = vector.broadcast %cst_174 : f32 to vector<10x1xf32>
    %246 = arith.divf %244, %245 : vector<10x1xf32>
    %247 = vector.broadcast %246 : vector<10x1xf32> to vector<10x32xf32>
    %248 = arith.subf %238, %247 : vector<10x32xf32>
    %249 = arith.mulf %248, %248 : vector<10x32xf32>
    %cst_175 = arith.constant dense<0.000000e+00> : vector<10xf32>
    %250 = vector.multi_reduction <add>, %249, %cst_175 [1] : vector<10x32xf32> to vector<10xf32>
    %251 = vector.shape_cast %250 : vector<10xf32> to vector<10x1xf32>
    %cst_176 = arith.constant 3.200000e+01 : f32
    %252 = vector.broadcast %cst_176 : f32 to vector<10x1xf32>
    %253 = arith.divf %251, %252 : vector<10x1xf32>
    %cst_177 = arith.constant 9.99999997E-7 : f32
    %254 = vector.broadcast %cst_177 : f32 to vector<10x1xf32>
    %255 = arith.addf %253, %254 : vector<10x1xf32>
    %256 = math.rsqrt %255 : vector<10x1xf32>
    %257 = vector.broadcast %256 : vector<10x1xf32> to vector<10x32xf32>
    %258 = arith.mulf %248, %257 : vector<10x32xf32>
    %259 = vector.broadcast %240 : vector<1x32xf32> to vector<10x32xf32>
    %260 = arith.mulf %258, %259 : vector<10x32xf32>
    %261 = vector.broadcast %242 : vector<1x32xf32> to vector<10x32xf32>
    %262 = arith.addf %260, %261 : vector<10x32xf32>
    %cst_178 = arith.constant 0.000000e+00 : f32
    %263 = vector.broadcast %cst_178 : f32 to vector<10x32xf32>
    %c4 = arith.constant 4 : index
    %c0_179 = arith.constant 0 : index
    %c0_180 = arith.constant 0 : index
    %264 = vector.load %arg7[%c4, %c0_179, %c0_180] : memref<16x32x8xf32, #tpu.memory_space<vmem>>, vector<1x32x8xf32>
    %265 = vector.shape_cast %264 : vector<1x32x8xf32> to vector<32x8xf32>
    %cst_181 = arith.constant dense<0.000000e+00> : vector<10x8xf32>
    %266 = tpu.matmul %262, %265, %cst_181 {dimension_numbers = #tpu.dot_dimension_numbers<[1], [0], [0], [1], [0, 0, 1, 1], [], []>} : vector<10x32xf32>, vector<32x8xf32>, vector<10x8xf32> -> vector<10x8xf32>
    %c4_182 = arith.constant 4 : index
    %c0_183 = arith.constant 0 : index
    %c0_184 = arith.constant 0 : index
    %267 = vector.load %arg8[%c4_182, %c0_183, %c0_184] : memref<16x1x8xf32, #tpu.memory_space<vmem>>, vector<1x1x8xf32>
    %268 = vector.shape_cast %267 : vector<1x1x8xf32> to vector<1x8xf32>
    %269 = vector.broadcast %268 : vector<1x8xf32> to vector<10x8xf32>
    %270 = arith.addf %266, %269 : vector<10x8xf32>
    %c4_185 = arith.constant 4 : index
    %c0_186 = arith.constant 0 : index
    %c0_187 = arith.constant 0 : index
    %271 = vector.load %arg9[%c4_185, %c0_186, %c0_187] : memref<16x32x8xf32, #tpu.memory_space<vmem>>, vector<1x32x8xf32>
    %272 = vector.shape_cast %271 : vector<1x32x8xf32> to vector<32x8xf32>
    %cst_188 = arith.constant dense<0.000000e+00> : vector<10x8xf32>
    %273 = tpu.matmul %262, %272, %cst_188 {dimension_numbers = #tpu.dot_dimension_numbers<[1], [0], [0], [1], [0, 0, 1, 1], [], []>} : vector<10x32xf32>, vector<32x8xf32>, vector<10x8xf32> -> vector<10x8xf32>
    %c4_189 = arith.constant 4 : index
    %c0_190 = arith.constant 0 : index
    %c0_191 = arith.constant 0 : index
    %274 = vector.load %arg10[%c4_189, %c0_190, %c0_191] : memref<16x1x8xf32, #tpu.memory_space<vmem>>, vector<1x1x8xf32>
    %275 = vector.shape_cast %274 : vector<1x1x8xf32> to vector<1x8xf32>
    %276 = vector.broadcast %275 : vector<1x8xf32> to vector<10x8xf32>
    %277 = arith.addf %273, %276 : vector<10x8xf32>
    %c4_192 = arith.constant 4 : index
    %c0_193 = arith.constant 0 : index
    %c0_194 = arith.constant 0 : index
    %278 = vector.load %arg11[%c4_192, %c0_193, %c0_194] : memref<16x32x8xf32, #tpu.memory_space<vmem>>, vector<1x32x8xf32>
    %279 = vector.shape_cast %278 : vector<1x32x8xf32> to vector<32x8xf32>
    %cst_195 = arith.constant dense<0.000000e+00> : vector<10x8xf32>
    %280 = tpu.matmul %262, %279, %cst_195 {dimension_numbers = #tpu.dot_dimension_numbers<[1], [0], [0], [1], [0, 0, 1, 1], [], []>} : vector<10x32xf32>, vector<32x8xf32>, vector<10x8xf32> -> vector<10x8xf32>
    %c4_196 = arith.constant 4 : index
    %c0_197 = arith.constant 0 : index
    %c0_198 = arith.constant 0 : index
    %281 = vector.load %arg12[%c4_196, %c0_197, %c0_198] : memref<16x1x8xf32, #tpu.memory_space<vmem>>, vector<1x1x8xf32>
    %282 = vector.shape_cast %281 : vector<1x1x8xf32> to vector<1x8xf32>
    %283 = vector.broadcast %282 : vector<1x8xf32> to vector<10x8xf32>
    %284 = arith.addf %280, %283 : vector<10x8xf32>
    %cst_199 = arith.constant dense<0.000000e+00> : vector<10x10xf32>
    %285 = tpu.matmul %270, %277, %cst_199 {dimension_numbers = #tpu.dot_dimension_numbers<[1], [1], [0], [0], [0, 0, 1, 0], [], []>} : vector<10x8xf32>, vector<10x8xf32>, vector<10x10xf32> -> vector<10x10xf32>
    %cst_200 = arith.constant 0.353553385 : f32
    %286 = vector.broadcast %cst_200 : f32 to vector<10x10xf32>
    %287 = arith.mulf %285, %286 : vector<10x10xf32>
    %288 = arith.addf %287, %5 : vector<10x10xf32>
    %cst_201 = arith.constant dense<0xFF800000> : vector<10xf32>
    %289 = vector.multi_reduction <maximumf>, %288, %cst_201 [1] : vector<10x10xf32> to vector<10xf32>
    %290 = vector.shape_cast %289 : vector<10xf32> to vector<10x1xf32>
    %291 = vector.broadcast %290 : vector<10x1xf32> to vector<10x10xf32>
    %292 = arith.subf %288, %291 : vector<10x10xf32>
    %293 = math.exp %292 : vector<10x10xf32>
    %cst_202 = arith.constant dense<0.000000e+00> : vector<10xf32>
    %294 = vector.multi_reduction <add>, %293, %cst_202 [1] : vector<10x10xf32> to vector<10xf32>
    %295 = vector.shape_cast %294 : vector<10xf32> to vector<10x1xf32>
    %296 = vector.broadcast %295 : vector<10x1xf32> to vector<10x10xf32>
    %297 = arith.divf %293, %296 : vector<10x10xf32>
    %cst_203 = arith.constant dense<0.000000e+00> : vector<10x8xf32>
    %298 = tpu.matmul %297, %284, %cst_203 {dimension_numbers = #tpu.dot_dimension_numbers<[1], [0], [0], [1], [0, 0, 1, 1], [], []>} : vector<10x10xf32>, vector<10x8xf32>, vector<10x8xf32> -> vector<10x8xf32>
    %c4_204 = arith.constant 4 : index
    %c0_205 = arith.constant 0 : index
    %c0_206 = arith.constant 0 : index
    %299 = vector.load %arg13[%c4_204, %c0_205, %c0_206] : memref<16x8x32xf32, #tpu.memory_space<vmem>>, vector<1x8x32xf32>
    %300 = vector.shape_cast %299 : vector<1x8x32xf32> to vector<8x32xf32>
    %cst_207 = arith.constant dense<0.000000e+00> : vector<10x32xf32>
    %301 = tpu.matmul %298, %300, %cst_207 {dimension_numbers = #tpu.dot_dimension_numbers<[1], [0], [0], [1], [0, 0, 1, 1], [], []>} : vector<10x8xf32>, vector<8x32xf32>, vector<10x32xf32> -> vector<10x32xf32>
    %302 = arith.addf %263, %301 : vector<10x32xf32>
    %c5 = arith.constant 5 : index
    %c0_208 = arith.constant 0 : index
    %c0_209 = arith.constant 0 : index
    %303 = vector.load %arg7[%c5, %c0_208, %c0_209] : memref<16x32x8xf32, #tpu.memory_space<vmem>>, vector<1x32x8xf32>
    %304 = vector.shape_cast %303 : vector<1x32x8xf32> to vector<32x8xf32>
    %cst_210 = arith.constant dense<0.000000e+00> : vector<10x8xf32>
    %305 = tpu.matmul %262, %304, %cst_210 {dimension_numbers = #tpu.dot_dimension_numbers<[1], [0], [0], [1], [0, 0, 1, 1], [], []>} : vector<10x32xf32>, vector<32x8xf32>, vector<10x8xf32> -> vector<10x8xf32>
    %c5_211 = arith.constant 5 : index
    %c0_212 = arith.constant 0 : index
    %c0_213 = arith.constant 0 : index
    %306 = vector.load %arg8[%c5_211, %c0_212, %c0_213] : memref<16x1x8xf32, #tpu.memory_space<vmem>>, vector<1x1x8xf32>
    %307 = vector.shape_cast %306 : vector<1x1x8xf32> to vector<1x8xf32>
    %308 = vector.broadcast %307 : vector<1x8xf32> to vector<10x8xf32>
    %309 = arith.addf %305, %308 : vector<10x8xf32>
    %c5_214 = arith.constant 5 : index
    %c0_215 = arith.constant 0 : index
    %c0_216 = arith.constant 0 : index
    %310 = vector.load %arg9[%c5_214, %c0_215, %c0_216] : memref<16x32x8xf32, #tpu.memory_space<vmem>>, vector<1x32x8xf32>
    %311 = vector.shape_cast %310 : vector<1x32x8xf32> to vector<32x8xf32>
    %cst_217 = arith.constant dense<0.000000e+00> : vector<10x8xf32>
    %312 = tpu.matmul %262, %311, %cst_217 {dimension_numbers = #tpu.dot_dimension_numbers<[1], [0], [0], [1], [0, 0, 1, 1], [], []>} : vector<10x32xf32>, vector<32x8xf32>, vector<10x8xf32> -> vector<10x8xf32>
    %c5_218 = arith.constant 5 : index
    %c0_219 = arith.constant 0 : index
    %c0_220 = arith.constant 0 : index
    %313 = vector.load %arg10[%c5_218, %c0_219, %c0_220] : memref<16x1x8xf32, #tpu.memory_space<vmem>>, vector<1x1x8xf32>
    %314 = vector.shape_cast %313 : vector<1x1x8xf32> to vector<1x8xf32>
    %315 = vector.broadcast %314 : vector<1x8xf32> to vector<10x8xf32>
    %316 = arith.addf %312, %315 : vector<10x8xf32>
    %c5_221 = arith.constant 5 : index
    %c0_222 = arith.constant 0 : index
    %c0_223 = arith.constant 0 : index
    %317 = vector.load %arg11[%c5_221, %c0_222, %c0_223] : memref<16x32x8xf32, #tpu.memory_space<vmem>>, vector<1x32x8xf32>
    %318 = vector.shape_cast %317 : vector<1x32x8xf32> to vector<32x8xf32>
    %cst_224 = arith.constant dense<0.000000e+00> : vector<10x8xf32>
    %319 = tpu.matmul %262, %318, %cst_224 {dimension_numbers = #tpu.dot_dimension_numbers<[1], [0], [0], [1], [0, 0, 1, 1], [], []>} : vector<10x32xf32>, vector<32x8xf32>, vector<10x8xf32> -> vector<10x8xf32>
    %c5_225 = arith.constant 5 : index
    %c0_226 = arith.constant 0 : index
    %c0_227 = arith.constant 0 : index
    %320 = vector.load %arg12[%c5_225, %c0_226, %c0_227] : memref<16x1x8xf32, #tpu.memory_space<vmem>>, vector<1x1x8xf32>
    %321 = vector.shape_cast %320 : vector<1x1x8xf32> to vector<1x8xf32>
    %322 = vector.broadcast %321 : vector<1x8xf32> to vector<10x8xf32>
    %323 = arith.addf %319, %322 : vector<10x8xf32>
    %cst_228 = arith.constant dense<0.000000e+00> : vector<10x10xf32>
    %324 = tpu.matmul %309, %316, %cst_228 {dimension_numbers = #tpu.dot_dimension_numbers<[1], [1], [0], [0], [0, 0, 1, 0], [], []>} : vector<10x8xf32>, vector<10x8xf32>, vector<10x10xf32> -> vector<10x10xf32>
    %cst_229 = arith.constant 0.353553385 : f32
    %325 = vector.broadcast %cst_229 : f32 to vector<10x10xf32>
    %326 = arith.mulf %324, %325 : vector<10x10xf32>
    %327 = arith.addf %326, %5 : vector<10x10xf32>
    %cst_230 = arith.constant dense<0xFF800000> : vector<10xf32>
    %328 = vector.multi_reduction <maximumf>, %327, %cst_230 [1] : vector<10x10xf32> to vector<10xf32>
    %329 = vector.shape_cast %328 : vector<10xf32> to vector<10x1xf32>
    %330 = vector.broadcast %329 : vector<10x1xf32> to vector<10x10xf32>
    %331 = arith.subf %327, %330 : vector<10x10xf32>
    %332 = math.exp %331 : vector<10x10xf32>
    %cst_231 = arith.constant dense<0.000000e+00> : vector<10xf32>
    %333 = vector.multi_reduction <add>, %332, %cst_231 [1] : vector<10x10xf32> to vector<10xf32>
    %334 = vector.shape_cast %333 : vector<10xf32> to vector<10x1xf32>
    %335 = vector.broadcast %334 : vector<10x1xf32> to vector<10x10xf32>
    %336 = arith.divf %332, %335 : vector<10x10xf32>
    %cst_232 = arith.constant dense<0.000000e+00> : vector<10x8xf32>
    %337 = tpu.matmul %336, %323, %cst_232 {dimension_numbers = #tpu.dot_dimension_numbers<[1], [0], [0], [1], [0, 0, 1, 1], [], []>} : vector<10x10xf32>, vector<10x8xf32>, vector<10x8xf32> -> vector<10x8xf32>
    %c5_233 = arith.constant 5 : index
    %c0_234 = arith.constant 0 : index
    %c0_235 = arith.constant 0 : index
    %338 = vector.load %arg13[%c5_233, %c0_234, %c0_235] : memref<16x8x32xf32, #tpu.memory_space<vmem>>, vector<1x8x32xf32>
    %339 = vector.shape_cast %338 : vector<1x8x32xf32> to vector<8x32xf32>
    %cst_236 = arith.constant dense<0.000000e+00> : vector<10x32xf32>
    %340 = tpu.matmul %337, %339, %cst_236 {dimension_numbers = #tpu.dot_dimension_numbers<[1], [0], [0], [1], [0, 0, 1, 1], [], []>} : vector<10x8xf32>, vector<8x32xf32>, vector<10x32xf32> -> vector<10x32xf32>
    %341 = arith.addf %302, %340 : vector<10x32xf32>
    %c6 = arith.constant 6 : index
    %c0_237 = arith.constant 0 : index
    %c0_238 = arith.constant 0 : index
    %342 = vector.load %arg7[%c6, %c0_237, %c0_238] : memref<16x32x8xf32, #tpu.memory_space<vmem>>, vector<1x32x8xf32>
    %343 = vector.shape_cast %342 : vector<1x32x8xf32> to vector<32x8xf32>
    %cst_239 = arith.constant dense<0.000000e+00> : vector<10x8xf32>
    %344 = tpu.matmul %262, %343, %cst_239 {dimension_numbers = #tpu.dot_dimension_numbers<[1], [0], [0], [1], [0, 0, 1, 1], [], []>} : vector<10x32xf32>, vector<32x8xf32>, vector<10x8xf32> -> vector<10x8xf32>
    %c6_240 = arith.constant 6 : index
    %c0_241 = arith.constant 0 : index
    %c0_242 = arith.constant 0 : index
    %345 = vector.load %arg8[%c6_240, %c0_241, %c0_242] : memref<16x1x8xf32, #tpu.memory_space<vmem>>, vector<1x1x8xf32>
    %346 = vector.shape_cast %345 : vector<1x1x8xf32> to vector<1x8xf32>
    %347 = vector.broadcast %346 : vector<1x8xf32> to vector<10x8xf32>
    %348 = arith.addf %344, %347 : vector<10x8xf32>
    %c6_243 = arith.constant 6 : index
    %c0_244 = arith.constant 0 : index
    %c0_245 = arith.constant 0 : index
    %349 = vector.load %arg9[%c6_243, %c0_244, %c0_245] : memref<16x32x8xf32, #tpu.memory_space<vmem>>, vector<1x32x8xf32>
    %350 = vector.shape_cast %349 : vector<1x32x8xf32> to vector<32x8xf32>
    %cst_246 = arith.constant dense<0.000000e+00> : vector<10x8xf32>
    %351 = tpu.matmul %262, %350, %cst_246 {dimension_numbers = #tpu.dot_dimension_numbers<[1], [0], [0], [1], [0, 0, 1, 1], [], []>} : vector<10x32xf32>, vector<32x8xf32>, vector<10x8xf32> -> vector<10x8xf32>
    %c6_247 = arith.constant 6 : index
    %c0_248 = arith.constant 0 : index
    %c0_249 = arith.constant 0 : index
    %352 = vector.load %arg10[%c6_247, %c0_248, %c0_249] : memref<16x1x8xf32, #tpu.memory_space<vmem>>, vector<1x1x8xf32>
    %353 = vector.shape_cast %352 : vector<1x1x8xf32> to vector<1x8xf32>
    %354 = vector.broadcast %353 : vector<1x8xf32> to vector<10x8xf32>
    %355 = arith.addf %351, %354 : vector<10x8xf32>
    %c6_250 = arith.constant 6 : index
    %c0_251 = arith.constant 0 : index
    %c0_252 = arith.constant 0 : index
    %356 = vector.load %arg11[%c6_250, %c0_251, %c0_252] : memref<16x32x8xf32, #tpu.memory_space<vmem>>, vector<1x32x8xf32>
    %357 = vector.shape_cast %356 : vector<1x32x8xf32> to vector<32x8xf32>
    %cst_253 = arith.constant dense<0.000000e+00> : vector<10x8xf32>
    %358 = tpu.matmul %262, %357, %cst_253 {dimension_numbers = #tpu.dot_dimension_numbers<[1], [0], [0], [1], [0, 0, 1, 1], [], []>} : vector<10x32xf32>, vector<32x8xf32>, vector<10x8xf32> -> vector<10x8xf32>
    %c6_254 = arith.constant 6 : index
    %c0_255 = arith.constant 0 : index
    %c0_256 = arith.constant 0 : index
    %359 = vector.load %arg12[%c6_254, %c0_255, %c0_256] : memref<16x1x8xf32, #tpu.memory_space<vmem>>, vector<1x1x8xf32>
    %360 = vector.shape_cast %359 : vector<1x1x8xf32> to vector<1x8xf32>
    %361 = vector.broadcast %360 : vector<1x8xf32> to vector<10x8xf32>
    %362 = arith.addf %358, %361 : vector<10x8xf32>
    %cst_257 = arith.constant dense<0.000000e+00> : vector<10x10xf32>
    %363 = tpu.matmul %348, %355, %cst_257 {dimension_numbers = #tpu.dot_dimension_numbers<[1], [1], [0], [0], [0, 0, 1, 0], [], []>} : vector<10x8xf32>, vector<10x8xf32>, vector<10x10xf32> -> vector<10x10xf32>
    %cst_258 = arith.constant 0.353553385 : f32
    %364 = vector.broadcast %cst_258 : f32 to vector<10x10xf32>
    %365 = arith.mulf %363, %364 : vector<10x10xf32>
    %366 = arith.addf %365, %5 : vector<10x10xf32>
    %cst_259 = arith.constant dense<0xFF800000> : vector<10xf32>
    %367 = vector.multi_reduction <maximumf>, %366, %cst_259 [1] : vector<10x10xf32> to vector<10xf32>
    %368 = vector.shape_cast %367 : vector<10xf32> to vector<10x1xf32>
    %369 = vector.broadcast %368 : vector<10x1xf32> to vector<10x10xf32>
    %370 = arith.subf %366, %369 : vector<10x10xf32>
    %371 = math.exp %370 : vector<10x10xf32>
    %cst_260 = arith.constant dense<0.000000e+00> : vector<10xf32>
    %372 = vector.multi_reduction <add>, %371, %cst_260 [1] : vector<10x10xf32> to vector<10xf32>
    %373 = vector.shape_cast %372 : vector<10xf32> to vector<10x1xf32>
    %374 = vector.broadcast %373 : vector<10x1xf32> to vector<10x10xf32>
    %375 = arith.divf %371, %374 : vector<10x10xf32>
    %cst_261 = arith.constant dense<0.000000e+00> : vector<10x8xf32>
    %376 = tpu.matmul %375, %362, %cst_261 {dimension_numbers = #tpu.dot_dimension_numbers<[1], [0], [0], [1], [0, 0, 1, 1], [], []>} : vector<10x10xf32>, vector<10x8xf32>, vector<10x8xf32> -> vector<10x8xf32>
    %c6_262 = arith.constant 6 : index
    %c0_263 = arith.constant 0 : index
    %c0_264 = arith.constant 0 : index
    %377 = vector.load %arg13[%c6_262, %c0_263, %c0_264] : memref<16x8x32xf32, #tpu.memory_space<vmem>>, vector<1x8x32xf32>
    %378 = vector.shape_cast %377 : vector<1x8x32xf32> to vector<8x32xf32>
    %cst_265 = arith.constant dense<0.000000e+00> : vector<10x32xf32>
    %379 = tpu.matmul %376, %378, %cst_265 {dimension_numbers = #tpu.dot_dimension_numbers<[1], [0], [0], [1], [0, 0, 1, 1], [], []>} : vector<10x8xf32>, vector<8x32xf32>, vector<10x32xf32> -> vector<10x32xf32>
    %380 = arith.addf %341, %379 : vector<10x32xf32>
    %c7 = arith.constant 7 : index
    %c0_266 = arith.constant 0 : index
    %c0_267 = arith.constant 0 : index
    %381 = vector.load %arg7[%c7, %c0_266, %c0_267] : memref<16x32x8xf32, #tpu.memory_space<vmem>>, vector<1x32x8xf32>
    %382 = vector.shape_cast %381 : vector<1x32x8xf32> to vector<32x8xf32>
    %cst_268 = arith.constant dense<0.000000e+00> : vector<10x8xf32>
    %383 = tpu.matmul %262, %382, %cst_268 {dimension_numbers = #tpu.dot_dimension_numbers<[1], [0], [0], [1], [0, 0, 1, 1], [], []>} : vector<10x32xf32>, vector<32x8xf32>, vector<10x8xf32> -> vector<10x8xf32>
    %c7_269 = arith.constant 7 : index
    %c0_270 = arith.constant 0 : index
    %c0_271 = arith.constant 0 : index
    %384 = vector.load %arg8[%c7_269, %c0_270, %c0_271] : memref<16x1x8xf32, #tpu.memory_space<vmem>>, vector<1x1x8xf32>
    %385 = vector.shape_cast %384 : vector<1x1x8xf32> to vector<1x8xf32>
    %386 = vector.broadcast %385 : vector<1x8xf32> to vector<10x8xf32>
    %387 = arith.addf %383, %386 : vector<10x8xf32>
    %c7_272 = arith.constant 7 : index
    %c0_273 = arith.constant 0 : index
    %c0_274 = arith.constant 0 : index
    %388 = vector.load %arg9[%c7_272, %c0_273, %c0_274] : memref<16x32x8xf32, #tpu.memory_space<vmem>>, vector<1x32x8xf32>
    %389 = vector.shape_cast %388 : vector<1x32x8xf32> to vector<32x8xf32>
    %cst_275 = arith.constant dense<0.000000e+00> : vector<10x8xf32>
    %390 = tpu.matmul %262, %389, %cst_275 {dimension_numbers = #tpu.dot_dimension_numbers<[1], [0], [0], [1], [0, 0, 1, 1], [], []>} : vector<10x32xf32>, vector<32x8xf32>, vector<10x8xf32> -> vector<10x8xf32>
    %c7_276 = arith.constant 7 : index
    %c0_277 = arith.constant 0 : index
    %c0_278 = arith.constant 0 : index
    %391 = vector.load %arg10[%c7_276, %c0_277, %c0_278] : memref<16x1x8xf32, #tpu.memory_space<vmem>>, vector<1x1x8xf32>
    %392 = vector.shape_cast %391 : vector<1x1x8xf32> to vector<1x8xf32>
    %393 = vector.broadcast %392 : vector<1x8xf32> to vector<10x8xf32>
    %394 = arith.addf %390, %393 : vector<10x8xf32>
    %c7_279 = arith.constant 7 : index
    %c0_280 = arith.constant 0 : index
    %c0_281 = arith.constant 0 : index
    %395 = vector.load %arg11[%c7_279, %c0_280, %c0_281] : memref<16x32x8xf32, #tpu.memory_space<vmem>>, vector<1x32x8xf32>
    %396 = vector.shape_cast %395 : vector<1x32x8xf32> to vector<32x8xf32>
    %cst_282 = arith.constant dense<0.000000e+00> : vector<10x8xf32>
    %397 = tpu.matmul %262, %396, %cst_282 {dimension_numbers = #tpu.dot_dimension_numbers<[1], [0], [0], [1], [0, 0, 1, 1], [], []>} : vector<10x32xf32>, vector<32x8xf32>, vector<10x8xf32> -> vector<10x8xf32>
    %c7_283 = arith.constant 7 : index
    %c0_284 = arith.constant 0 : index
    %c0_285 = arith.constant 0 : index
    %398 = vector.load %arg12[%c7_283, %c0_284, %c0_285] : memref<16x1x8xf32, #tpu.memory_space<vmem>>, vector<1x1x8xf32>
    %399 = vector.shape_cast %398 : vector<1x1x8xf32> to vector<1x8xf32>
    %400 = vector.broadcast %399 : vector<1x8xf32> to vector<10x8xf32>
    %401 = arith.addf %397, %400 : vector<10x8xf32>
    %cst_286 = arith.constant dense<0.000000e+00> : vector<10x10xf32>
    %402 = tpu.matmul %387, %394, %cst_286 {dimension_numbers = #tpu.dot_dimension_numbers<[1], [1], [0], [0], [0, 0, 1, 0], [], []>} : vector<10x8xf32>, vector<10x8xf32>, vector<10x10xf32> -> vector<10x10xf32>
    %cst_287 = arith.constant 0.353553385 : f32
    %403 = vector.broadcast %cst_287 : f32 to vector<10x10xf32>
    %404 = arith.mulf %402, %403 : vector<10x10xf32>
    %405 = arith.addf %404, %5 : vector<10x10xf32>
    %cst_288 = arith.constant dense<0xFF800000> : vector<10xf32>
    %406 = vector.multi_reduction <maximumf>, %405, %cst_288 [1] : vector<10x10xf32> to vector<10xf32>
    %407 = vector.shape_cast %406 : vector<10xf32> to vector<10x1xf32>
    %408 = vector.broadcast %407 : vector<10x1xf32> to vector<10x10xf32>
    %409 = arith.subf %405, %408 : vector<10x10xf32>
    %410 = math.exp %409 : vector<10x10xf32>
    %cst_289 = arith.constant dense<0.000000e+00> : vector<10xf32>
    %411 = vector.multi_reduction <add>, %410, %cst_289 [1] : vector<10x10xf32> to vector<10xf32>
    %412 = vector.shape_cast %411 : vector<10xf32> to vector<10x1xf32>
    %413 = vector.broadcast %412 : vector<10x1xf32> to vector<10x10xf32>
    %414 = arith.divf %410, %413 : vector<10x10xf32>
    %cst_290 = arith.constant dense<0.000000e+00> : vector<10x8xf32>
    %415 = tpu.matmul %414, %401, %cst_290 {dimension_numbers = #tpu.dot_dimension_numbers<[1], [0], [0], [1], [0, 0, 1, 1], [], []>} : vector<10x10xf32>, vector<10x8xf32>, vector<10x8xf32> -> vector<10x8xf32>
    %c7_291 = arith.constant 7 : index
    %c0_292 = arith.constant 0 : index
    %c0_293 = arith.constant 0 : index
    %416 = vector.load %arg13[%c7_291, %c0_292, %c0_293] : memref<16x8x32xf32, #tpu.memory_space<vmem>>, vector<1x8x32xf32>
    %417 = vector.shape_cast %416 : vector<1x8x32xf32> to vector<8x32xf32>
    %cst_294 = arith.constant dense<0.000000e+00> : vector<10x32xf32>
    %418 = tpu.matmul %415, %417, %cst_294 {dimension_numbers = #tpu.dot_dimension_numbers<[1], [0], [0], [1], [0, 0, 1, 1], [], []>} : vector<10x8xf32>, vector<8x32xf32>, vector<10x32xf32> -> vector<10x32xf32>
    %419 = arith.addf %380, %418 : vector<10x32xf32>
    %420 = arith.addf %238, %419 : vector<10x32xf32>
    %c1_295 = arith.constant 1 : index
    %c0_296 = arith.constant 0 : index
    %c0_297 = arith.constant 0 : index
    %421 = vector.load %arg14[%c1_295, %c0_296, %c0_297] : memref<4x1x32xf32, #tpu.memory_space<vmem>>, vector<1x1x32xf32>
    %422 = vector.shape_cast %421 : vector<1x1x32xf32> to vector<1x32xf32>
    %423 = vector.broadcast %422 : vector<1x32xf32> to vector<10x32xf32>
    %424 = arith.addf %420, %423 : vector<10x32xf32>
    %c1_298 = arith.constant 1 : index
    %c0_299 = arith.constant 0 : index
    %c0_300 = arith.constant 0 : index
    %425 = vector.load %arg15[%c1_298, %c0_299, %c0_300] : memref<4x1x32xf32, #tpu.memory_space<vmem>>, vector<1x1x32xf32>
    %426 = vector.shape_cast %425 : vector<1x1x32xf32> to vector<1x32xf32>
    %c1_301 = arith.constant 1 : index
    %c0_302 = arith.constant 0 : index
    %c0_303 = arith.constant 0 : index
    %427 = vector.load %arg16[%c1_301, %c0_302, %c0_303] : memref<4x1x32xf32, #tpu.memory_space<vmem>>, vector<1x1x32xf32>
    %428 = vector.shape_cast %427 : vector<1x1x32xf32> to vector<1x32xf32>
    %cst_304 = arith.constant dense<0.000000e+00> : vector<10xf32>
    %429 = vector.multi_reduction <add>, %424, %cst_304 [1] : vector<10x32xf32> to vector<10xf32>
    %430 = vector.shape_cast %429 : vector<10xf32> to vector<10x1xf32>
    %cst_305 = arith.constant 3.200000e+01 : f32
    %431 = vector.broadcast %cst_305 : f32 to vector<10x1xf32>
    %432 = arith.divf %430, %431 : vector<10x1xf32>
    %433 = vector.broadcast %432 : vector<10x1xf32> to vector<10x32xf32>
    %434 = arith.subf %424, %433 : vector<10x32xf32>
    %435 = arith.mulf %434, %434 : vector<10x32xf32>
    %cst_306 = arith.constant dense<0.000000e+00> : vector<10xf32>
    %436 = vector.multi_reduction <add>, %435, %cst_306 [1] : vector<10x32xf32> to vector<10xf32>
    %437 = vector.shape_cast %436 : vector<10xf32> to vector<10x1xf32>
    %cst_307 = arith.constant 3.200000e+01 : f32
    %438 = vector.broadcast %cst_307 : f32 to vector<10x1xf32>
    %439 = arith.divf %437, %438 : vector<10x1xf32>
    %cst_308 = arith.constant 9.99999997E-7 : f32
    %440 = vector.broadcast %cst_308 : f32 to vector<10x1xf32>
    %441 = arith.addf %439, %440 : vector<10x1xf32>
    %442 = math.rsqrt %441 : vector<10x1xf32>
    %443 = vector.broadcast %442 : vector<10x1xf32> to vector<10x32xf32>
    %444 = arith.mulf %434, %443 : vector<10x32xf32>
    %445 = vector.broadcast %426 : vector<1x32xf32> to vector<10x32xf32>
    %446 = arith.mulf %444, %445 : vector<10x32xf32>
    %447 = vector.broadcast %428 : vector<1x32xf32> to vector<10x32xf32>
    %448 = arith.addf %446, %447 : vector<10x32xf32>
    %c1_309 = arith.constant 1 : index
    %c0_310 = arith.constant 0 : index
    %c0_311 = arith.constant 0 : index
    %449 = vector.load %arg17[%c1_309, %c0_310, %c0_311] : memref<4x32x128xf32, #tpu.memory_space<vmem>>, vector<1x32x128xf32>
    %450 = vector.shape_cast %449 : vector<1x32x128xf32> to vector<32x128xf32>
    %cst_312 = arith.constant dense<0.000000e+00> : vector<10x128xf32>
    %451 = tpu.matmul %448, %450, %cst_312 {dimension_numbers = #tpu.dot_dimension_numbers<[1], [0], [0], [1], [0, 0, 1, 1], [], []>} : vector<10x32xf32>, vector<32x128xf32>, vector<10x128xf32> -> vector<10x128xf32>
    %c1_313 = arith.constant 1 : index
    %c0_314 = arith.constant 0 : index
    %c0_315 = arith.constant 0 : index
    %452 = vector.load %arg18[%c1_313, %c0_314, %c0_315] : memref<4x1x128xf32, #tpu.memory_space<vmem>>, vector<1x1x128xf32>
    %453 = vector.shape_cast %452 : vector<1x1x128xf32> to vector<1x128xf32>
    %454 = vector.broadcast %453 : vector<1x128xf32> to vector<10x128xf32>
    %455 = arith.addf %451, %454 : vector<10x128xf32>
    %cst_316 = arith.constant 5.000000e-01 : f32
    %456 = vector.broadcast %cst_316 : f32 to vector<10x128xf32>
    %457 = arith.mulf %456, %455 : vector<10x128xf32>
    %cst_317 = arith.constant 0.707106769 : f32
    %458 = vector.broadcast %cst_317 : f32 to vector<10x128xf32>
    %459 = arith.mulf %455, %458 : vector<10x128xf32>
    %460 = math.erf %459 : vector<10x128xf32>
    %cst_318 = arith.constant 1.000000e+00 : f32
    %461 = vector.broadcast %cst_318 : f32 to vector<10x128xf32>
    %462 = arith.addf %461, %460 : vector<10x128xf32>
    %463 = arith.mulf %457, %462 : vector<10x128xf32>
    %c1_319 = arith.constant 1 : index
    %c0_320 = arith.constant 0 : index
    %c0_321 = arith.constant 0 : index
    %464 = vector.load %arg19[%c1_319, %c0_320, %c0_321] : memref<4x128x32xf32, #tpu.memory_space<vmem>>, vector<1x128x32xf32>
    %465 = vector.shape_cast %464 : vector<1x128x32xf32> to vector<128x32xf32>
    %cst_322 = arith.constant dense<0.000000e+00> : vector<10x32xf32>
    %466 = tpu.matmul %463, %465, %cst_322 {dimension_numbers = #tpu.dot_dimension_numbers<[1], [0], [0], [1], [0, 0, 1, 1], [], []>} : vector<10x128xf32>, vector<128x32xf32>, vector<10x32xf32> -> vector<10x32xf32>
    %c1_323 = arith.constant 1 : index
    %c0_324 = arith.constant 0 : index
    %c0_325 = arith.constant 0 : index
    %467 = vector.load %arg20[%c1_323, %c0_324, %c0_325] : memref<4x1x32xf32, #tpu.memory_space<vmem>>, vector<1x1x32xf32>
    %468 = vector.shape_cast %467 : vector<1x1x32xf32> to vector<1x32xf32>
    %469 = vector.broadcast %468 : vector<1x32xf32> to vector<10x32xf32>
    %470 = arith.addf %466, %469 : vector<10x32xf32>
    %471 = arith.addf %424, %470 : vector<10x32xf32>
    %c2_326 = arith.constant 2 : index
    %c0_327 = arith.constant 0 : index
    %c0_328 = arith.constant 0 : index
    %472 = vector.load %arg5[%c2_326, %c0_327, %c0_328] : memref<4x1x32xf32, #tpu.memory_space<vmem>>, vector<1x1x32xf32>
    %473 = vector.shape_cast %472 : vector<1x1x32xf32> to vector<1x32xf32>
    %c2_329 = arith.constant 2 : index
    %c0_330 = arith.constant 0 : index
    %c0_331 = arith.constant 0 : index
    %474 = vector.load %arg6[%c2_329, %c0_330, %c0_331] : memref<4x1x32xf32, #tpu.memory_space<vmem>>, vector<1x1x32xf32>
    %475 = vector.shape_cast %474 : vector<1x1x32xf32> to vector<1x32xf32>
    %cst_332 = arith.constant dense<0.000000e+00> : vector<10xf32>
    %476 = vector.multi_reduction <add>, %471, %cst_332 [1] : vector<10x32xf32> to vector<10xf32>
    %477 = vector.shape_cast %476 : vector<10xf32> to vector<10x1xf32>
    %cst_333 = arith.constant 3.200000e+01 : f32
    %478 = vector.broadcast %cst_333 : f32 to vector<10x1xf32>
    %479 = arith.divf %477, %478 : vector<10x1xf32>
    %480 = vector.broadcast %479 : vector<10x1xf32> to vector<10x32xf32>
    %481 = arith.subf %471, %480 : vector<10x32xf32>
    %482 = arith.mulf %481, %481 : vector<10x32xf32>
    %cst_334 = arith.constant dense<0.000000e+00> : vector<10xf32>
    %483 = vector.multi_reduction <add>, %482, %cst_334 [1] : vector<10x32xf32> to vector<10xf32>
    %484 = vector.shape_cast %483 : vector<10xf32> to vector<10x1xf32>
    %cst_335 = arith.constant 3.200000e+01 : f32
    %485 = vector.broadcast %cst_335 : f32 to vector<10x1xf32>
    %486 = arith.divf %484, %485 : vector<10x1xf32>
    %cst_336 = arith.constant 9.99999997E-7 : f32
    %487 = vector.broadcast %cst_336 : f32 to vector<10x1xf32>
    %488 = arith.addf %486, %487 : vector<10x1xf32>
    %489 = math.rsqrt %488 : vector<10x1xf32>
    %490 = vector.broadcast %489 : vector<10x1xf32> to vector<10x32xf32>
    %491 = arith.mulf %481, %490 : vector<10x32xf32>
    %492 = vector.broadcast %473 : vector<1x32xf32> to vector<10x32xf32>
    %493 = arith.mulf %491, %492 : vector<10x32xf32>
    %494 = vector.broadcast %475 : vector<1x32xf32> to vector<10x32xf32>
    %495 = arith.addf %493, %494 : vector<10x32xf32>
    %cst_337 = arith.constant 0.000000e+00 : f32
    %496 = vector.broadcast %cst_337 : f32 to vector<10x32xf32>
    %c8 = arith.constant 8 : index
    %c0_338 = arith.constant 0 : index
    %c0_339 = arith.constant 0 : index
    %497 = vector.load %arg7[%c8, %c0_338, %c0_339] : memref<16x32x8xf32, #tpu.memory_space<vmem>>, vector<1x32x8xf32>
    %498 = vector.shape_cast %497 : vector<1x32x8xf32> to vector<32x8xf32>
    %cst_340 = arith.constant dense<0.000000e+00> : vector<10x8xf32>
    %499 = tpu.matmul %495, %498, %cst_340 {dimension_numbers = #tpu.dot_dimension_numbers<[1], [0], [0], [1], [0, 0, 1, 1], [], []>} : vector<10x32xf32>, vector<32x8xf32>, vector<10x8xf32> -> vector<10x8xf32>
    %c8_341 = arith.constant 8 : index
    %c0_342 = arith.constant 0 : index
    %c0_343 = arith.constant 0 : index
    %500 = vector.load %arg8[%c8_341, %c0_342, %c0_343] : memref<16x1x8xf32, #tpu.memory_space<vmem>>, vector<1x1x8xf32>
    %501 = vector.shape_cast %500 : vector<1x1x8xf32> to vector<1x8xf32>
    %502 = vector.broadcast %501 : vector<1x8xf32> to vector<10x8xf32>
    %503 = arith.addf %499, %502 : vector<10x8xf32>
    %c8_344 = arith.constant 8 : index
    %c0_345 = arith.constant 0 : index
    %c0_346 = arith.constant 0 : index
    %504 = vector.load %arg9[%c8_344, %c0_345, %c0_346] : memref<16x32x8xf32, #tpu.memory_space<vmem>>, vector<1x32x8xf32>
    %505 = vector.shape_cast %504 : vector<1x32x8xf32> to vector<32x8xf32>
    %cst_347 = arith.constant dense<0.000000e+00> : vector<10x8xf32>
    %506 = tpu.matmul %495, %505, %cst_347 {dimension_numbers = #tpu.dot_dimension_numbers<[1], [0], [0], [1], [0, 0, 1, 1], [], []>} : vector<10x32xf32>, vector<32x8xf32>, vector<10x8xf32> -> vector<10x8xf32>
    %c8_348 = arith.constant 8 : index
    %c0_349 = arith.constant 0 : index
    %c0_350 = arith.constant 0 : index
    %507 = vector.load %arg10[%c8_348, %c0_349, %c0_350] : memref<16x1x8xf32, #tpu.memory_space<vmem>>, vector<1x1x8xf32>
    %508 = vector.shape_cast %507 : vector<1x1x8xf32> to vector<1x8xf32>
    %509 = vector.broadcast %508 : vector<1x8xf32> to vector<10x8xf32>
    %510 = arith.addf %506, %509 : vector<10x8xf32>
    %c8_351 = arith.constant 8 : index
    %c0_352 = arith.constant 0 : index
    %c0_353 = arith.constant 0 : index
    %511 = vector.load %arg11[%c8_351, %c0_352, %c0_353] : memref<16x32x8xf32, #tpu.memory_space<vmem>>, vector<1x32x8xf32>
    %512 = vector.shape_cast %511 : vector<1x32x8xf32> to vector<32x8xf32>
    %cst_354 = arith.constant dense<0.000000e+00> : vector<10x8xf32>
    %513 = tpu.matmul %495, %512, %cst_354 {dimension_numbers = #tpu.dot_dimension_numbers<[1], [0], [0], [1], [0, 0, 1, 1], [], []>} : vector<10x32xf32>, vector<32x8xf32>, vector<10x8xf32> -> vector<10x8xf32>
    %c8_355 = arith.constant 8 : index
    %c0_356 = arith.constant 0 : index
    %c0_357 = arith.constant 0 : index
    %514 = vector.load %arg12[%c8_355, %c0_356, %c0_357] : memref<16x1x8xf32, #tpu.memory_space<vmem>>, vector<1x1x8xf32>
    %515 = vector.shape_cast %514 : vector<1x1x8xf32> to vector<1x8xf32>
    %516 = vector.broadcast %515 : vector<1x8xf32> to vector<10x8xf32>
    %517 = arith.addf %513, %516 : vector<10x8xf32>
    %cst_358 = arith.constant dense<0.000000e+00> : vector<10x10xf32>
    %518 = tpu.matmul %503, %510, %cst_358 {dimension_numbers = #tpu.dot_dimension_numbers<[1], [1], [0], [0], [0, 0, 1, 0], [], []>} : vector<10x8xf32>, vector<10x8xf32>, vector<10x10xf32> -> vector<10x10xf32>
    %cst_359 = arith.constant 0.353553385 : f32
    %519 = vector.broadcast %cst_359 : f32 to vector<10x10xf32>
    %520 = arith.mulf %518, %519 : vector<10x10xf32>
    %521 = arith.addf %520, %5 : vector<10x10xf32>
    %cst_360 = arith.constant dense<0xFF800000> : vector<10xf32>
    %522 = vector.multi_reduction <maximumf>, %521, %cst_360 [1] : vector<10x10xf32> to vector<10xf32>
    %523 = vector.shape_cast %522 : vector<10xf32> to vector<10x1xf32>
    %524 = vector.broadcast %523 : vector<10x1xf32> to vector<10x10xf32>
    %525 = arith.subf %521, %524 : vector<10x10xf32>
    %526 = math.exp %525 : vector<10x10xf32>
    %cst_361 = arith.constant dense<0.000000e+00> : vector<10xf32>
    %527 = vector.multi_reduction <add>, %526, %cst_361 [1] : vector<10x10xf32> to vector<10xf32>
    %528 = vector.shape_cast %527 : vector<10xf32> to vector<10x1xf32>
    %529 = vector.broadcast %528 : vector<10x1xf32> to vector<10x10xf32>
    %530 = arith.divf %526, %529 : vector<10x10xf32>
    %cst_362 = arith.constant dense<0.000000e+00> : vector<10x8xf32>
    %531 = tpu.matmul %530, %517, %cst_362 {dimension_numbers = #tpu.dot_dimension_numbers<[1], [0], [0], [1], [0, 0, 1, 1], [], []>} : vector<10x10xf32>, vector<10x8xf32>, vector<10x8xf32> -> vector<10x8xf32>
    %c8_363 = arith.constant 8 : index
    %c0_364 = arith.constant 0 : index
    %c0_365 = arith.constant 0 : index
    %532 = vector.load %arg13[%c8_363, %c0_364, %c0_365] : memref<16x8x32xf32, #tpu.memory_space<vmem>>, vector<1x8x32xf32>
    %533 = vector.shape_cast %532 : vector<1x8x32xf32> to vector<8x32xf32>
    %cst_366 = arith.constant dense<0.000000e+00> : vector<10x32xf32>
    %534 = tpu.matmul %531, %533, %cst_366 {dimension_numbers = #tpu.dot_dimension_numbers<[1], [0], [0], [1], [0, 0, 1, 1], [], []>} : vector<10x8xf32>, vector<8x32xf32>, vector<10x32xf32> -> vector<10x32xf32>
    %535 = arith.addf %496, %534 : vector<10x32xf32>
    %c9 = arith.constant 9 : index
    %c0_367 = arith.constant 0 : index
    %c0_368 = arith.constant 0 : index
    %536 = vector.load %arg7[%c9, %c0_367, %c0_368] : memref<16x32x8xf32, #tpu.memory_space<vmem>>, vector<1x32x8xf32>
    %537 = vector.shape_cast %536 : vector<1x32x8xf32> to vector<32x8xf32>
    %cst_369 = arith.constant dense<0.000000e+00> : vector<10x8xf32>
    %538 = tpu.matmul %495, %537, %cst_369 {dimension_numbers = #tpu.dot_dimension_numbers<[1], [0], [0], [1], [0, 0, 1, 1], [], []>} : vector<10x32xf32>, vector<32x8xf32>, vector<10x8xf32> -> vector<10x8xf32>
    %c9_370 = arith.constant 9 : index
    %c0_371 = arith.constant 0 : index
    %c0_372 = arith.constant 0 : index
    %539 = vector.load %arg8[%c9_370, %c0_371, %c0_372] : memref<16x1x8xf32, #tpu.memory_space<vmem>>, vector<1x1x8xf32>
    %540 = vector.shape_cast %539 : vector<1x1x8xf32> to vector<1x8xf32>
    %541 = vector.broadcast %540 : vector<1x8xf32> to vector<10x8xf32>
    %542 = arith.addf %538, %541 : vector<10x8xf32>
    %c9_373 = arith.constant 9 : index
    %c0_374 = arith.constant 0 : index
    %c0_375 = arith.constant 0 : index
    %543 = vector.load %arg9[%c9_373, %c0_374, %c0_375] : memref<16x32x8xf32, #tpu.memory_space<vmem>>, vector<1x32x8xf32>
    %544 = vector.shape_cast %543 : vector<1x32x8xf32> to vector<32x8xf32>
    %cst_376 = arith.constant dense<0.000000e+00> : vector<10x8xf32>
    %545 = tpu.matmul %495, %544, %cst_376 {dimension_numbers = #tpu.dot_dimension_numbers<[1], [0], [0], [1], [0, 0, 1, 1], [], []>} : vector<10x32xf32>, vector<32x8xf32>, vector<10x8xf32> -> vector<10x8xf32>
    %c9_377 = arith.constant 9 : index
    %c0_378 = arith.constant 0 : index
    %c0_379 = arith.constant 0 : index
    %546 = vector.load %arg10[%c9_377, %c0_378, %c0_379] : memref<16x1x8xf32, #tpu.memory_space<vmem>>, vector<1x1x8xf32>
    %547 = vector.shape_cast %546 : vector<1x1x8xf32> to vector<1x8xf32>
    %548 = vector.broadcast %547 : vector<1x8xf32> to vector<10x8xf32>
    %549 = arith.addf %545, %548 : vector<10x8xf32>
    %c9_380 = arith.constant 9 : index
    %c0_381 = arith.constant 0 : index
    %c0_382 = arith.constant 0 : index
    %550 = vector.load %arg11[%c9_380, %c0_381, %c0_382] : memref<16x32x8xf32, #tpu.memory_space<vmem>>, vector<1x32x8xf32>
    %551 = vector.shape_cast %550 : vector<1x32x8xf32> to vector<32x8xf32>
    %cst_383 = arith.constant dense<0.000000e+00> : vector<10x8xf32>
    %552 = tpu.matmul %495, %551, %cst_383 {dimension_numbers = #tpu.dot_dimension_numbers<[1], [0], [0], [1], [0, 0, 1, 1], [], []>} : vector<10x32xf32>, vector<32x8xf32>, vector<10x8xf32> -> vector<10x8xf32>
    %c9_384 = arith.constant 9 : index
    %c0_385 = arith.constant 0 : index
    %c0_386 = arith.constant 0 : index
    %553 = vector.load %arg12[%c9_384, %c0_385, %c0_386] : memref<16x1x8xf32, #tpu.memory_space<vmem>>, vector<1x1x8xf32>
    %554 = vector.shape_cast %553 : vector<1x1x8xf32> to vector<1x8xf32>
    %555 = vector.broadcast %554 : vector<1x8xf32> to vector<10x8xf32>
    %556 = arith.addf %552, %555 : vector<10x8xf32>
    %cst_387 = arith.constant dense<0.000000e+00> : vector<10x10xf32>
    %557 = tpu.matmul %542, %549, %cst_387 {dimension_numbers = #tpu.dot_dimension_numbers<[1], [1], [0], [0], [0, 0, 1, 0], [], []>} : vector<10x8xf32>, vector<10x8xf32>, vector<10x10xf32> -> vector<10x10xf32>
    %cst_388 = arith.constant 0.353553385 : f32
    %558 = vector.broadcast %cst_388 : f32 to vector<10x10xf32>
    %559 = arith.mulf %557, %558 : vector<10x10xf32>
    %560 = arith.addf %559, %5 : vector<10x10xf32>
    %cst_389 = arith.constant dense<0xFF800000> : vector<10xf32>
    %561 = vector.multi_reduction <maximumf>, %560, %cst_389 [1] : vector<10x10xf32> to vector<10xf32>
    %562 = vector.shape_cast %561 : vector<10xf32> to vector<10x1xf32>
    %563 = vector.broadcast %562 : vector<10x1xf32> to vector<10x10xf32>
    %564 = arith.subf %560, %563 : vector<10x10xf32>
    %565 = math.exp %564 : vector<10x10xf32>
    %cst_390 = arith.constant dense<0.000000e+00> : vector<10xf32>
    %566 = vector.multi_reduction <add>, %565, %cst_390 [1] : vector<10x10xf32> to vector<10xf32>
    %567 = vector.shape_cast %566 : vector<10xf32> to vector<10x1xf32>
    %568 = vector.broadcast %567 : vector<10x1xf32> to vector<10x10xf32>
    %569 = arith.divf %565, %568 : vector<10x10xf32>
    %cst_391 = arith.constant dense<0.000000e+00> : vector<10x8xf32>
    %570 = tpu.matmul %569, %556, %cst_391 {dimension_numbers = #tpu.dot_dimension_numbers<[1], [0], [0], [1], [0, 0, 1, 1], [], []>} : vector<10x10xf32>, vector<10x8xf32>, vector<10x8xf32> -> vector<10x8xf32>
    %c9_392 = arith.constant 9 : index
    %c0_393 = arith.constant 0 : index
    %c0_394 = arith.constant 0 : index
    %571 = vector.load %arg13[%c9_392, %c0_393, %c0_394] : memref<16x8x32xf32, #tpu.memory_space<vmem>>, vector<1x8x32xf32>
    %572 = vector.shape_cast %571 : vector<1x8x32xf32> to vector<8x32xf32>
    %cst_395 = arith.constant dense<0.000000e+00> : vector<10x32xf32>
    %573 = tpu.matmul %570, %572, %cst_395 {dimension_numbers = #tpu.dot_dimension_numbers<[1], [0], [0], [1], [0, 0, 1, 1], [], []>} : vector<10x8xf32>, vector<8x32xf32>, vector<10x32xf32> -> vector<10x32xf32>
    %574 = arith.addf %535, %573 : vector<10x32xf32>
    %c10 = arith.constant 10 : index
    %c0_396 = arith.constant 0 : index
    %c0_397 = arith.constant 0 : index
    %575 = vector.load %arg7[%c10, %c0_396, %c0_397] : memref<16x32x8xf32, #tpu.memory_space<vmem>>, vector<1x32x8xf32>
    %576 = vector.shape_cast %575 : vector<1x32x8xf32> to vector<32x8xf32>
    %cst_398 = arith.constant dense<0.000000e+00> : vector<10x8xf32>
    %577 = tpu.matmul %495, %576, %cst_398 {dimension_numbers = #tpu.dot_dimension_numbers<[1], [0], [0], [1], [0, 0, 1, 1], [], []>} : vector<10x32xf32>, vector<32x8xf32>, vector<10x8xf32> -> vector<10x8xf32>
    %c10_399 = arith.constant 10 : index
    %c0_400 = arith.constant 0 : index
    %c0_401 = arith.constant 0 : index
    %578 = vector.load %arg8[%c10_399, %c0_400, %c0_401] : memref<16x1x8xf32, #tpu.memory_space<vmem>>, vector<1x1x8xf32>
    %579 = vector.shape_cast %578 : vector<1x1x8xf32> to vector<1x8xf32>
    %580 = vector.broadcast %579 : vector<1x8xf32> to vector<10x8xf32>
    %581 = arith.addf %577, %580 : vector<10x8xf32>
    %c10_402 = arith.constant 10 : index
    %c0_403 = arith.constant 0 : index
    %c0_404 = arith.constant 0 : index
    %582 = vector.load %arg9[%c10_402, %c0_403, %c0_404] : memref<16x32x8xf32, #tpu.memory_space<vmem>>, vector<1x32x8xf32>
    %583 = vector.shape_cast %582 : vector<1x32x8xf32> to vector<32x8xf32>
    %cst_405 = arith.constant dense<0.000000e+00> : vector<10x8xf32>
    %584 = tpu.matmul %495, %583, %cst_405 {dimension_numbers = #tpu.dot_dimension_numbers<[1], [0], [0], [1], [0, 0, 1, 1], [], []>} : vector<10x32xf32>, vector<32x8xf32>, vector<10x8xf32> -> vector<10x8xf32>
    %c10_406 = arith.constant 10 : index
    %c0_407 = arith.constant 0 : index
    %c0_408 = arith.constant 0 : index
    %585 = vector.load %arg10[%c10_406, %c0_407, %c0_408] : memref<16x1x8xf32, #tpu.memory_space<vmem>>, vector<1x1x8xf32>
    %586 = vector.shape_cast %585 : vector<1x1x8xf32> to vector<1x8xf32>
    %587 = vector.broadcast %586 : vector<1x8xf32> to vector<10x8xf32>
    %588 = arith.addf %584, %587 : vector<10x8xf32>
    %c10_409 = arith.constant 10 : index
    %c0_410 = arith.constant 0 : index
    %c0_411 = arith.constant 0 : index
    %589 = vector.load %arg11[%c10_409, %c0_410, %c0_411] : memref<16x32x8xf32, #tpu.memory_space<vmem>>, vector<1x32x8xf32>
    %590 = vector.shape_cast %589 : vector<1x32x8xf32> to vector<32x8xf32>
    %cst_412 = arith.constant dense<0.000000e+00> : vector<10x8xf32>
    %591 = tpu.matmul %495, %590, %cst_412 {dimension_numbers = #tpu.dot_dimension_numbers<[1], [0], [0], [1], [0, 0, 1, 1], [], []>} : vector<10x32xf32>, vector<32x8xf32>, vector<10x8xf32> -> vector<10x8xf32>
    %c10_413 = arith.constant 10 : index
    %c0_414 = arith.constant 0 : index
    %c0_415 = arith.constant 0 : index
    %592 = vector.load %arg12[%c10_413, %c0_414, %c0_415] : memref<16x1x8xf32, #tpu.memory_space<vmem>>, vector<1x1x8xf32>
    %593 = vector.shape_cast %592 : vector<1x1x8xf32> to vector<1x8xf32>
    %594 = vector.broadcast %593 : vector<1x8xf32> to vector<10x8xf32>
    %595 = arith.addf %591, %594 : vector<10x8xf32>
    %cst_416 = arith.constant dense<0.000000e+00> : vector<10x10xf32>
    %596 = tpu.matmul %581, %588, %cst_416 {dimension_numbers = #tpu.dot_dimension_numbers<[1], [1], [0], [0], [0, 0, 1, 0], [], []>} : vector<10x8xf32>, vector<10x8xf32>, vector<10x10xf32> -> vector<10x10xf32>
    %cst_417 = arith.constant 0.353553385 : f32
    %597 = vector.broadcast %cst_417 : f32 to vector<10x10xf32>
    %598 = arith.mulf %596, %597 : vector<10x10xf32>
    %599 = arith.addf %598, %5 : vector<10x10xf32>
    %cst_418 = arith.constant dense<0xFF800000> : vector<10xf32>
    %600 = vector.multi_reduction <maximumf>, %599, %cst_418 [1] : vector<10x10xf32> to vector<10xf32>
    %601 = vector.shape_cast %600 : vector<10xf32> to vector<10x1xf32>
    %602 = vector.broadcast %601 : vector<10x1xf32> to vector<10x10xf32>
    %603 = arith.subf %599, %602 : vector<10x10xf32>
    %604 = math.exp %603 : vector<10x10xf32>
    %cst_419 = arith.constant dense<0.000000e+00> : vector<10xf32>
    %605 = vector.multi_reduction <add>, %604, %cst_419 [1] : vector<10x10xf32> to vector<10xf32>
    %606 = vector.shape_cast %605 : vector<10xf32> to vector<10x1xf32>
    %607 = vector.broadcast %606 : vector<10x1xf32> to vector<10x10xf32>
    %608 = arith.divf %604, %607 : vector<10x10xf32>
    %cst_420 = arith.constant dense<0.000000e+00> : vector<10x8xf32>
    %609 = tpu.matmul %608, %595, %cst_420 {dimension_numbers = #tpu.dot_dimension_numbers<[1], [0], [0], [1], [0, 0, 1, 1], [], []>} : vector<10x10xf32>, vector<10x8xf32>, vector<10x8xf32> -> vector<10x8xf32>
    %c10_421 = arith.constant 10 : index
    %c0_422 = arith.constant 0 : index
    %c0_423 = arith.constant 0 : index
    %610 = vector.load %arg13[%c10_421, %c0_422, %c0_423] : memref<16x8x32xf32, #tpu.memory_space<vmem>>, vector<1x8x32xf32>
    %611 = vector.shape_cast %610 : vector<1x8x32xf32> to vector<8x32xf32>
    %cst_424 = arith.constant dense<0.000000e+00> : vector<10x32xf32>
    %612 = tpu.matmul %609, %611, %cst_424 {dimension_numbers = #tpu.dot_dimension_numbers<[1], [0], [0], [1], [0, 0, 1, 1], [], []>} : vector<10x8xf32>, vector<8x32xf32>, vector<10x32xf32> -> vector<10x32xf32>
    %613 = arith.addf %574, %612 : vector<10x32xf32>
    %c11 = arith.constant 11 : index
    %c0_425 = arith.constant 0 : index
    %c0_426 = arith.constant 0 : index
    %614 = vector.load %arg7[%c11, %c0_425, %c0_426] : memref<16x32x8xf32, #tpu.memory_space<vmem>>, vector<1x32x8xf32>
    %615 = vector.shape_cast %614 : vector<1x32x8xf32> to vector<32x8xf32>
    %cst_427 = arith.constant dense<0.000000e+00> : vector<10x8xf32>
    %616 = tpu.matmul %495, %615, %cst_427 {dimension_numbers = #tpu.dot_dimension_numbers<[1], [0], [0], [1], [0, 0, 1, 1], [], []>} : vector<10x32xf32>, vector<32x8xf32>, vector<10x8xf32> -> vector<10x8xf32>
    %c11_428 = arith.constant 11 : index
    %c0_429 = arith.constant 0 : index
    %c0_430 = arith.constant 0 : index
    %617 = vector.load %arg8[%c11_428, %c0_429, %c0_430] : memref<16x1x8xf32, #tpu.memory_space<vmem>>, vector<1x1x8xf32>
    %618 = vector.shape_cast %617 : vector<1x1x8xf32> to vector<1x8xf32>
    %619 = vector.broadcast %618 : vector<1x8xf32> to vector<10x8xf32>
    %620 = arith.addf %616, %619 : vector<10x8xf32>
    %c11_431 = arith.constant 11 : index
    %c0_432 = arith.constant 0 : index
    %c0_433 = arith.constant 0 : index
    %621 = vector.load %arg9[%c11_431, %c0_432, %c0_433] : memref<16x32x8xf32, #tpu.memory_space<vmem>>, vector<1x32x8xf32>
    %622 = vector.shape_cast %621 : vector<1x32x8xf32> to vector<32x8xf32>
    %cst_434 = arith.constant dense<0.000000e+00> : vector<10x8xf32>
    %623 = tpu.matmul %495, %622, %cst_434 {dimension_numbers = #tpu.dot_dimension_numbers<[1], [0], [0], [1], [0, 0, 1, 1], [], []>} : vector<10x32xf32>, vector<32x8xf32>, vector<10x8xf32> -> vector<10x8xf32>
    %c11_435 = arith.constant 11 : index
    %c0_436 = arith.constant 0 : index
    %c0_437 = arith.constant 0 : index
    %624 = vector.load %arg10[%c11_435, %c0_436, %c0_437] : memref<16x1x8xf32, #tpu.memory_space<vmem>>, vector<1x1x8xf32>
    %625 = vector.shape_cast %624 : vector<1x1x8xf32> to vector<1x8xf32>
    %626 = vector.broadcast %625 : vector<1x8xf32> to vector<10x8xf32>
    %627 = arith.addf %623, %626 : vector<10x8xf32>
    %c11_438 = arith.constant 11 : index
    %c0_439 = arith.constant 0 : index
    %c0_440 = arith.constant 0 : index
    %628 = vector.load %arg11[%c11_438, %c0_439, %c0_440] : memref<16x32x8xf32, #tpu.memory_space<vmem>>, vector<1x32x8xf32>
    %629 = vector.shape_cast %628 : vector<1x32x8xf32> to vector<32x8xf32>
    %cst_441 = arith.constant dense<0.000000e+00> : vector<10x8xf32>
    %630 = tpu.matmul %495, %629, %cst_441 {dimension_numbers = #tpu.dot_dimension_numbers<[1], [0], [0], [1], [0, 0, 1, 1], [], []>} : vector<10x32xf32>, vector<32x8xf32>, vector<10x8xf32> -> vector<10x8xf32>
    %c11_442 = arith.constant 11 : index
    %c0_443 = arith.constant 0 : index
    %c0_444 = arith.constant 0 : index
    %631 = vector.load %arg12[%c11_442, %c0_443, %c0_444] : memref<16x1x8xf32, #tpu.memory_space<vmem>>, vector<1x1x8xf32>
    %632 = vector.shape_cast %631 : vector<1x1x8xf32> to vector<1x8xf32>
    %633 = vector.broadcast %632 : vector<1x8xf32> to vector<10x8xf32>
    %634 = arith.addf %630, %633 : vector<10x8xf32>
    %cst_445 = arith.constant dense<0.000000e+00> : vector<10x10xf32>
    %635 = tpu.matmul %620, %627, %cst_445 {dimension_numbers = #tpu.dot_dimension_numbers<[1], [1], [0], [0], [0, 0, 1, 0], [], []>} : vector<10x8xf32>, vector<10x8xf32>, vector<10x10xf32> -> vector<10x10xf32>
    %cst_446 = arith.constant 0.353553385 : f32
    %636 = vector.broadcast %cst_446 : f32 to vector<10x10xf32>
    %637 = arith.mulf %635, %636 : vector<10x10xf32>
    %638 = arith.addf %637, %5 : vector<10x10xf32>
    %cst_447 = arith.constant dense<0xFF800000> : vector<10xf32>
    %639 = vector.multi_reduction <maximumf>, %638, %cst_447 [1] : vector<10x10xf32> to vector<10xf32>
    %640 = vector.shape_cast %639 : vector<10xf32> to vector<10x1xf32>
    %641 = vector.broadcast %640 : vector<10x1xf32> to vector<10x10xf32>
    %642 = arith.subf %638, %641 : vector<10x10xf32>
    %643 = math.exp %642 : vector<10x10xf32>
    %cst_448 = arith.constant dense<0.000000e+00> : vector<10xf32>
    %644 = vector.multi_reduction <add>, %643, %cst_448 [1] : vector<10x10xf32> to vector<10xf32>
    %645 = vector.shape_cast %644 : vector<10xf32> to vector<10x1xf32>
    %646 = vector.broadcast %645 : vector<10x1xf32> to vector<10x10xf32>
    %647 = arith.divf %643, %646 : vector<10x10xf32>
    %cst_449 = arith.constant dense<0.000000e+00> : vector<10x8xf32>
    %648 = tpu.matmul %647, %634, %cst_449 {dimension_numbers = #tpu.dot_dimension_numbers<[1], [0], [0], [1], [0, 0, 1, 1], [], []>} : vector<10x10xf32>, vector<10x8xf32>, vector<10x8xf32> -> vector<10x8xf32>
    %c11_450 = arith.constant 11 : index
    %c0_451 = arith.constant 0 : index
    %c0_452 = arith.constant 0 : index
    %649 = vector.load %arg13[%c11_450, %c0_451, %c0_452] : memref<16x8x32xf32, #tpu.memory_space<vmem>>, vector<1x8x32xf32>
    %650 = vector.shape_cast %649 : vector<1x8x32xf32> to vector<8x32xf32>
    %cst_453 = arith.constant dense<0.000000e+00> : vector<10x32xf32>
    %651 = tpu.matmul %648, %650, %cst_453 {dimension_numbers = #tpu.dot_dimension_numbers<[1], [0], [0], [1], [0, 0, 1, 1], [], []>} : vector<10x8xf32>, vector<8x32xf32>, vector<10x32xf32> -> vector<10x32xf32>
    %652 = arith.addf %613, %651 : vector<10x32xf32>
    %653 = arith.addf %471, %652 : vector<10x32xf32>
    %c2_454 = arith.constant 2 : index
    %c0_455 = arith.constant 0 : index
    %c0_456 = arith.constant 0 : index
    %654 = vector.load %arg14[%c2_454, %c0_455, %c0_456] : memref<4x1x32xf32, #tpu.memory_space<vmem>>, vector<1x1x32xf32>
    %655 = vector.shape_cast %654 : vector<1x1x32xf32> to vector<1x32xf32>
    %656 = vector.broadcast %655 : vector<1x32xf32> to vector<10x32xf32>
    %657 = arith.addf %653, %656 : vector<10x32xf32>
    %c2_457 = arith.constant 2 : index
    %c0_458 = arith.constant 0 : index
    %c0_459 = arith.constant 0 : index
    %658 = vector.load %arg15[%c2_457, %c0_458, %c0_459] : memref<4x1x32xf32, #tpu.memory_space<vmem>>, vector<1x1x32xf32>
    %659 = vector.shape_cast %658 : vector<1x1x32xf32> to vector<1x32xf32>
    %c2_460 = arith.constant 2 : index
    %c0_461 = arith.constant 0 : index
    %c0_462 = arith.constant 0 : index
    %660 = vector.load %arg16[%c2_460, %c0_461, %c0_462] : memref<4x1x32xf32, #tpu.memory_space<vmem>>, vector<1x1x32xf32>
    %661 = vector.shape_cast %660 : vector<1x1x32xf32> to vector<1x32xf32>
    %cst_463 = arith.constant dense<0.000000e+00> : vector<10xf32>
    %662 = vector.multi_reduction <add>, %657, %cst_463 [1] : vector<10x32xf32> to vector<10xf32>
    %663 = vector.shape_cast %662 : vector<10xf32> to vector<10x1xf32>
    %cst_464 = arith.constant 3.200000e+01 : f32
    %664 = vector.broadcast %cst_464 : f32 to vector<10x1xf32>
    %665 = arith.divf %663, %664 : vector<10x1xf32>
    %666 = vector.broadcast %665 : vector<10x1xf32> to vector<10x32xf32>
    %667 = arith.subf %657, %666 : vector<10x32xf32>
    %668 = arith.mulf %667, %667 : vector<10x32xf32>
    %cst_465 = arith.constant dense<0.000000e+00> : vector<10xf32>
    %669 = vector.multi_reduction <add>, %668, %cst_465 [1] : vector<10x32xf32> to vector<10xf32>
    %670 = vector.shape_cast %669 : vector<10xf32> to vector<10x1xf32>
    %cst_466 = arith.constant 3.200000e+01 : f32
    %671 = vector.broadcast %cst_466 : f32 to vector<10x1xf32>
    %672 = arith.divf %670, %671 : vector<10x1xf32>
    %cst_467 = arith.constant 9.99999997E-7 : f32
    %673 = vector.broadcast %cst_467 : f32 to vector<10x1xf32>
    %674 = arith.addf %672, %673 : vector<10x1xf32>
    %675 = math.rsqrt %674 : vector<10x1xf32>
    %676 = vector.broadcast %675 : vector<10x1xf32> to vector<10x32xf32>
    %677 = arith.mulf %667, %676 : vector<10x32xf32>
    %678 = vector.broadcast %659 : vector<1x32xf32> to vector<10x32xf32>
    %679 = arith.mulf %677, %678 : vector<10x32xf32>
    %680 = vector.broadcast %661 : vector<1x32xf32> to vector<10x32xf32>
    %681 = arith.addf %679, %680 : vector<10x32xf32>
    %c2_468 = arith.constant 2 : index
    %c0_469 = arith.constant 0 : index
    %c0_470 = arith.constant 0 : index
    %682 = vector.load %arg17[%c2_468, %c0_469, %c0_470] : memref<4x32x128xf32, #tpu.memory_space<vmem>>, vector<1x32x128xf32>
    %683 = vector.shape_cast %682 : vector<1x32x128xf32> to vector<32x128xf32>
    %cst_471 = arith.constant dense<0.000000e+00> : vector<10x128xf32>
    %684 = tpu.matmul %681, %683, %cst_471 {dimension_numbers = #tpu.dot_dimension_numbers<[1], [0], [0], [1], [0, 0, 1, 1], [], []>} : vector<10x32xf32>, vector<32x128xf32>, vector<10x128xf32> -> vector<10x128xf32>
    %c2_472 = arith.constant 2 : index
    %c0_473 = arith.constant 0 : index
    %c0_474 = arith.constant 0 : index
    %685 = vector.load %arg18[%c2_472, %c0_473, %c0_474] : memref<4x1x128xf32, #tpu.memory_space<vmem>>, vector<1x1x128xf32>
    %686 = vector.shape_cast %685 : vector<1x1x128xf32> to vector<1x128xf32>
    %687 = vector.broadcast %686 : vector<1x128xf32> to vector<10x128xf32>
    %688 = arith.addf %684, %687 : vector<10x128xf32>
    %cst_475 = arith.constant 5.000000e-01 : f32
    %689 = vector.broadcast %cst_475 : f32 to vector<10x128xf32>
    %690 = arith.mulf %689, %688 : vector<10x128xf32>
    %cst_476 = arith.constant 0.707106769 : f32
    %691 = vector.broadcast %cst_476 : f32 to vector<10x128xf32>
    %692 = arith.mulf %688, %691 : vector<10x128xf32>
    %693 = math.erf %692 : vector<10x128xf32>
    %cst_477 = arith.constant 1.000000e+00 : f32
    %694 = vector.broadcast %cst_477 : f32 to vector<10x128xf32>
    %695 = arith.addf %694, %693 : vector<10x128xf32>
    %696 = arith.mulf %690, %695 : vector<10x128xf32>
    %c2_478 = arith.constant 2 : index
    %c0_479 = arith.constant 0 : index
    %c0_480 = arith.constant 0 : index
    %697 = vector.load %arg19[%c2_478, %c0_479, %c0_480] : memref<4x128x32xf32, #tpu.memory_space<vmem>>, vector<1x128x32xf32>
    %698 = vector.shape_cast %697 : vector<1x128x32xf32> to vector<128x32xf32>
    %cst_481 = arith.constant dense<0.000000e+00> : vector<10x32xf32>
    %699 = tpu.matmul %696, %698, %cst_481 {dimension_numbers = #tpu.dot_dimension_numbers<[1], [0], [0], [1], [0, 0, 1, 1], [], []>} : vector<10x128xf32>, vector<128x32xf32>, vector<10x32xf32> -> vector<10x32xf32>
    %c2_482 = arith.constant 2 : index
    %c0_483 = arith.constant 0 : index
    %c0_484 = arith.constant 0 : index
    %700 = vector.load %arg20[%c2_482, %c0_483, %c0_484] : memref<4x1x32xf32, #tpu.memory_space<vmem>>, vector<1x1x32xf32>
    %701 = vector.shape_cast %700 : vector<1x1x32xf32> to vector<1x32xf32>
    %702 = vector.broadcast %701 : vector<1x32xf32> to vector<10x32xf32>
    %703 = arith.addf %699, %702 : vector<10x32xf32>
    %704 = arith.addf %657, %703 : vector<10x32xf32>
    %c3_485 = arith.constant 3 : index
    %c0_486 = arith.constant 0 : index
    %c0_487 = arith.constant 0 : index
    %705 = vector.load %arg5[%c3_485, %c0_486, %c0_487] : memref<4x1x32xf32, #tpu.memory_space<vmem>>, vector<1x1x32xf32>
    %706 = vector.shape_cast %705 : vector<1x1x32xf32> to vector<1x32xf32>
    %c3_488 = arith.constant 3 : index
    %c0_489 = arith.constant 0 : index
    %c0_490 = arith.constant 0 : index
    %707 = vector.load %arg6[%c3_488, %c0_489, %c0_490] : memref<4x1x32xf32, #tpu.memory_space<vmem>>, vector<1x1x32xf32>
    %708 = vector.shape_cast %707 : vector<1x1x32xf32> to vector<1x32xf32>
    %cst_491 = arith.constant dense<0.000000e+00> : vector<10xf32>
    %709 = vector.multi_reduction <add>, %704, %cst_491 [1] : vector<10x32xf32> to vector<10xf32>
    %710 = vector.shape_cast %709 : vector<10xf32> to vector<10x1xf32>
    %cst_492 = arith.constant 3.200000e+01 : f32
    %711 = vector.broadcast %cst_492 : f32 to vector<10x1xf32>
    %712 = arith.divf %710, %711 : vector<10x1xf32>
    %713 = vector.broadcast %712 : vector<10x1xf32> to vector<10x32xf32>
    %714 = arith.subf %704, %713 : vector<10x32xf32>
    %715 = arith.mulf %714, %714 : vector<10x32xf32>
    %cst_493 = arith.constant dense<0.000000e+00> : vector<10xf32>
    %716 = vector.multi_reduction <add>, %715, %cst_493 [1] : vector<10x32xf32> to vector<10xf32>
    %717 = vector.shape_cast %716 : vector<10xf32> to vector<10x1xf32>
    %cst_494 = arith.constant 3.200000e+01 : f32
    %718 = vector.broadcast %cst_494 : f32 to vector<10x1xf32>
    %719 = arith.divf %717, %718 : vector<10x1xf32>
    %cst_495 = arith.constant 9.99999997E-7 : f32
    %720 = vector.broadcast %cst_495 : f32 to vector<10x1xf32>
    %721 = arith.addf %719, %720 : vector<10x1xf32>
    %722 = math.rsqrt %721 : vector<10x1xf32>
    %723 = vector.broadcast %722 : vector<10x1xf32> to vector<10x32xf32>
    %724 = arith.mulf %714, %723 : vector<10x32xf32>
    %725 = vector.broadcast %706 : vector<1x32xf32> to vector<10x32xf32>
    %726 = arith.mulf %724, %725 : vector<10x32xf32>
    %727 = vector.broadcast %708 : vector<1x32xf32> to vector<10x32xf32>
    %728 = arith.addf %726, %727 : vector<10x32xf32>
    %cst_496 = arith.constant 0.000000e+00 : f32
    %729 = vector.broadcast %cst_496 : f32 to vector<10x32xf32>
    %c12 = arith.constant 12 : index
    %c0_497 = arith.constant 0 : index
    %c0_498 = arith.constant 0 : index
    %730 = vector.load %arg7[%c12, %c0_497, %c0_498] : memref<16x32x8xf32, #tpu.memory_space<vmem>>, vector<1x32x8xf32>
    %731 = vector.shape_cast %730 : vector<1x32x8xf32> to vector<32x8xf32>
    %cst_499 = arith.constant dense<0.000000e+00> : vector<10x8xf32>
    %732 = tpu.matmul %728, %731, %cst_499 {dimension_numbers = #tpu.dot_dimension_numbers<[1], [0], [0], [1], [0, 0, 1, 1], [], []>} : vector<10x32xf32>, vector<32x8xf32>, vector<10x8xf32> -> vector<10x8xf32>
    %c12_500 = arith.constant 12 : index
    %c0_501 = arith.constant 0 : index
    %c0_502 = arith.constant 0 : index
    %733 = vector.load %arg8[%c12_500, %c0_501, %c0_502] : memref<16x1x8xf32, #tpu.memory_space<vmem>>, vector<1x1x8xf32>
    %734 = vector.shape_cast %733 : vector<1x1x8xf32> to vector<1x8xf32>
    %735 = vector.broadcast %734 : vector<1x8xf32> to vector<10x8xf32>
    %736 = arith.addf %732, %735 : vector<10x8xf32>
    %c12_503 = arith.constant 12 : index
    %c0_504 = arith.constant 0 : index
    %c0_505 = arith.constant 0 : index
    %737 = vector.load %arg9[%c12_503, %c0_504, %c0_505] : memref<16x32x8xf32, #tpu.memory_space<vmem>>, vector<1x32x8xf32>
    %738 = vector.shape_cast %737 : vector<1x32x8xf32> to vector<32x8xf32>
    %cst_506 = arith.constant dense<0.000000e+00> : vector<10x8xf32>
    %739 = tpu.matmul %728, %738, %cst_506 {dimension_numbers = #tpu.dot_dimension_numbers<[1], [0], [0], [1], [0, 0, 1, 1], [], []>} : vector<10x32xf32>, vector<32x8xf32>, vector<10x8xf32> -> vector<10x8xf32>
    %c12_507 = arith.constant 12 : index
    %c0_508 = arith.constant 0 : index
    %c0_509 = arith.constant 0 : index
    %740 = vector.load %arg10[%c12_507, %c0_508, %c0_509] : memref<16x1x8xf32, #tpu.memory_space<vmem>>, vector<1x1x8xf32>
    %741 = vector.shape_cast %740 : vector<1x1x8xf32> to vector<1x8xf32>
    %742 = vector.broadcast %741 : vector<1x8xf32> to vector<10x8xf32>
    %743 = arith.addf %739, %742 : vector<10x8xf32>
    %c12_510 = arith.constant 12 : index
    %c0_511 = arith.constant 0 : index
    %c0_512 = arith.constant 0 : index
    %744 = vector.load %arg11[%c12_510, %c0_511, %c0_512] : memref<16x32x8xf32, #tpu.memory_space<vmem>>, vector<1x32x8xf32>
    %745 = vector.shape_cast %744 : vector<1x32x8xf32> to vector<32x8xf32>
    %cst_513 = arith.constant dense<0.000000e+00> : vector<10x8xf32>
    %746 = tpu.matmul %728, %745, %cst_513 {dimension_numbers = #tpu.dot_dimension_numbers<[1], [0], [0], [1], [0, 0, 1, 1], [], []>} : vector<10x32xf32>, vector<32x8xf32>, vector<10x8xf32> -> vector<10x8xf32>
    %c12_514 = arith.constant 12 : index
    %c0_515 = arith.constant 0 : index
    %c0_516 = arith.constant 0 : index
    %747 = vector.load %arg12[%c12_514, %c0_515, %c0_516] : memref<16x1x8xf32, #tpu.memory_space<vmem>>, vector<1x1x8xf32>
    %748 = vector.shape_cast %747 : vector<1x1x8xf32> to vector<1x8xf32>
    %749 = vector.broadcast %748 : vector<1x8xf32> to vector<10x8xf32>
    %750 = arith.addf %746, %749 : vector<10x8xf32>
    %cst_517 = arith.constant dense<0.000000e+00> : vector<10x10xf32>
    %751 = tpu.matmul %736, %743, %cst_517 {dimension_numbers = #tpu.dot_dimension_numbers<[1], [1], [0], [0], [0, 0, 1, 0], [], []>} : vector<10x8xf32>, vector<10x8xf32>, vector<10x10xf32> -> vector<10x10xf32>
    %cst_518 = arith.constant 0.353553385 : f32
    %752 = vector.broadcast %cst_518 : f32 to vector<10x10xf32>
    %753 = arith.mulf %751, %752 : vector<10x10xf32>
    %754 = arith.addf %753, %5 : vector<10x10xf32>
    %cst_519 = arith.constant dense<0xFF800000> : vector<10xf32>
    %755 = vector.multi_reduction <maximumf>, %754, %cst_519 [1] : vector<10x10xf32> to vector<10xf32>
    %756 = vector.shape_cast %755 : vector<10xf32> to vector<10x1xf32>
    %757 = vector.broadcast %756 : vector<10x1xf32> to vector<10x10xf32>
    %758 = arith.subf %754, %757 : vector<10x10xf32>
    %759 = math.exp %758 : vector<10x10xf32>
    %cst_520 = arith.constant dense<0.000000e+00> : vector<10xf32>
    %760 = vector.multi_reduction <add>, %759, %cst_520 [1] : vector<10x10xf32> to vector<10xf32>
    %761 = vector.shape_cast %760 : vector<10xf32> to vector<10x1xf32>
    %762 = vector.broadcast %761 : vector<10x1xf32> to vector<10x10xf32>
    %763 = arith.divf %759, %762 : vector<10x10xf32>
    %cst_521 = arith.constant dense<0.000000e+00> : vector<10x8xf32>
    %764 = tpu.matmul %763, %750, %cst_521 {dimension_numbers = #tpu.dot_dimension_numbers<[1], [0], [0], [1], [0, 0, 1, 1], [], []>} : vector<10x10xf32>, vector<10x8xf32>, vector<10x8xf32> -> vector<10x8xf32>
    %c12_522 = arith.constant 12 : index
    %c0_523 = arith.constant 0 : index
    %c0_524 = arith.constant 0 : index
    %765 = vector.load %arg13[%c12_522, %c0_523, %c0_524] : memref<16x8x32xf32, #tpu.memory_space<vmem>>, vector<1x8x32xf32>
    %766 = vector.shape_cast %765 : vector<1x8x32xf32> to vector<8x32xf32>
    %cst_525 = arith.constant dense<0.000000e+00> : vector<10x32xf32>
    %767 = tpu.matmul %764, %766, %cst_525 {dimension_numbers = #tpu.dot_dimension_numbers<[1], [0], [0], [1], [0, 0, 1, 1], [], []>} : vector<10x8xf32>, vector<8x32xf32>, vector<10x32xf32> -> vector<10x32xf32>
    %768 = arith.addf %729, %767 : vector<10x32xf32>
    %c13 = arith.constant 13 : index
    %c0_526 = arith.constant 0 : index
    %c0_527 = arith.constant 0 : index
    %769 = vector.load %arg7[%c13, %c0_526, %c0_527] : memref<16x32x8xf32, #tpu.memory_space<vmem>>, vector<1x32x8xf32>
    %770 = vector.shape_cast %769 : vector<1x32x8xf32> to vector<32x8xf32>
    %cst_528 = arith.constant dense<0.000000e+00> : vector<10x8xf32>
    %771 = tpu.matmul %728, %770, %cst_528 {dimension_numbers = #tpu.dot_dimension_numbers<[1], [0], [0], [1], [0, 0, 1, 1], [], []>} : vector<10x32xf32>, vector<32x8xf32>, vector<10x8xf32> -> vector<10x8xf32>
    %c13_529 = arith.constant 13 : index
    %c0_530 = arith.constant 0 : index
    %c0_531 = arith.constant 0 : index
    %772 = vector.load %arg8[%c13_529, %c0_530, %c0_531] : memref<16x1x8xf32, #tpu.memory_space<vmem>>, vector<1x1x8xf32>
    %773 = vector.shape_cast %772 : vector<1x1x8xf32> to vector<1x8xf32>
    %774 = vector.broadcast %773 : vector<1x8xf32> to vector<10x8xf32>
    %775 = arith.addf %771, %774 : vector<10x8xf32>
    %c13_532 = arith.constant 13 : index
    %c0_533 = arith.constant 0 : index
    %c0_534 = arith.constant 0 : index
    %776 = vector.load %arg9[%c13_532, %c0_533, %c0_534] : memref<16x32x8xf32, #tpu.memory_space<vmem>>, vector<1x32x8xf32>
    %777 = vector.shape_cast %776 : vector<1x32x8xf32> to vector<32x8xf32>
    %cst_535 = arith.constant dense<0.000000e+00> : vector<10x8xf32>
    %778 = tpu.matmul %728, %777, %cst_535 {dimension_numbers = #tpu.dot_dimension_numbers<[1], [0], [0], [1], [0, 0, 1, 1], [], []>} : vector<10x32xf32>, vector<32x8xf32>, vector<10x8xf32> -> vector<10x8xf32>
    %c13_536 = arith.constant 13 : index
    %c0_537 = arith.constant 0 : index
    %c0_538 = arith.constant 0 : index
    %779 = vector.load %arg10[%c13_536, %c0_537, %c0_538] : memref<16x1x8xf32, #tpu.memory_space<vmem>>, vector<1x1x8xf32>
    %780 = vector.shape_cast %779 : vector<1x1x8xf32> to vector<1x8xf32>
    %781 = vector.broadcast %780 : vector<1x8xf32> to vector<10x8xf32>
    %782 = arith.addf %778, %781 : vector<10x8xf32>
    %c13_539 = arith.constant 13 : index
    %c0_540 = arith.constant 0 : index
    %c0_541 = arith.constant 0 : index
    %783 = vector.load %arg11[%c13_539, %c0_540, %c0_541] : memref<16x32x8xf32, #tpu.memory_space<vmem>>, vector<1x32x8xf32>
    %784 = vector.shape_cast %783 : vector<1x32x8xf32> to vector<32x8xf32>
    %cst_542 = arith.constant dense<0.000000e+00> : vector<10x8xf32>
    %785 = tpu.matmul %728, %784, %cst_542 {dimension_numbers = #tpu.dot_dimension_numbers<[1], [0], [0], [1], [0, 0, 1, 1], [], []>} : vector<10x32xf32>, vector<32x8xf32>, vector<10x8xf32> -> vector<10x8xf32>
    %c13_543 = arith.constant 13 : index
    %c0_544 = arith.constant 0 : index
    %c0_545 = arith.constant 0 : index
    %786 = vector.load %arg12[%c13_543, %c0_544, %c0_545] : memref<16x1x8xf32, #tpu.memory_space<vmem>>, vector<1x1x8xf32>
    %787 = vector.shape_cast %786 : vector<1x1x8xf32> to vector<1x8xf32>
    %788 = vector.broadcast %787 : vector<1x8xf32> to vector<10x8xf32>
    %789 = arith.addf %785, %788 : vector<10x8xf32>
    %cst_546 = arith.constant dense<0.000000e+00> : vector<10x10xf32>
    %790 = tpu.matmul %775, %782, %cst_546 {dimension_numbers = #tpu.dot_dimension_numbers<[1], [1], [0], [0], [0, 0, 1, 0], [], []>} : vector<10x8xf32>, vector<10x8xf32>, vector<10x10xf32> -> vector<10x10xf32>
    %cst_547 = arith.constant 0.353553385 : f32
    %791 = vector.broadcast %cst_547 : f32 to vector<10x10xf32>
    %792 = arith.mulf %790, %791 : vector<10x10xf32>
    %793 = arith.addf %792, %5 : vector<10x10xf32>
    %cst_548 = arith.constant dense<0xFF800000> : vector<10xf32>
    %794 = vector.multi_reduction <maximumf>, %793, %cst_548 [1] : vector<10x10xf32> to vector<10xf32>
    %795 = vector.shape_cast %794 : vector<10xf32> to vector<10x1xf32>
    %796 = vector.broadcast %795 : vector<10x1xf32> to vector<10x10xf32>
    %797 = arith.subf %793, %796 : vector<10x10xf32>
    %798 = math.exp %797 : vector<10x10xf32>
    %cst_549 = arith.constant dense<0.000000e+00> : vector<10xf32>
    %799 = vector.multi_reduction <add>, %798, %cst_549 [1] : vector<10x10xf32> to vector<10xf32>
    %800 = vector.shape_cast %799 : vector<10xf32> to vector<10x1xf32>
    %801 = vector.broadcast %800 : vector<10x1xf32> to vector<10x10xf32>
    %802 = arith.divf %798, %801 : vector<10x10xf32>
    %cst_550 = arith.constant dense<0.000000e+00> : vector<10x8xf32>
    %803 = tpu.matmul %802, %789, %cst_550 {dimension_numbers = #tpu.dot_dimension_numbers<[1], [0], [0], [1], [0, 0, 1, 1], [], []>} : vector<10x10xf32>, vector<10x8xf32>, vector<10x8xf32> -> vector<10x8xf32>
    %c13_551 = arith.constant 13 : index
    %c0_552 = arith.constant 0 : index
    %c0_553 = arith.constant 0 : index
    %804 = vector.load %arg13[%c13_551, %c0_552, %c0_553] : memref<16x8x32xf32, #tpu.memory_space<vmem>>, vector<1x8x32xf32>
    %805 = vector.shape_cast %804 : vector<1x8x32xf32> to vector<8x32xf32>
    %cst_554 = arith.constant dense<0.000000e+00> : vector<10x32xf32>
    %806 = tpu.matmul %803, %805, %cst_554 {dimension_numbers = #tpu.dot_dimension_numbers<[1], [0], [0], [1], [0, 0, 1, 1], [], []>} : vector<10x8xf32>, vector<8x32xf32>, vector<10x32xf32> -> vector<10x32xf32>
    %807 = arith.addf %768, %806 : vector<10x32xf32>
    %c14 = arith.constant 14 : index
    %c0_555 = arith.constant 0 : index
    %c0_556 = arith.constant 0 : index
    %808 = vector.load %arg7[%c14, %c0_555, %c0_556] : memref<16x32x8xf32, #tpu.memory_space<vmem>>, vector<1x32x8xf32>
    %809 = vector.shape_cast %808 : vector<1x32x8xf32> to vector<32x8xf32>
    %cst_557 = arith.constant dense<0.000000e+00> : vector<10x8xf32>
    %810 = tpu.matmul %728, %809, %cst_557 {dimension_numbers = #tpu.dot_dimension_numbers<[1], [0], [0], [1], [0, 0, 1, 1], [], []>} : vector<10x32xf32>, vector<32x8xf32>, vector<10x8xf32> -> vector<10x8xf32>
    %c14_558 = arith.constant 14 : index
    %c0_559 = arith.constant 0 : index
    %c0_560 = arith.constant 0 : index
    %811 = vector.load %arg8[%c14_558, %c0_559, %c0_560] : memref<16x1x8xf32, #tpu.memory_space<vmem>>, vector<1x1x8xf32>
    %812 = vector.shape_cast %811 : vector<1x1x8xf32> to vector<1x8xf32>
    %813 = vector.broadcast %812 : vector<1x8xf32> to vector<10x8xf32>
    %814 = arith.addf %810, %813 : vector<10x8xf32>
    %c14_561 = arith.constant 14 : index
    %c0_562 = arith.constant 0 : index
    %c0_563 = arith.constant 0 : index
    %815 = vector.load %arg9[%c14_561, %c0_562, %c0_563] : memref<16x32x8xf32, #tpu.memory_space<vmem>>, vector<1x32x8xf32>
    %816 = vector.shape_cast %815 : vector<1x32x8xf32> to vector<32x8xf32>
    %cst_564 = arith.constant dense<0.000000e+00> : vector<10x8xf32>
    %817 = tpu.matmul %728, %816, %cst_564 {dimension_numbers = #tpu.dot_dimension_numbers<[1], [0], [0], [1], [0, 0, 1, 1], [], []>} : vector<10x32xf32>, vector<32x8xf32>, vector<10x8xf32> -> vector<10x8xf32>
    %c14_565 = arith.constant 14 : index
    %c0_566 = arith.constant 0 : index
    %c0_567 = arith.constant 0 : index
    %818 = vector.load %arg10[%c14_565, %c0_566, %c0_567] : memref<16x1x8xf32, #tpu.memory_space<vmem>>, vector<1x1x8xf32>
    %819 = vector.shape_cast %818 : vector<1x1x8xf32> to vector<1x8xf32>
    %820 = vector.broadcast %819 : vector<1x8xf32> to vector<10x8xf32>
    %821 = arith.addf %817, %820 : vector<10x8xf32>
    %c14_568 = arith.constant 14 : index
    %c0_569 = arith.constant 0 : index
    %c0_570 = arith.constant 0 : index
    %822 = vector.load %arg11[%c14_568, %c0_569, %c0_570] : memref<16x32x8xf32, #tpu.memory_space<vmem>>, vector<1x32x8xf32>
    %823 = vector.shape_cast %822 : vector<1x32x8xf32> to vector<32x8xf32>
    %cst_571 = arith.constant dense<0.000000e+00> : vector<10x8xf32>
    %824 = tpu.matmul %728, %823, %cst_571 {dimension_numbers = #tpu.dot_dimension_numbers<[1], [0], [0], [1], [0, 0, 1, 1], [], []>} : vector<10x32xf32>, vector<32x8xf32>, vector<10x8xf32> -> vector<10x8xf32>
    %c14_572 = arith.constant 14 : index
    %c0_573 = arith.constant 0 : index
    %c0_574 = arith.constant 0 : index
    %825 = vector.load %arg12[%c14_572, %c0_573, %c0_574] : memref<16x1x8xf32, #tpu.memory_space<vmem>>, vector<1x1x8xf32>
    %826 = vector.shape_cast %825 : vector<1x1x8xf32> to vector<1x8xf32>
    %827 = vector.broadcast %826 : vector<1x8xf32> to vector<10x8xf32>
    %828 = arith.addf %824, %827 : vector<10x8xf32>
    %cst_575 = arith.constant dense<0.000000e+00> : vector<10x10xf32>
    %829 = tpu.matmul %814, %821, %cst_575 {dimension_numbers = #tpu.dot_dimension_numbers<[1], [1], [0], [0], [0, 0, 1, 0], [], []>} : vector<10x8xf32>, vector<10x8xf32>, vector<10x10xf32> -> vector<10x10xf32>
    %cst_576 = arith.constant 0.353553385 : f32
    %830 = vector.broadcast %cst_576 : f32 to vector<10x10xf32>
    %831 = arith.mulf %829, %830 : vector<10x10xf32>
    %832 = arith.addf %831, %5 : vector<10x10xf32>
    %cst_577 = arith.constant dense<0xFF800000> : vector<10xf32>
    %833 = vector.multi_reduction <maximumf>, %832, %cst_577 [1] : vector<10x10xf32> to vector<10xf32>
    %834 = vector.shape_cast %833 : vector<10xf32> to vector<10x1xf32>
    %835 = vector.broadcast %834 : vector<10x1xf32> to vector<10x10xf32>
    %836 = arith.subf %832, %835 : vector<10x10xf32>
    %837 = math.exp %836 : vector<10x10xf32>
    %cst_578 = arith.constant dense<0.000000e+00> : vector<10xf32>
    %838 = vector.multi_reduction <add>, %837, %cst_578 [1] : vector<10x10xf32> to vector<10xf32>
    %839 = vector.shape_cast %838 : vector<10xf32> to vector<10x1xf32>
    %840 = vector.broadcast %839 : vector<10x1xf32> to vector<10x10xf32>
    %841 = arith.divf %837, %840 : vector<10x10xf32>
    %cst_579 = arith.constant dense<0.000000e+00> : vector<10x8xf32>
    %842 = tpu.matmul %841, %828, %cst_579 {dimension_numbers = #tpu.dot_dimension_numbers<[1], [0], [0], [1], [0, 0, 1, 1], [], []>} : vector<10x10xf32>, vector<10x8xf32>, vector<10x8xf32> -> vector<10x8xf32>
    %c14_580 = arith.constant 14 : index
    %c0_581 = arith.constant 0 : index
    %c0_582 = arith.constant 0 : index
    %843 = vector.load %arg13[%c14_580, %c0_581, %c0_582] : memref<16x8x32xf32, #tpu.memory_space<vmem>>, vector<1x8x32xf32>
    %844 = vector.shape_cast %843 : vector<1x8x32xf32> to vector<8x32xf32>
    %cst_583 = arith.constant dense<0.000000e+00> : vector<10x32xf32>
    %845 = tpu.matmul %842, %844, %cst_583 {dimension_numbers = #tpu.dot_dimension_numbers<[1], [0], [0], [1], [0, 0, 1, 1], [], []>} : vector<10x8xf32>, vector<8x32xf32>, vector<10x32xf32> -> vector<10x32xf32>
    %846 = arith.addf %807, %845 : vector<10x32xf32>
    %c15 = arith.constant 15 : index
    %c0_584 = arith.constant 0 : index
    %c0_585 = arith.constant 0 : index
    %847 = vector.load %arg7[%c15, %c0_584, %c0_585] : memref<16x32x8xf32, #tpu.memory_space<vmem>>, vector<1x32x8xf32>
    %848 = vector.shape_cast %847 : vector<1x32x8xf32> to vector<32x8xf32>
    %cst_586 = arith.constant dense<0.000000e+00> : vector<10x8xf32>
    %849 = tpu.matmul %728, %848, %cst_586 {dimension_numbers = #tpu.dot_dimension_numbers<[1], [0], [0], [1], [0, 0, 1, 1], [], []>} : vector<10x32xf32>, vector<32x8xf32>, vector<10x8xf32> -> vector<10x8xf32>
    %c15_587 = arith.constant 15 : index
    %c0_588 = arith.constant 0 : index
    %c0_589 = arith.constant 0 : index
    %850 = vector.load %arg8[%c15_587, %c0_588, %c0_589] : memref<16x1x8xf32, #tpu.memory_space<vmem>>, vector<1x1x8xf32>
    %851 = vector.shape_cast %850 : vector<1x1x8xf32> to vector<1x8xf32>
    %852 = vector.broadcast %851 : vector<1x8xf32> to vector<10x8xf32>
    %853 = arith.addf %849, %852 : vector<10x8xf32>
    %c15_590 = arith.constant 15 : index
    %c0_591 = arith.constant 0 : index
    %c0_592 = arith.constant 0 : index
    %854 = vector.load %arg9[%c15_590, %c0_591, %c0_592] : memref<16x32x8xf32, #tpu.memory_space<vmem>>, vector<1x32x8xf32>
    %855 = vector.shape_cast %854 : vector<1x32x8xf32> to vector<32x8xf32>
    %cst_593 = arith.constant dense<0.000000e+00> : vector<10x8xf32>
    %856 = tpu.matmul %728, %855, %cst_593 {dimension_numbers = #tpu.dot_dimension_numbers<[1], [0], [0], [1], [0, 0, 1, 1], [], []>} : vector<10x32xf32>, vector<32x8xf32>, vector<10x8xf32> -> vector<10x8xf32>
    %c15_594 = arith.constant 15 : index
    %c0_595 = arith.constant 0 : index
    %c0_596 = arith.constant 0 : index
    %857 = vector.load %arg10[%c15_594, %c0_595, %c0_596] : memref<16x1x8xf32, #tpu.memory_space<vmem>>, vector<1x1x8xf32>
    %858 = vector.shape_cast %857 : vector<1x1x8xf32> to vector<1x8xf32>
    %859 = vector.broadcast %858 : vector<1x8xf32> to vector<10x8xf32>
    %860 = arith.addf %856, %859 : vector<10x8xf32>
    %c15_597 = arith.constant 15 : index
    %c0_598 = arith.constant 0 : index
    %c0_599 = arith.constant 0 : index
    %861 = vector.load %arg11[%c15_597, %c0_598, %c0_599] : memref<16x32x8xf32, #tpu.memory_space<vmem>>, vector<1x32x8xf32>
    %862 = vector.shape_cast %861 : vector<1x32x8xf32> to vector<32x8xf32>
    %cst_600 = arith.constant dense<0.000000e+00> : vector<10x8xf32>
    %863 = tpu.matmul %728, %862, %cst_600 {dimension_numbers = #tpu.dot_dimension_numbers<[1], [0], [0], [1], [0, 0, 1, 1], [], []>} : vector<10x32xf32>, vector<32x8xf32>, vector<10x8xf32> -> vector<10x8xf32>
    %c15_601 = arith.constant 15 : index
    %c0_602 = arith.constant 0 : index
    %c0_603 = arith.constant 0 : index
    %864 = vector.load %arg12[%c15_601, %c0_602, %c0_603] : memref<16x1x8xf32, #tpu.memory_space<vmem>>, vector<1x1x8xf32>
    %865 = vector.shape_cast %864 : vector<1x1x8xf32> to vector<1x8xf32>
    %866 = vector.broadcast %865 : vector<1x8xf32> to vector<10x8xf32>
    %867 = arith.addf %863, %866 : vector<10x8xf32>
    %cst_604 = arith.constant dense<0.000000e+00> : vector<10x10xf32>
    %868 = tpu.matmul %853, %860, %cst_604 {dimension_numbers = #tpu.dot_dimension_numbers<[1], [1], [0], [0], [0, 0, 1, 0], [], []>} : vector<10x8xf32>, vector<10x8xf32>, vector<10x10xf32> -> vector<10x10xf32>
    %cst_605 = arith.constant 0.353553385 : f32
    %869 = vector.broadcast %cst_605 : f32 to vector<10x10xf32>
    %870 = arith.mulf %868, %869 : vector<10x10xf32>
    %871 = arith.addf %870, %5 : vector<10x10xf32>
    %cst_606 = arith.constant dense<0xFF800000> : vector<10xf32>
    %872 = vector.multi_reduction <maximumf>, %871, %cst_606 [1] : vector<10x10xf32> to vector<10xf32>
    %873 = vector.shape_cast %872 : vector<10xf32> to vector<10x1xf32>
    %874 = vector.broadcast %873 : vector<10x1xf32> to vector<10x10xf32>
    %875 = arith.subf %871, %874 : vector<10x10xf32>
    %876 = math.exp %875 : vector<10x10xf32>
    %cst_607 = arith.constant dense<0.000000e+00> : vector<10xf32>
    %877 = vector.multi_reduction <add>, %876, %cst_607 [1] : vector<10x10xf32> to vector<10xf32>
    %878 = vector.shape_cast %877 : vector<10xf32> to vector<10x1xf32>
    %879 = vector.broadcast %878 : vector<10x1xf32> to vector<10x10xf32>
    %880 = arith.divf %876, %879 : vector<10x10xf32>
    %cst_608 = arith.constant dense<0.000000e+00> : vector<10x8xf32>
    %881 = tpu.matmul %880, %867, %cst_608 {dimension_numbers = #tpu.dot_dimension_numbers<[1], [0], [0], [1], [0, 0, 1, 1], [], []>} : vector<10x10xf32>, vector<10x8xf32>, vector<10x8xf32> -> vector<10x8xf32>
    %c15_609 = arith.constant 15 : index
    %c0_610 = arith.constant 0 : index
    %c0_611 = arith.constant 0 : index
    %882 = vector.load %arg13[%c15_609, %c0_610, %c0_611] : memref<16x8x32xf32, #tpu.memory_space<vmem>>, vector<1x8x32xf32>
    %883 = vector.shape_cast %882 : vector<1x8x32xf32> to vector<8x32xf32>
    %cst_612 = arith.constant dense<0.000000e+00> : vector<10x32xf32>
    %884 = tpu.matmul %881, %883, %cst_612 {dimension_numbers = #tpu.dot_dimension_numbers<[1], [0], [0], [1], [0, 0, 1, 1], [], []>} : vector<10x8xf32>, vector<8x32xf32>, vector<10x32xf32> -> vector<10x32xf32>
    %885 = arith.addf %846, %884 : vector<10x32xf32>
    %886 = arith.addf %704, %885 : vector<10x32xf32>
    %c3_613 = arith.constant 3 : index
    %c0_614 = arith.constant 0 : index
    %c0_615 = arith.constant 0 : index
    %887 = vector.load %arg14[%c3_613, %c0_614, %c0_615] : memref<4x1x32xf32, #tpu.memory_space<vmem>>, vector<1x1x32xf32>
    %888 = vector.shape_cast %887 : vector<1x1x32xf32> to vector<1x32xf32>
    %889 = vector.broadcast %888 : vector<1x32xf32> to vector<10x32xf32>
    %890 = arith.addf %886, %889 : vector<10x32xf32>
    %c3_616 = arith.constant 3 : index
    %c0_617 = arith.constant 0 : index
    %c0_618 = arith.constant 0 : index
    %891 = vector.load %arg15[%c3_616, %c0_617, %c0_618] : memref<4x1x32xf32, #tpu.memory_space<vmem>>, vector<1x1x32xf32>
    %892 = vector.shape_cast %891 : vector<1x1x32xf32> to vector<1x32xf32>
    %c3_619 = arith.constant 3 : index
    %c0_620 = arith.constant 0 : index
    %c0_621 = arith.constant 0 : index
    %893 = vector.load %arg16[%c3_619, %c0_620, %c0_621] : memref<4x1x32xf32, #tpu.memory_space<vmem>>, vector<1x1x32xf32>
    %894 = vector.shape_cast %893 : vector<1x1x32xf32> to vector<1x32xf32>
    %cst_622 = arith.constant dense<0.000000e+00> : vector<10xf32>
    %895 = vector.multi_reduction <add>, %890, %cst_622 [1] : vector<10x32xf32> to vector<10xf32>
    %896 = vector.shape_cast %895 : vector<10xf32> to vector<10x1xf32>
    %cst_623 = arith.constant 3.200000e+01 : f32
    %897 = vector.broadcast %cst_623 : f32 to vector<10x1xf32>
    %898 = arith.divf %896, %897 : vector<10x1xf32>
    %899 = vector.broadcast %898 : vector<10x1xf32> to vector<10x32xf32>
    %900 = arith.subf %890, %899 : vector<10x32xf32>
    %901 = arith.mulf %900, %900 : vector<10x32xf32>
    %cst_624 = arith.constant dense<0.000000e+00> : vector<10xf32>
    %902 = vector.multi_reduction <add>, %901, %cst_624 [1] : vector<10x32xf32> to vector<10xf32>
    %903 = vector.shape_cast %902 : vector<10xf32> to vector<10x1xf32>
    %cst_625 = arith.constant 3.200000e+01 : f32
    %904 = vector.broadcast %cst_625 : f32 to vector<10x1xf32>
    %905 = arith.divf %903, %904 : vector<10x1xf32>
    %cst_626 = arith.constant 9.99999997E-7 : f32
    %906 = vector.broadcast %cst_626 : f32 to vector<10x1xf32>
    %907 = arith.addf %905, %906 : vector<10x1xf32>
    %908 = math.rsqrt %907 : vector<10x1xf32>
    %909 = vector.broadcast %908 : vector<10x1xf32> to vector<10x32xf32>
    %910 = arith.mulf %900, %909 : vector<10x32xf32>
    %911 = vector.broadcast %892 : vector<1x32xf32> to vector<10x32xf32>
    %912 = arith.mulf %910, %911 : vector<10x32xf32>
    %913 = vector.broadcast %894 : vector<1x32xf32> to vector<10x32xf32>
    %914 = arith.addf %912, %913 : vector<10x32xf32>
    %c3_627 = arith.constant 3 : index
    %c0_628 = arith.constant 0 : index
    %c0_629 = arith.constant 0 : index
    %915 = vector.load %arg17[%c3_627, %c0_628, %c0_629] : memref<4x32x128xf32, #tpu.memory_space<vmem>>, vector<1x32x128xf32>
    %916 = vector.shape_cast %915 : vector<1x32x128xf32> to vector<32x128xf32>
    %cst_630 = arith.constant dense<0.000000e+00> : vector<10x128xf32>
    %917 = tpu.matmul %914, %916, %cst_630 {dimension_numbers = #tpu.dot_dimension_numbers<[1], [0], [0], [1], [0, 0, 1, 1], [], []>} : vector<10x32xf32>, vector<32x128xf32>, vector<10x128xf32> -> vector<10x128xf32>
    %c3_631 = arith.constant 3 : index
    %c0_632 = arith.constant 0 : index
    %c0_633 = arith.constant 0 : index
    %918 = vector.load %arg18[%c3_631, %c0_632, %c0_633] : memref<4x1x128xf32, #tpu.memory_space<vmem>>, vector<1x1x128xf32>
    %919 = vector.shape_cast %918 : vector<1x1x128xf32> to vector<1x128xf32>
    %920 = vector.broadcast %919 : vector<1x128xf32> to vector<10x128xf32>
    %921 = arith.addf %917, %920 : vector<10x128xf32>
    %cst_634 = arith.constant 5.000000e-01 : f32
    %922 = vector.broadcast %cst_634 : f32 to vector<10x128xf32>
    %923 = arith.mulf %922, %921 : vector<10x128xf32>
    %cst_635 = arith.constant 0.707106769 : f32
    %924 = vector.broadcast %cst_635 : f32 to vector<10x128xf32>
    %925 = arith.mulf %921, %924 : vector<10x128xf32>
    %926 = math.erf %925 : vector<10x128xf32>
    %cst_636 = arith.constant 1.000000e+00 : f32
    %927 = vector.broadcast %cst_636 : f32 to vector<10x128xf32>
    %928 = arith.addf %927, %926 : vector<10x128xf32>
    %929 = arith.mulf %923, %928 : vector<10x128xf32>
    %c3_637 = arith.constant 3 : index
    %c0_638 = arith.constant 0 : index
    %c0_639 = arith.constant 0 : index
    %930 = vector.load %arg19[%c3_637, %c0_638, %c0_639] : memref<4x128x32xf32, #tpu.memory_space<vmem>>, vector<1x128x32xf32>
    %931 = vector.shape_cast %930 : vector<1x128x32xf32> to vector<128x32xf32>
    %cst_640 = arith.constant dense<0.000000e+00> : vector<10x32xf32>
    %932 = tpu.matmul %929, %931, %cst_640 {dimension_numbers = #tpu.dot_dimension_numbers<[1], [0], [0], [1], [0, 0, 1, 1], [], []>} : vector<10x128xf32>, vector<128x32xf32>, vector<10x32xf32> -> vector<10x32xf32>
    %c3_641 = arith.constant 3 : index
    %c0_642 = arith.constant 0 : index
    %c0_643 = arith.constant 0 : index
    %933 = vector.load %arg20[%c3_641, %c0_642, %c0_643] : memref<4x1x32xf32, #tpu.memory_space<vmem>>, vector<1x1x32xf32>
    %934 = vector.shape_cast %933 : vector<1x1x32xf32> to vector<1x32xf32>
    %935 = vector.broadcast %934 : vector<1x32xf32> to vector<10x32xf32>
    %936 = arith.addf %932, %935 : vector<10x32xf32>
    %937 = arith.addf %890, %936 : vector<10x32xf32>
    %c0_644 = arith.constant 0 : index
    %c0_645 = arith.constant 0 : index
    %938 = vector.load %arg21[%c0_644, %c0_645] : memref<10x32xf32, #tpu.memory_space<vmem>>, vector<10x32xf32>
    tpu.vector_store %arg21[%c0_644, %c0_645], %937 {strides = array<i32>} : memref<10x32xf32, #tpu.memory_space<vmem>>, vector<10x32xf32>,
    return
  }
  func.func @transform_0(%arg0: i32) -> (i32, i32) {
    %c0_i32 = arith.constant 0 : i32
    %c0_i32_0 = arith.constant 0 : i32
    %c0_i32_1 = arith.constant 0 : i32
    return %c0_i32, %c0_i32_0 : i32, i32
  }
  func.func @transform_1(%arg0: i32) -> (i32, i32) {
    %c0_i32 = arith.constant 0 : i32
    %c0_i32_0 = arith.constant 0 : i32
    %c0_i32_1 = arith.constant 0 : i32
    return %c0_i32, %c0_i32_0 : i32, i32
  }
  func.func @transform_2(%arg0: i32) -> (i32, i32) {
    %c0_i32 = arith.constant 0 : i32
    %c0_i32_0 = arith.constant 0 : i32
    %c0_i32_1 = arith.constant 0 : i32
    return %c0_i32, %c0_i32_0 : i32, i32
  }
  func.func @transform_3(%arg0: i32) -> (i32, i32) {
    %c0_i32 = arith.constant 0 : i32
    %c0_i32_0 = arith.constant 0 : i32
    %c0_i32_1 = arith.constant 0 : i32
    return %c0_i32, %c0_i32_0 : i32, i32
  }
  func.func @transform_4(%arg0: i32) -> (i32, i32, i32) {
    %c0_i32 = arith.constant 0 : i32
    %c0_i32_0 = arith.constant 0 : i32
    %c0_i32_1 = arith.constant 0 : i32
    %c0_i32_2 = arith.constant 0 : i32
    return %c0_i32, %c0_i32_0, %c0_i32_1 : i32, i32, i32
  }
  func.func @transform_5(%arg0: i32) -> (i32, i32, i32) {
    %c0_i32 = arith.constant 0 : i32
    %c0_i32_0 = arith.constant 0 : i32
    %c0_i32_1 = arith.constant 0 : i32
    %c0_i32_2 = arith.constant 0 : i32
    return %c0_i32, %c0_i32_0, %c0_i32_1 : i32, i32, i32
  }
  func.func @transform_6(%arg0: i32) -> (i32, i32, i32) {
    %c0_i32 = arith.constant 0 : i32
    %c0_i32_0 = arith.constant 0 : i32
    %c0_i32_1 = arith.constant 0 : i32
    %c0_i32_2 = arith.constant 0 : i32
    return %c0_i32, %c0_i32_0, %c0_i32_1 : i32, i32, i32
  }
  func.func @transform_7(%arg0: i32) -> (i32, i32, i32) {
    %c0_i32 = arith.constant 0 : i32
    %c0_i32_0 = arith.constant 0 : i32
    %c0_i32_1 = arith.constant 0 : i32
    %c0_i32_2 = arith.constant 0 : i32
    return %c0_i32, %c0_i32_0, %c0_i32_1 : i32, i32, i32
  }
  func.func @transform_8(%arg0: i32) -> (i32, i32, i32) {
    %c0_i32 = arith.constant 0 : i32
    %c0_i32_0 = arith.constant 0 : i32
    %c0_i32_1 = arith.constant 0 : i32
    %c0_i32_2 = arith.constant 0 : i32
    return %c0_i32, %c0_i32_0, %c0_i32_1 : i32, i32, i32
  }
  func.func @transform_9(%arg0: i32) -> (i32, i32, i32) {
    %c0_i32 = arith.constant 0 : i32
    %c0_i32_0 = arith.constant 0 : i32
    %c0_i32_1 = arith.constant 0 : i32
    %c0_i32_2 = arith.constant 0 : i32
    return %c0_i32, %c0_i32_0, %c0_i32_1 : i32, i32, i32
  }
  func.func @transform_10(%arg0: i32) -> (i32, i32, i32) {
    %c0_i32 = arith.constant 0 : i32
    %c0_i32_0 = arith.constant 0 : i32
    %c0_i32_1 = arith.constant 0 : i32
    %c0_i32_2 = arith.constant 0 : i32
    return %c0_i32, %c0_i32_0, %c0_i32_1 : i32, i32, i32
  }
  func.func @transform_11(%arg0: i32) -> (i32, i32, i32) {
    %c0_i32 = arith.constant 0 : i32
    %c0_i32_0 = arith.constant 0 : i32
    %c0_i32_1 = arith.constant 0 : i32
    %c0_i32_2 = arith.constant 0 : i32
    return %c0_i32, %c0_i32_0, %c0_i32_1 : i32, i32, i32
  }
  func.func @transform_12(%arg0: i32) -> (i32, i32, i32) {
    %c0_i32 = arith.constant 0 : i32
    %c0_i32_0 = arith.constant 0 : i32
    %c0_i32_1 = arith.constant 0 : i32
    %c0_i32_2 = arith.constant 0 : i32
    return %c0_i32, %c0_i32_0, %c0_i32_1 : i32, i32, i32
  }
  func.func @transform_13(%arg0: i32) -> (i32, i32, i32) {
    %c0_i32 = arith.constant 0 : i32
    %c0_i32_0 = arith.constant 0 : i32
    %c0_i32_1 = arith.constant 0 : i32
    %c0_i32_2 = arith.constant 0 : i32
    return %c0_i32, %c0_i32_0, %c0_i32_1 : i32, i32, i32
  }
  func.func @transform_14(%arg0: i32) -> (i32, i32, i32) {
    %c0_i32 = arith.constant 0 : i32
    %c0_i32_0 = arith.constant 0 : i32
    %c0_i32_1 = arith.constant 0 : i32
    %c0_i32_2 = arith.constant 0 : i32
    return %c0_i32, %c0_i32_0, %c0_i32_1 : i32, i32, i32
  }
  func.func @transform_15(%arg0: i32) -> (i32, i32, i32) {
    %c0_i32 = arith.constant 0 : i32
    %c0_i32_0 = arith.constant 0 : i32
    %c0_i32_1 = arith.constant 0 : i32
    %c0_i32_2 = arith.constant 0 : i32
    return %c0_i32, %c0_i32_0, %c0_i32_1 : i32, i32, i32
  }
  func.func @transform_16(%arg0: i32) -> (i32, i32, i32) {
    %c0_i32 = arith.constant 0 : i32
    %c0_i32_0 = arith.constant 0 : i32
    %c0_i32_1 = arith.constant 0 : i32
    %c0_i32_2 = arith.constant 0 : i32
    return %c0_i32, %c0_i32_0, %c0_i32_1 : i32, i32, i32
  }
  func.func @transform_17(%arg0: i32) -> (i32, i32, i32) {
    %c0_i32 = arith.constant 0 : i32
    %c0_i32_0 = arith.constant 0 : i32
    %c0_i32_1 = arith.constant 0 : i32
    %c0_i32_2 = arith.constant 0 : i32
    return %c0_i32, %c0_i32_0, %c0_i32_1 : i32, i32, i32
  }
  func.func @transform_18(%arg0: i32) -> (i32, i32, i32) {
    %c0_i32 = arith.constant 0 : i32
    %c0_i32_0 = arith.constant 0 : i32
    %c0_i32_1 = arith.constant 0 : i32
    %c0_i32_2 = arith.constant 0 : i32
    return %c0_i32, %c0_i32_0, %c0_i32_1 : i32, i32, i32
  }
  func.func @transform_19(%arg0: i32) -> (i32, i32, i32) {
    %c0_i32 = arith.constant 0 : i32
    %c0_i32_0 = arith.constant 0 : i32
    %c0_i32_1 = arith.constant 0 : i32
    %c0_i32_2 = arith.constant 0 : i32
    return %c0_i32, %c0_i32_0, %c0_i32_1 : i32, i32, i32
  }
  func.func @transform_20(%arg0: i32) -> (i32, i32) {
    %c0_i32 = arith.constant 0 : i32
    %c0_i32_0 = arith.constant 0 : i32
    %c0_i32_1 = arith.constant 0 : i32
    return %c0_i32, %c0_i32_0 : i32, i32
  }
}

</mosaic_0001>

<llo_original>
// kernel: tile.7
$region0: #{tile.7}
  %s0 = inlined_call_operand.vmem [shape: f32[2,5,32], index: 0, kind: input, shape index: {}]
  %s1 = inlined_call_operand.vmem [shape: f32[10,32], index: 1, kind: output, shape index: {}]
  %v2 = vld [vmem:[%s0] sm:$0x1f]
  %vm3 = vcmask 261120
  %4 = vst.msk [vmem:[%s1] sm:$0x1f] %vm3, %v2
  %s5 = scalar_lea.vmem %s0, 8
  %v6 = vld [vmem:[%s5] sm:$0x1f]
  %vm7 = vcmask 261120
  %s8 = scalar_lea.vmem %s1, 5
  %9 = vst.msk [vmem:[%s8] sm:$0x1f] %vm7, %v6

// kernel: ibot_forward_pallas.1
$region0: #{ibot_forward_pallas.1}
  #allocation0 [shape = 'u32[]', space=smem, size = 0x4, offset = 0x4, fixed_abs, tag = 'smem constant byte address 0x4 - core index']
  #allocation1 [shape = 'u32[72,128]{1,0:T(1,128)}', space=vmem, size = 0x9000, scoped, tag = 'internal scratch']
  %s0 = inlined_call_operand.vmem [shape: f32[10,769], index: 0, kind: input, shape index: {}]
  %s1 = inlined_call_operand.vmem [shape: f32[769,32], index: 1, kind: input, shape index: {}]
  %s2 = inlined_call_operand.vmem [shape: f32[10,32], index: 2, kind: input, shape index: {}]
  %s3 = inlined_call_operand.vmem [shape: f32[10,10], index: 3, kind: input, shape index: {}]
  %s4 = inlined_call_operand.vmem [shape: f32[4,1,32], index: 4, kind: input, shape index: {}]
  %s5 = inlined_call_operand.vmem [shape: f32[4,1,32], index: 5, kind: input, shape index: {}]
  %s6 = inlined_call_operand.vmem [shape: f32[16,32,8], index: 6, kind: input, shape index: {}]
  %s7 = inlined_call_operand.vmem [shape: f32[16,1,8], index: 7, kind: input, shape index: {}]
  %s8 = inlined_call_operand.vmem [shape: f32[16,32,8], index: 8, kind: input, shape index: {}]
  %s9 = inlined_call_operand.vmem [shape: f32[16,1,8], index: 9, kind: input, shape index: {}]
  %s10 = inlined_call_operand.vmem [shape: f32[16,32,8], index: 10, kind: input, shape index: {}]
  %s11 = inlined_call_operand.vmem [shape: f32[16,1,8], index: 11, kind: input, shape index: {}]
  %s12 = inlined_call_operand.vmem [shape: f32[16,8,32], index: 12, kind: input, shape index: {}]
  %s13 = inlined_call_operand.vmem [shape: f32[4,1,32], index: 13, kind: input, shape index: {}]
  %s14 = inlined_call_operand.vmem [shape: f32[4,1,32], index: 14, kind: input, shape index: {}]
  %s15 = inlined_call_operand.vmem [shape: f32[4,1,32], index: 15, kind: input, shape index: {}]
  %s16 = inlined_call_operand.vmem [shape: f32[4,32,128], index: 16, kind: input, shape index: {}]
  %s17 = inlined_call_operand.vmem [shape: f32[4,1,128], index: 17, kind: input, shape index: {}]
  %s18 = inlined_call_operand.vmem [shape: f32[4,128,32], index: 18, kind: input, shape index: {}]
  %s19 = inlined_call_operand.vmem [shape: f32[4,1,32], index: 19, kind: input, shape index: {}]
  %s20 = inlined_call_operand.vmem [shape: f32[10,32], index: 20, kind: output, shape index: {}]
  %s21 = sld [smem:[#allocation0]]
  $region90: #{ibot_forward_pallas.1} parent=0
    _
  %s23 = ssub.s32 1, %s21
  %s24 = scalar_select 0, %s23, %s21
  // Predicated region
  $region2: #{ibot_forward_pallas.1} parent=0 // pred_check
    _
  $region3: #{ibot_forward_pallas.1} parent=0 // pred_check_branch
    %26 = sbr.rel (0) target = $region5
  $region4: #{ibot_forward_pallas.1} parent=0 // pred_region
    _
  $region5: #{ibot_forward_pallas.1} parent=0 // pred_fallthru
    _
  // Predicated region
  $region6: #{ibot_forward_pallas.1} parent=0 // pred_check
    _
  $region7: #{ibot_forward_pallas.1} parent=0 // pred_check_branch
    %28 = sbr.rel (0) target = $region9
  $region8: #{ibot_forward_pallas.1} parent=0 // pred_region
    _
  $region9: #{ibot_forward_pallas.1} parent=0 // pred_fallthru
    _
  // Predicated region
  $region10: #{ibot_forward_pallas.1} parent=0 // pred_check
    _
  $region11: #{ibot_forward_pallas.1} parent=0 // pred_check_branch
    %30 = sbr.rel (0) target = $region13
  $region12: #{ibot_forward_pallas.1} parent=0 // pred_region
    _
  $region13: #{ibot_forward_pallas.1} parent=0 // pred_fallthru
    _
  // Predicated region
  $region14: #{ibot_forward_pallas.1} parent=0 // pred_check
    _
  $region15: #{ibot_forward_pallas.1} parent=0 // pred_check_branch
    %32 = sbr.rel (0) target = $region17
  $region16: #{ibot_forward_pallas.1} parent=0 // pred_region
    _
  $region17: #{ibot_forward_pallas.1} parent=0 // pred_fallthru
    _
  // Predicated region
  $region18: #{ibot_forward_pallas.1} parent=0 // pred_check
    _
  $region19: #{ibot_forward_pallas.1} parent=0 // pred_check_branch
    %34 = sbr.rel (0) target = $region21
  $region20: #{ibot_forward_pallas.1} parent=0 // pred_region
    _
  $region21: #{ibot_forward_pallas.1} parent=0 // pred_fallthru
    _
  // Predicated region
  $region22: #{ibot_forward_pallas.1} parent=0 // pred_check
    _
  $region23: #{ibot_forward_pallas.1} parent=0 // pred_check_branch
    %36 = sbr.rel (0) target = $region25
  $region24: #{ibot_forward_pallas.1} parent=0 // pred_region
    _
  $region25: #{ibot_forward_pallas.1} parent=0 // pred_fallthru
    _
  // Predicated region
  $region26: #{ibot_forward_pallas.1} parent=0 // pred_check
    _
  $region27: #{ibot_forward_pallas.1} parent=0 // pred_check_branch
    %38 = sbr.rel (0) target = $region29
  $region28: #{ibot_forward_pallas.1} parent=0 // pred_region
    _
  $region29: #{ibot_forward_pallas.1} parent=0 // pred_fallthru
    _
  // Predicated region
  $region30: #{ibot_forward_pallas.1} parent=0 // pred_check
    _
  $region31: #{ibot_forward_pallas.1} parent=0 // pred_check_branch
    %40 = sbr.rel (0) target = $region33
  $region32: #{ibot_forward_pallas.1} parent=0 // pred_region
    _
  $region33: #{ibot_forward_pallas.1} parent=0 // pred_fallthru
    _
  // Predicated region
  $region34: #{ibot_forward_pallas.1} parent=0 // pred_check
    _
  $region35: #{ibot_forward_pallas.1} parent=0 // pred_check_branch
    %42 = sbr.rel (0) target = $region37
  $region36: #{ibot_forward_pallas.1} parent=0 // pred_region
    _
  $region37: #{ibot_forward_pallas.1} parent=0 // pred_fallthru
    _
  // Predicated region
  $region38: #{ibot_forward_pallas.1} parent=0 // pred_check
    _
  $region39: #{ibot_forward_pallas.1} parent=0 // pred_check_branch
    %44 = sbr.rel (0) target = $region41
  $region40: #{ibot_forward_pallas.1} parent=0 // pred_region
    _
  $region41: #{ibot_forward_pallas.1} parent=0 // pred_fallthru
    _
  // Predicated region
  $region42: #{ibot_forward_pallas.1} parent=0 // pred_check
    _
  $region43: #{ibot_forward_pallas.1} parent=0 // pred_check_branch
    %46 = sbr.rel (0) target = $region45
  $region44: #{ibot_forward_pallas.1} parent=0 // pred_region
    _
  $region45: #{ibot_forward_pallas.1} parent=0 // pred_fallthru
    _
  // Predicated region
  $region46: #{ibot_forward_pallas.1} parent=0 // pred_check
    _
  $region47: #{ibot_forward_pallas.1} parent=0 // pred_check_branch
    %48 = sbr.rel (0) target = $region49
  $region48: #{ibot_forward_pallas.1} parent=0 // pred_region
    _
  $region49: #{ibot_forward_pallas.1} parent=0 // pred_fallthru
    _
  // Predicated region
  $region50: #{ibot_forward_pallas.1} parent=0 // pred_check
    _
  $region51: #{ibot_forward_pallas.1} parent=0 // pred_check_branch
    %50 = sbr.rel (0) target = $region53
  $region52: #{ibot_forward_pallas.1} parent=0 // pred_region
    _
  $region53: #{ibot_forward_pallas.1} parent=0 // pred_fallthru
    _
  // Predicated region
  $region54: #{ibot_forward_pallas.1} parent=0 // pred_check
    _
  $region55: #{ibot_forward_pallas.1} parent=0 // pred_check_branch
    %52 = sbr.rel (0) target = $region57
  $region56: #{ibot_forward_pallas.1} parent=0 // pred_region
    _
  $region57: #{ibot_forward_pallas.1} parent=0 // pred_fallthru
    _
  // Predicated region
  $region58: #{ibot_forward_pallas.1} parent=0 // pred_check
    _
  $region59: #{ibot_forward_pallas.1} parent=0 // pred_check_branch
    %54 = sbr.rel (0) target = $region61
  $region60: #{ibot_forward_pallas.1} parent=0 // pred_region
    _
  $region61: #{ibot_forward_pallas.1} parent=0 // pred_fallthru
    _
  // Predicated region
  $region62: #{ibot_forward_pallas.1} parent=0 // pred_check
    _
  $region63: #{ibot_forward_pallas.1} parent=0 // pred_check_branch
    %56 = sbr.rel (0) target = $region65
  $region64: #{ibot_forward_pallas.1} parent=0 // pred_region
    _
  $region65: #{ibot_forward_pallas.1} parent=0 // pred_fallthru
    _
  // Predicated region
  $region66: #{ibot_forward_pallas.1} parent=0 // pred_check
    _
  $region67: #{ibot_forward_pallas.1} parent=0 // pred_check_branch
    %58 = sbr.rel (0) target = $region69
  $region68: #{ibot_forward_pallas.1} parent=0 // pred_region
    _
  $region69: #{ibot_forward_pallas.1} parent=0 // pred_fallthru
    _
  // Predicated region
  $region70: #{ibot_forward_pallas.1} parent=0 // pred_check
    _
  $region71: #{ibot_forward_pallas.1} parent=0 // pred_check_branch
    %60 = sbr.rel (0) target = $region73
  $region72: #{ibot_forward_pallas.1} parent=0 // pred_region
    _
  $region73: #{ibot_forward_pallas.1} parent=0 // pred_fallthru
    _
  // Predicated region
  $region74: #{ibot_forward_pallas.1} parent=0 // pred_check
    _
  $region75: #{ibot_forward_pallas.1} parent=0 // pred_check_branch
    %62 = sbr.rel (0) target = $region77
  $region76: #{ibot_forward_pallas.1} parent=0 // pred_region
    _
  $region77: #{ibot_forward_pallas.1} parent=0 // pred_fallthru
    _
  // Predicated region
  $region78: #{ibot_forward_pallas.1} parent=0 // pred_check
    _
  $region79: #{ibot_forward_pallas.1} parent=0 // pred_check_branch
    %64 = sbr.rel (0) target = $region81
  $region80: #{ibot_forward_pallas.1} parent=0 // pred_region
    _
  $region81: #{ibot_forward_pallas.1} parent=0 // pred_fallthru
    _
  %v65 = vld [vmem:[%s0] sm:$0xff]
  %v66 = vld [vmem:[%s0 + $0x8] sm:$0xff]
  %v67 = vld [vmem:[%s0 + $0x10] sm:$0xff]
  %v68 = vld [vmem:[%s0 + $0x18] sm:$0xff]
  %v69 = vld [vmem:[%s0 + $0x20] sm:$0xff]
  %v70 = vld [vmem:[%s0 + $0x28] sm:$0xff]
  %v71 = vld [vmem:[%s0 + $0x30] sm:$0xff]
  %v72 = vld [vmem:[%s0 + $0x38] sm:$0x3]
  %v73 = vld [vmem:[%s0 + $0x40] sm:$0x3]
  %v74 = vld [vmem:[%s0 + $0x48] sm:$0x3]
  %v75 = vld [vmem:[%s0 + $0x50] sm:$0x3]
  %v76 = vld [vmem:[%s0 + $0x58] sm:$0x3]
  %v77 = vld [vmem:[%s0 + $0x60] sm:$0x3]
  %v78 = vld [vmem:[%s0 + $0x68] sm:$0x3]
  %v79 = vld [vmem:[%s1] sm:$0xff]
  %v80 = vld [vmem:[%s1 + $0x8] sm:$0xff]
  %v81 = vld [vmem:[%s1 + $0x10] sm:$0xff]
  %v82 = vld [vmem:[%s1 + $0x18] sm:$0xff]
  %v83 = vld [vmem:[%s1 + $0x20] sm:$0xff]
  %v84 = vld [vmem:[%s1 + $0x28] sm:$0xff]
  %v85 = vld [vmem:[%s1 + $0x30] sm:$0xff]
  %v86 = vld [vmem:[%s1 + $0x38] sm:$0xff]
  %v87 = vld [vmem:[%s1 + $0x40] sm:$0xff]
  %v88 = vld [vmem:[%s1 + $0x48] sm:$0xff]
  %v89 = vld [vmem:[%s1 + $0x50] sm:$0xff]
  %v90 = vld [vmem:[%s1 + $0x58] sm:$0xff]
  %v91 = vld [vmem:[%s1 + $0x60] sm:$0xff]
  %v92 = vld [vmem:[%s1 + $0x68] sm:$0xff]
  %v93 = vld [vmem:[%s1 + $0x70] sm:$0xff]
  %v94 = vld [vmem:[%s1 + $0x78] sm:$0xff]
  %v95 = vld [vmem:[%s1 + $0x80] sm:$0xff]
  %v96 = vld [vmem:[%s1 + $0x88] sm:$0xff]
  %v97 = vld [vmem:[%s1 + $0x90] sm:$0xff]
  %v98 = vld [vmem:[%s1 + $0x98] sm:$0xff]
  %v99 = vld [vmem:[%s1 + $0xa0] sm:$0xff]
  %v100 = vld [vmem:[%s1 + $0xa8] sm:$0xff]
  %v101 = vld [vmem:[%s1 + $0xb0] sm:$0xff]
  %v102 = vld [vmem:[%s1 + $0xb8] sm:$0xff]
  %v103 = vld [vmem:[%s1 + $0xc0] sm:$0xff]
  %v104 = vld [vmem:[%s1 + $0xc8] sm:$0xff]
  %v105 = vld [vmem:[%s1 + $0xd0] sm:$0xff]
  %v106 = vld [vmem:[%s1 + $0xd8] sm:$0xff]
  %v107 = vld [vmem:[%s1 + $0xe0] sm:$0xff]
  %v108 = vld [vmem:[%s1 + $0xe8] sm:$0xff]
  %v109 = vld [vmem:[%s1 + $0xf0] sm:$0xff]
  %v110 = vld [vmem:[%s1 + $0xf8] sm:$0xff]
  %v111 = vld [vmem:[%s1 + $0x100] sm:$0xff]
  %v112 = vld [vmem:[%s1 + $0x108] sm:$0xff]
  %v113 = vld [vmem:[%s1 + $0x110] sm:$0xff]
  %v114 = vld [vmem:[%s1 + $0x118] sm:$0xff]
  %v115 = vld [vmem:[%s1 + $0x120] sm:$0xff]
  %v116 = vld [vmem:[%s1 + $0x128] sm:$0xff]
  %v117 = vld [vmem:[%s1 + $0x130] sm:$0xff]
  %v118 = vld [vmem:[%s1 + $0x138] sm:$0xff]
  %v119 = vld [vmem:[%s1 + $0x140] sm:$0xff]
  %v120 = vld [vmem:[%s1 + $0x148] sm:$0xff]
  %v121 = vld [vmem:[%s1 + $0x150] sm:$0xff]
  %v122 = vld [vmem:[%s1 + $0x158] sm:$0xff]
  %v123 = vld [vmem:[%s1 + $0x160] sm:$0xff]
  %v124 = vld [vmem:[%s1 + $0x168] sm:$0xff]
  %v125 = vld [vmem:[%s1 + $0x170] sm:$0xff]
  %v126 = vld [vmem:[%s1 + $0x178] sm:$0xff]
  %v127 = vld [vmem:[%s1 + $0x180] sm:$0xff]
  %v128 = vld [vmem:[%s1 + $0x188] sm:$0xff]
  %v129 = vld [vmem:[%s1 + $0x190] sm:$0xff]
  %v130 = vld [vmem:[%s1 + $0x198] sm:$0xff]
  %v131 = vld [vmem:[%s1 + $0x1a0] sm:$0xff]
  %v132 = vld [vmem:[%s1 + $0x1a8] sm:$0xff]
  %v133 = vld [vmem:[%s1 + $0x1b0] sm:$0xff]
  %v134 = vld [vmem:[%s1 + $0x1b8] sm:$0xff]
  %v135 = vld [vmem:[%s1 + $0x1c0] sm:$0xff]
  %v136 = vld [vmem:[%s1 + $0x1c8] sm:$0xff]
  %v137 = vld [vmem:[%s1 + $0x1d0] sm:$0xff]
  %v138 = vld [vmem:[%s1 + $0x1d8] sm:$0xff]
  %v139 = vld [vmem:[%s1 + $0x1e0] sm:$0xff]
  %v140 = vld [vmem:[%s1 + $0x1e8] sm:$0xff]
  %v141 = vld [vmem:[%s1 + $0x1f0] sm:$0xff]
  %v142 = vld [vmem:[%s1 + $0x1f8] sm:$0xff]
  %v143 = vld [vmem:[%s1 + $0x200] sm:$0xff]
  %v144 = vld [vmem:[%s1 + $0x208] sm:$0xff]
  %v145 = vld [vmem:[%s1 + $0x210] sm:$0xff]
  %v146 = vld [vmem:[%s1 + $0x218] sm:$0xff]
  %v147 = vld [vmem:[%s1 + $0x220] sm:$0xff]
  %v148 = vld [vmem:[%s1 + $0x228] sm:$0xff]
  %v149 = vld [vmem:[%s1 + $0x230] sm:$0xff]
  %v150 = vld [vmem:[%s1 + $0x238] sm:$0xff]
  %v151 = vld [vmem:[%s1 + $0x240] sm:$0xff]
  %v152 = vld [vmem:[%s1 + $0x248] sm:$0xff]
  %v153 = vld [vmem:[%s1 + $0x250] sm:$0xff]
  %v154 = vld [vmem:[%s1 + $0x258] sm:$0xff]
  %v155 = vld [vmem:[%s1 + $0x260] sm:$0xff]
  %v156 = vld [vmem:[%s1 + $0x268] sm:$0xff]
  %v157 = vld [vmem:[%s1 + $0x270] sm:$0xff]
  %v158 = vld [vmem:[%s1 + $0x278] sm:$0xff]
  %v159 = vld [vmem:[%s1 + $0x280] sm:$0xff]
  %v160 = vld [vmem:[%s1 + $0x288] sm:$0xff]
  %v161 = vld [vmem:[%s1 + $0x290] sm:$0xff]
  %v162 = vld [vmem:[%s1 + $0x298] sm:$0xff]
  %v163 = vld [vmem:[%s1 + $0x2a0] sm:$0xff]
  %v164 = vld [vmem:[%s1 + $0x2a8] sm:$0xff]
  %v165 = vld [vmem:[%s1 + $0x2b0] sm:$0xff]
  %v166 = vld [vmem:[%s1 + $0x2b8] sm:$0xff]
  %v167 = vld [vmem:[%s1 + $0x2c0] sm:$0xff]
  %v168 = vld [vmem:[%s1 + $0x2c8] sm:$0xff]
  %v169 = vld [vmem:[%s1 + $0x2d0] sm:$0xff]
  %v170 = vld [vmem:[%s1 + $0x2d8] sm:$0xff]
  %v171 = vld [vmem:[%s1 + $0x2e0] sm:$0xff]
  %v172 = vld [vmem:[%s1 + $0x2e8] sm:$0xff]
  %v173 = vld [vmem:[%s1 + $0x2f0] sm:$0xff]
  %v174 = vld [vmem:[%s1 + $0x2f8] sm:$0xff]
  %v175 = vld [vmem:[%s1 + $0x300] sm:$0x1]
  %v176 = vld [vmem:[%s2] sm:$0xff]
  %v177 = vld [vmem:[%s2 + $0x8] sm:$0x3]
  %vm178 = vcmask 7168
  %v180 = vsel %vm178, %v71, 0
  %v183 = vsel %vm178, %v78, 0
  %vm185 = vcmask 1040384
  %v187 = vsel %vm185, %v175, 0
  %189 = vmatpush.msra.mxu0 %v94
  %190 = vmatpush.msra.mxu0 %v93
  %191 = vmatpush.msra.mxu0 %v92
  %192 = vmatpush.msra.mxu0 %v91
  %193 = vmatpush.msra.mxu0 %v90
  %194 = vmatpush.msra.mxu0 %v89
  %195 = vmatpush.msra.mxu0 %v88
  %196 = vmatpush.msra.mxu0 %v87
  %197 = vmatpush.msra.mxu0 %v86
  %198 = vmatpush.msra.mxu0 %v85
  %199 = vmatpush.msra.mxu0 %v84
  %200 = vmatpush.msra.mxu0 %v83
  %201 = vmatpush.msra.mxu0 %v82
  %202 = vmatpush.msra.mxu0 %v81
  %203 = vmatpush.msra.mxu0 %v80
  %204 = vmatpush.msra.mxu0 %v79
  %205 = vmatmul.f32.gmra.mxu0 %v65
  %v206 = vpop.f32.mrf.mxu0
  %v207 = vadd.f32 %v176, %v206
  %208 = vmatmul.f32.gmra.mxu0 %v72
  %v209 = vpop.f32.mrf.mxu0
  %v210 = vadd.f32 %v177, %v209
  %211 = vdwg.mxu0
  %212 = vmatpush.msra.mxu0 %v110
  %213 = vmatpush.msra.mxu0 %v109
  %214 = vmatpush.msra.mxu0 %v108
  %215 = vmatpush.msra.mxu0 %v107
  %216 = vmatpush.msra.mxu0 %v106
  %217 = vmatpush.msra.mxu0 %v105
  %218 = vmatpush.msra.mxu0 %v104
  %219 = vmatpush.msra.mxu0 %v103
  %220 = vmatpush.msra.mxu0 %v102
  %221 = vmatpush.msra.mxu0 %v101
  %222 = vmatpush.msra.mxu0 %v100
  %223 = vmatpush.msra.mxu0 %v99
  %224 = vmatpush.msra.mxu0 %v98
  %225 = vmatpush.msra.mxu0 %v97
  %226 = vmatpush.msra.mxu0 %v96
  %227 = vmatpush.msra.mxu0 %v95
  %228 = vmatmul.f32.gmra.mxu0 %v66
  %v229 = vpop.f32.mrf.mxu0
  %v230 = vadd.f32 %v207, %v229
  %231 = vmatmul.f32.gmra.mxu0 %v73
  %v232 = vpop.f32.mrf.mxu0
  %v233 = vadd.f32 %v210, %v232
  %234 = vdwg.mxu0
  %235 = vmatpush.msra.mxu0 %v126
  %236 = vmatpush.msra.mxu0 %v125
  %237 = vmatpush.msra.mxu0 %v124
  %238 = vmatpush.msra.mxu0 %v123
  %239 = vmatpush.msra.mxu0 %v122
  %240 = vmatpush.msra.mxu0 %v121
  %241 = vmatpush.msra.mxu0 %v120
  %242 = vmatpush.msra.mxu0 %v119
  %243 = vmatpush.msra.mxu0 %v118
  %244 = vmatpush.msra.mxu0 %v117
  %245 = vmatpush.msra.mxu0 %v116
  %246 = vmatpush.msra.mxu0 %v115
  %247 = vmatpush.msra.mxu0 %v114
  %248 = vmatpush.msra.mxu0 %v113
  %249 = vmatpush.msra.mxu0 %v112
  %250 = vmatpush.msra.mxu0 %v111
  %251 = vmatmul.f32.gmra.mxu0 %v67
  %v252 = vpop.f32.mrf.mxu0
  %v253 = vadd.f32 %v230, %v252
  %254 = vmatmul.f32.gmra.mxu0 %v74
  %v255 = vpop.f32.mrf.mxu0
  %v256 = vadd.f32 %v233, %v255
  %257 = vdwg.mxu0
  %258 = vmatpush.msra.mxu0 %v142
  %259 = vmatpush.msra.mxu0 %v141
  %260 = vmatpush.msra.mxu0 %v140
  %261 = vmatpush.msra.mxu0 %v139
  %262 = vmatpush.msra.mxu0 %v138
  %263 = vmatpush.msra.mxu0 %v137
  %264 = vmatpush.msra.mxu0 %v136
  %265 = vmatpush.msra.mxu0 %v135
  %266 = vmatpush.msra.mxu0 %v134
  %267 = vmatpush.msra.mxu0 %v133
  %268 = vmatpush.msra.mxu0 %v132
  %269 = vmatpush.msra.mxu0 %v131
  %270 = vmatpush.msra.mxu0 %v130
  %271 = vmatpush.msra.mxu0 %v129
  %272 = vmatpush.msra.mxu0 %v128
  %273 = vmatpush.msra.mxu0 %v127
  %274 = vmatmul.f32.gmra.mxu0 %v68
  %v275 = vpop.f32.mrf.mxu0
  %v276 = vadd.f32 %v253, %v275
  %277 = vmatmul.f32.gmra.mxu0 %v75
  %v278 = vpop.f32.mrf.mxu0
  %v279 = vadd.f32 %v256, %v278
  %280 = vdwg.mxu0
  %281 = vmatpush.msra.mxu0 %v158
  %282 = vmatpush.msra.mxu0 %v157
  %283 = vmatpush.msra.mxu0 %v156
  %284 = vmatpush.msra.mxu0 %v155
  %285 = vmatpush.msra.mxu0 %v154
  %286 = vmatpush.msra.mxu0 %v153
  %287 = vmatpush.msra.mxu0 %v152
  %288 = vmatpush.msra.mxu0 %v151
  %289 = vmatpush.msra.mxu0 %v150
  %290 = vmatpush.msra.mxu0 %v149
  %291 = vmatpush.msra.mxu0 %v148
  %292 = vmatpush.msra.mxu0 %v147
  %293 = vmatpush.msra.mxu0 %v146
  %294 = vmatpush.msra.mxu0 %v145
  %295 = vmatpush.msra.mxu0 %v144
  %296 = vmatpush.msra.mxu0 %v143
  %297 = vmatmul.f32.gmra.mxu0 %v69
  %v298 = vpop.f32.mrf.mxu0
  %v299 = vadd.f32 %v276, %v298
  %300 = vmatmul.f32.gmra.mxu0 %v76
  %v301 = vpop.f32.mrf.mxu0
  %v302 = vadd.f32 %v279, %v301
  %303 = vdwg.mxu0
  %304 = vmatpush.msra.mxu0 %v174
  %305 = vmatpush.msra.mxu0 %v173
  %306 = vmatpush.msra.mxu0 %v172
  %307 = vmatpush.msra.mxu0 %v171
  %308 = vmatpush.msra.mxu0 %v170
  %309 = vmatpush.msra.mxu0 %v169
  %310 = vmatpush.msra.mxu0 %v168
  %311 = vmatpush.msra.mxu0 %v167
  %312 = vmatpush.msra.mxu0 %v166
  %313 = vmatpush.msra.mxu0 %v165
  %314 = vmatpush.msra.mxu0 %v164
  %315 = vmatpush.msra.mxu0 %v163
  %316 = vmatpush.msra.mxu0 %v162
  %317 = vmatpush.msra.mxu0 %v161
  %318 = vmatpush.msra.mxu0 %v160
  %319 = vmatpush.msra.mxu0 %v159
  %320 = vmatmul.f32.gmra.mxu0 %v70
  %v321 = vpop.f32.mrf.mxu0
  %v322 = vadd.f32 %v299, %v321
  %323 = vmatmul.f32.gmra.mxu0 %v77
  %v324 = vpop.f32.mrf.mxu0
  %v325 = vadd.f32 %v302, %v324
  %326 = vdwg.mxu0
  %327 = vmatpush.msra.mxu0 0.0
  %328 = vmatpush.msra.mxu0 0.0
  %329 = vmatpush.msra.mxu0 0.0
  %330 = vmatpush.msra.mxu0 0.0
  %331 = vmatpush.msra.mxu0 0.0
  %332 = vmatpush.msra.mxu0 0.0
  %333 = vmatpush.msra.mxu0 0.0
  %334 = vmatpush.msra.mxu0 0.0
  %335 = vmatpush.msra.mxu0 0.0
  %336 = vmatpush.msra.mxu0 0.0
  %337 = vmatpush.msra.mxu0 0.0
  %338 = vmatpush.msra.mxu0 0.0
  %339 = vmatpush.msra.mxu0 0.0
  %340 = vmatpush.msra.mxu0 0.0
  %341 = vmatpush.msra.mxu0 0.0
  %342 = vmatpush.msra.mxu0 %v187
  %343 = vmatmul.f32.gmra.mxu0 %v180
  %v344 = vpop.f32.mrf.mxu0
  %v345 = vadd.f32 %v322, %v344
  %346 = vmatmul.f32.gmra.mxu0 %v183
  %v347 = vpop.f32.mrf.mxu0
  %v348 = vadd.f32 %v325, %v347
  %349 = vdwg.mxu0
  %v350 = vld [vmem:[%s3] sm:$0xff]
  %v351 = vld [vmem:[%s3 + $0x8] sm:$0x3]
  %v352 = vld [vmem:[%s4] sm:$0x1]
  %v353 = vld [vmem:[%s5] sm:$0x1]
  %vm354 = vcmask 261120
  %v355 = vsel %vm354, %v345, 0.0
  %356 = vadd.xlane.f32.xlu0 %v355
  %v357 = vpop.xlane.xlu0 %356
  %vm358 = vcmask 254976
  %v359 = vsel %vm358, %v348, 0.0
  %360 = vadd.xlane.f32.xlu0 %v359
  %v361 = vpop.xlane.xlu0 %360
  %v362 = vrcp.pop 32.0
  %v363 = vmul.f32 32.0, %v362
  %v364 = vsub.f32 1.0, %v363
  %v365 = vmul.f32 %v362, %v364
  %v366 = vadd.f32 %v362, %v365
  %vm367 = vweird.f32 %v362
  %v368 = vsel %vm367, %v362, %v366
  %v369 = vmul.f32 %v357, %v368
  %v370 = vmul.f32 %v361, %v368
  %v371 = vsub.f32 %v345, %v369
  %v372 = vsub.f32 %v348, %v370
  %v373 = vmul.f32 %v371, %v371
  %v374 = vmul.f32 %v372, %v372
  %v375 = vsel %vm354, %v373, 0.0
  %376 = vadd.xlane.f32.xlu0 %v375
  %v377 = vpop.xlane.xlu0 %376
  %v378 = vsel %vm358, %v374, 0.0
  %379 = vadd.xlane.f32.xlu0 %v378
  %v380 = vpop.xlane.xlu0 %379
  %v381 = vmul.f32 %v377, %v368
  %v382 = vmul.f32 %v380, %v368
  %v383 = vadd.f32 %v381, 1e-06
  %v384 = vadd.f32 %v382, 1e-06
  %v385 = vrsqrt.pop %v383
  %v386 = vmul.f32 %v385, %v383
  %v387 = vmul.f32 %v386, %v385
  %v388 = vmul.f32 0.5, %v387
  %v389 = vsub.f32 1.5, %v388
  %v390 = vmul.f32 %v385, %v389
  %vm391 = vweird.f32 %v383
  %vm392 = vweird.f32 %v385
  %vm393 = vmor %vm391, %vm392
  %v394 = vsel %vm393, %v385, %v390
  %v395 = vrsqrt.pop %v384
  %v396 = vmul.f32 %v395, %v384
  %v397 = vmul.f32 %v396, %v395
  %v398 = vmul.f32 0.5, %v397
  %v399 = vsub.f32 1.5, %v398
  %v400 = vmul.f32 %v395, %v399
  %vm401 = vweird.f32 %v384
  %vm402 = vweird.f32 %v395
  %vm403 = vmor %vm401, %vm402
  %v404 = vsel %vm403, %v395, %v400
  %v405 = vmul.f32 %v371, %v394
  %v406 = vmul.f32 %v372, %v404
  %v408 = vperm.slane %v352, 0
  %v410 = vmul.f32 %v405, %v408
  %v411 = vmul.f32 %v406, %v408
  %v413 = vperm.slane %v353, 0
  %v415 = vadd.f32 %v410, %v413
  %v416 = vadd.f32 %v411, %v413
  %v417 = vld [vmem:[%s6] sm:$0xff]
  %v418 = vld [vmem:[%s6 + $0x8] sm:$0xff]
  %v419 = vld [vmem:[%s6 + $0x10] sm:$0xff]
  %v420 = vld [vmem:[%s6 + $0x18] sm:$0xff]
  %v421 = vld [vmem:[%s7] sm:$0x1]
  %v423 = vperm.slane %v421, 0
  %v426 = vsel %vm354, %v415, 0
  %v429 = vsel %vm354, %v416, 0
  %431 = vmatpush.msra.mxu0 0.0
  %432 = vmatpush.msra.mxu0 0.0
  %433 = vmatpush.msra.mxu0 0.0
  %434 = vmatpush.msra.mxu0 0.0
  %435 = vmatpush.msra.mxu0 0.0
  %436 = vmatpush.msra.mxu0 0.0
  %437 = vmatpush.msra.mxu0 0.0
  %438 = vmatpush.msra.mxu0 0.0
  %439 = vmatpush.msra.mxu0 0.0
  %440 = vmatpush.msra.mxu0 0.0
  %441 = vmatpush.msra.mxu0 0.0
  %442 = vmatpush.msra.mxu0 0.0
  %443 = vmatpush.msra.mxu0 %v420
  %444 = vmatpush.msra.mxu0 %v419
  %445 = vmatpush.msra.mxu0 %v418
  %446 = vmatpush.msra.mxu0 %v417
  %447 = vmatmul.f32.gmra.mxu0 %v426
  %v448 = vpop.f32.mrf.mxu0
  %v449 = vadd.f32 %v423, %v448
  %450 = vmatmul.f32.gmra.mxu0 %v429
  %v451 = vpop.f32.mrf.mxu0
  %v452 = vadd.f32 %v423, %v451
  %453 = vdwg.mxu0
  %v454 = vld [vmem:[%s8] sm:$0xff]
  %v455 = vld [vmem:[%s8 + $0x8] sm:$0xff]
  %v456 = vld [vmem:[%s8 + $0x10] sm:$0xff]
  %v457 = vld [vmem:[%s8 + $0x18] sm:$0xff]
  %v458 = vld [vmem:[%s9] sm:$0x1]
  %v460 = vperm.slane %v458, 0
  %462 = vmatpush.msra.mxu0 0.0
  %463 = vmatpush.msra.mxu0 0.0
  %464 = vmatpush.msra.mxu0 0.0
  %465 = vmatpush.msra.mxu0 0.0
  %466 = vmatpush.msra.mxu0 0.0
  %467 = vmatpush.msra.mxu0 0.0
  %468 = vmatpush.msra.mxu0 0.0
  %469 = vmatpush.msra.mxu0 0.0
  %470 = vmatpush.msra.mxu0 0.0
  %471 = vmatpush.msra.mxu0 0.0
  %472 = vmatpush.msra.mxu0 0.0
  %473 = vmatpush.msra.mxu0 0.0
  %474 = vmatpush.msra.mxu0 %v457
  %475 = vmatpush.msra.mxu0 %v456
  %476 = vmatpush.msra.mxu0 %v455
  %477 = vmatpush.msra.mxu0 %v454
  %478 = vmatmul.f32.gmra.mxu0 %v426
  %v479 = vpop.f32.mrf.mxu0
  %v480 = vadd.f32 %v460, %v479
  %481 = vmatmul.f32.gmra.mxu0 %v429
  %v482 = vpop.f32.mrf.mxu0
  %v483 = vadd.f32 %v460, %v482
  %484 = vdwg.mxu0
  %v485 = vld [vmem:[%s10] sm:$0xff]
  %v486 = vld [vmem:[%s10 + $0x8] sm:$0xff]
  %v487 = vld [vmem:[%s10 + $0x10] sm:$0xff]
  %v488 = vld [vmem:[%s10 + $0x18] sm:$0xff]
  %v489 = vld [vmem:[%s11] sm:$0x1]
  %v491 = vperm.slane %v489, 0
  %493 = vmatpush.msra.mxu0 0.0
  %494 = vmatpush.msra.mxu0 0.0
  %495 = vmatpush.msra.mxu0 0.0
  %496 = vmatpush.msra.mxu0 0.0
  %497 = vmatpush.msra.mxu0 0.0
  %498 = vmatpush.msra.mxu0 0.0
  %499 = vmatpush.msra.mxu0 0.0
  %500 = vmatpush.msra.mxu0 0.0
  %501 = vmatpush.msra.mxu0 0.0
  %502 = vmatpush.msra.mxu0 0.0
  %503 = vmatpush.msra.mxu0 0.0
  %504 = vmatpush.msra.mxu0 0.0
  %505 = vmatpush.msra.mxu0 %v488
  %506 = vmatpush.msra.mxu0 %v487
  %507 = vmatpush.msra.mxu0 %v486
  %508 = vmatpush.msra.mxu0 %v485
  %509 = vmatmul.f32.gmra.mxu0 %v426
  %v510 = vpop.f32.mrf.mxu0
  %v511 = vadd.f32 %v491, %v510
  %512 = vmatmul.f32.gmra.mxu0 %v429
  %v513 = vpop.f32.mrf.mxu0
  %v514 = vadd.f32 %v491, %v513
  %515 = vdwg.mxu0
  %vm516 = vcmask 64512
  %v518 = vsel %vm516, %v449, 0
  %v521 = vsel %vm516, %v452, 0
  %v524 = vsel %vm516, %v480, 0
  %v527 = vsel %vm516, %v483, 0
  %529 = vmatpush.xpose.msra.mxu0 0.0
  %530 = vmatpush.xpose.msra.mxu0 0.0
  %531 = vmatpush.xpose.msra.mxu0 0.0
  %532 = vmatpush.xpose.msra.mxu0 0.0
  %533 = vmatpush.xpose.msra.mxu0 0.0
  %534 = vmatpush.xpose.msra.mxu0 0.0
  %535 = vmatpush.xpose.msra.mxu0 0.0
  %536 = vmatpush.xpose.msra.mxu0 0.0
  %537 = vmatpush.xpose.msra.mxu0 0.0
  %538 = vmatpush.xpose.msra.mxu0 0.0
  %539 = vmatpush.xpose.msra.mxu0 0.0
  %540 = vmatpush.xpose.msra.mxu0 0.0
  %541 = vmatpush.xpose.msra.mxu0 0.0
  %542 = vmatpush.xpose.msra.mxu0 0.0
  %543 = vmatpush.xpose.msra.mxu0 %v527
  %544 = vmatpush.xpose.msra.mxu0 %v524
  %545 = vmatmul.f32.gmra.mxu0 %v518
  %v546 = vpop.f32.mrf.mxu0
  %v547 = vadd.f32 0.0, %v546
  %548 = vmatmul.f32.gmra.mxu0 %v521
  %v549 = vpop.f32.mrf.mxu0
  %v550 = vadd.f32 0.0, %v549
  %551 = vdwg.mxu0
  %v552 = vmul.f32 %v547, 0.35355338
  %v553 = vmul.f32 %v550, 0.35355338
  %v554 = vadd.f32 %v552, %v350
  %v555 = vadd.f32 %v553, %v351
  %vm556 = vcmask 80896
  %v557 = vsel %vm556, %v554, -inf
  %558 = vmax.xlane.f32.xlu0 %v557
  %v559 = vpop.xlane.xlu0 %558
  %vm560 = vcmask 74752
  %v561 = vsel %vm560, %v555, -inf
  %562 = vmax.xlane.f32.xlu0 %v561
  %v563 = vpop.xlane.xlu0 %562
  %v564 = vsub.f32 %v554, %v559
  %v565 = vsub.f32 %v555, %v563
  %v566 = vmul.f32 %v564, 1.442695
  %v567 = vpow.pop %v566
  %v568 = vmul.f32 %v565, 1.442695
  %v569 = vpow.pop %v568
  %v570 = vsel %vm556, %v567, 0.0
  %571 = vadd.xlane.f32.xlu0 %v570
  %v572 = vpop.xlane.xlu0 %571
  %v573 = vsel %vm560, %v569, 0.0
  %574 = vadd.xlane.f32.xlu0 %v573
  %v575 = vpop.xlane.xlu0 %574
  %v576 = vrcp.pop %v572
  %v577 = vmul.f32 %v572, %v576
  %v578 = vsub.f32 1.0, %v577
  %v579 = vmul.f32 %v576, %v578
  %v580 = vadd.f32 %v576, %v579
  %vm581 = vweird.f32 %v572
  %vm582 = vweird.f32 %v576
  %vm583 = vmor %vm581, %vm582
  %v584 = vsel %vm583, %v576, %v580
  %v585 = vand.u32 2147483647, %v572
  %vm586 = vcmp.eq.f32.partialorder %v585, 8.507059e+37
  %v587 = vand.u32 %v572, 2147483648
  %v588 = vor.u32 1.1754944e-38, %v587
  %v589 = vsel %vm586, %v588, %v584
  %v590 = vmul.f32 %v567, %v589
  %v591 = vrcp.pop %v575
  %v592 = vmul.f32 %v575, %v591
  %v593 = vsub.f32 1.0, %v592
  %v594 = vmul.f32 %v591, %v593
  %v595 = vadd.f32 %v591, %v594
  %vm596 = vweird.f32 %v575
  %vm597 = vweird.f32 %v591
  %vm598 = vmor %vm596, %vm597
  %v599 = vsel %vm598, %v591, %v595
  %v600 = vand.u32 2147483647, %v575
  %vm601 = vcmp.eq.f32.partialorder %v600, 8.507059e+37
  %v602 = vand.u32 %v575, 2147483648
  %v603 = vor.u32 1.1754944e-38, %v602
  %v604 = vsel %vm601, %v603, %v599
  %v605 = vmul.f32 %v569, %v604
  %v607 = vsel %vm556, %v590, 0
  %v610 = vsel %vm556, %v605, 0
  %vm612 = vcmask 1041408
  %v614 = vsel %vm612, %v514, 0
  %616 = vmatpush.msra.mxu0 0.0
  %617 = vmatpush.msra.mxu0 0.0
  %618 = vmatpush.msra.mxu0 0.0
  %619 = vmatpush.msra.mxu0 0.0
  %620 = vmatpush.msra.mxu0 0.0
  %621 = vmatpush.msra.mxu0 0.0
  %622 = vmatpush.msra.mxu0 0.0
  %623 = vmatpush.msra.mxu0 0.0
  %624 = vmatpush.msra.mxu0 0.0
  %625 = vmatpush.msra.mxu0 0.0
  %626 = vmatpush.msra.mxu0 0.0
  %627 = vmatpush.msra.mxu0 0.0
  %628 = vmatpush.msra.mxu0 0.0
  %629 = vmatpush.msra.mxu0 0.0
  %630 = vmatpush.msra.mxu0 %v614
  %631 = vmatpush.msra.mxu0 %v511
  %632 = vmatmul.f32.gmra.mxu0 %v607
  %v633 = vpop.f32.mrf.mxu0
  %v634 = vadd.f32 0.0, %v633
  %635 = vmatmul.f32.gmra.mxu0 %v610
  %v636 = vpop.f32.mrf.mxu0
  %v637 = vadd.f32 0.0, %v636
  %638 = vdwg.mxu0
  %v639 = vld [vmem:[%s12] sm:$0xff]
  %s640 = scalar_lea.vmem %s6, 32
  %v641 = vld [vmem:[%s640] sm:$0xff]
  %v642 = vld [vmem:[%s640 + $0x8] sm:$0xff]
  %v643 = vld [vmem:[%s640 + $0x10] sm:$0xff]
  %v644 = vld [vmem:[%s640 + $0x18] sm:$0xff]
  %s645 = scalar_lea.vmem %s7, 1
  %v646 = vld [vmem:[%s645] sm:$0x1]
  %v648 = vperm.slane %v646, 0
  %650 = vmatpush.msra.mxu0 0.0
  %651 = vmatpush.msra.mxu0 0.0
  %652 = vmatpush.msra.mxu0 0.0
  %653 = vmatpush.msra.mxu0 0.0
  %654 = vmatpush.msra.mxu0 0.0
  %655 = vmatpush.msra.mxu0 0.0
  %656 = vmatpush.msra.mxu0 0.0
  %657 = vmatpush.msra.mxu0 0.0
  %658 = vmatpush.msra.mxu0 0.0
  %659 = vmatpush.msra.mxu0 0.0
  %660 = vmatpush.msra.mxu0 0.0
  %661 = vmatpush.msra.mxu0 0.0
  %662 = vmatpush.msra.mxu0 %v644
  %663 = vmatpush.msra.mxu0 %v643
  %664 = vmatpush.msra.mxu0 %v642
  %665 = vmatpush.msra.mxu0 %v641
  %666 = vmatmul.f32.gmra.mxu0 %v426
  %v667 = vpop.f32.mrf.mxu0
  %v668 = vadd.f32 %v648, %v667
  %669 = vmatmul.f32.gmra.mxu0 %v429
  %v670 = vpop.f32.mrf.mxu0
  %v671 = vadd.f32 %v648, %v670
  %672 = vdwg.mxu0
  %s673 = scalar_lea.vmem %s8, 32
  %v674 = vld [vmem:[%s673] sm:$0xff]
  %v675 = vld [vmem:[%s673 + $0x8] sm:$0xff]
  %v676 = vld [vmem:[%s673 + $0x10] sm:$0xff]
  %v677 = vld [vmem:[%s673 + $0x18] sm:$0xff]
  %s678 = scalar_lea.vmem %s9, 1
  %v679 = vld [vmem:[%s678] sm:$0x1]
  %v681 = vperm.slane %v679, 0
  %683 = vmatpush.msra.mxu0 0.0
  %684 = vmatpush.msra.mxu0 0.0
  %685 = vmatpush.msra.mxu0 0.0
  %686 = vmatpush.msra.mxu0 0.0
  %687 = vmatpush.msra.mxu0 0.0
  %688 = vmatpush.msra.mxu0 0.0
  %689 = vmatpush.msra.mxu0 0.0
  %690 = vmatpush.msra.mxu0 0.0
  %691 = vmatpush.msra.mxu0 0.0
  %692 = vmatpush.msra.mxu0 0.0
  %693 = vmatpush.msra.mxu0 0.0
  %694 = vmatpush.msra.mxu0 0.0
  %695 = vmatpush.msra.mxu0 %v677
  %696 = vmatpush.msra.mxu0 %v676
  %697 = vmatpush.msra.mxu0 %v675
  %698 = vmatpush.msra.mxu0 %v674
  %699 = vmatmul.f32.gmra.mxu0 %v426
  %v700 = vpop.f32.mrf.mxu0
  %v701 = vadd.f32 %v681, %v700
  %702 = vmatmul.f32.gmra.mxu0 %v429
  %v703 = vpop.f32.mrf.mxu0
  %v704 = vadd.f32 %v681, %v703
  %705 = vdwg.mxu0
  %s706 = scalar_lea.vmem %s10, 32
  %v707 = vld [vmem:[%s706] sm:$0xff]
  %v708 = vld [vmem:[%s706 + $0x8] sm:$0xff]
  %v709 = vld [vmem:[%s706 + $0x10] sm:$0xff]
  %v710 = vld [vmem:[%s706 + $0x18] sm:$0xff]
  %s711 = scalar_lea.vmem %s11, 1
  %v712 = vld [vmem:[%s711] sm:$0x1]
  %v714 = vperm.slane %v712, 0
  %716 = vmatpush.msra.mxu0 0.0
  %717 = vmatpush.msra.mxu0 0.0
  %718 = vmatpush.msra.mxu0 0.0
  %719 = vmatpush.msra.mxu0 0.0
  %720 = vmatpush.msra.mxu0 0.0
  %721 = vmatpush.msra.mxu0 0.0
  %722 = vmatpush.msra.mxu0 0.0
  %723 = vmatpush.msra.mxu0 0.0
  %724 = vmatpush.msra.mxu0 0.0
  %725 = vmatpush.msra.mxu0 0.0
  %726 = vmatpush.msra.mxu0 0.0
  %727 = vmatpush.msra.mxu0 0.0
  %728 = vmatpush.msra.mxu0 %v710
  %729 = vmatpush.msra.mxu0 %v709
  %730 = vmatpush.msra.mxu0 %v708
  %731 = vmatpush.msra.mxu0 %v707
  %732 = vmatmul.f32.gmra.mxu0 %v426
  %v733 = vpop.f32.mrf.mxu0
  %v734 = vadd.f32 %v714, %v733
  %735 = vmatmul.f32.gmra.mxu0 %v429
  %v736 = vpop.f32.mrf.mxu0
  %v737 = vadd.f32 %v714, %v736
  %738 = vdwg.mxu0
  %v740 = vsel %vm516, %v668, 0
  %v743 = vsel %vm516, %v671, 0
  %v746 = vsel %vm516, %v701, 0
  %v749 = vsel %vm516, %v704, 0
  %751 = vmatpush.xpose.msra.mxu0 0.0
  %752 = vmatpush.xpose.msra.mxu0 0.0
  %753 = vmatpush.xpose.msra.mxu0 0.0
  %754 = vmatpush.xpose.msra.mxu0 0.0
  %755 = vmatpush.xpose.msra.mxu0 0.0
  %756 = vmatpush.xpose.msra.mxu0 0.0
  %757 = vmatpush.xpose.msra.mxu0 0.0
  %758 = vmatpush.xpose.msra.mxu0 0.0
  %759 = vmatpush.xpose.msra.mxu0 0.0
  %760 = vmatpush.xpose.msra.mxu0 0.0
  %761 = vmatpush.xpose.msra.mxu0 0.0
  %762 = vmatpush.xpose.msra.mxu0 0.0
  %763 = vmatpush.xpose.msra.mxu0 0.0
  %764 = vmatpush.xpose.msra.mxu0 0.0
  %765 = vmatpush.xpose.msra.mxu0 %v749
  %766 = vmatpush.xpose.msra.mxu0 %v746
  %767 = vmatmul.f32.gmra.mxu0 %v740
  %v768 = vpop.f32.mrf.mxu0
  %v769 = vadd.f32 0.0, %v768
  %770 = vmatmul.f32.gmra.mxu0 %v743
  %v771 = vpop.f32.mrf.mxu0
  %v772 = vadd.f32 0.0, %v771
  %773 = vdwg.mxu0
  %v774 = vmul.f32 %v769, 0.35355338
  %v775 = vmul.f32 %v772, 0.35355338
  %v776 = vadd.f32 %v774, %v350
  %v777 = vadd.f32 %v775, %v351
  %v778 = vsel %vm556, %v776, -inf
  %779 = vmax.xlane.f32.xlu0 %v778
  %v780 = vpop.xlane.xlu0 %779
  %v781 = vsel %vm560, %v777, -inf
  %782 = vmax.xlane.f32.xlu0 %v781
  %v783 = vpop.xlane.xlu0 %782
  %v784 = vsub.f32 %v776, %v780
  %v785 = vsub.f32 %v777, %v783
  %v786 = vmul.f32 %v784, 1.442695
  %v787 = vpow.pop %v786
  %v788 = vmul.f32 %v785, 1.442695
  %v789 = vpow.pop %v788
  %v790 = vsel %vm556, %v787, 0.0
  %791 = vadd.xlane.f32.xlu0 %v790
  %v792 = vpop.xlane.xlu0 %791
  %v793 = vsel %vm560, %v789, 0.0
  %794 = vadd.xlane.f32.xlu0 %v793
  %v795 = vpop.xlane.xlu0 %794
  %v796 = vrcp.pop %v792
  %v797 = vmul.f32 %v792, %v796
  %v798 = vsub.f32 1.0, %v797
  %v799 = vmul.f32 %v796, %v798
  %v800 = vadd.f32 %v796, %v799
  %vm801 = vweird.f32 %v792
  %vm802 = vweird.f32 %v796
  %vm803 = vmor %vm801, %vm802
  %v804 = vsel %vm803, %v796, %v800
  %v805 = vand.u32 2147483647, %v792
  %vm806 = vcmp.eq.f32.partialorder %v805, 8.507059e+37
  %v807 = vand.u32 %v792, 2147483648
  %v808 = vor.u32 1.1754944e-38, %v807
  %v809 = vsel %vm806, %v808, %v804
  %v810 = vmul.f32 %v787, %v809
  %v811 = vrcp.pop %v795
  %v812 = vmul.f32 %v795, %v811
  %v813 = vsub.f32 1.0, %v812
  %v814 = vmul.f32 %v811, %v813
  %v815 = vadd.f32 %v811, %v814
  %vm816 = vweird.f32 %v795
  %vm817 = vweird.f32 %v811
  %vm818 = vmor %vm816, %vm817
  %v819 = vsel %vm818, %v811, %v815
  %v820 = vand.u32 2147483647, %v795
  %vm821 = vcmp.eq.f32.partialorder %v820, 8.507059e+37
  %v822 = vand.u32 %v795, 2147483648
  %v823 = vor.u32 1.1754944e-38, %v822
  %v824 = vsel %vm821, %v823, %v819
  %v825 = vmul.f32 %v789, %v824
  %v827 = vsel %vm556, %v810, 0
  %v830 = vsel %vm556, %v825, 0
  %v833 = vsel %vm612, %v737, 0
  %835 = vmatpush.msra.mxu0 0.0
  %836 = vmatpush.msra.mxu0 0.0
  %837 = vmatpush.msra.mxu0 0.0
  %838 = vmatpush.msra.mxu0 0.0
  %839 = vmatpush.msra.mxu0 0.0
  %840 = vmatpush.msra.mxu0 0.0
  %841 = vmatpush.msra.mxu0 0.0
  %842 = vmatpush.msra.mxu0 0.0
  %843 = vmatpush.msra.mxu0 0.0
  %844 = vmatpush.msra.mxu0 0.0
  %845 = vmatpush.msra.mxu0 0.0
  %846 = vmatpush.msra.mxu0 0.0
  %847 = vmatpush.msra.mxu0 0.0
  %848 = vmatpush.msra.mxu0 0.0
  %849 = vmatpush.msra.mxu0 %v833
  %850 = vmatpush.msra.mxu0 %v734
  %851 = vmatmul.f32.gmra.mxu0 %v827
  %v852 = vpop.f32.mrf.mxu0
  %v853 = vadd.f32 0.0, %v852
  %854 = vmatmul.f32.gmra.mxu0 %v830
  %v855 = vpop.f32.mrf.mxu0
  %v856 = vadd.f32 0.0, %v855
  %857 = vdwg.mxu0
  %s858 = scalar_lea.vmem %s12, 8
  %v859 = vld [vmem:[%s858] sm:$0xff]
  %v861 = vsel %vm516, %v853, 0
  %v864 = vsel %vm516, %v856, 0
  %866 = vmatpush.msra.mxu0 0.0
  %867 = vmatpush.msra.mxu0 0.0
  %868 = vmatpush.msra.mxu0 0.0
  %869 = vmatpush.msra.mxu0 0.0
  %870 = vmatpush.msra.mxu0 0.0
  %871 = vmatpush.msra.mxu0 0.0
  %872 = vmatpush.msra.mxu0 0.0
  %873 = vmatpush.msra.mxu0 0.0
  %874 = vmatpush.msra.mxu0 0.0
  %875 = vmatpush.msra.mxu0 0.0
  %876 = vmatpush.msra.mxu0 0.0
  %877 = vmatpush.msra.mxu0 0.0
  %878 = vmatpush.msra.mxu0 0.0
  %879 = vmatpush.msra.mxu0 0.0
  %880 = vmatpush.msra.mxu0 0.0
  %881 = vmatpush.msra.mxu0 %v859
  %882 = vmatmul.f32.gmra.mxu0 %v861
  %v883 = vpop.f32.mrf.mxu0
  %v884 = vadd.f32 0.0, %v883
  %885 = vmatmul.f32.gmra.mxu0 %v864
  %v886 = vpop.f32.mrf.mxu0
  %v887 = vadd.f32 0.0, %v886
  %888 = vdwg.mxu0
  %v890 = vsel %vm516, %v634, 0
  %v893 = vsel %vm516, %v637, 0
  %895 = vmatpush.msra.mxu0 0.0
  %896 = vmatpush.msra.mxu0 0.0
  %897 = vmatpush.msra.mxu0 0.0
  %898 = vmatpush.msra.mxu0 0.0
  %899 = vmatpush.msra.mxu0 0.0
  %900 = vmatpush.msra.mxu0 0.0
  %901 = vmatpush.msra.mxu0 0.0
  %902 = vmatpush.msra.mxu0 0.0
  %903 = vmatpush.msra.mxu0 0.0
  %904 = vmatpush.msra.mxu0 0.0
  %905 = vmatpush.msra.mxu0 0.0
  %906 = vmatpush.msra.mxu0 0.0
  %907 = vmatpush.msra.mxu0 0.0
  %908 = vmatpush.msra.mxu0 0.0
  %909 = vmatpush.msra.mxu0 0.0
  %910 = vmatpush.msra.mxu0 %v639
  %911 = vmatmul.f32.gmra.mxu0 %v890
  %v912 = vpop.f32.mrf.mxu0
  %v913 = vadd.f32 %v884, %v912
  %914 = vmatmul.f32.gmra.mxu0 %v893
  %v915 = vpop.f32.mrf.mxu0
  %v916 = vadd.f32 %v887, %v915
  %917 = vdwg.mxu0
  %s918 = scalar_lea.vmem %s6, 64
  %v919 = vld [vmem:[%s918] sm:$0xff]
  %v920 = vld [vmem:[%s918 + $0x8] sm:$0xff]
  %v921 = vld [vmem:[%s918 + $0x10] sm:$0xff]
  %v922 = vld [vmem:[%s918 + $0x18] sm:$0xff]
  %s923 = scalar_lea.vmem %s7, 2
  %v924 = vld [vmem:[%s923] sm:$0x1]
  %v926 = vperm.slane %v924, 0
  %928 = vmatpush.msra.mxu0 0.0
  %929 = vmatpush.msra.mxu0 0.0
  %930 = vmatpush.msra.mxu0 0.0
  %931 = vmatpush.msra.mxu0 0.0
  %932 = vmatpush.msra.mxu0 0.0
  %933 = vmatpush.msra.mxu0 0.0
  %934 = vmatpush.msra.mxu0 0.0
  %935 = vmatpush.msra.mxu0 0.0
  %936 = vmatpush.msra.mxu0 0.0
  %937 = vmatpush.msra.mxu0 0.0
  %938 = vmatpush.msra.mxu0 0.0
  %939 = vmatpush.msra.mxu0 0.0
  %940 = vmatpush.msra.mxu0 %v922
  %941 = vmatpush.msra.mxu0 %v921
  %942 = vmatpush.msra.mxu0 %v920
  %943 = vmatpush.msra.mxu0 %v919
  %944 = vmatmul.f32.gmra.mxu0 %v426
  %v945 = vpop.f32.mrf.mxu0
  %v946 = vadd.f32 %v926, %v945
  %947 = vmatmul.f32.gmra.mxu0 %v429
  %v948 = vpop.f32.mrf.mxu0
  %v949 = vadd.f32 %v926, %v948
  %950 = vdwg.mxu0
  %s951 = scalar_lea.vmem %s8, 64
  %v952 = vld [vmem:[%s951] sm:$0xff]
  %v953 = vld [vmem:[%s951 + $0x8] sm:$0xff]
  %v954 = vld [vmem:[%s951 + $0x10] sm:$0xff]
  %v955 = vld [vmem:[%s951 + $0x18] sm:$0xff]
  %s956 = scalar_lea.vmem %s9, 2
  %v957 = vld [vmem:[%s956] sm:$0x1]
  %v959 = vperm.slane %v957, 0
  %961 = vmatpush.msra.mxu0 0.0
  %962 = vmatpush.msra.mxu0 0.0
  %963 = vmatpush.msra.mxu0 0.0
  %964 = vmatpush.msra.mxu0 0.0
  %965 = vmatpush.msra.mxu0 0.0
  %966 = vmatpush.msra.mxu0 0.0
  %967 = vmatpush.msra.mxu0 0.0
  %968 = vmatpush.msra.mxu0 0.0
  %969 = vmatpush.msra.mxu0 0.0
  %970 = vmatpush.msra.mxu0 0.0
  %971 = vmatpush.msra.mxu0 0.0
  %972 = vmatpush.msra.mxu0 0.0
  %973 = vmatpush.msra.mxu0 %v955
  %974 = vmatpush.msra.mxu0 %v954
  %975 = vmatpush.msra.mxu0 %v953
  %976 = vmatpush.msra.mxu0 %v952
  %977 = vmatmul.f32.gmra.mxu0 %v426
  %v978 = vpop.f32.mrf.mxu0
  %v979 = vadd.f32 %v959, %v978
  %980 = vmatmul.f32.gmra.mxu0 %v429
  %v981 = vpop.f32.mrf.mxu0
  %v982 = vadd.f32 %v959, %v981
  %983 = vdwg.mxu0
  %s984 = scalar_lea.vmem %s10, 64
  %v985 = vld [vmem:[%s984] sm:$0xff]
  %v986 = vld [vmem:[%s984 + $0x8] sm:$0xff]
  %v987 = vld [vmem:[%s984 + $0x10] sm:$0xff]
  %v988 = vld [vmem:[%s984 + $0x18] sm:$0xff]
  %s989 = scalar_lea.vmem %s11, 2
  %v990 = vld [vmem:[%s989] sm:$0x1]
  %v992 = vperm.slane %v990, 0
  %994 = vmatpush.msra.mxu0 0.0
  %995 = vmatpush.msra.mxu0 0.0
  %996 = vmatpush.msra.mxu0 0.0
  %997 = vmatpush.msra.mxu0 0.0
  %998 = vmatpush.msra.mxu0 0.0
  %999 = vmatpush.msra.mxu0 0.0
  %1000 = vmatpush.msra.mxu0 0.0
  %1001 = vmatpush.msra.mxu0 0.0
  %1002 = vmatpush.msra.mxu0 0.0
  %1003 = vmatpush.msra.mxu0 0.0
  %1004 = vmatpush.msra.mxu0 0.0
  %1005 = vmatpush.msra.mxu0 0.0
  %1006 = vmatpush.msra.mxu0 %v988
  %1007 = vmatpush.msra.mxu0 %v987
  %1008 = vmatpush.msra.mxu0 %v986
  %1009 = vmatpush.msra.mxu0 %v985
  %1010 = vmatmul.f32.gmra.mxu0 %v426
  %v1011 = vpop.f32.mrf.mxu0
  %v1012 = vadd.f32 %v992, %v1011
  %1013 = vmatmul.f32.gmra.mxu0 %v429
  %v1014 = vpop.f32.mrf.mxu0
  %v1015 = vadd.f32 %v992, %v1014
  %1016 = vdwg.mxu0
  %v1018 = vsel %vm516, %v946, 0
  %v1021 = vsel %vm516, %v949, 0
  %v1024 = vsel %vm516, %v979, 0
  %v1027 = vsel %vm516, %v982, 0
  %1029 = vmatpush.xpose.msra.mxu0 0.0
  %1030 = vmatpush.xpose.msra.mxu0 0.0
  %1031 = vmatpush.xpose.msra.mxu0 0.0
  %1032 = vmatpush.xpose.msra.mxu0 0.0
  %1033 = vmatpush.xpose.msra.mxu0 0.0
  %1034 = vmatpush.xpose.msra.mxu0 0.0
  %1035 = vmatpush.xpose.msra.mxu0 0.0
  %1036 = vmatpush.xpose.msra.mxu0 0.0
  %1037 = vmatpush.xpose.msra.mxu0 0.0
  %1038 = vmatpush.xpose.msra.mxu0 0.0
  %1039 = vmatpush.xpose.msra.mxu0 0.0
  %1040 = vmatpush.xpose.msra.mxu0 0.0
  %1041 = vmatpush.xpose.msra.mxu0 0.0
  %1042 = vmatpush.xpose.msra.mxu0 0.0
  %1043 = vmatpush.xpose.msra.mxu0 %v1027
  %1044 = vmatpush.xpose.msra.mxu0 %v1024
  %1045 = vmatmul.f32.gmra.mxu0 %v1018
  %v1046 = vpop.f32.mrf.mxu0
  %v1047 = vadd.f32 0.0, %v1046
  %1048 = vmatmul.f32.gmra.mxu0 %v1021
  %v1049 = vpop.f32.mrf.mxu0
  %v1050 = vadd.f32 0.0, %v1049
  %1051 = vdwg.mxu0
  %v1052 = vmul.f32 %v1047, 0.35355338
  %v1053 = vmul.f32 %v1050, 0.35355338
  %v1054 = vadd.f32 %v1052, %v350
  %v1055 = vadd.f32 %v1053, %v351
  %v1056 = vsel %vm556, %v1054, -inf
  %1057 = vmax.xlane.f32.xlu0 %v1056
  %v1058 = vpop.xlane.xlu0 %1057
  %v1059 = vsel %vm560, %v1055, -inf
  %1060 = vmax.xlane.f32.xlu0 %v1059
  %v1061 = vpop.xlane.xlu0 %1060
  %v1062 = vsub.f32 %v1054, %v1058
  %v1063 = vsub.f32 %v1055, %v1061
  %v1064 = vmul.f32 %v1062, 1.442695
  %v1065 = vpow.pop %v1064
  %v1066 = vmul.f32 %v1063, 1.442695
  %v1067 = vpow.pop %v1066
  %v1068 = vsel %vm556, %v1065, 0.0
  %1069 = vadd.xlane.f32.xlu0 %v1068
  %v1070 = vpop.xlane.xlu0 %1069
  %v1071 = vsel %vm560, %v1067, 0.0
  %1072 = vadd.xlane.f32.xlu0 %v1071
  %v1073 = vpop.xlane.xlu0 %1072
  %v1074 = vrcp.pop %v1070
  %v1075 = vmul.f32 %v1070, %v1074
  %v1076 = vsub.f32 1.0, %v1075
  %v1077 = vmul.f32 %v1074, %v1076
  %v1078 = vadd.f32 %v1074, %v1077
  %vm1079 = vweird.f32 %v1070
  %vm1080 = vweird.f32 %v1074
  %vm1081 = vmor %vm1079, %vm1080
  %v1082 = vsel %vm1081, %v1074, %v1078
  %v1083 = vand.u32 2147483647, %v1070
  %vm1084 = vcmp.eq.f32.partialorder %v1083, 8.507059e+37
  %v1085 = vand.u32 %v1070, 2147483648
  %v1086 = vor.u32 1.1754944e-38, %v1085
  %v1087 = vsel %vm1084, %v1086, %v1082
  %v1088 = vmul.f32 %v1065, %v1087
  %v1089 = vrcp.pop %v1073
  %v1090 = vmul.f32 %v1073, %v1089
  %v1091 = vsub.f32 1.0, %v1090
  %v1092 = vmul.f32 %v1089, %v1091
  %v1093 = vadd.f32 %v1089, %v1092
  %vm1094 = vweird.f32 %v1073
  %vm1095 = vweird.f32 %v1089
  %vm1096 = vmor %vm1094, %vm1095
  %v1097 = vsel %vm1096, %v1089, %v1093
  %v1098 = vand.u32 2147483647, %v1073
  %vm1099 = vcmp.eq.f32.partialorder %v1098, 8.507059e+37
  %v1100 = vand.u32 %v1073, 2147483648
  %v1101 = vor.u32 1.1754944e-38, %v1100
  %v1102 = vsel %vm1099, %v1101, %v1097
  %v1103 = vmul.f32 %v1067, %v1102
  %v1105 = vsel %vm556, %v1088, 0
  %v1108 = vsel %vm556, %v1103, 0
  %v1111 = vsel %vm612, %v1015, 0
  %1113 = vmatpush.msra.mxu0 0.0
  %1114 = vmatpush.msra.mxu0 0.0
  %1115 = vmatpush.msra.mxu0 0.0
  %1116 = vmatpush.msra.mxu0 0.0
  %1117 = vmatpush.msra.mxu0 0.0
  %1118 = vmatpush.msra.mxu0 0.0
  %1119 = vmatpush.msra.mxu0 0.0
  %1120 = vmatpush.msra.mxu0 0.0
  %1121 = vmatpush.msra.mxu0 0.0
  %1122 = vmatpush.msra.mxu0 0.0
  %1123 = vmatpush.msra.mxu0 0.0
  %1124 = vmatpush.msra.mxu0 0.0
  %1125 = vmatpush.msra.mxu0 0.0
  %1126 = vmatpush.msra.mxu0 0.0
  %1127 = vmatpush.msra.mxu0 %v1111
  %1128 = vmatpush.msra.mxu0 %v1012
  %1129 = vmatmul.f32.gmra.mxu0 %v1105
  %v1130 = vpop.f32.mrf.mxu0
  %v1131 = vadd.f32 0.0, %v1130
  %1132 = vmatmul.f32.gmra.mxu0 %v1108
  %v1133 = vpop.f32.mrf.mxu0
  %v1134 = vadd.f32 0.0, %v1133
  %1135 = vdwg.mxu0
  %s1136 = scalar_lea.vmem %s12, 16
  %v1137 = vld [vmem:[%s1136] sm:$0xff]
  %v1139 = vsel %vm516, %v1131, 0
  %v1142 = vsel %vm516, %v1134, 0
  %1144 = vmatpush.msra.mxu0 0.0
  %1145 = vmatpush.msra.mxu0 0.0
  %1146 = vmatpush.msra.mxu0 0.0
  %1147 = vmatpush.msra.mxu0 0.0
  %1148 = vmatpush.msra.mxu0 0.0
  %1149 = vmatpush.msra.mxu0 0.0
  %1150 = vmatpush.msra.mxu0 0.0
  %1151 = vmatpush.msra.mxu0 0.0
  %1152 = vmatpush.msra.mxu0 0.0
  %1153 = vmatpush.msra.mxu0 0.0
  %1154 = vmatpush.msra.mxu0 0.0
  %1155 = vmatpush.msra.mxu0 0.0
  %1156 = vmatpush.msra.mxu0 0.0
  %1157 = vmatpush.msra.mxu0 0.0
  %1158 = vmatpush.msra.mxu0 0.0
  %1159 = vmatpush.msra.mxu0 %v1137
  %1160 = vmatmul.f32.gmra.mxu0 %v1139
  %v1161 = vpop.f32.mrf.mxu0
  %v1162 = vadd.f32 0.0, %v1161
  %1163 = vmatmul.f32.gmra.mxu0 %v1142
  %v1164 = vpop.f32.mrf.mxu0
  %v1165 = vadd.f32 0.0, %v1164
  %1166 = vdwg.mxu0
  %v1167 = vadd.f32 %v913, %v1162
  %v1168 = vadd.f32 %v916, %v1165
  %s1169 = scalar_lea.vmem %s6, 96
  %v1170 = vld [vmem:[%s1169] sm:$0xff]
  %v1171 = vld [vmem:[%s1169 + $0x8] sm:$0xff]
  %v1172 = vld [vmem:[%s1169 + $0x10] sm:$0xff]
  %v1173 = vld [vmem:[%s1169 + $0x18] sm:$0xff]
  %s1174 = scalar_lea.vmem %s7, 3
  %v1175 = vld [vmem:[%s1174] sm:$0x1]
  %v1177 = vperm.slane %v1175, 0
  %1179 = vmatpush.msra.mxu0 0.0
  %1180 = vmatpush.msra.mxu0 0.0
  %1181 = vmatpush.msra.mxu0 0.0
  %1182 = vmatpush.msra.mxu0 0.0
  %1183 = vmatpush.msra.mxu0 0.0
  %1184 = vmatpush.msra.mxu0 0.0
  %1185 = vmatpush.msra.mxu0 0.0
  %1186 = vmatpush.msra.mxu0 0.0
  %1187 = vmatpush.msra.mxu0 0.0
  %1188 = vmatpush.msra.mxu0 0.0
  %1189 = vmatpush.msra.mxu0 0.0
  %1190 = vmatpush.msra.mxu0 0.0
  %1191 = vmatpush.msra.mxu0 %v1173
  %1192 = vmatpush.msra.mxu0 %v1172
  %1193 = vmatpush.msra.mxu0 %v1171
  %1194 = vmatpush.msra.mxu0 %v1170
  %1195 = vmatmul.f32.gmra.mxu0 %v426
  %v1196 = vpop.f32.mrf.mxu0
  %v1197 = vadd.f32 %v1177, %v1196
  %1198 = vmatmul.f32.gmra.mxu0 %v429
  %v1199 = vpop.f32.mrf.mxu0
  %v1200 = vadd.f32 %v1177, %v1199
  %1201 = vdwg.mxu0
  %s1202 = scalar_lea.vmem %s8, 96
  %v1203 = vld [vmem:[%s1202] sm:$0xff]
  %v1204 = vld [vmem:[%s1202 + $0x8] sm:$0xff]
  %v1205 = vld [vmem:[%s1202 + $0x10] sm:$0xff]
  %v1206 = vld [vmem:[%s1202 + $0x18] sm:$0xff]
  %s1207 = scalar_lea.vmem %s9, 3
  %v1208 = vld [vmem:[%s1207] sm:$0x1]
  %v1210 = vperm.slane %v1208, 0
  %1212 = vmatpush.msra.mxu0 0.0
  %1213 = vmatpush.msra.mxu0 0.0
  %1214 = vmatpush.msra.mxu0 0.0
  %1215 = vmatpush.msra.mxu0 0.0
  %1216 = vmatpush.msra.mxu0 0.0
  %1217 = vmatpush.msra.mxu0 0.0
  %1218 = vmatpush.msra.mxu0 0.0
  %1219 = vmatpush.msra.mxu0 0.0
  %1220 = vmatpush.msra.mxu0 0.0
  %1221 = vmatpush.msra.mxu0 0.0
  %1222 = vmatpush.msra.mxu0 0.0
  %1223 = vmatpush.msra.mxu0 0.0
  %1224 = vmatpush.msra.mxu0 %v1206
  %1225 = vmatpush.msra.mxu0 %v1205
  %1226 = vmatpush.msra.mxu0 %v1204
  %1227 = vmatpush.msra.mxu0 %v1203
  %1228 = vmatmul.f32.gmra.mxu0 %v426
  %v1229 = vpop.f32.mrf.mxu0
  %v1230 = vadd.f32 %v1210, %v1229
  %1231 = vmatmul.f32.gmra.mxu0 %v429
  %v1232 = vpop.f32.mrf.mxu0
  %v1233 = vadd.f32 %v1210, %v1232
  %1234 = vdwg.mxu0
  %s1235 = scalar_lea.vmem %s10, 96
  %v1236 = vld [vmem:[%s1235] sm:$0xff]
  %v1237 = vld [vmem:[%s1235 + $0x8] sm:$0xff]
  %v1238 = vld [vmem:[%s1235 + $0x10] sm:$0xff]
  %v1239 = vld [vmem:[%s1235 + $0x18] sm:$0xff]
  %s1240 = scalar_lea.vmem %s11, 3
  %v1241 = vld [vmem:[%s1240] sm:$0x1]
  %v1243 = vperm.slane %v1241, 0
  %1245 = vmatpush.msra.mxu0 0.0
  %1246 = vmatpush.msra.mxu0 0.0
  %1247 = vmatpush.msra.mxu0 0.0
  %1248 = vmatpush.msra.mxu0 0.0
  %1249 = vmatpush.msra.mxu0 0.0
  %1250 = vmatpush.msra.mxu0 0.0
  %1251 = vmatpush.msra.mxu0 0.0
  %1252 = vmatpush.msra.mxu0 0.0
  %1253 = vmatpush.msra.mxu0 0.0
  %1254 = vmatpush.msra.mxu0 0.0
  %1255 = vmatpush.msra.mxu0 0.0
  %1256 = vmatpush.msra.mxu0 0.0
  %1257 = vmatpush.msra.mxu0 %v1239
  %1258 = vmatpush.msra.mxu0 %v1238
  %1259 = vmatpush.msra.mxu0 %v1237
  %1260 = vmatpush.msra.mxu0 %v1236
  %1261 = vmatmul.f32.gmra.mxu0 %v426
  %v1262 = vpop.f32.mrf.mxu0
  %v1263 = vadd.f32 %v1243, %v1262
  %1264 = vmatmul.f32.gmra.mxu0 %v429
  %v1265 = vpop.f32.mrf.mxu0
  %v1266 = vadd.f32 %v1243, %v1265
  %1267 = vdwg.mxu0
  %v1269 = vsel %vm516, %v1197, 0
  %v1272 = vsel %vm516, %v1200, 0
  %v1275 = vsel %vm516, %v1230, 0
  %v1278 = vsel %vm516, %v1233, 0
  %1280 = vmatpush.xpose.msra.mxu0 0.0
  %1281 = vmatpush.xpose.msra.mxu0 0.0
  %1282 = vmatpush.xpose.msra.mxu0 0.0
  %1283 = vmatpush.xpose.msra.mxu0 0.0
  %1284 = vmatpush.xpose.msra.mxu0 0.0
  %1285 = vmatpush.xpose.msra.mxu0 0.0
  %1286 = vmatpush.xpose.msra.mxu0 0.0
  %1287 = vmatpush.xpose.msra.mxu0 0.0
  %1288 = vmatpush.xpose.msra.mxu0 0.0
  %1289 = vmatpush.xpose.msra.mxu0 0.0
  %1290 = vmatpush.xpose.msra.mxu0 0.0
  %1291 = vmatpush.xpose.msra.mxu0 0.0
  %1292 = vmatpush.xpose.msra.mxu0 0.0
  %1293 = vmatpush.xpose.msra.mxu0 0.0
  %1294 = vmatpush.xpose.msra.mxu0 %v1278
  %1295 = vmatpush.xpose.msra.mxu0 %v1275
  %1296 = vmatmul.f32.gmra.mxu0 %v1269
  %v1297 = vpop.f32.mrf.mxu0
  %v1298 = vadd.f32 0.0, %v1297
  %1299 = vmatmul.f32.gmra.mxu0 %v1272
  %v1300 = vpop.f32.mrf.mxu0
  %v1301 = vadd.f32 0.0, %v1300
  %1302 = vdwg.mxu0
  %v1303 = vmul.f32 %v1298, 0.35355338
  %v1304 = vmul.f32 %v1301, 0.35355338
  %v1305 = vadd.f32 %v1303, %v350
  %v1306 = vadd.f32 %v1304, %v351
  %v1307 = vsel %vm556, %v1305, -inf
  %1308 = vmax.xlane.f32.xlu0 %v1307
  %v1309 = vpop.xlane.xlu0 %1308
  %v1310 = vsel %vm560, %v1306, -inf
  %1311 = vmax.xlane.f32.xlu0 %v1310
  %v1312 = vpop.xlane.xlu0 %1311
  %v1313 = vsub.f32 %v1305, %v1309
  %v1314 = vsub.f32 %v1306, %v1312
  %v1315 = vmul.f32 %v1313, 1.442695
  %v1316 = vpow.pop %v1315
  %v1317 = vmul.f32 %v1314, 1.442695
  %v1318 = vpow.pop %v1317
  %v1319 = vsel %vm556, %v1316, 0.0
  %1320 = vadd.xlane.f32.xlu0 %v1319
  %v1321 = vpop.xlane.xlu0 %1320
  %v1322 = vsel %vm560, %v1318, 0.0
  %1323 = vadd.xlane.f32.xlu0 %v1322
  %v1324 = vpop.xlane.xlu0 %1323
  %v1325 = vrcp.pop %v1321
  %v1326 = vmul.f32 %v1321, %v1325
  %v1327 = vsub.f32 1.0, %v1326
  %v1328 = vmul.f32 %v1325, %v1327
  %v1329 = vadd.f32 %v1325, %v1328
  %vm1330 = vweird.f32 %v1321
  %vm1331 = vweird.f32 %v1325
  %vm1332 = vmor %vm1330, %vm1331
  %v1333 = vsel %vm1332, %v1325, %v1329
  %v1334 = vand.u32 2147483647, %v1321
  %vm1335 = vcmp.eq.f32.partialorder %v1334, 8.507059e+37
  %v1336 = vand.u32 %v1321, 2147483648
  %v1337 = vor.u32 1.1754944e-38, %v1336
  %v1338 = vsel %vm1335, %v1337, %v1333
  %v1339 = vmul.f32 %v1316, %v1338
  %v1340 = vrcp.pop %v1324
  %v1341 = vmul.f32 %v1324, %v1340
  %v1342 = vsub.f32 1.0, %v1341
  %v1343 = vmul.f32 %v1340, %v1342
  %v1344 = vadd.f32 %v1340, %v1343
  %vm1345 = vweird.f32 %v1324
  %vm1346 = vweird.f32 %v1340
  %vm1347 = vmor %vm1345, %vm1346
  %v1348 = vsel %vm1347, %v1340, %v1344
  %v1349 = vand.u32 2147483647, %v1324
  %vm1350 = vcmp.eq.f32.partialorder %v1349, 8.507059e+37
  %v1351 = vand.u32 %v1324, 2147483648
  %v1352 = vor.u32 1.1754944e-38, %v1351
  %v1353 = vsel %vm1350, %v1352, %v1348
  %v1354 = vmul.f32 %v1318, %v1353
  %v1356 = vsel %vm556, %v1339, 0
  %v1359 = vsel %vm556, %v1354, 0
  %v1362 = vsel %vm612, %v1266, 0
  %1364 = vmatpush.msra.mxu0 0.0
  %1365 = vmatpush.msra.mxu0 0.0
  %1366 = vmatpush.msra.mxu0 0.0
  %1367 = vmatpush.msra.mxu0 0.0
  %1368 = vmatpush.msra.mxu0 0.0
  %1369 = vmatpush.msra.mxu0 0.0
  %1370 = vmatpush.msra.mxu0 0.0
  %1371 = vmatpush.msra.mxu0 0.0
  %1372 = vmatpush.msra.mxu0 0.0
  %1373 = vmatpush.msra.mxu0 0.0
  %1374 = vmatpush.msra.mxu0 0.0
  %1375 = vmatpush.msra.mxu0 0.0
  %1376 = vmatpush.msra.mxu0 0.0
  %1377 = vmatpush.msra.mxu0 0.0
  %1378 = vmatpush.msra.mxu0 %v1362
  %1379 = vmatpush.msra.mxu0 %v1263
  %1380 = vmatmul.f32.gmra.mxu0 %v1356
  %v1381 = vpop.f32.mrf.mxu0
  %v1382 = vadd.f32 0.0, %v1381
  %1383 = vmatmul.f32.gmra.mxu0 %v1359
  %v1384 = vpop.f32.mrf.mxu0
  %v1385 = vadd.f32 0.0, %v1384
  %1386 = vdwg.mxu0
  %s1387 = scalar_lea.vmem %s12, 24
  %v1388 = vld [vmem:[%s1387] sm:$0xff]
  %v1390 = vsel %vm516, %v1382, 0
  %v1393 = vsel %vm516, %v1385, 0
  %1395 = vmatpush.msra.mxu0 0.0
  %1396 = vmatpush.msra.mxu0 0.0
  %1397 = vmatpush.msra.mxu0 0.0
  %1398 = vmatpush.msra.mxu0 0.0
  %1399 = vmatpush.msra.mxu0 0.0
  %1400 = vmatpush.msra.mxu0 0.0
  %1401 = vmatpush.msra.mxu0 0.0
  %1402 = vmatpush.msra.mxu0 0.0
  %1403 = vmatpush.msra.mxu0 0.0
  %1404 = vmatpush.msra.mxu0 0.0
  %1405 = vmatpush.msra.mxu0 0.0
  %1406 = vmatpush.msra.mxu0 0.0
  %1407 = vmatpush.msra.mxu0 0.0
  %1408 = vmatpush.msra.mxu0 0.0
  %1409 = vmatpush.msra.mxu0 0.0
  %1410 = vmatpush.msra.mxu0 %v1388
  %1411 = vmatmul.f32.gmra.mxu0 %v1390
  %v1412 = vpop.f32.mrf.mxu0
  %v1413 = vadd.f32 0.0, %v1412
  %1414 = vmatmul.f32.gmra.mxu0 %v1393
  %v1415 = vpop.f32.mrf.mxu0
  %v1416 = vadd.f32 0.0, %v1415
  %1417 = vdwg.mxu0
  %v1418 = vadd.f32 %v1167, %v1413
  %v1419 = vadd.f32 %v1168, %v1416
  %v1420 = vadd.f32 %v345, %v1418
  %v1421 = vadd.f32 %v348, %v1419
  %v1422 = vld [vmem:[%s13] sm:$0x1]
  %v1424 = vperm.slane %v1422, 0
  %v1426 = vadd.f32 %v1420, %v1424
  %v1427 = vadd.f32 %v1421, %v1424
  %v1428 = vld [vmem:[%s14] sm:$0x1]
  %v1429 = vld [vmem:[%s15] sm:$0x1]
  %v1430 = vsel %vm354, %v1426, 0.0
  %1431 = vadd.xlane.f32.xlu0 %v1430
  %v1432 = vpop.xlane.xlu0 %1431
  %v1433 = vsel %vm358, %v1427, 0.0
  %1434 = vadd.xlane.f32.xlu0 %v1433
  %v1435 = vpop.xlane.xlu0 %1434
  %v1436 = vmul.f32 %v1432, %v368
  %v1437 = vmul.f32 %v1435, %v368
  %v1438 = vsub.f32 %v1426, %v1436
  %v1439 = vsub.f32 %v1427, %v1437
  %v1440 = vmul.f32 %v1438, %v1438
  %v1441 = vmul.f32 %v1439, %v1439
  %v1442 = vsel %vm354, %v1440, 0.0
  %1443 = vadd.xlane.f32.xlu0 %v1442
  %v1444 = vpop.xlane.xlu0 %1443
  %v1445 = vsel %vm358, %v1441, 0.0
  %1446 = vadd.xlane.f32.xlu0 %v1445
  %v1447 = vpop.xlane.xlu0 %1446
  %v1448 = vmul.f32 %v1444, %v368
  %v1449 = vmul.f32 %v1447, %v368
  %v1450 = vadd.f32 %v1448, 1e-06
  %v1451 = vadd.f32 %v1449, 1e-06
  %v1452 = vrsqrt.pop %v1450
  %v1453 = vmul.f32 %v1452, %v1450
  %v1454 = vmul.f32 %v1453, %v1452
  %v1455 = vmul.f32 0.5, %v1454
  %v1456 = vsub.f32 1.5, %v1455
  %v1457 = vmul.f32 %v1452, %v1456
  %vm1458 = vweird.f32 %v1450
  %vm1459 = vweird.f32 %v1452
  %vm1460 = vmor %vm1458, %vm1459
  %v1461 = vsel %vm1460, %v1452, %v1457
  %v1462 = vrsqrt.pop %v1451
  %v1463 = vmul.f32 %v1462, %v1451
  %v1464 = vmul.f32 %v1463, %v1462
  %v1465 = vmul.f32 0.5, %v1464
  %v1466 = vsub.f32 1.5, %v1465
  %v1467 = vmul.f32 %v1462, %v1466
  %vm1468 = vweird.f32 %v1451
  %vm1469 = vweird.f32 %v1462
  %vm1470 = vmor %vm1468, %vm1469
  %v1471 = vsel %vm1470, %v1462, %v1467
  %v1472 = vmul.f32 %v1438, %v1461
  %v1473 = vmul.f32 %v1439, %v1471
  %v1475 = vperm.slane %v1428, 0
  %v1477 = vmul.f32 %v1472, %v1475
  %v1478 = vmul.f32 %v1473, %v1475
  %v1480 = vperm.slane %v1429, 0
  %v1482 = vadd.f32 %v1477, %v1480
  %v1483 = vadd.f32 %v1478, %v1480
  %v1484 = vld [vmem:[%s16] sm:$0xff]
  %v1485 = vld [vmem:[%s16 + $0x8] sm:$0xff]
  %v1486 = vld [vmem:[%s16 + $0x10] sm:$0xff]
  %v1487 = vld [vmem:[%s16 + $0x18] sm:$0xff]
  %v1488 = vld [vmem:[%s17] sm:$0x1]
  %v1490 = vperm.slane %v1488, 0
  %v1493 = vsel %vm354, %v1482, 0
  %v1496 = vsel %vm354, %v1483, 0
  %1498 = vmatpush.msra.mxu0 0.0
  %1499 = vmatpush.msra.mxu0 0.0
  %1500 = vmatpush.msra.mxu0 0.0
  %1501 = vmatpush.msra.mxu0 0.0
  %1502 = vmatpush.msra.mxu0 0.0
  %1503 = vmatpush.msra.mxu0 0.0
  %1504 = vmatpush.msra.mxu0 0.0
  %1505 = vmatpush.msra.mxu0 0.0
  %1506 = vmatpush.msra.mxu0 0.0
  %1507 = vmatpush.msra.mxu0 0.0
  %1508 = vmatpush.msra.mxu0 0.0
  %1509 = vmatpush.msra.mxu0 0.0
  %1510 = vmatpush.msra.mxu0 %v1487
  %1511 = vmatpush.msra.mxu0 %v1486
  %1512 = vmatpush.msra.mxu0 %v1485
  %1513 = vmatpush.msra.mxu0 %v1484
  %1514 = vmatmul.f32.gmra.mxu0 %v1493
  %v1515 = vpop.f32.mrf.mxu0
  %v1516 = vadd.f32 %v1490, %v1515
  %1517 = vmatmul.f32.gmra.mxu0 %v1496
  %v1518 = vpop.f32.mrf.mxu0
  %v1519 = vadd.f32 %v1490, %v1518
  %1520 = vdwg.mxu0
  %v1521 = vmul.f32 %v1516, 0.5
  %v1522 = vmul.f32 %v1519, 0.5
  %v1523 = vmul.f32 %v1516, 0.70710677
  %v1524 = vmul.f32 %v1519, 0.70710677
  %v1525 = vmul.f32 %v1523, %v1523
  %v1526 = vmin.f32 16.0, %v1525
  %v1527 = vmul.f32 %v1526, 2.1237322e-06
  %v1528 = vadd.f32 %v1527, 0.00028619796
  %v1529 = vmul.f32 %v1526, %v1528
  %v1530 = vadd.f32 %v1529, 0.0036580483
  %v1531 = vmul.f32 %v1526, %v1530
  %v1532 = vadd.f32 %v1531, 0.05243302
  %v1533 = vmul.f32 %v1526, %v1532
  %v1534 = vadd.f32 %v1533, 0.18741608
  %v1535 = vmul.f32 %v1526, %v1534
  %v1536 = vadd.f32 %v1535, 1.1283791
  %v1537 = vmul.f32 %v1523, %v1536
  %v1538 = vmul.f32 %v1526, 3.8918573e-05
  %v1539 = vadd.f32 %v1538, 0.001143296
  %v1540 = vmul.f32 %v1526, %v1539
  %v1541 = vadd.f32 %v1540, 0.014752088
  %v1542 = vmul.f32 %v1526, %v1541
  %v1543 = vadd.f32 %v1542, 0.112945676
  %v1544 = vmul.f32 %v1526, %v1543
  %v1545 = vadd.f32 %v1544, 0.4994258
  %v1546 = vmul.f32 %v1526, %v1545
  %v1547 = vadd.f32 %v1546, 1.0
  %v1548 = vrcp.pop %v1547
  %v1549 = vmul.f32 %v1547, %v1548
  %v1550 = vsub.f32 1.0, %v1549
  %v1551 = vmul.f32 %v1548, %v1550
  %v1552 = vadd.f32 %v1548, %v1551
  %vm1553 = vweird.f32 %v1547
  %vm1554 = vweird.f32 %v1548
  %vm1555 = vmor %vm1553, %vm1554
  %v1556 = vsel %vm1555, %v1548, %v1552
  %v1557 = vand.u32 2147483647, %v1547
  %vm1558 = vcmp.eq.f32.partialorder %v1557, 8.507059e+37
  %v1559 = vand.u32 %v1547, 2147483648
  %v1560 = vor.u32 1.1754944e-38, %v1559
  %v1561 = vsel %vm1558, %v1560, %v1556
  %v1562 = vmul.f32 %v1537, %v1561
  %v1563 = vmin.f32 %v1562, 1.0
  %v1564 = vmax.f32 %v1563, -1.0
  %v1565 = vmul.f32 %v1524, %v1524
  %v1566 = vmin.f32 16.0, %v1565
  %v1567 = vmul.f32 %v1566, 2.1237322e-06
  %v1568 = vadd.f32 %v1567, 0.00028619796
  %v1569 = vmul.f32 %v1566, %v1568
  %v1570 = vadd.f32 %v1569, 0.0036580483
  %v1571 = vmul.f32 %v1566, %v1570
  %v1572 = vadd.f32 %v1571, 0.05243302
  %v1573 = vmul.f32 %v1566, %v1572
  %v1574 = vadd.f32 %v1573, 0.18741608
  %v1575 = vmul.f32 %v1566, %v1574
  %v1576 = vadd.f32 %v1575, 1.1283791
  %v1577 = vmul.f32 %v1524, %v1576
  %v1578 = vmul.f32 %v1566, 3.8918573e-05
  %v1579 = vadd.f32 %v1578, 0.001143296
  %v1580 = vmul.f32 %v1566, %v1579
  %v1581 = vadd.f32 %v1580, 0.014752088
  %v1582 = vmul.f32 %v1566, %v1581
  %v1583 = vadd.f32 %v1582, 0.112945676
  %v1584 = vmul.f32 %v1566, %v1583
  %v1585 = vadd.f32 %v1584, 0.4994258
  %v1586 = vmul.f32 %v1566, %v1585
  %v1587 = vadd.f32 %v1586, 1.0
  %v1588 = vrcp.pop %v1587
  %v1589 = vmul.f32 %v1587, %v1588
  %v1590 = vsub.f32 1.0, %v1589
  %v1591 = vmul.f32 %v1588, %v1590
  %v1592 = vadd.f32 %v1588, %v1591
  %vm1593 = vweird.f32 %v1587
  %vm1594 = vweird.f32 %v1588
  %vm1595 = vmor %vm1593, %vm1594
  %v1596 = vsel %vm1595, %v1588, %v1592
  %v1597 = vand.u32 2147483647, %v1587
  %vm1598 = vcmp.eq.f32.partialorder %v1597, 8.507059e+37
  %v1599 = vand.u32 %v1587, 2147483648
  %v1600 = vor.u32 1.1754944e-38, %v1599
  %v1601 = vsel %vm1598, %v1600, %v1596
  %v1602 = vmul.f32 %v1577, %v1601
  %v1603 = vmin.f32 %v1602, 1.0
  %v1604 = vmax.f32 %v1603, -1.0
  %v1605 = vadd.f32 %v1564, 1.0
  %v1606 = vadd.f32 %v1604, 1.0
  %v1607 = vmul.f32 %v1521, %v1605
  %v1608 = vmul.f32 %v1522, %v1606
  %v1609 = vld [vmem:[%s18] sm:$0xff]
  %v1610 = vld [vmem:[%s18 + $0x8] sm:$0xff]
  %v1611 = vld [vmem:[%s18 + $0x10] sm:$0xff]
  %v1612 = vld [vmem:[%s18 + $0x18] sm:$0xff]
  %v1613 = vld [vmem:[%s18 + $0x20] sm:$0xff]
  %v1614 = vld [vmem:[%s18 + $0x28] sm:$0xff]
  %v1615 = vld [vmem:[%s18 + $0x30] sm:$0xff]
  %v1616 = vld [vmem:[%s18 + $0x38] sm:$0xff]
  %v1617 = vld [vmem:[%s18 + $0x40] sm:$0xff]
  %v1618 = vld [vmem:[%s18 + $0x48] sm:$0xff]
  %v1619 = vld [vmem:[%s18 + $0x50] sm:$0xff]
  %v1620 = vld [vmem:[%s18 + $0x58] sm:$0xff]
  %v1621 = vld [vmem:[%s18 + $0x60] sm:$0xff]
  %v1622 = vld [vmem:[%s18 + $0x68] sm:$0xff]
  %v1623 = vld [vmem:[%s18 + $0x70] sm:$0xff]
  %v1624 = vld [vmem:[%s18 + $0x78] sm:$0xff]
  %v1625 = vld [vmem:[%s19] sm:$0x1]
  %v1627 = vperm.slane %v1625, 0
  %1629 = vmatpush.msra.mxu0 %v1624
  %1630 = vmatpush.msra.mxu0 %v1623
  %1631 = vmatpush.msra.mxu0 %v1622
  %1632 = vmatpush.msra.mxu0 %v1621
  %1633 = vmatpush.msra.mxu0 %v1620
  %1634 = vmatpush.msra.mxu0 %v1619
  %1635 = vmatpush.msra.mxu0 %v1618
  %1636 = vmatpush.msra.mxu0 %v1617
  %1637 = vmatpush.msra.mxu0 %v1616
  %1638 = vmatpush.msra.mxu0 %v1615
  %1639 = vmatpush.msra.mxu0 %v1614
  %1640 = vmatpush.msra.mxu0 %v1613
  %1641 = vmatpush.msra.mxu0 %v1612
  %1642 = vmatpush.msra.mxu0 %v1611
  %1643 = vmatpush.msra.mxu0 %v1610
  %1644 = vmatpush.msra.mxu0 %v1609
  %1645 = vmatmul.f32.gmra.mxu0 %v1607
  %v1646 = vpop.f32.mrf.mxu0
  %v1647 = vadd.f32 %v1627, %v1646
  %1648 = vmatmul.f32.gmra.mxu0 %v1608
  %v1649 = vpop.f32.mrf.mxu0
  %v1650 = vadd.f32 %v1627, %v1649
  %1651 = vdwg.mxu0
  %v1652 = vadd.f32 %v1426, %v1647
  %v1653 = vadd.f32 %v1427, %v1650
  %s1654 = scalar_lea.vmem %s4, 1
  %v1655 = vld [vmem:[%s1654] sm:$0x1]
  %s1656 = scalar_lea.vmem %s5, 1
  %v1657 = vld [vmem:[%s1656] sm:$0x1]
  %v1658 = vsel %vm354, %v1652, 0.0
  %1659 = vadd.xlane.f32.xlu0 %v1658
  %v1660 = vpop.xlane.xlu0 %1659
  %v1661 = vsel %vm358, %v1653, 0.0
  %1662 = vadd.xlane.f32.xlu0 %v1661
  %v1663 = vpop.xlane.xlu0 %1662
  %v1664 = vmul.f32 %v1660, %v368
  %v1665 = vmul.f32 %v1663, %v368
  %v1666 = vsub.f32 %v1652, %v1664
  %v1667 = vsub.f32 %v1653, %v1665
  %v1668 = vmul.f32 %v1666, %v1666
  %v1669 = vmul.f32 %v1667, %v1667
  %v1670 = vsel %vm354, %v1668, 0.0
  %1671 = vadd.xlane.f32.xlu0 %v1670
  %v1672 = vpop.xlane.xlu0 %1671
  %v1673 = vsel %vm358, %v1669, 0.0
  %1674 = vadd.xlane.f32.xlu0 %v1673
  %v1675 = vpop.xlane.xlu0 %1674
  %v1676 = vmul.f32 %v1672, %v368
  %v1677 = vmul.f32 %v1675, %v368
  %v1678 = vadd.f32 %v1676, 1e-06
  %v1679 = vadd.f32 %v1677, 1e-06
  %v1680 = vrsqrt.pop %v1678
  %v1681 = vmul.f32 %v1680, %v1678
  %v1682 = vmul.f32 %v1681, %v1680
  %v1683 = vmul.f32 0.5, %v1682
  %v1684 = vsub.f32 1.5, %v1683
  %v1685 = vmul.f32 %v1680, %v1684
  %vm1686 = vweird.f32 %v1678
  %vm1687 = vweird.f32 %v1680
  %vm1688 = vmor %vm1686, %vm1687
  %v1689 = vsel %vm1688, %v1680, %v1685
  %v1690 = vrsqrt.pop %v1679
  %v1691 = vmul.f32 %v1690, %v1679
  %v1692 = vmul.f32 %v1691, %v1690
  %v1693 = vmul.f32 0.5, %v1692
  %v1694 = vsub.f32 1.5, %v1693
  %v1695 = vmul.f32 %v1690, %v1694
  %vm1696 = vweird.f32 %v1679
  %vm1697 = vweird.f32 %v1690
  %vm1698 = vmor %vm1696, %vm1697
  %v1699 = vsel %vm1698, %v1690, %v1695
  %v1700 = vmul.f32 %v1666, %v1689
  %v1701 = vmul.f32 %v1667, %v1699
  %v1703 = vperm.slane %v1655, 0
  %v1705 = vmul.f32 %v1700, %v1703
  %v1706 = vmul.f32 %v1701, %v1703
  %v1708 = vperm.slane %v1657, 0
  %v1710 = vadd.f32 %v1705, %v1708
  %v1711 = vadd.f32 %v1706, %v1708
  %s1712 = scalar_lea.vmem %s6, 128
  %v1713 = vld [vmem:[%s1712] sm:$0xff]
  %v1714 = vld [vmem:[%s1712 + $0x8] sm:$0xff]
  %v1715 = vld [vmem:[%s1712 + $0x10] sm:$0xff]
  %v1716 = vld [vmem:[%s1712 + $0x18] sm:$0xff]
  %s1717 = scalar_lea.vmem %s7, 4
  %v1718 = vld [vmem:[%s1717] sm:$0x1]
  %v1720 = vperm.slane %v1718, 0
  %v1723 = vsel %vm354, %v1710, 0
  %v1726 = vsel %vm354, %v1711, 0
  %1728 = vmatpush.msra.mxu0 0.0
  %1729 = vmatpush.msra.mxu0 0.0
  %1730 = vmatpush.msra.mxu0 0.0
  %1731 = vmatpush.msra.mxu0 0.0
  %1732 = vmatpush.msra.mxu0 0.0
  %1733 = vmatpush.msra.mxu0 0.0
  %1734 = vmatpush.msra.mxu0 0.0
  %1735 = vmatpush.msra.mxu0 0.0
  %1736 = vmatpush.msra.mxu0 0.0
  %1737 = vmatpush.msra.mxu0 0.0
  %1738 = vmatpush.msra.mxu0 0.0
  %1739 = vmatpush.msra.mxu0 0.0
  %1740 = vmatpush.msra.mxu0 %v1716
  %1741 = vmatpush.msra.mxu0 %v1715
  %1742 = vmatpush.msra.mxu0 %v1714
  %1743 = vmatpush.msra.mxu0 %v1713
  %1744 = vmatmul.f32.gmra.mxu0 %v1723
  %v1745 = vpop.f32.mrf.mxu0
  %v1746 = vadd.f32 %v1720, %v1745
  %1747 = vmatmul.f32.gmra.mxu0 %v1726
  %v1748 = vpop.f32.mrf.mxu0
  %v1749 = vadd.f32 %v1720, %v1748
  %1750 = vdwg.mxu0
  %s1751 = scalar_lea.vmem %s8, 128
  %v1752 = vld [vmem:[%s1751] sm:$0xff]
  %v1753 = vld [vmem:[%s1751 + $0x8] sm:$0xff]
  %v1754 = vld [vmem:[%s1751 + $0x10] sm:$0xff]
  %v1755 = vld [vmem:[%s1751 + $0x18] sm:$0xff]
  %s1756 = scalar_lea.vmem %s9, 4
  %v1757 = vld [vmem:[%s1756] sm:$0x1]
  %v1759 = vperm.slane %v1757, 0
  %1761 = vmatpush.msra.mxu0 0.0
  %1762 = vmatpush.msra.mxu0 0.0
  %1763 = vmatpush.msra.mxu0 0.0
  %1764 = vmatpush.msra.mxu0 0.0
  %1765 = vmatpush.msra.mxu0 0.0
  %1766 = vmatpush.msra.mxu0 0.0
  %1767 = vmatpush.msra.mxu0 0.0
  %1768 = vmatpush.msra.mxu0 0.0
  %1769 = vmatpush.msra.mxu0 0.0
  %1770 = vmatpush.msra.mxu0 0.0
  %1771 = vmatpush.msra.mxu0 0.0
  %1772 = vmatpush.msra.mxu0 0.0
  %1773 = vmatpush.msra.mxu0 %v1755
  %1774 = vmatpush.msra.mxu0 %v1754
  %1775 = vmatpush.msra.mxu0 %v1753
  %1776 = vmatpush.msra.mxu0 %v1752
  %1777 = vmatmul.f32.gmra.mxu0 %v1723
  %v1778 = vpop.f32.mrf.mxu0
  %v1779 = vadd.f32 %v1759, %v1778
  %1780 = vmatmul.f32.gmra.mxu0 %v1726
  %v1781 = vpop.f32.mrf.mxu0
  %v1782 = vadd.f32 %v1759, %v1781
  %1783 = vdwg.mxu0
  %s1784 = scalar_lea.vmem %s10, 128
  %v1785 = vld [vmem:[%s1784] sm:$0xff]
  %v1786 = vld [vmem:[%s1784 + $0x8] sm:$0xff]
  %v1787 = vld [vmem:[%s1784 + $0x10] sm:$0xff]
  %v1788 = vld [vmem:[%s1784 + $0x18] sm:$0xff]
  %s1789 = scalar_lea.vmem %s11, 4
  %v1790 = vld [vmem:[%s1789] sm:$0x1]
  %v1792 = vperm.slane %v1790, 0
  %1794 = vmatpush.msra.mxu0 0.0
  %1795 = vmatpush.msra.mxu0 0.0
  %1796 = vmatpush.msra.mxu0 0.0
  %1797 = vmatpush.msra.mxu0 0.0
  %1798 = vmatpush.msra.mxu0 0.0
  %1799 = vmatpush.msra.mxu0 0.0
  %1800 = vmatpush.msra.mxu0 0.0
  %1801 = vmatpush.msra.mxu0 0.0
  %1802 = vmatpush.msra.mxu0 0.0
  %1803 = vmatpush.msra.mxu0 0.0
  %1804 = vmatpush.msra.mxu0 0.0
  %1805 = vmatpush.msra.mxu0 0.0
  %1806 = vmatpush.msra.mxu0 %v1788
  %1807 = vmatpush.msra.mxu0 %v1787
  %1808 = vmatpush.msra.mxu0 %v1786
  %1809 = vmatpush.msra.mxu0 %v1785
  %1810 = vmatmul.f32.gmra.mxu0 %v1723
  %v1811 = vpop.f32.mrf.mxu0
  %v1812 = vadd.f32 %v1792, %v1811
  %1813 = vmatmul.f32.gmra.mxu0 %v1726
  %v1814 = vpop.f32.mrf.mxu0
  %v1815 = vadd.f32 %v1792, %v1814
  %1816 = vdwg.mxu0
  %v1818 = vsel %vm516, %v1746, 0
  %v1821 = vsel %vm516, %v1749, 0
  %v1824 = vsel %vm516, %v1779, 0
  %v1827 = vsel %vm516, %v1782, 0
  %1829 = vmatpush.xpose.msra.mxu0 0.0
  %1830 = vmatpush.xpose.msra.mxu0 0.0
  %1831 = vmatpush.xpose.msra.mxu0 0.0
  %1832 = vmatpush.xpose.msra.mxu0 0.0
  %1833 = vmatpush.xpose.msra.mxu0 0.0
  %1834 = vmatpush.xpose.msra.mxu0 0.0
  %1835 = vmatpush.xpose.msra.mxu0 0.0
  %1836 = vmatpush.xpose.msra.mxu0 0.0
  %1837 = vmatpush.xpose.msra.mxu0 0.0
  %1838 = vmatpush.xpose.msra.mxu0 0.0
  %1839 = vmatpush.xpose.msra.mxu0 0.0
  %1840 = vmatpush.xpose.msra.mxu0 0.0
  %1841 = vmatpush.xpose.msra.mxu0 0.0
  %1842 = vmatpush.xpose.msra.mxu0 0.0
  %1843 = vmatpush.xpose.msra.mxu0 %v1827
  %1844 = vmatpush.xpose.msra.mxu0 %v1824
  %1845 = vmatmul.f32.gmra.mxu0 %v1818
  %v1846 = vpop.f32.mrf.mxu0
  %v1847 = vadd.f32 0.0, %v1846
  %1848 = vmatmul.f32.gmra.mxu0 %v1821
  %v1849 = vpop.f32.mrf.mxu0
  %v1850 = vadd.f32 0.0, %v1849
  %1851 = vdwg.mxu0
  %v1852 = vmul.f32 %v1847, 0.35355338
  %v1853 = vmul.f32 %v1850, 0.35355338
  %v1854 = vadd.f32 %v1852, %v350
  %v1855 = vadd.f32 %v1853, %v351
  %v1856 = vsel %vm556, %v1854, -inf
  %1857 = vmax.xlane.f32.xlu0 %v1856
  %v1858 = vpop.xlane.xlu0 %1857
  %v1859 = vsel %vm560, %v1855, -inf
  %1860 = vmax.xlane.f32.xlu0 %v1859
  %v1861 = vpop.xlane.xlu0 %1860
  %v1862 = vsub.f32 %v1854, %v1858
  %v1863 = vsub.f32 %v1855, %v1861
  %v1864 = vmul.f32 %v1862, 1.442695
  %v1865 = vpow.pop %v1864
  %v1866 = vmul.f32 %v1863, 1.442695
  %v1867 = vpow.pop %v1866
  %v1868 = vsel %vm556, %v1865, 0.0
  %1869 = vadd.xlane.f32.xlu0 %v1868
  %v1870 = vpop.xlane.xlu0 %1869
  %v1871 = vsel %vm560, %v1867, 0.0
  %1872 = vadd.xlane.f32.xlu0 %v1871
  %v1873 = vpop.xlane.xlu0 %1872
  %v1874 = vrcp.pop %v1870
  %v1875 = vmul.f32 %v1870, %v1874
  %v1876 = vsub.f32 1.0, %v1875
  %v1877 = vmul.f32 %v1874, %v1876
  %v1878 = vadd.f32 %v1874, %v1877
  %vm1879 = vweird.f32 %v1870
  %vm1880 = vweird.f32 %v1874
  %vm1881 = vmor %vm1879, %vm1880
  %v1882 = vsel %vm1881, %v1874, %v1878
  %v1883 = vand.u32 2147483647, %v1870
  %vm1884 = vcmp.eq.f32.partialorder %v1883, 8.507059e+37
  %v1885 = vand.u32 %v1870, 2147483648
  %v1886 = vor.u32 1.1754944e-38, %v1885
  %v1887 = vsel %vm1884, %v1886, %v1882
  %v1888 = vmul.f32 %v1865, %v1887
  %v1889 = vrcp.pop %v1873
  %v1890 = vmul.f32 %v1873, %v1889
  %v1891 = vsub.f32 1.0, %v1890
  %v1892 = vmul.f32 %v1889, %v1891
  %v1893 = vadd.f32 %v1889, %v1892
  %vm1894 = vweird.f32 %v1873
  %vm1895 = vweird.f32 %v1889
  %vm1896 = vmor %vm1894, %vm1895
  %v1897 = vsel %vm1896, %v1889, %v1893
  %v1898 = vand.u32 2147483647, %v1873
  %vm1899 = vcmp.eq.f32.partialorder %v1898, 8.507059e+37
  %v1900 = vand.u32 %v1873, 2147483648
  %v1901 = vor.u32 1.1754944e-38, %v1900
  %v1902 = vsel %vm1899, %v1901, %v1897
  %v1903 = vmul.f32 %v1867, %v1902
  %v1905 = vsel %vm556, %v1888, 0
  %v1908 = vsel %vm556, %v1903, 0
  %v1911 = vsel %vm612, %v1815, 0
  %1913 = vmatpush.msra.mxu0 0.0
  %1914 = vmatpush.msra.mxu0 0.0
  %1915 = vmatpush.msra.mxu0 0.0
  %1916 = vmatpush.msra.mxu0 0.0
  %1917 = vmatpush.msra.mxu0 0.0
  %1918 = vmatpush.msra.mxu0 0.0
  %1919 = vmatpush.msra.mxu0 0.0
  %1920 = vmatpush.msra.mxu0 0.0
  %1921 = vmatpush.msra.mxu0 0.0
  %1922 = vmatpush.msra.mxu0 0.0
  %1923 = vmatpush.msra.mxu0 0.0
  %1924 = vmatpush.msra.mxu0 0.0
  %1925 = vmatpush.msra.mxu0 0.0
  %1926 = vmatpush.msra.mxu0 0.0
  %1927 = vmatpush.msra.mxu0 %v1911
  %1928 = vmatpush.msra.mxu0 %v1812
  %1929 = vmatmul.f32.gmra.mxu0 %v1905
  %v1930 = vpop.f32.mrf.mxu0
  %v1931 = vadd.f32 0.0, %v1930
  %1932 = vmatmul.f32.gmra.mxu0 %v1908
  %v1933 = vpop.f32.mrf.mxu0
  %v1934 = vadd.f32 0.0, %v1933
  %1935 = vdwg.mxu0
  %s1936 = scalar_lea.vmem %s12, 32
  %v1937 = vld [vmem:[%s1936] sm:$0xff]
  %s1938 = scalar_lea.vmem %s6, 160
  %v1939 = vld [vmem:[%s1938] sm:$0xff]
  %v1940 = vld [vmem:[%s1938 + $0x8] sm:$0xff]
  %v1941 = vld [vmem:[%s1938 + $0x10] sm:$0xff]
  %v1942 = vld [vmem:[%s1938 + $0x18] sm:$0xff]
  %s1943 = scalar_lea.vmem %s7, 5
  %v1944 = vld [vmem:[%s1943] sm:$0x1]
  %v1946 = vperm.slane %v1944, 0
  %1948 = vmatpush.msra.mxu0 0.0
  %1949 = vmatpush.msra.mxu0 0.0
  %1950 = vmatpush.msra.mxu0 0.0
  %1951 = vmatpush.msra.mxu0 0.0
  %1952 = vmatpush.msra.mxu0 0.0
  %1953 = vmatpush.msra.mxu0 0.0
  %1954 = vmatpush.msra.mxu0 0.0
  %1955 = vmatpush.msra.mxu0 0.0
  %1956 = vmatpush.msra.mxu0 0.0
  %1957 = vmatpush.msra.mxu0 0.0
  %1958 = vmatpush.msra.mxu0 0.0
  %1959 = vmatpush.msra.mxu0 0.0
  %1960 = vmatpush.msra.mxu0 %v1942
  %1961 = vmatpush.msra.mxu0 %v1941
  %1962 = vmatpush.msra.mxu0 %v1940
  %1963 = vmatpush.msra.mxu0 %v1939
  %1964 = vmatmul.f32.gmra.mxu0 %v1723
  %v1965 = vpop.f32.mrf.mxu0
  %v1966 = vadd.f32 %v1946, %v1965
  %1967 = vmatmul.f32.gmra.mxu0 %v1726
  %v1968 = vpop.f32.mrf.mxu0
  %v1969 = vadd.f32 %v1946, %v1968
  %1970 = vdwg.mxu0
  %s1971 = scalar_lea.vmem %s8, 160
  %v1972 = vld [vmem:[%s1971] sm:$0xff]
  %v1973 = vld [vmem:[%s1971 + $0x8] sm:$0xff]
  %v1974 = vld [vmem:[%s1971 + $0x10] sm:$0xff]
  %v1975 = vld [vmem:[%s1971 + $0x18] sm:$0xff]
  %s1976 = scalar_lea.vmem %s9, 5
  %v1977 = vld [vmem:[%s1976] sm:$0x1]
  %v1979 = vperm.slane %v1977, 0
  %1981 = vmatpush.msra.mxu0 0.0
  %1982 = vmatpush.msra.mxu0 0.0
  %1983 = vmatpush.msra.mxu0 0.0
  %1984 = vmatpush.msra.mxu0 0.0
  %1985 = vmatpush.msra.mxu0 0.0
  %1986 = vmatpush.msra.mxu0 0.0
  %1987 = vmatpush.msra.mxu0 0.0
  %1988 = vmatpush.msra.mxu0 0.0
  %1989 = vmatpush.msra.mxu0 0.0
  %1990 = vmatpush.msra.mxu0 0.0
  %1991 = vmatpush.msra.mxu0 0.0
  %1992 = vmatpush.msra.mxu0 0.0
  %1993 = vmatpush.msra.mxu0 %v1975
  %1994 = vmatpush.msra.mxu0 %v1974
  %1995 = vmatpush.msra.mxu0 %v1973
  %1996 = vmatpush.msra.mxu0 %v1972
  %1997 = vmatmul.f32.gmra.mxu0 %v1723
  %v1998 = vpop.f32.mrf.mxu0
  %v1999 = vadd.f32 %v1979, %v1998
  %2000 = vmatmul.f32.gmra.mxu0 %v1726
  %v2001 = vpop.f32.mrf.mxu0
  %v2002 = vadd.f32 %v1979, %v2001
  %2003 = vdwg.mxu0
  %s2004 = scalar_lea.vmem %s10, 160
  %v2005 = vld [vmem:[%s2004] sm:$0xff]
  %v2006 = vld [vmem:[%s2004 + $0x8] sm:$0xff]
  %v2007 = vld [vmem:[%s2004 + $0x10] sm:$0xff]
  %v2008 = vld [vmem:[%s2004 + $0x18] sm:$0xff]
  %s2009 = scalar_lea.vmem %s11, 5
  %v2010 = vld [vmem:[%s2009] sm:$0x1]
  %v2012 = vperm.slane %v2010, 0
  %2014 = vmatpush.msra.mxu0 0.0
  %2015 = vmatpush.msra.mxu0 0.0
  %2016 = vmatpush.msra.mxu0 0.0
  %2017 = vmatpush.msra.mxu0 0.0
  %2018 = vmatpush.msra.mxu0 0.0
  %2019 = vmatpush.msra.mxu0 0.0
  %2020 = vmatpush.msra.mxu0 0.0
  %2021 = vmatpush.msra.mxu0 0.0
  %2022 = vmatpush.msra.mxu0 0.0
  %2023 = vmatpush.msra.mxu0 0.0
  %2024 = vmatpush.msra.mxu0 0.0
  %2025 = vmatpush.msra.mxu0 0.0
  %2026 = vmatpush.msra.mxu0 %v2008
  %2027 = vmatpush.msra.mxu0 %v2007
  %2028 = vmatpush.msra.mxu0 %v2006
  %2029 = vmatpush.msra.mxu0 %v2005
  %2030 = vmatmul.f32.gmra.mxu0 %v1723
  %v2031 = vpop.f32.mrf.mxu0
  %v2032 = vadd.f32 %v2012, %v2031
  %2033 = vmatmul.f32.gmra.mxu0 %v1726
  %v2034 = vpop.f32.mrf.mxu0
  %v2035 = vadd.f32 %v2012, %v2034
  %2036 = vdwg.mxu0
  %v2038 = vsel %vm516, %v1966, 0
  %v2041 = vsel %vm516, %v1969, 0
  %v2044 = vsel %vm516, %v1999, 0
  %v2047 = vsel %vm516, %v2002, 0
  %2049 = vmatpush.xpose.msra.mxu0 0.0
  %2050 = vmatpush.xpose.msra.mxu0 0.0
  %2051 = vmatpush.xpose.msra.mxu0 0.0
  %2052 = vmatpush.xpose.msra.mxu0 0.0
  %2053 = vmatpush.xpose.msra.mxu0 0.0
  %2054 = vmatpush.xpose.msra.mxu0 0.0
  %2055 = vmatpush.xpose.msra.mxu0 0.0
  %2056 = vmatpush.xpose.msra.mxu0 0.0
  %2057 = vmatpush.xpose.msra.mxu0 0.0
  %2058 = vmatpush.xpose.msra.mxu0 0.0
  %2059 = vmatpush.xpose.msra.mxu0 0.0
  %2060 = vmatpush.xpose.msra.mxu0 0.0
  %2061 = vmatpush.xpose.msra.mxu0 0.0
  %2062 = vmatpush.xpose.msra.mxu0 0.0
  %2063 = vmatpush.xpose.msra.mxu0 %v2047
  %2064 = vmatpush.xpose.msra.mxu0 %v2044
  %2065 = vmatmul.f32.gmra.mxu0 %v2038
  %v2066 = vpop.f32.mrf.mxu0
  %v2067 = vadd.f32 0.0, %v2066
  %2068 = vmatmul.f32.gmra.mxu0 %v2041
  %v2069 = vpop.f32.mrf.mxu0
  %v2070 = vadd.f32 0.0, %v2069
  %2071 = vdwg.mxu0
  %v2072 = vmul.f32 %v2067, 0.35355338
  %v2073 = vmul.f32 %v2070, 0.35355338
  %v2074 = vadd.f32 %v2072, %v350
  %v2075 = vadd.f32 %v2073, %v351
  %v2076 = vsel %vm556, %v2074, -inf
  %2077 = vmax.xlane.f32.xlu0 %v2076
  %v2078 = vpop.xlane.xlu0 %2077
  %v2079 = vsel %vm560, %v2075, -inf
  %2080 = vmax.xlane.f32.xlu0 %v2079
  %v2081 = vpop.xlane.xlu0 %2080
  %v2082 = vsub.f32 %v2074, %v2078
  %v2083 = vsub.f32 %v2075, %v2081
  %v2084 = vmul.f32 %v2082, 1.442695
  %v2085 = vpow.pop %v2084
  %v2086 = vmul.f32 %v2083, 1.442695
  %v2087 = vpow.pop %v2086
  %v2088 = vsel %vm556, %v2085, 0.0
  %2089 = vadd.xlane.f32.xlu0 %v2088
  %v2090 = vpop.xlane.xlu0 %2089
  %v2091 = vsel %vm560, %v2087, 0.0
  %2092 = vadd.xlane.f32.xlu0 %v2091
  %v2093 = vpop.xlane.xlu0 %2092
  %v2094 = vrcp.pop %v2090
  %v2095 = vmul.f32 %v2090, %v2094
  %v2096 = vsub.f32 1.0, %v2095
  %v2097 = vmul.f32 %v2094, %v2096
  %v2098 = vadd.f32 %v2094, %v2097
  %vm2099 = vweird.f32 %v2090
  %vm2100 = vweird.f32 %v2094
  %vm2101 = vmor %vm2099, %vm2100
  %v2102 = vsel %vm2101, %v2094, %v2098
  %v2103 = vand.u32 2147483647, %v2090
  %vm2104 = vcmp.eq.f32.partialorder %v2103, 8.507059e+37
  %v2105 = vand.u32 %v2090, 2147483648
  %v2106 = vor.u32 1.1754944e-38, %v2105
  %v2107 = vsel %vm2104, %v2106, %v2102
  %v2108 = vmul.f32 %v2085, %v2107
  %v2109 = vrcp.pop %v2093
  %v2110 = vmul.f32 %v2093, %v2109
  %v2111 = vsub.f32 1.0, %v2110
  %v2112 = vmul.f32 %v2109, %v2111
  %v2113 = vadd.f32 %v2109, %v2112
  %vm2114 = vweird.f32 %v2093
  %vm2115 = vweird.f32 %v2109
  %vm2116 = vmor %vm2114, %vm2115
  %v2117 = vsel %vm2116, %v2109, %v2113
  %v2118 = vand.u32 2147483647, %v2093
  %vm2119 = vcmp.eq.f32.partialorder %v2118, 8.507059e+37
  %v2120 = vand.u32 %v2093, 2147483648
  %v2121 = vor.u32 1.1754944e-38, %v2120
  %v2122 = vsel %vm2119, %v2121, %v2117
  %v2123 = vmul.f32 %v2087, %v2122
  %v2125 = vsel %vm556, %v2108, 0
  %v2128 = vsel %vm556, %v2123, 0
  %v2131 = vsel %vm612, %v2035, 0
  %2133 = vmatpush.msra.mxu0 0.0
  %2134 = vmatpush.msra.mxu0 0.0
  %2135 = vmatpush.msra.mxu0 0.0
  %2136 = vmatpush.msra.mxu0 0.0
  %2137 = vmatpush.msra.mxu0 0.0
  %2138 = vmatpush.msra.mxu0 0.0
  %2139 = vmatpush.msra.mxu0 0.0
  %2140 = vmatpush.msra.mxu0 0.0
  %2141 = vmatpush.msra.mxu0 0.0
  %2142 = vmatpush.msra.mxu0 0.0
  %2143 = vmatpush.msra.mxu0 0.0
  %2144 = vmatpush.msra.mxu0 0.0
  %2145 = vmatpush.msra.mxu0 0.0
  %2146 = vmatpush.msra.mxu0 0.0
  %2147 = vmatpush.msra.mxu0 %v2131
  %2148 = vmatpush.msra.mxu0 %v2032
  %2149 = vmatmul.f32.gmra.mxu0 %v2125
  %v2150 = vpop.f32.mrf.mxu0
  %v2151 = vadd.f32 0.0, %v2150
  %2152 = vmatmul.f32.gmra.mxu0 %v2128
  %v2153 = vpop.f32.mrf.mxu0
  %v2154 = vadd.f32 0.0, %v2153
  %2155 = vdwg.mxu0
  %s2156 = scalar_lea.vmem %s12, 40
  %v2157 = vld [vmem:[%s2156] sm:$0xff]
  %v2159 = vsel %vm516, %v2151, 0
  %v2162 = vsel %vm516, %v2154, 0
  %2164 = vmatpush.msra.mxu0 0.0
  %2165 = vmatpush.msra.mxu0 0.0
  %2166 = vmatpush.msra.mxu0 0.0
  %2167 = vmatpush.msra.mxu0 0.0
  %2168 = vmatpush.msra.mxu0 0.0
  %2169 = vmatpush.msra.mxu0 0.0
  %2170 = vmatpush.msra.mxu0 0.0
  %2171 = vmatpush.msra.mxu0 0.0
  %2172 = vmatpush.msra.mxu0 0.0
  %2173 = vmatpush.msra.mxu0 0.0
  %2174 = vmatpush.msra.mxu0 0.0
  %2175 = vmatpush.msra.mxu0 0.0
  %2176 = vmatpush.msra.mxu0 0.0
  %2177 = vmatpush.msra.mxu0 0.0
  %2178 = vmatpush.msra.mxu0 0.0
  %2179 = vmatpush.msra.mxu0 %v2157
  %2180 = vmatmul.f32.gmra.mxu0 %v2159
  %v2181 = vpop.f32.mrf.mxu0
  %v2182 = vadd.f32 0.0, %v2181
  %2183 = vmatmul.f32.gmra.mxu0 %v2162
  %v2184 = vpop.f32.mrf.mxu0
  %v2185 = vadd.f32 0.0, %v2184
  %2186 = vdwg.mxu0
  %v2188 = vsel %vm516, %v1931, 0
  %v2191 = vsel %vm516, %v1934, 0
  %2193 = vmatpush.msra.mxu0 0.0
  %2194 = vmatpush.msra.mxu0 0.0
  %2195 = vmatpush.msra.mxu0 0.0
  %2196 = vmatpush.msra.mxu0 0.0
  %2197 = vmatpush.msra.mxu0 0.0
  %2198 = vmatpush.msra.mxu0 0.0
  %2199 = vmatpush.msra.mxu0 0.0
  %2200 = vmatpush.msra.mxu0 0.0
  %2201 = vmatpush.msra.mxu0 0.0
  %2202 = vmatpush.msra.mxu0 0.0
  %2203 = vmatpush.msra.mxu0 0.0
  %2204 = vmatpush.msra.mxu0 0.0
  %2205 = vmatpush.msra.mxu0 0.0
  %2206 = vmatpush.msra.mxu0 0.0
  %2207 = vmatpush.msra.mxu0 0.0
  %2208 = vmatpush.msra.mxu0 %v1937
  %2209 = vmatmul.f32.gmra.mxu0 %v2188
  %v2210 = vpop.f32.mrf.mxu0
  %v2211 = vadd.f32 %v2182, %v2210
  %2212 = vmatmul.f32.gmra.mxu0 %v2191
  %v2213 = vpop.f32.mrf.mxu0
  %v2214 = vadd.f32 %v2185, %v2213
  %2215 = vdwg.mxu0
  %s2216 = scalar_lea.vmem %s6, 192
  %v2217 = vld [vmem:[%s2216] sm:$0xff]
  %v2218 = vld [vmem:[%s2216 + $0x8] sm:$0xff]
  %v2219 = vld [vmem:[%s2216 + $0x10] sm:$0xff]
  %v2220 = vld [vmem:[%s2216 + $0x18] sm:$0xff]
  %s2221 = scalar_lea.vmem %s7, 6
  %v2222 = vld [vmem:[%s2221] sm:$0x1]
  %v2224 = vperm.slane %v2222, 0
  %2226 = vmatpush.msra.mxu0 0.0
  %2227 = vmatpush.msra.mxu0 0.0
  %2228 = vmatpush.msra.mxu0 0.0
  %2229 = vmatpush.msra.mxu0 0.0
  %2230 = vmatpush.msra.mxu0 0.0
  %2231 = vmatpush.msra.mxu0 0.0
  %2232 = vmatpush.msra.mxu0 0.0
  %2233 = vmatpush.msra.mxu0 0.0
  %2234 = vmatpush.msra.mxu0 0.0
  %2235 = vmatpush.msra.mxu0 0.0
  %2236 = vmatpush.msra.mxu0 0.0
  %2237 = vmatpush.msra.mxu0 0.0
  %2238 = vmatpush.msra.mxu0 %v2220
  %2239 = vmatpush.msra.mxu0 %v2219
  %2240 = vmatpush.msra.mxu0 %v2218
  %2241 = vmatpush.msra.mxu0 %v2217
  %2242 = vmatmul.f32.gmra.mxu0 %v1723
  %v2243 = vpop.f32.mrf.mxu0
  %v2244 = vadd.f32 %v2224, %v2243
  %2245 = vmatmul.f32.gmra.mxu0 %v1726
  %v2246 = vpop.f32.mrf.mxu0
  %v2247 = vadd.f32 %v2224, %v2246
  %2248 = vdwg.mxu0
  %s2249 = scalar_lea.vmem %s8, 192
  %v2250 = vld [vmem:[%s2249] sm:$0xff]
  %v2251 = vld [vmem:[%s2249 + $0x8] sm:$0xff]
  %v2252 = vld [vmem:[%s2249 + $0x10] sm:$0xff]
  %v2253 = vld [vmem:[%s2249 + $0x18] sm:$0xff]
  %s2254 = scalar_lea.vmem %s9, 6
  %v2255 = vld [vmem:[%s2254] sm:$0x1]
  %v2257 = vperm.slane %v2255, 0
  %2259 = vmatpush.msra.mxu0 0.0
  %2260 = vmatpush.msra.mxu0 0.0
  %2261 = vmatpush.msra.mxu0 0.0
  %2262 = vmatpush.msra.mxu0 0.0
  %2263 = vmatpush.msra.mxu0 0.0
  %2264 = vmatpush.msra.mxu0 0.0
  %2265 = vmatpush.msra.mxu0 0.0
  %2266 = vmatpush.msra.mxu0 0.0
  %2267 = vmatpush.msra.mxu0 0.0
  %2268 = vmatpush.msra.mxu0 0.0
  %2269 = vmatpush.msra.mxu0 0.0
  %2270 = vmatpush.msra.mxu0 0.0
  %2271 = vmatpush.msra.mxu0 %v2253
  %2272 = vmatpush.msra.mxu0 %v2252
  %2273 = vmatpush.msra.mxu0 %v2251
  %2274 = vmatpush.msra.mxu0 %v2250
  %2275 = vmatmul.f32.gmra.mxu0 %v1723
  %v2276 = vpop.f32.mrf.mxu0
  %v2277 = vadd.f32 %v2257, %v2276
  %2278 = vmatmul.f32.gmra.mxu0 %v1726
  %v2279 = vpop.f32.mrf.mxu0
  %v2280 = vadd.f32 %v2257, %v2279
  %2281 = vdwg.mxu0
  %s2282 = scalar_lea.vmem %s10, 192
  %v2283 = vld [vmem:[%s2282] sm:$0xff]
  %v2284 = vld [vmem:[%s2282 + $0x8] sm:$0xff]
  %v2285 = vld [vmem:[%s2282 + $0x10] sm:$0xff]
  %v2286 = vld [vmem:[%s2282 + $0x18] sm:$0xff]
  %s2287 = scalar_lea.vmem %s11, 6
  %v2288 = vld [vmem:[%s2287] sm:$0x1]
  %v2290 = vperm.slane %v2288, 0
  %2292 = vmatpush.msra.mxu0 0.0
  %2293 = vmatpush.msra.mxu0 0.0
  %2294 = vmatpush.msra.mxu0 0.0
  %2295 = vmatpush.msra.mxu0 0.0
  %2296 = vmatpush.msra.mxu0 0.0
  %2297 = vmatpush.msra.mxu0 0.0
  %2298 = vmatpush.msra.mxu0 0.0
  %2299 = vmatpush.msra.mxu0 0.0
  %2300 = vmatpush.msra.mxu0 0.0
  %2301 = vmatpush.msra.mxu0 0.0
  %2302 = vmatpush.msra.mxu0 0.0
  %2303 = vmatpush.msra.mxu0 0.0
  %2304 = vmatpush.msra.mxu0 %v2286
  %2305 = vmatpush.msra.mxu0 %v2285
  %2306 = vmatpush.msra.mxu0 %v2284
  %2307 = vmatpush.msra.mxu0 %v2283
  %2308 = vmatmul.f32.gmra.mxu0 %v1723
  %v2309 = vpop.f32.mrf.mxu0
  %v2310 = vadd.f32 %v2290, %v2309
  %2311 = vmatmul.f32.gmra.mxu0 %v1726
  %v2312 = vpop.f32.mrf.mxu0
  %v2313 = vadd.f32 %v2290, %v2312
  %2314 = vdwg.mxu0
  %v2316 = vsel %vm516, %v2244, 0
  %v2319 = vsel %vm516, %v2247, 0
  %v2322 = vsel %vm516, %v2277, 0
  %v2325 = vsel %vm516, %v2280, 0
  %2327 = vmatpush.xpose.msra.mxu0 0.0
  %2328 = vmatpush.xpose.msra.mxu0 0.0
  %2329 = vmatpush.xpose.msra.mxu0 0.0
  %2330 = vmatpush.xpose.msra.mxu0 0.0
  %2331 = vmatpush.xpose.msra.mxu0 0.0
  %2332 = vmatpush.xpose.msra.mxu0 0.0
  %2333 = vmatpush.xpose.msra.mxu0 0.0
  %2334 = vmatpush.xpose.msra.mxu0 0.0
  %2335 = vmatpush.xpose.msra.mxu0 0.0
  %2336 = vmatpush.xpose.msra.mxu0 0.0
  %2337 = vmatpush.xpose.msra.mxu0 0.0
  %2338 = vmatpush.xpose.msra.mxu0 0.0
  %2339 = vmatpush.xpose.msra.mxu0 0.0
  %2340 = vmatpush.xpose.msra.mxu0 0.0
  %2341 = vmatpush.xpose.msra.mxu0 %v2325
  %2342 = vmatpush.xpose.msra.mxu0 %v2322
  %2343 = vmatmul.f32.gmra.mxu0 %v2316
  %v2344 = vpop.f32.mrf.mxu0
  %v2345 = vadd.f32 0.0, %v2344
  %2346 = vmatmul.f32.gmra.mxu0 %v2319
  %v2347 = vpop.f32.mrf.mxu0
  %v2348 = vadd.f32 0.0, %v2347
  %2349 = vdwg.mxu0
  %v2350 = vmul.f32 %v2345, 0.35355338
  %v2351 = vmul.f32 %v2348, 0.35355338
  %v2352 = vadd.f32 %v2350, %v350
  %v2353 = vadd.f32 %v2351, %v351
  %v2354 = vsel %vm556, %v2352, -inf
  %2355 = vmax.xlane.f32.xlu0 %v2354
  %v2356 = vpop.xlane.xlu0 %2355
  %v2357 = vsel %vm560, %v2353, -inf
  %2358 = vmax.xlane.f32.xlu0 %v2357
  %v2359 = vpop.xlane.xlu0 %2358
  %v2360 = vsub.f32 %v2352, %v2356
  %v2361 = vsub.f32 %v2353, %v2359
  %v2362 = vmul.f32 %v2360, 1.442695
  %v2363 = vpow.pop %v2362
  %v2364 = vmul.f32 %v2361, 1.442695
  %v2365 = vpow.pop %v2364
  %v2366 = vsel %vm556, %v2363, 0.0
  %2367 = vadd.xlane.f32.xlu0 %v2366
  %v2368 = vpop.xlane.xlu0 %2367
  %v2369 = vsel %vm560, %v2365, 0.0
  %2370 = vadd.xlane.f32.xlu0 %v2369
  %v2371 = vpop.xlane.xlu0 %2370
  %v2372 = vrcp.pop %v2368
  %v2373 = vmul.f32 %v2368, %v2372
  %v2374 = vsub.f32 1.0, %v2373
  %v2375 = vmul.f32 %v2372, %v2374
  %v2376 = vadd.f32 %v2372, %v2375
  %vm2377 = vweird.f32 %v2368
  %vm2378 = vweird.f32 %v2372
  %vm2379 = vmor %vm2377, %vm2378
  %v2380 = vsel %vm2379, %v2372, %v2376
  %v2381 = vand.u32 2147483647, %v2368
  %vm2382 = vcmp.eq.f32.partialorder %v2381, 8.507059e+37
  %v2383 = vand.u32 %v2368, 2147483648
  %v2384 = vor.u32 1.1754944e-38, %v2383
  %v2385 = vsel %vm2382, %v2384, %v2380
  %v2386 = vmul.f32 %v2363, %v2385
  %v2387 = vrcp.pop %v2371
  %v2388 = vmul.f32 %v2371, %v2387
  %v2389 = vsub.f32 1.0, %v2388
  %v2390 = vmul.f32 %v2387, %v2389
  %v2391 = vadd.f32 %v2387, %v2390
  %vm2392 = vweird.f32 %v2371
  %vm2393 = vweird.f32 %v2387
  %vm2394 = vmor %vm2392, %vm2393
  %v2395 = vsel %vm2394, %v2387, %v2391
  %v2396 = vand.u32 2147483647, %v2371
  %vm2397 = vcmp.eq.f32.partialorder %v2396, 8.507059e+37
  %v2398 = vand.u32 %v2371, 2147483648
  %v2399 = vor.u32 1.1754944e-38, %v2398
  %v2400 = vsel %vm2397, %v2399, %v2395
  %v2401 = vmul.f32 %v2365, %v2400
  %v2403 = vsel %vm556, %v2386, 0
  %v2406 = vsel %vm556, %v2401, 0
  %v2409 = vsel %vm612, %v2313, 0
  %2411 = vmatpush.msra.mxu0 0.0
  %2412 = vmatpush.msra.mxu0 0.0
  %2413 = vmatpush.msra.mxu0 0.0
  %2414 = vmatpush.msra.mxu0 0.0
  %2415 = vmatpush.msra.mxu0 0.0
  %2416 = vmatpush.msra.mxu0 0.0
  %2417 = vmatpush.msra.mxu0 0.0
  %2418 = vmatpush.msra.mxu0 0.0
  %2419 = vmatpush.msra.mxu0 0.0
  %2420 = vmatpush.msra.mxu0 0.0
  %2421 = vmatpush.msra.mxu0 0.0
  %2422 = vmatpush.msra.mxu0 0.0
  %2423 = vmatpush.msra.mxu0 0.0
  %2424 = vmatpush.msra.mxu0 0.0
  %2425 = vmatpush.msra.mxu0 %v2409
  %2426 = vmatpush.msra.mxu0 %v2310
  %2427 = vmatmul.f32.gmra.mxu0 %v2403
  %v2428 = vpop.f32.mrf.mxu0
  %v2429 = vadd.f32 0.0, %v2428
  %2430 = vmatmul.f32.gmra.mxu0 %v2406
  %v2431 = vpop.f32.mrf.mxu0
  %v2432 = vadd.f32 0.0, %v2431
  %2433 = vdwg.mxu0
  %s2434 = scalar_lea.vmem %s12, 48
  %v2435 = vld [vmem:[%s2434] sm:$0xff]
  %v2437 = vsel %vm516, %v2429, 0
  %v2440 = vsel %vm516, %v2432, 0
  %2442 = vmatpush.msra.mxu0 0.0
  %2443 = vmatpush.msra.mxu0 0.0
  %2444 = vmatpush.msra.mxu0 0.0
  %2445 = vmatpush.msra.mxu0 0.0
  %2446 = vmatpush.msra.mxu0 0.0
  %2447 = vmatpush.msra.mxu0 0.0
  %2448 = vmatpush.msra.mxu0 0.0
  %2449 = vmatpush.msra.mxu0 0.0
  %2450 = vmatpush.msra.mxu0 0.0
  %2451 = vmatpush.msra.mxu0 0.0
  %2452 = vmatpush.msra.mxu0 0.0
  %2453 = vmatpush.msra.mxu0 0.0
  %2454 = vmatpush.msra.mxu0 0.0
  %2455 = vmatpush.msra.mxu0 0.0
  %2456 = vmatpush.msra.mxu0 0.0
  %2457 = vmatpush.msra.mxu0 %v2435
  %2458 = vmatmul.f32.gmra.mxu0 %v2437
  %v2459 = vpop.f32.mrf.mxu0
  %v2460 = vadd.f32 0.0, %v2459
  %2461 = vmatmul.f32.gmra.mxu0 %v2440
  %v2462 = vpop.f32.mrf.mxu0
  %v2463 = vadd.f32 0.0, %v2462
  %2464 = vdwg.mxu0
  %v2465 = vadd.f32 %v2211, %v2460
  %v2466 = vadd.f32 %v2214, %v2463
  %s2467 = scalar_lea.vmem %s6, 224
  %v2468 = vld [vmem:[%s2467] sm:$0xff]
  %v2469 = vld [vmem:[%s2467 + $0x8] sm:$0xff]
  %v2470 = vld [vmem:[%s2467 + $0x10] sm:$0xff]
  %v2471 = vld [vmem:[%s2467 + $0x18] sm:$0xff]
  %s2472 = scalar_lea.vmem %s7, 7
  %v2473 = vld [vmem:[%s2472] sm:$0x1]
  %v2475 = vperm.slane %v2473, 0
  %2477 = vmatpush.msra.mxu0 0.0
  %2478 = vmatpush.msra.mxu0 0.0
  %2479 = vmatpush.msra.mxu0 0.0
  %2480 = vmatpush.msra.mxu0 0.0
  %2481 = vmatpush.msra.mxu0 0.0
  %2482 = vmatpush.msra.mxu0 0.0
  %2483 = vmatpush.msra.mxu0 0.0
  %2484 = vmatpush.msra.mxu0 0.0
  %2485 = vmatpush.msra.mxu0 0.0
  %2486 = vmatpush.msra.mxu0 0.0
  %2487 = vmatpush.msra.mxu0 0.0
  %2488 = vmatpush.msra.mxu0 0.0
  %2489 = vmatpush.msra.mxu0 %v2471
  %2490 = vmatpush.msra.mxu0 %v2470
  %2491 = vmatpush.msra.mxu0 %v2469
  %2492 = vmatpush.msra.mxu0 %v2468
  %2493 = vmatmul.f32.gmra.mxu0 %v1723
  %v2494 = vpop.f32.mrf.mxu0
  %v2495 = vadd.f32 %v2475, %v2494
  %2496 = vmatmul.f32.gmra.mxu0 %v1726
  %v2497 = vpop.f32.mrf.mxu0
  %v2498 = vadd.f32 %v2475, %v2497
  %2499 = vdwg.mxu0
  %s2500 = scalar_lea.vmem %s8, 224
  %v2501 = vld [vmem:[%s2500] sm:$0xff]
  %v2502 = vld [vmem:[%s2500 + $0x8] sm:$0xff]
  %v2503 = vld [vmem:[%s2500 + $0x10] sm:$0xff]
  %v2504 = vld [vmem:[%s2500 + $0x18] sm:$0xff]
  %s2505 = scalar_lea.vmem %s9, 7
  %v2506 = vld [vmem:[%s2505] sm:$0x1]
  %v2508 = vperm.slane %v2506, 0
  %2510 = vmatpush.msra.mxu0 0.0
  %2511 = vmatpush.msra.mxu0 0.0
  %2512 = vmatpush.msra.mxu0 0.0
  %2513 = vmatpush.msra.mxu0 0.0
  %2514 = vmatpush.msra.mxu0 0.0
  %2515 = vmatpush.msra.mxu0 0.0
  %2516 = vmatpush.msra.mxu0 0.0
  %2517 = vmatpush.msra.mxu0 0.0
  %2518 = vmatpush.msra.mxu0 0.0
  %2519 = vmatpush.msra.mxu0 0.0
  %2520 = vmatpush.msra.mxu0 0.0
  %2521 = vmatpush.msra.mxu0 0.0
  %2522 = vmatpush.msra.mxu0 %v2504
  %2523 = vmatpush.msra.mxu0 %v2503
  %2524 = vmatpush.msra.mxu0 %v2502
  %2525 = vmatpush.msra.mxu0 %v2501
  %2526 = vmatmul.f32.gmra.mxu0 %v1723
  %v2527 = vpop.f32.mrf.mxu0
  %v2528 = vadd.f32 %v2508, %v2527
  %2529 = vmatmul.f32.gmra.mxu0 %v1726
  %v2530 = vpop.f32.mrf.mxu0
  %v2531 = vadd.f32 %v2508, %v2530
  %2532 = vdwg.mxu0
  %s2533 = scalar_lea.vmem %s10, 224
  %v2534 = vld [vmem:[%s2533] sm:$0xff]
  %v2535 = vld [vmem:[%s2533 + $0x8] sm:$0xff]
  %v2536 = vld [vmem:[%s2533 + $0x10] sm:$0xff]
  %v2537 = vld [vmem:[%s2533 + $0x18] sm:$0xff]
  %s2538 = scalar_lea.vmem %s11, 7
  %v2539 = vld [vmem:[%s2538] sm:$0x1]
  %v2541 = vperm.slane %v2539, 0
  %2543 = vmatpush.msra.mxu0 0.0
  %2544 = vmatpush.msra.mxu0 0.0
  %2545 = vmatpush.msra.mxu0 0.0
  %2546 = vmatpush.msra.mxu0 0.0
  %2547 = vmatpush.msra.mxu0 0.0
  %2548 = vmatpush.msra.mxu0 0.0
  %2549 = vmatpush.msra.mxu0 0.0
  %2550 = vmatpush.msra.mxu0 0.0
  %2551 = vmatpush.msra.mxu0 0.0
  %2552 = vmatpush.msra.mxu0 0.0
  %2553 = vmatpush.msra.mxu0 0.0
  %2554 = vmatpush.msra.mxu0 0.0
  %2555 = vmatpush.msra.mxu0 %v2537
  %2556 = vmatpush.msra.mxu0 %v2536
  %2557 = vmatpush.msra.mxu0 %v2535
  %2558 = vmatpush.msra.mxu0 %v2534
  %2559 = vmatmul.f32.gmra.mxu0 %v1723
  %v2560 = vpop.f32.mrf.mxu0
  %v2561 = vadd.f32 %v2541, %v2560
  %2562 = vmatmul.f32.gmra.mxu0 %v1726
  %v2563 = vpop.f32.mrf.mxu0
  %v2564 = vadd.f32 %v2541, %v2563
  %2565 = vdwg.mxu0
  %v2567 = vsel %vm516, %v2495, 0
  %v2570 = vsel %vm516, %v2498, 0
  %v2573 = vsel %vm516, %v2528, 0
  %v2576 = vsel %vm516, %v2531, 0
  %2578 = vmatpush.xpose.msra.mxu0 0.0
  %2579 = vmatpush.xpose.msra.mxu0 0.0
  %2580 = vmatpush.xpose.msra.mxu0 0.0
  %2581 = vmatpush.xpose.msra.mxu0 0.0
  %2582 = vmatpush.xpose.msra.mxu0 0.0
  %2583 = vmatpush.xpose.msra.mxu0 0.0
  %2584 = vmatpush.xpose.msra.mxu0 0.0
  %2585 = vmatpush.xpose.msra.mxu0 0.0
  %2586 = vmatpush.xpose.msra.mxu0 0.0
  %2587 = vmatpush.xpose.msra.mxu0 0.0
  %2588 = vmatpush.xpose.msra.mxu0 0.0
  %2589 = vmatpush.xpose.msra.mxu0 0.0
  %2590 = vmatpush.xpose.msra.mxu0 0.0
  %2591 = vmatpush.xpose.msra.mxu0 0.0
  %2592 = vmatpush.xpose.msra.mxu0 %v2576
  %2593 = vmatpush.xpose.msra.mxu0 %v2573
  %2594 = vmatmul.f32.gmra.mxu0 %v2567
  %v2595 = vpop.f32.mrf.mxu0
  %v2596 = vadd.f32 0.0, %v2595
  %2597 = vmatmul.f32.gmra.mxu0 %v2570
  %v2598 = vpop.f32.mrf.mxu0
  %v2599 = vadd.f32 0.0, %v2598
  %2600 = vdwg.mxu0
  %v2601 = vmul.f32 %v2596, 0.35355338
  %v2602 = vmul.f32 %v2599, 0.35355338
  %v2603 = vadd.f32 %v2601, %v350
  %v2604 = vadd.f32 %v2602, %v351
  %v2605 = vsel %vm556, %v2603, -inf
  %2606 = vmax.xlane.f32.xlu0 %v2605
  %v2607 = vpop.xlane.xlu0 %2606
  %v2608 = vsel %vm560, %v2604, -inf
  %2609 = vmax.xlane.f32.xlu0 %v2608
  %v2610 = vpop.xlane.xlu0 %2609
  %v2611 = vsub.f32 %v2603, %v2607
  %v2612 = vsub.f32 %v2604, %v2610
  %v2613 = vmul.f32 %v2611, 1.442695
  %v2614 = vpow.pop %v2613
  %v2615 = vmul.f32 %v2612, 1.442695
  %v2616 = vpow.pop %v2615
  %v2617 = vsel %vm556, %v2614, 0.0
  %2618 = vadd.xlane.f32.xlu0 %v2617
  %v2619 = vpop.xlane.xlu0 %2618
  %v2620 = vsel %vm560, %v2616, 0.0
  %2621 = vadd.xlane.f32.xlu0 %v2620
  %v2622 = vpop.xlane.xlu0 %2621
  %v2623 = vrcp.pop %v2619
  %v2624 = vmul.f32 %v2619, %v2623
  %v2625 = vsub.f32 1.0, %v2624
  %v2626 = vmul.f32 %v2623, %v2625
  %v2627 = vadd.f32 %v2623, %v2626
  %vm2628 = vweird.f32 %v2619
  %vm2629 = vweird.f32 %v2623
  %vm2630 = vmor %vm2628, %vm2629
  %v2631 = vsel %vm2630, %v2623, %v2627
  %v2632 = vand.u32 2147483647, %v2619
  %vm2633 = vcmp.eq.f32.partialorder %v2632, 8.507059e+37
  %v2634 = vand.u32 %v2619, 2147483648
  %v2635 = vor.u32 1.1754944e-38, %v2634
  %v2636 = vsel %vm2633, %v2635, %v2631
  %v2637 = vmul.f32 %v2614, %v2636
  %v2638 = vrcp.pop %v2622
  %v2639 = vmul.f32 %v2622, %v2638
  %v2640 = vsub.f32 1.0, %v2639
  %v2641 = vmul.f32 %v2638, %v2640
  %v2642 = vadd.f32 %v2638, %v2641
  %vm2643 = vweird.f32 %v2622
  %vm2644 = vweird.f32 %v2638
  %vm2645 = vmor %vm2643, %vm2644
  %v2646 = vsel %vm2645, %v2638, %v2642
  %v2647 = vand.u32 2147483647, %v2622
  %vm2648 = vcmp.eq.f32.partialorder %v2647, 8.507059e+37
  %v2649 = vand.u32 %v2622, 2147483648
  %v2650 = vor.u32 1.1754944e-38, %v2649
  %v2651 = vsel %vm2648, %v2650, %v2646
  %v2652 = vmul.f32 %v2616, %v2651
  %v2654 = vsel %vm556, %v2637, 0
  %v2657 = vsel %vm556, %v2652, 0
  %v2660 = vsel %vm612, %v2564, 0
  %2662 = vmatpush.msra.mxu0 0.0
  %2663 = vmatpush.msra.mxu0 0.0
  %2664 = vmatpush.msra.mxu0 0.0
  %2665 = vmatpush.msra.mxu0 0.0
  %2666 = vmatpush.msra.mxu0 0.0
  %2667 = vmatpush.msra.mxu0 0.0
  %2668 = vmatpush.msra.mxu0 0.0
  %2669 = vmatpush.msra.mxu0 0.0
  %2670 = vmatpush.msra.mxu0 0.0
  %2671 = vmatpush.msra.mxu0 0.0
  %2672 = vmatpush.msra.mxu0 0.0
  %2673 = vmatpush.msra.mxu0 0.0
  %2674 = vmatpush.msra.mxu0 0.0
  %2675 = vmatpush.msra.mxu0 0.0
  %2676 = vmatpush.msra.mxu0 %v2660
  %2677 = vmatpush.msra.mxu0 %v2561
  %2678 = vmatmul.f32.gmra.mxu0 %v2654
  %v2679 = vpop.f32.mrf.mxu0
  %v2680 = vadd.f32 0.0, %v2679
  %2681 = vmatmul.f32.gmra.mxu0 %v2657
  %v2682 = vpop.f32.mrf.mxu0
  %v2683 = vadd.f32 0.0, %v2682
  %2684 = vdwg.mxu0
  %s2685 = scalar_lea.vmem %s12, 56
  %v2686 = vld [vmem:[%s2685] sm:$0xff]
  %v2688 = vsel %vm516, %v2680, 0
  %v2691 = vsel %vm516, %v2683, 0
  %2693 = vmatpush.msra.mxu0 0.0
  %2694 = vmatpush.msra.mxu0 0.0
  %2695 = vmatpush.msra.mxu0 0.0
  %2696 = vmatpush.msra.mxu0 0.0
  %2697 = vmatpush.msra.mxu0 0.0
  %2698 = vmatpush.msra.mxu0 0.0
  %2699 = vmatpush.msra.mxu0 0.0
  %2700 = vmatpush.msra.mxu0 0.0
  %2701 = vmatpush.msra.mxu0 0.0
  %2702 = vmatpush.msra.mxu0 0.0
  %2703 = vmatpush.msra.mxu0 0.0
  %2704 = vmatpush.msra.mxu0 0.0
  %2705 = vmatpush.msra.mxu0 0.0
  %2706 = vmatpush.msra.mxu0 0.0
  %2707 = vmatpush.msra.mxu0 0.0
  %2708 = vmatpush.msra.mxu0 %v2686
  %2709 = vmatmul.f32.gmra.mxu0 %v2688
  %v2710 = vpop.f32.mrf.mxu0
  %v2711 = vadd.f32 0.0, %v2710
  %2712 = vmatmul.f32.gmra.mxu0 %v2691
  %v2713 = vpop.f32.mrf.mxu0
  %v2714 = vadd.f32 0.0, %v2713
  %2715 = vdwg.mxu0
  %v2716 = vadd.f32 %v2465, %v2711
  %v2717 = vadd.f32 %v2466, %v2714
  %v2718 = vadd.f32 %v1652, %v2716
  %v2719 = vadd.f32 %v1653, %v2717
  %s2720 = scalar_lea.vmem %s13, 1
  %v2721 = vld [vmem:[%s2720] sm:$0x1]
  %v2723 = vperm.slane %v2721, 0
  %v2725 = vadd.f32 %v2718, %v2723
  %v2726 = vadd.f32 %v2719, %v2723
  %s2727 = scalar_lea.vmem %s14, 1
  %v2728 = vld [vmem:[%s2727] sm:$0x1]
  %s2729 = scalar_lea.vmem %s15, 1
  %v2730 = vld [vmem:[%s2729] sm:$0x1]
  %v2731 = vsel %vm354, %v2725, 0.0
  %2732 = vadd.xlane.f32.xlu0 %v2731
  %v2733 = vpop.xlane.xlu0 %2732
  %v2734 = vsel %vm358, %v2726, 0.0
  %2735 = vadd.xlane.f32.xlu0 %v2734
  %v2736 = vpop.xlane.xlu0 %2735
  %v2737 = vmul.f32 %v2733, %v368
  %v2738 = vmul.f32 %v2736, %v368
  %v2739 = vsub.f32 %v2725, %v2737
  %v2740 = vsub.f32 %v2726, %v2738
  %v2741 = vmul.f32 %v2739, %v2739
  %v2742 = vmul.f32 %v2740, %v2740
  %v2743 = vsel %vm354, %v2741, 0.0
  %2744 = vadd.xlane.f32.xlu0 %v2743
  %v2745 = vpop.xlane.xlu0 %2744
  %v2746 = vsel %vm358, %v2742, 0.0
  %2747 = vadd.xlane.f32.xlu0 %v2746
  %v2748 = vpop.xlane.xlu0 %2747
  %v2749 = vmul.f32 %v2745, %v368
  %v2750 = vmul.f32 %v2748, %v368
  %v2751 = vadd.f32 %v2749, 1e-06
  %v2752 = vadd.f32 %v2750, 1e-06
  %v2753 = vrsqrt.pop %v2751
  %v2754 = vmul.f32 %v2753, %v2751
  %v2755 = vmul.f32 %v2754, %v2753
  %v2756 = vmul.f32 0.5, %v2755
  %v2757 = vsub.f32 1.5, %v2756
  %v2758 = vmul.f32 %v2753, %v2757
  %vm2759 = vweird.f32 %v2751
  %vm2760 = vweird.f32 %v2753
  %vm2761 = vmor %vm2759, %vm2760
  %v2762 = vsel %vm2761, %v2753, %v2758
  %v2763 = vrsqrt.pop %v2752
  %v2764 = vmul.f32 %v2763, %v2752
  %v2765 = vmul.f32 %v2764, %v2763
  %v2766 = vmul.f32 0.5, %v2765
  %v2767 = vsub.f32 1.5, %v2766
  %v2768 = vmul.f32 %v2763, %v2767
  %vm2769 = vweird.f32 %v2752
  %vm2770 = vweird.f32 %v2763
  %vm2771 = vmor %vm2769, %vm2770
  %v2772 = vsel %vm2771, %v2763, %v2768
  %v2773 = vmul.f32 %v2739, %v2762
  %v2774 = vmul.f32 %v2740, %v2772
  %v2776 = vperm.slane %v2728, 0
  %v2778 = vmul.f32 %v2773, %v2776
  %v2779 = vmul.f32 %v2774, %v2776
  %v2781 = vperm.slane %v2730, 0
  %v2783 = vadd.f32 %v2778, %v2781
  %v2784 = vadd.f32 %v2779, %v2781
  %s2785 = scalar_lea.vmem %s16, 32
  %v2786 = vld [vmem:[%s2785] sm:$0xff]
  %v2787 = vld [vmem:[%s2785 + $0x8] sm:$0xff]
  %v2788 = vld [vmem:[%s2785 + $0x10] sm:$0xff]
  %v2789 = vld [vmem:[%s2785 + $0x18] sm:$0xff]
  %s2790 = scalar_lea.vmem %s17, 1
  %v2791 = vld [vmem:[%s2790] sm:$0x1]
  %v2793 = vperm.slane %v2791, 0
  %v2796 = vsel %vm354, %v2783, 0
  %v2799 = vsel %vm354, %v2784, 0
  %2801 = vmatpush.msra.mxu0 0.0
  %2802 = vmatpush.msra.mxu0 0.0
  %2803 = vmatpush.msra.mxu0 0.0
  %2804 = vmatpush.msra.mxu0 0.0
  %2805 = vmatpush.msra.mxu0 0.0
  %2806 = vmatpush.msra.mxu0 0.0
  %2807 = vmatpush.msra.mxu0 0.0
  %2808 = vmatpush.msra.mxu0 0.0
  %2809 = vmatpush.msra.mxu0 0.0
  %2810 = vmatpush.msra.mxu0 0.0
  %2811 = vmatpush.msra.mxu0 0.0
  %2812 = vmatpush.msra.mxu0 0.0
  %2813 = vmatpush.msra.mxu0 %v2789
  %2814 = vmatpush.msra.mxu0 %v2788
  %2815 = vmatpush.msra.mxu0 %v2787
  %2816 = vmatpush.msra.mxu0 %v2786
  %2817 = vmatmul.f32.gmra.mxu0 %v2796
  %v2818 = vpop.f32.mrf.mxu0
  %v2819 = vadd.f32 %v2793, %v2818
  %2820 = vmatmul.f32.gmra.mxu0 %v2799
  %v2821 = vpop.f32.mrf.mxu0
  %v2822 = vadd.f32 %v2793, %v2821
  %2823 = vdwg.mxu0
  %v2824 = vmul.f32 %v2819, 0.5
  %v2825 = vmul.f32 %v2822, 0.5
  %v2826 = vmul.f32 %v2819, 0.70710677
  %v2827 = vmul.f32 %v2822, 0.70710677
  %v2828 = vmul.f32 %v2826, %v2826
  %v2829 = vmin.f32 16.0, %v2828
  %v2830 = vmul.f32 %v2829, 2.1237322e-06
  %v2831 = vadd.f32 %v2830, 0.00028619796
  %v2832 = vmul.f32 %v2829, %v2831
  %v2833 = vadd.f32 %v2832, 0.0036580483
  %v2834 = vmul.f32 %v2829, %v2833
  %v2835 = vadd.f32 %v2834, 0.05243302
  %v2836 = vmul.f32 %v2829, %v2835
  %v2837 = vadd.f32 %v2836, 0.18741608
  %v2838 = vmul.f32 %v2829, %v2837
  %v2839 = vadd.f32 %v2838, 1.1283791
  %v2840 = vmul.f32 %v2826, %v2839
  %v2841 = vmul.f32 %v2829, 3.8918573e-05
  %v2842 = vadd.f32 %v2841, 0.001143296
  %v2843 = vmul.f32 %v2829, %v2842
  %v2844 = vadd.f32 %v2843, 0.014752088
  %v2845 = vmul.f32 %v2829, %v2844
  %v2846 = vadd.f32 %v2845, 0.112945676
  %v2847 = vmul.f32 %v2829, %v2846
  %v2848 = vadd.f32 %v2847, 0.4994258
  %v2849 = vmul.f32 %v2829, %v2848
  %v2850 = vadd.f32 %v2849, 1.0
  %v2851 = vrcp.pop %v2850
  %v2852 = vmul.f32 %v2850, %v2851
  %v2853 = vsub.f32 1.0, %v2852
  %v2854 = vmul.f32 %v2851, %v2853
  %v2855 = vadd.f32 %v2851, %v2854
  %vm2856 = vweird.f32 %v2850
  %vm2857 = vweird.f32 %v2851
  %vm2858 = vmor %vm2856, %vm2857
  %v2859 = vsel %vm2858, %v2851, %v2855
  %v2860 = vand.u32 2147483647, %v2850
  %vm2861 = vcmp.eq.f32.partialorder %v2860, 8.507059e+37
  %v2862 = vand.u32 %v2850, 2147483648
  %v2863 = vor.u32 1.1754944e-38, %v2862
  %v2864 = vsel %vm2861, %v2863, %v2859
  %v2865 = vmul.f32 %v2840, %v2864
  %v2866 = vmin.f32 %v2865, 1.0
  %v2867 = vmax.f32 %v2866, -1.0
  %v2868 = vmul.f32 %v2827, %v2827
  %v2869 = vmin.f32 16.0, %v2868
  %v2870 = vmul.f32 %v2869, 2.1237322e-06
  %v2871 = vadd.f32 %v2870, 0.00028619796
  %v2872 = vmul.f32 %v2869, %v2871
  %v2873 = vadd.f32 %v2872, 0.0036580483
  %v2874 = vmul.f32 %v2869, %v2873
  %v2875 = vadd.f32 %v2874, 0.05243302
  %v2876 = vmul.f32 %v2869, %v2875
  %v2877 = vadd.f32 %v2876, 0.18741608
  %v2878 = vmul.f32 %v2869, %v2877
  %v2879 = vadd.f32 %v2878, 1.1283791
  %v2880 = vmul.f32 %v2827, %v2879
  %v2881 = vmul.f32 %v2869, 3.8918573e-05
  %v2882 = vadd.f32 %v2881, 0.001143296
  %v2883 = vmul.f32 %v2869, %v2882
  %v2884 = vadd.f32 %v2883, 0.014752088
  %v2885 = vmul.f32 %v2869, %v2884
  %v2886 = vadd.f32 %v2885, 0.112945676
  %v2887 = vmul.f32 %v2869, %v2886
  %v2888 = vadd.f32 %v2887, 0.4994258
  %v2889 = vmul.f32 %v2869, %v2888
  %v2890 = vadd.f32 %v2889, 1.0
  %v2891 = vrcp.pop %v2890
  %v2892 = vmul.f32 %v2890, %v2891
  %v2893 = vsub.f32 1.0, %v2892
  %v2894 = vmul.f32 %v2891, %v2893
  %v2895 = vadd.f32 %v2891, %v2894
  %vm2896 = vweird.f32 %v2890
  %vm2897 = vweird.f32 %v2891
  %vm2898 = vmor %vm2896, %vm2897
  %v2899 = vsel %vm2898, %v2891, %v2895
  %v2900 = vand.u32 2147483647, %v2890
  %vm2901 = vcmp.eq.f32.partialorder %v2900, 8.507059e+37
  %v2902 = vand.u32 %v2890, 2147483648
  %v2903 = vor.u32 1.1754944e-38, %v2902
  %v2904 = vsel %vm2901, %v2903, %v2899
  %v2905 = vmul.f32 %v2880, %v2904
  %v2906 = vmin.f32 %v2905, 1.0
  %v2907 = vmax.f32 %v2906, -1.0
  %v2908 = vadd.f32 %v2867, 1.0
  %v2909 = vadd.f32 %v2907, 1.0
  %v2910 = vmul.f32 %v2824, %v2908
  %v2911 = vmul.f32 %v2825, %v2909
  %s2912 = scalar_lea.vmem %s18, 128
  %v2913 = vld [vmem:[%s2912] sm:$0xff]
  %v2914 = vld [vmem:[%s2912 + $0x8] sm:$0xff]
  %v2915 = vld [vmem:[%s2912 + $0x10] sm:$0xff]
  %v2916 = vld [vmem:[%s2912 + $0x18] sm:$0xff]
  %v2917 = vld [vmem:[%s2912 + $0x20] sm:$0xff]
  %v2918 = vld [vmem:[%s2912 + $0x28] sm:$0xff]
  %v2919 = vld [vmem:[%s2912 + $0x30] sm:$0xff]
  %v2920 = vld [vmem:[%s2912 + $0x38] sm:$0xff]
  %v2921 = vld [vmem:[%s2912 + $0x40] sm:$0xff]
  %v2922 = vld [vmem:[%s2912 + $0x48] sm:$0xff]
  %v2923 = vld [vmem:[%s2912 + $0x50] sm:$0xff]
  %v2924 = vld [vmem:[%s2912 + $0x58] sm:$0xff]
  %v2925 = vld [vmem:[%s2912 + $0x60] sm:$0xff]
  %v2926 = vld [vmem:[%s2912 + $0x68] sm:$0xff]
  %v2927 = vld [vmem:[%s2912 + $0x70] sm:$0xff]
  %v2928 = vld [vmem:[%s2912 + $0x78] sm:$0xff]
  %s2929 = scalar_lea.vmem %s19, 1
  %v2930 = vld [vmem:[%s2929] sm:$0x1]
  %v2932 = vperm.slane %v2930, 0
  %2934 = vmatpush.msra.mxu0 %v2928
  %2935 = vmatpush.msra.mxu0 %v2927
  %2936 = vmatpush.msra.mxu0 %v2926
  %2937 = vmatpush.msra.mxu0 %v2925
  %2938 = vmatpush.msra.mxu0 %v2924
  %2939 = vmatpush.msra.mxu0 %v2923
  %2940 = vmatpush.msra.mxu0 %v2922
  %2941 = vmatpush.msra.mxu0 %v2921
  %2942 = vmatpush.msra.mxu0 %v2920
  %2943 = vmatpush.msra.mxu0 %v2919
  %2944 = vmatpush.msra.mxu0 %v2918
  %2945 = vmatpush.msra.mxu0 %v2917
  %2946 = vmatpush.msra.mxu0 %v2916
  %2947 = vmatpush.msra.mxu0 %v2915
  %2948 = vmatpush.msra.mxu0 %v2914
  %2949 = vmatpush.msra.mxu0 %v2913
  %2950 = vmatmul.f32.gmra.mxu0 %v2910
  %v2951 = vpop.f32.mrf.mxu0
  %v2952 = vadd.f32 %v2932, %v2951
  %2953 = vmatmul.f32.gmra.mxu0 %v2911
  %v2954 = vpop.f32.mrf.mxu0
  %v2955 = vadd.f32 %v2932, %v2954
  %2956 = vdwg.mxu0
  %v2957 = vadd.f32 %v2725, %v2952
  %v2958 = vadd.f32 %v2726, %v2955
  %s2959 = scalar_lea.vmem %s4, 2
  %v2960 = vld [vmem:[%s2959] sm:$0x1]
  %s2961 = scalar_lea.vmem %s5, 2
  %v2962 = vld [vmem:[%s2961] sm:$0x1]
  %v2963 = vsel %vm354, %v2957, 0.0
  %2964 = vadd.xlane.f32.xlu0 %v2963
  %v2965 = vpop.xlane.xlu0 %2964
  %v2966 = vsel %vm358, %v2958, 0.0
  %2967 = vadd.xlane.f32.xlu0 %v2966
  %v2968 = vpop.xlane.xlu0 %2967
  %v2969 = vmul.f32 %v2965, %v368
  %v2970 = vmul.f32 %v2968, %v368
  %v2971 = vsub.f32 %v2957, %v2969
  %v2972 = vsub.f32 %v2958, %v2970
  %v2973 = vmul.f32 %v2971, %v2971
  %v2974 = vmul.f32 %v2972, %v2972
  %v2975 = vsel %vm354, %v2973, 0.0
  %2976 = vadd.xlane.f32.xlu0 %v2975
  %v2977 = vpop.xlane.xlu0 %2976
  %v2978 = vsel %vm358, %v2974, 0.0
  %2979 = vadd.xlane.f32.xlu0 %v2978
  %v2980 = vpop.xlane.xlu0 %2979
  %v2981 = vmul.f32 %v2977, %v368
  %v2982 = vmul.f32 %v2980, %v368
  %v2983 = vadd.f32 %v2981, 1e-06
  %v2984 = vadd.f32 %v2982, 1e-06
  %v2985 = vrsqrt.pop %v2983
  %v2986 = vmul.f32 %v2985, %v2983
  %v2987 = vmul.f32 %v2986, %v2985
  %v2988 = vmul.f32 0.5, %v2987
  %v2989 = vsub.f32 1.5, %v2988
  %v2990 = vmul.f32 %v2985, %v2989
  %vm2991 = vweird.f32 %v2983
  %vm2992 = vweird.f32 %v2985
  %vm2993 = vmor %vm2991, %vm2992
  %v2994 = vsel %vm2993, %v2985, %v2990
  %v2995 = vrsqrt.pop %v2984
  %v2996 = vmul.f32 %v2995, %v2984
  %v2997 = vmul.f32 %v2996, %v2995
  %v2998 = vmul.f32 0.5, %v2997
  %v2999 = vsub.f32 1.5, %v2998
  %v3000 = vmul.f32 %v2995, %v2999
  %vm3001 = vweird.f32 %v2984
  %vm3002 = vweird.f32 %v2995
  %vm3003 = vmor %vm3001, %vm3002
  %v3004 = vsel %vm3003, %v2995, %v3000
  %v3005 = vmul.f32 %v2971, %v2994
  %v3006 = vmul.f32 %v2972, %v3004
  %v3008 = vperm.slane %v2960, 0
  %v3010 = vmul.f32 %v3005, %v3008
  %v3011 = vmul.f32 %v3006, %v3008
  %v3013 = vperm.slane %v2962, 0
  %v3015 = vadd.f32 %v3010, %v3013
  %v3016 = vadd.f32 %v3011, %v3013
  %s3017 = scalar_lea.vmem %s6, 256
  %v3018 = vld [vmem:[%s3017] sm:$0xff]
  %v3019 = vld [vmem:[%s3017 + $0x8] sm:$0xff]
  %v3020 = vld [vmem:[%s3017 + $0x10] sm:$0xff]
  %v3021 = vld [vmem:[%s3017 + $0x18] sm:$0xff]
  %s3022 = scalar_lea.vmem %s7, 8
  %v3023 = vld [vmem:[%s3022] sm:$0x1]
  %v3025 = vperm.slane %v3023, 0
  %v3028 = vsel %vm354, %v3015, 0
  %v3031 = vsel %vm354, %v3016, 0
  %3033 = vmatpush.msra.mxu0 0.0
  %3034 = vmatpush.msra.mxu0 0.0
  %3035 = vmatpush.msra.mxu0 0.0
  %3036 = vmatpush.msra.mxu0 0.0
  %3037 = vmatpush.msra.mxu0 0.0
  %3038 = vmatpush.msra.mxu0 0.0
  %3039 = vmatpush.msra.mxu0 0.0
  %3040 = vmatpush.msra.mxu0 0.0
  %3041 = vmatpush.msra.mxu0 0.0
  %3042 = vmatpush.msra.mxu0 0.0
  %3043 = vmatpush.msra.mxu0 0.0
  %3044 = vmatpush.msra.mxu0 0.0
  %3045 = vmatpush.msra.mxu0 %v3021
  %3046 = vmatpush.msra.mxu0 %v3020
  %3047 = vmatpush.msra.mxu0 %v3019
  %3048 = vmatpush.msra.mxu0 %v3018
  %3049 = vmatmul.f32.gmra.mxu0 %v3028
  %v3050 = vpop.f32.mrf.mxu0
  %v3051 = vadd.f32 %v3025, %v3050
  %3052 = vmatmul.f32.gmra.mxu0 %v3031
  %v3053 = vpop.f32.mrf.mxu0
  %v3054 = vadd.f32 %v3025, %v3053
  %3055 = vdwg.mxu0
  %s3056 = scalar_lea.vmem %s8, 256
  %v3057 = vld [vmem:[%s3056] sm:$0xff]
  %v3058 = vld [vmem:[%s3056 + $0x8] sm:$0xff]
  %v3059 = vld [vmem:[%s3056 + $0x10] sm:$0xff]
  %v3060 = vld [vmem:[%s3056 + $0x18] sm:$0xff]
  %s3061 = scalar_lea.vmem %s9, 8
  %v3062 = vld [vmem:[%s3061] sm:$0x1]
  %v3064 = vperm.slane %v3062, 0
  %3066 = vmatpush.msra.mxu0 0.0
  %3067 = vmatpush.msra.mxu0 0.0
  %3068 = vmatpush.msra.mxu0 0.0
  %3069 = vmatpush.msra.mxu0 0.0
  %3070 = vmatpush.msra.mxu0 0.0
  %3071 = vmatpush.msra.mxu0 0.0
  %3072 = vmatpush.msra.mxu0 0.0
  %3073 = vmatpush.msra.mxu0 0.0
  %3074 = vmatpush.msra.mxu0 0.0
  %3075 = vmatpush.msra.mxu0 0.0
  %3076 = vmatpush.msra.mxu0 0.0
  %3077 = vmatpush.msra.mxu0 0.0
  %3078 = vmatpush.msra.mxu0 %v3060
  %3079 = vmatpush.msra.mxu0 %v3059
  %3080 = vmatpush.msra.mxu0 %v3058
  %3081 = vmatpush.msra.mxu0 %v3057
  %3082 = vmatmul.f32.gmra.mxu0 %v3028
  %v3083 = vpop.f32.mrf.mxu0
  %v3084 = vadd.f32 %v3064, %v3083
  %3085 = vmatmul.f32.gmra.mxu0 %v3031
  %v3086 = vpop.f32.mrf.mxu0
  %v3087 = vadd.f32 %v3064, %v3086
  %3088 = vdwg.mxu0
  %s3089 = scalar_lea.vmem %s10, 256
  %v3090 = vld [vmem:[%s3089] sm:$0xff]
  %v3091 = vld [vmem:[%s3089 + $0x8] sm:$0xff]
  %v3092 = vld [vmem:[%s3089 + $0x10] sm:$0xff]
  %v3093 = vld [vmem:[%s3089 + $0x18] sm:$0xff]
  %s3094 = scalar_lea.vmem %s11, 8
  %v3095 = vld [vmem:[%s3094] sm:$0x1]
  %v3097 = vperm.slane %v3095, 0
  %3099 = vmatpush.msra.mxu0 0.0
  %3100 = vmatpush.msra.mxu0 0.0
  %3101 = vmatpush.msra.mxu0 0.0
  %3102 = vmatpush.msra.mxu0 0.0
  %3103 = vmatpush.msra.mxu0 0.0
  %3104 = vmatpush.msra.mxu0 0.0
  %3105 = vmatpush.msra.mxu0 0.0
  %3106 = vmatpush.msra.mxu0 0.0
  %3107 = vmatpush.msra.mxu0 0.0
  %3108 = vmatpush.msra.mxu0 0.0
  %3109 = vmatpush.msra.mxu0 0.0
  %3110 = vmatpush.msra.mxu0 0.0
  %3111 = vmatpush.msra.mxu0 %v3093
  %3112 = vmatpush.msra.mxu0 %v3092
  %3113 = vmatpush.msra.mxu0 %v3091
  %3114 = vmatpush.msra.mxu0 %v3090
  %3115 = vmatmul.f32.gmra.mxu0 %v3028
  %v3116 = vpop.f32.mrf.mxu0
  %v3117 = vadd.f32 %v3097, %v3116
  %3118 = vmatmul.f32.gmra.mxu0 %v3031
  %v3119 = vpop.f32.mrf.mxu0
  %v3120 = vadd.f32 %v3097, %v3119
  %3121 = vdwg.mxu0
  %v3123 = vsel %vm516, %v3051, 0
  %v3126 = vsel %vm516, %v3054, 0
  %v3129 = vsel %vm516, %v3084, 0
  %v3132 = vsel %vm516, %v3087, 0
  %3134 = vmatpush.xpose.msra.mxu0 0.0
  %3135 = vmatpush.xpose.msra.mxu0 0.0
  %3136 = vmatpush.xpose.msra.mxu0 0.0
  %3137 = vmatpush.xpose.msra.mxu0 0.0
  %3138 = vmatpush.xpose.msra.mxu0 0.0
  %3139 = vmatpush.xpose.msra.mxu0 0.0
  %3140 = vmatpush.xpose.msra.mxu0 0.0
  %3141 = vmatpush.xpose.msra.mxu0 0.0
  %3142 = vmatpush.xpose.msra.mxu0 0.0
  %3143 = vmatpush.xpose.msra.mxu0 0.0
  %3144 = vmatpush.xpose.msra.mxu0 0.0
  %3145 = vmatpush.xpose.msra.mxu0 0.0
  %3146 = vmatpush.xpose.msra.mxu0 0.0
  %3147 = vmatpush.xpose.msra.mxu0 0.0
  %3148 = vmatpush.xpose.msra.mxu0 %v3132
  %3149 = vmatpush.xpose.msra.mxu0 %v3129
  %3150 = vmatmul.f32.gmra.mxu0 %v3123
  %v3151 = vpop.f32.mrf.mxu0
  %v3152 = vadd.f32 0.0, %v3151
  %3153 = vmatmul.f32.gmra.mxu0 %v3126
  %v3154 = vpop.f32.mrf.mxu0
  %v3155 = vadd.f32 0.0, %v3154
  %3156 = vdwg.mxu0
  %v3157 = vmul.f32 %v3152, 0.35355338
  %v3158 = vmul.f32 %v3155, 0.35355338
  %v3159 = vadd.f32 %v3157, %v350
  %v3160 = vadd.f32 %v3158, %v351
  %v3161 = vsel %vm556, %v3159, -inf
  %3162 = vmax.xlane.f32.xlu0 %v3161
  %v3163 = vpop.xlane.xlu0 %3162
  %v3164 = vsel %vm560, %v3160, -inf
  %3165 = vmax.xlane.f32.xlu0 %v3164
  %v3166 = vpop.xlane.xlu0 %3165
  %v3167 = vsub.f32 %v3159, %v3163
  %v3168 = vsub.f32 %v3160, %v3166
  %v3169 = vmul.f32 %v3167, 1.442695
  %v3170 = vpow.pop %v3169
  %v3171 = vmul.f32 %v3168, 1.442695
  %v3172 = vpow.pop %v3171
  %v3173 = vsel %vm556, %v3170, 0.0
  %3174 = vadd.xlane.f32.xlu0 %v3173
  %v3175 = vpop.xlane.xlu0 %3174
  %v3176 = vsel %vm560, %v3172, 0.0
  %3177 = vadd.xlane.f32.xlu0 %v3176
  %v3178 = vpop.xlane.xlu0 %3177
  %v3179 = vrcp.pop %v3175
  %v3180 = vmul.f32 %v3175, %v3179
  %v3181 = vsub.f32 1.0, %v3180
  %v3182 = vmul.f32 %v3179, %v3181
  %v3183 = vadd.f32 %v3179, %v3182
  %vm3184 = vweird.f32 %v3175
  %vm3185 = vweird.f32 %v3179
  %vm3186 = vmor %vm3184, %vm3185
  %v3187 = vsel %vm3186, %v3179, %v3183
  %v3188 = vand.u32 2147483647, %v3175
  %vm3189 = vcmp.eq.f32.partialorder %v3188, 8.507059e+37
  %v3190 = vand.u32 %v3175, 2147483648
  %v3191 = vor.u32 1.1754944e-38, %v3190
  %v3192 = vsel %vm3189, %v3191, %v3187
  %v3193 = vmul.f32 %v3170, %v3192
  %v3194 = vrcp.pop %v3178
  %v3195 = vmul.f32 %v3178, %v3194
  %v3196 = vsub.f32 1.0, %v3195
  %v3197 = vmul.f32 %v3194, %v3196
  %v3198 = vadd.f32 %v3194, %v3197
  %vm3199 = vweird.f32 %v3178
  %vm3200 = vweird.f32 %v3194
  %vm3201 = vmor %vm3199, %vm3200
  %v3202 = vsel %vm3201, %v3194, %v3198
  %v3203 = vand.u32 2147483647, %v3178
  %vm3204 = vcmp.eq.f32.partialorder %v3203, 8.507059e+37
  %v3205 = vand.u32 %v3178, 2147483648
  %v3206 = vor.u32 1.1754944e-38, %v3205
  %v3207 = vsel %vm3204, %v3206, %v3202
  %v3208 = vmul.f32 %v3172, %v3207
  %v3210 = vsel %vm556, %v3193, 0
  %v3213 = vsel %vm556, %v3208, 0
  %v3216 = vsel %vm612, %v3120, 0
  %3218 = vmatpush.msra.mxu0 0.0
  %3219 = vmatpush.msra.mxu0 0.0
  %3220 = vmatpush.msra.mxu0 0.0
  %3221 = vmatpush.msra.mxu0 0.0
  %3222 = vmatpush.msra.mxu0 0.0
  %3223 = vmatpush.msra.mxu0 0.0
  %3224 = vmatpush.msra.mxu0 0.0
  %3225 = vmatpush.msra.mxu0 0.0
  %3226 = vmatpush.msra.mxu0 0.0
  %3227 = vmatpush.msra.mxu0 0.0
  %3228 = vmatpush.msra.mxu0 0.0
  %3229 = vmatpush.msra.mxu0 0.0
  %3230 = vmatpush.msra.mxu0 0.0
  %3231 = vmatpush.msra.mxu0 0.0
  %3232 = vmatpush.msra.mxu0 %v3216
  %3233 = vmatpush.msra.mxu0 %v3117
  %3234 = vmatmul.f32.gmra.mxu0 %v3210
  %v3235 = vpop.f32.mrf.mxu0
  %v3236 = vadd.f32 0.0, %v3235
  %3237 = vmatmul.f32.gmra.mxu0 %v3213
  %v3238 = vpop.f32.mrf.mxu0
  %v3239 = vadd.f32 0.0, %v3238
  %3240 = vdwg.mxu0
  %s3241 = scalar_lea.vmem %s12, 64
  %v3242 = vld [vmem:[%s3241] sm:$0xff]
  %s3243 = scalar_lea.vmem %s6, 288
  %v3244 = vld [vmem:[%s3243] sm:$0xff]
  %v3245 = vld [vmem:[%s3243 + $0x8] sm:$0xff]
  %v3246 = vld [vmem:[%s3243 + $0x10] sm:$0xff]
  %v3247 = vld [vmem:[%s3243 + $0x18] sm:$0xff]
  %s3248 = scalar_lea.vmem %s7, 9
  %v3249 = vld [vmem:[%s3248] sm:$0x1]
  %v3251 = vperm.slane %v3249, 0
  %3253 = vmatpush.msra.mxu0 0.0
  %3254 = vmatpush.msra.mxu0 0.0
  %3255 = vmatpush.msra.mxu0 0.0
  %3256 = vmatpush.msra.mxu0 0.0
  %3257 = vmatpush.msra.mxu0 0.0
  %3258 = vmatpush.msra.mxu0 0.0
  %3259 = vmatpush.msra.mxu0 0.0
  %3260 = vmatpush.msra.mxu0 0.0
  %3261 = vmatpush.msra.mxu0 0.0
  %3262 = vmatpush.msra.mxu0 0.0
  %3263 = vmatpush.msra.mxu0 0.0
  %3264 = vmatpush.msra.mxu0 0.0
  %3265 = vmatpush.msra.mxu0 %v3247
  %3266 = vmatpush.msra.mxu0 %v3246
  %3267 = vmatpush.msra.mxu0 %v3245
  %3268 = vmatpush.msra.mxu0 %v3244
  %3269 = vmatmul.f32.gmra.mxu0 %v3028
  %v3270 = vpop.f32.mrf.mxu0
  %v3271 = vadd.f32 %v3251, %v3270
  %3272 = vmatmul.f32.gmra.mxu0 %v3031
  %v3273 = vpop.f32.mrf.mxu0
  %v3274 = vadd.f32 %v3251, %v3273
  %3275 = vdwg.mxu0
  %s3276 = scalar_lea.vmem %s8, 288
  %v3277 = vld [vmem:[%s3276] sm:$0xff]
  %v3278 = vld [vmem:[%s3276 + $0x8] sm:$0xff]
  %v3279 = vld [vmem:[%s3276 + $0x10] sm:$0xff]
  %v3280 = vld [vmem:[%s3276 + $0x18] sm:$0xff]
  %s3281 = scalar_lea.vmem %s9, 9
  %v3282 = vld [vmem:[%s3281] sm:$0x1]
  %v3284 = vperm.slane %v3282, 0
  %3286 = vmatpush.msra.mxu0 0.0
  %3287 = vmatpush.msra.mxu0 0.0
  %3288 = vmatpush.msra.mxu0 0.0
  %3289 = vmatpush.msra.mxu0 0.0
  %3290 = vmatpush.msra.mxu0 0.0
  %3291 = vmatpush.msra.mxu0 0.0
  %3292 = vmatpush.msra.mxu0 0.0
  %3293 = vmatpush.msra.mxu0 0.0
  %3294 = vmatpush.msra.mxu0 0.0
  %3295 = vmatpush.msra.mxu0 0.0
  %3296 = vmatpush.msra.mxu0 0.0
  %3297 = vmatpush.msra.mxu0 0.0
  %3298 = vmatpush.msra.mxu0 %v3280
  %3299 = vmatpush.msra.mxu0 %v3279
  %3300 = vmatpush.msra.mxu0 %v3278
  %3301 = vmatpush.msra.mxu0 %v3277
  %3302 = vmatmul.f32.gmra.mxu0 %v3028
  %v3303 = vpop.f32.mrf.mxu0
  %v3304 = vadd.f32 %v3284, %v3303
  %3305 = vmatmul.f32.gmra.mxu0 %v3031
  %v3306 = vpop.f32.mrf.mxu0
  %v3307 = vadd.f32 %v3284, %v3306
  %3308 = vdwg.mxu0
  %s3309 = scalar_lea.vmem %s10, 288
  %v3310 = vld [vmem:[%s3309] sm:$0xff]
  %v3311 = vld [vmem:[%s3309 + $0x8] sm:$0xff]
  %v3312 = vld [vmem:[%s3309 + $0x10] sm:$0xff]
  %v3313 = vld [vmem:[%s3309 + $0x18] sm:$0xff]
  %s3314 = scalar_lea.vmem %s11, 9
  %v3315 = vld [vmem:[%s3314] sm:$0x1]
  %v3317 = vperm.slane %v3315, 0
  %3319 = vmatpush.msra.mxu0 0.0
  %3320 = vmatpush.msra.mxu0 0.0
  %3321 = vmatpush.msra.mxu0 0.0
  %3322 = vmatpush.msra.mxu0 0.0
  %3323 = vmatpush.msra.mxu0 0.0
  %3324 = vmatpush.msra.mxu0 0.0
  %3325 = vmatpush.msra.mxu0 0.0
  %3326 = vmatpush.msra.mxu0 0.0
  %3327 = vmatpush.msra.mxu0 0.0
  %3328 = vmatpush.msra.mxu0 0.0
  %3329 = vmatpush.msra.mxu0 0.0
  %3330 = vmatpush.msra.mxu0 0.0
  %3331 = vmatpush.msra.mxu0 %v3313
  %3332 = vmatpush.msra.mxu0 %v3312
  %3333 = vmatpush.msra.mxu0 %v3311
  %3334 = vmatpush.msra.mxu0 %v3310
  %3335 = vmatmul.f32.gmra.mxu0 %v3028
  %v3336 = vpop.f32.mrf.mxu0
  %v3337 = vadd.f32 %v3317, %v3336
  %3338 = vmatmul.f32.gmra.mxu0 %v3031
  %v3339 = vpop.f32.mrf.mxu0
  %v3340 = vadd.f32 %v3317, %v3339
  %3341 = vdwg.mxu0
  %v3343 = vsel %vm516, %v3271, 0
  %v3346 = vsel %vm516, %v3274, 0
  %v3349 = vsel %vm516, %v3304, 0
  %v3352 = vsel %vm516, %v3307, 0
  %3354 = vmatpush.xpose.msra.mxu0 0.0
  %3355 = vmatpush.xpose.msra.mxu0 0.0
  %3356 = vmatpush.xpose.msra.mxu0 0.0
  %3357 = vmatpush.xpose.msra.mxu0 0.0
  %3358 = vmatpush.xpose.msra.mxu0 0.0
  %3359 = vmatpush.xpose.msra.mxu0 0.0
  %3360 = vmatpush.xpose.msra.mxu0 0.0
  %3361 = vmatpush.xpose.msra.mxu0 0.0
  %3362 = vmatpush.xpose.msra.mxu0 0.0
  %3363 = vmatpush.xpose.msra.mxu0 0.0
  %3364 = vmatpush.xpose.msra.mxu0 0.0
  %3365 = vmatpush.xpose.msra.mxu0 0.0
  %3366 = vmatpush.xpose.msra.mxu0 0.0
  %3367 = vmatpush.xpose.msra.mxu0 0.0
  %3368 = vmatpush.xpose.msra.mxu0 %v3352
  %3369 = vmatpush.xpose.msra.mxu0 %v3349
  %3370 = vmatmul.f32.gmra.mxu0 %v3343
  %v3371 = vpop.f32.mrf.mxu0
  %v3372 = vadd.f32 0.0, %v3371
  %3373 = vmatmul.f32.gmra.mxu0 %v3346
  %v3374 = vpop.f32.mrf.mxu0
  %v3375 = vadd.f32 0.0, %v3374
  %3376 = vdwg.mxu0
  %v3377 = vmul.f32 %v3372, 0.35355338
  %v3378 = vmul.f32 %v3375, 0.35355338
  %v3379 = vadd.f32 %v3377, %v350
  %v3380 = vadd.f32 %v3378, %v351
  %v3381 = vsel %vm556, %v3379, -inf
  %3382 = vmax.xlane.f32.xlu0 %v3381
  %v3383 = vpop.xlane.xlu0 %3382
  %v3384 = vsel %vm560, %v3380, -inf
  %3385 = vmax.xlane.f32.xlu0 %v3384
  %v3386 = vpop.xlane.xlu0 %3385
  %v3387 = vsub.f32 %v3379, %v3383
  %v3388 = vsub.f32 %v3380, %v3386
  %v3389 = vmul.f32 %v3387, 1.442695
  %v3390 = vpow.pop %v3389
  %v3391 = vmul.f32 %v3388, 1.442695
  %v3392 = vpow.pop %v3391
  %v3393 = vsel %vm556, %v3390, 0.0
  %3394 = vadd.xlane.f32.xlu0 %v3393
  %v3395 = vpop.xlane.xlu0 %3394
  %v3396 = vsel %vm560, %v3392, 0.0
  %3397 = vadd.xlane.f32.xlu0 %v3396
  %v3398 = vpop.xlane.xlu0 %3397
  %v3399 = vrcp.pop %v3395
  %v3400 = vmul.f32 %v3395, %v3399
  %v3401 = vsub.f32 1.0, %v3400
  %v3402 = vmul.f32 %v3399, %v3401
  %v3403 = vadd.f32 %v3399, %v3402
  %vm3404 = vweird.f32 %v3395
  %vm3405 = vweird.f32 %v3399
  %vm3406 = vmor %vm3404, %vm3405
  %v3407 = vsel %vm3406, %v3399, %v3403
  %v3408 = vand.u32 2147483647, %v3395
  %vm3409 = vcmp.eq.f32.partialorder %v3408, 8.507059e+37
  %v3410 = vand.u32 %v3395, 2147483648
  %v3411 = vor.u32 1.1754944e-38, %v3410
  %v3412 = vsel %vm3409, %v3411, %v3407
  %v3413 = vmul.f32 %v3390, %v3412
  %v3414 = vrcp.pop %v3398
  %v3415 = vmul.f32 %v3398, %v3414
  %v3416 = vsub.f32 1.0, %v3415
  %v3417 = vmul.f32 %v3414, %v3416
  %v3418 = vadd.f32 %v3414, %v3417
  %vm3419 = vweird.f32 %v3398
  %vm3420 = vweird.f32 %v3414
  %vm3421 = vmor %vm3419, %vm3420
  %v3422 = vsel %vm3421, %v3414, %v3418
  %v3423 = vand.u32 2147483647, %v3398
  %vm3424 = vcmp.eq.f32.partialorder %v3423, 8.507059e+37
  %v3425 = vand.u32 %v3398, 2147483648
  %v3426 = vor.u32 1.1754944e-38, %v3425
  %v3427 = vsel %vm3424, %v3426, %v3422
  %v3428 = vmul.f32 %v3392, %v3427
  %v3430 = vsel %vm556, %v3413, 0
  %v3433 = vsel %vm556, %v3428, 0
  %v3436 = vsel %vm612, %v3340, 0
  %3438 = vmatpush.msra.mxu0 0.0
  %3439 = vmatpush.msra.mxu0 0.0
  %3440 = vmatpush.msra.mxu0 0.0
  %3441 = vmatpush.msra.mxu0 0.0
  %3442 = vmatpush.msra.mxu0 0.0
  %3443 = vmatpush.msra.mxu0 0.0
  %3444 = vmatpush.msra.mxu0 0.0
  %3445 = vmatpush.msra.mxu0 0.0
  %3446 = vmatpush.msra.mxu0 0.0
  %3447 = vmatpush.msra.mxu0 0.0
  %3448 = vmatpush.msra.mxu0 0.0
  %3449 = vmatpush.msra.mxu0 0.0
  %3450 = vmatpush.msra.mxu0 0.0
  %3451 = vmatpush.msra.mxu0 0.0
  %3452 = vmatpush.msra.mxu0 %v3436
  %3453 = vmatpush.msra.mxu0 %v3337
  %3454 = vmatmul.f32.gmra.mxu0 %v3430
  %v3455 = vpop.f32.mrf.mxu0
  %v3456 = vadd.f32 0.0, %v3455
  %3457 = vmatmul.f32.gmra.mxu0 %v3433
  %v3458 = vpop.f32.mrf.mxu0
  %v3459 = vadd.f32 0.0, %v3458
  %3460 = vdwg.mxu0
  %s3461 = scalar_lea.vmem %s12, 72
  %v3462 = vld [vmem:[%s3461] sm:$0xff]
  %v3464 = vsel %vm516, %v3456, 0
  %v3467 = vsel %vm516, %v3459, 0
  %3469 = vmatpush.msra.mxu0 0.0
  %3470 = vmatpush.msra.mxu0 0.0
  %3471 = vmatpush.msra.mxu0 0.0
  %3472 = vmatpush.msra.mxu0 0.0
  %3473 = vmatpush.msra.mxu0 0.0
  %3474 = vmatpush.msra.mxu0 0.0
  %3475 = vmatpush.msra.mxu0 0.0
  %3476 = vmatpush.msra.mxu0 0.0
  %3477 = vmatpush.msra.mxu0 0.0
  %3478 = vmatpush.msra.mxu0 0.0
  %3479 = vmatpush.msra.mxu0 0.0
  %3480 = vmatpush.msra.mxu0 0.0
  %3481 = vmatpush.msra.mxu0 0.0
  %3482 = vmatpush.msra.mxu0 0.0
  %3483 = vmatpush.msra.mxu0 0.0
  %3484 = vmatpush.msra.mxu0 %v3462
  %3485 = vmatmul.f32.gmra.mxu0 %v3464
  %v3486 = vpop.f32.mrf.mxu0
  %v3487 = vadd.f32 0.0, %v3486
  %3488 = vmatmul.f32.gmra.mxu0 %v3467
  %v3489 = vpop.f32.mrf.mxu0
  %v3490 = vadd.f32 0.0, %v3489
  %3491 = vdwg.mxu0
  %v3493 = vsel %vm516, %v3236, 0
  %v3496 = vsel %vm516, %v3239, 0
  %3498 = vmatpush.msra.mxu0 0.0
  %3499 = vmatpush.msra.mxu0 0.0
  %3500 = vmatpush.msra.mxu0 0.0
  %3501 = vmatpush.msra.mxu0 0.0
  %3502 = vmatpush.msra.mxu0 0.0
  %3503 = vmatpush.msra.mxu0 0.0
  %3504 = vmatpush.msra.mxu0 0.0
  %3505 = vmatpush.msra.mxu0 0.0
  %3506 = vmatpush.msra.mxu0 0.0
  %3507 = vmatpush.msra.mxu0 0.0
  %3508 = vmatpush.msra.mxu0 0.0
  %3509 = vmatpush.msra.mxu0 0.0
  %3510 = vmatpush.msra.mxu0 0.0
  %3511 = vmatpush.msra.mxu0 0.0
  %3512 = vmatpush.msra.mxu0 0.0
  %3513 = vmatpush.msra.mxu0 %v3242
  %3514 = vmatmul.f32.gmra.mxu0 %v3493
  %v3515 = vpop.f32.mrf.mxu0
  %v3516 = vadd.f32 %v3487, %v3515
  %3517 = vmatmul.f32.gmra.mxu0 %v3496
  %v3518 = vpop.f32.mrf.mxu0
  %v3519 = vadd.f32 %v3490, %v3518
  %3520 = vdwg.mxu0
  %s3521 = scalar_lea.vmem %s6, 320
  %v3522 = vld [vmem:[%s3521] sm:$0xff]
  %v3523 = vld [vmem:[%s3521 + $0x8] sm:$0xff]
  %v3524 = vld [vmem:[%s3521 + $0x10] sm:$0xff]
  %v3525 = vld [vmem:[%s3521 + $0x18] sm:$0xff]
  %s3526 = scalar_lea.vmem %s7, 10
  %v3527 = vld [vmem:[%s3526] sm:$0x1]
  %v3529 = vperm.slane %v3527, 0
  %3531 = vmatpush.msra.mxu0 0.0
  %3532 = vmatpush.msra.mxu0 0.0
  %3533 = vmatpush.msra.mxu0 0.0
  %3534 = vmatpush.msra.mxu0 0.0
  %3535 = vmatpush.msra.mxu0 0.0
  %3536 = vmatpush.msra.mxu0 0.0
  %3537 = vmatpush.msra.mxu0 0.0
  %3538 = vmatpush.msra.mxu0 0.0
  %3539 = vmatpush.msra.mxu0 0.0
  %3540 = vmatpush.msra.mxu0 0.0
  %3541 = vmatpush.msra.mxu0 0.0
  %3542 = vmatpush.msra.mxu0 0.0
  %3543 = vmatpush.msra.mxu0 %v3525
  %3544 = vmatpush.msra.mxu0 %v3524
  %3545 = vmatpush.msra.mxu0 %v3523
  %3546 = vmatpush.msra.mxu0 %v3522
  %3547 = vmatmul.f32.gmra.mxu0 %v3028
  %v3548 = vpop.f32.mrf.mxu0
  %v3549 = vadd.f32 %v3529, %v3548
  %3550 = vmatmul.f32.gmra.mxu0 %v3031
  %v3551 = vpop.f32.mrf.mxu0
  %v3552 = vadd.f32 %v3529, %v3551
  %3553 = vdwg.mxu0
  %s3554 = scalar_lea.vmem %s8, 320
  %v3555 = vld [vmem:[%s3554] sm:$0xff]
  %v3556 = vld [vmem:[%s3554 + $0x8] sm:$0xff]
  %v3557 = vld [vmem:[%s3554 + $0x10] sm:$0xff]
  %v3558 = vld [vmem:[%s3554 + $0x18] sm:$0xff]
  %s3559 = scalar_lea.vmem %s9, 10
  %v3560 = vld [vmem:[%s3559] sm:$0x1]
  %v3562 = vperm.slane %v3560, 0
  %3564 = vmatpush.msra.mxu0 0.0
  %3565 = vmatpush.msra.mxu0 0.0
  %3566 = vmatpush.msra.mxu0 0.0
  %3567 = vmatpush.msra.mxu0 0.0
  %3568 = vmatpush.msra.mxu0 0.0
  %3569 = vmatpush.msra.mxu0 0.0
  %3570 = vmatpush.msra.mxu0 0.0
  %3571 = vmatpush.msra.mxu0 0.0
  %3572 = vmatpush.msra.mxu0 0.0
  %3573 = vmatpush.msra.mxu0 0.0
  %3574 = vmatpush.msra.mxu0 0.0
  %3575 = vmatpush.msra.mxu0 0.0
  %3576 = vmatpush.msra.mxu0 %v3558
  %3577 = vmatpush.msra.mxu0 %v3557
  %3578 = vmatpush.msra.mxu0 %v3556
  %3579 = vmatpush.msra.mxu0 %v3555
  %3580 = vmatmul.f32.gmra.mxu0 %v3028
  %v3581 = vpop.f32.mrf.mxu0
  %v3582 = vadd.f32 %v3562, %v3581
  %3583 = vmatmul.f32.gmra.mxu0 %v3031
  %v3584 = vpop.f32.mrf.mxu0
  %v3585 = vadd.f32 %v3562, %v3584
  %3586 = vdwg.mxu0
  %s3587 = scalar_lea.vmem %s10, 320
  %v3588 = vld [vmem:[%s3587] sm:$0xff]
  %v3589 = vld [vmem:[%s3587 + $0x8] sm:$0xff]
  %v3590 = vld [vmem:[%s3587 + $0x10] sm:$0xff]
  %v3591 = vld [vmem:[%s3587 + $0x18] sm:$0xff]
  %s3592 = scalar_lea.vmem %s11, 10
  %v3593 = vld [vmem:[%s3592] sm:$0x1]
  %v3595 = vperm.slane %v3593, 0
  %3597 = vmatpush.msra.mxu0 0.0
  %3598 = vmatpush.msra.mxu0 0.0
  %3599 = vmatpush.msra.mxu0 0.0
  %3600 = vmatpush.msra.mxu0 0.0
  %3601 = vmatpush.msra.mxu0 0.0
  %3602 = vmatpush.msra.mxu0 0.0
  %3603 = vmatpush.msra.mxu0 0.0
  %3604 = vmatpush.msra.mxu0 0.0
  %3605 = vmatpush.msra.mxu0 0.0
  %3606 = vmatpush.msra.mxu0 0.0
  %3607 = vmatpush.msra.mxu0 0.0
  %3608 = vmatpush.msra.mxu0 0.0
  %3609 = vmatpush.msra.mxu0 %v3591
  %3610 = vmatpush.msra.mxu0 %v3590
  %3611 = vmatpush.msra.mxu0 %v3589
  %3612 = vmatpush.msra.mxu0 %v3588
  %3613 = vmatmul.f32.gmra.mxu0 %v3028
  %v3614 = vpop.f32.mrf.mxu0
  %v3615 = vadd.f32 %v3595, %v3614
  %3616 = vmatmul.f32.gmra.mxu0 %v3031
  %v3617 = vpop.f32.mrf.mxu0
  %v3618 = vadd.f32 %v3595, %v3617
  %3619 = vdwg.mxu0
  %v3621 = vsel %vm516, %v3549, 0
  %v3624 = vsel %vm516, %v3552, 0
  %v3627 = vsel %vm516, %v3582, 0
  %v3630 = vsel %vm516, %v3585, 0
  %3632 = vmatpush.xpose.msra.mxu0 0.0
  %3633 = vmatpush.xpose.msra.mxu0 0.0
  %3634 = vmatpush.xpose.msra.mxu0 0.0
  %3635 = vmatpush.xpose.msra.mxu0 0.0
  %3636 = vmatpush.xpose.msra.mxu0 0.0
  %3637 = vmatpush.xpose.msra.mxu0 0.0
  %3638 = vmatpush.xpose.msra.mxu0 0.0
  %3639 = vmatpush.xpose.msra.mxu0 0.0
  %3640 = vmatpush.xpose.msra.mxu0 0.0
  %3641 = vmatpush.xpose.msra.mxu0 0.0
  %3642 = vmatpush.xpose.msra.mxu0 0.0
  %3643 = vmatpush.xpose.msra.mxu0 0.0
  %3644 = vmatpush.xpose.msra.mxu0 0.0
  %3645 = vmatpush.xpose.msra.mxu0 0.0
  %3646 = vmatpush.xpose.msra.mxu0 %v3630
  %3647 = vmatpush.xpose.msra.mxu0 %v3627
  %3648 = vmatmul.f32.gmra.mxu0 %v3621
  %v3649 = vpop.f32.mrf.mxu0
  %v3650 = vadd.f32 0.0, %v3649
  %3651 = vmatmul.f32.gmra.mxu0 %v3624
  %v3652 = vpop.f32.mrf.mxu0
  %v3653 = vadd.f32 0.0, %v3652
  %3654 = vdwg.mxu0
  %v3655 = vmul.f32 %v3650, 0.35355338
  %v3656 = vmul.f32 %v3653, 0.35355338
  %v3657 = vadd.f32 %v3655, %v350
  %v3658 = vadd.f32 %v3656, %v351
  %v3659 = vsel %vm556, %v3657, -inf
  %3660 = vmax.xlane.f32.xlu0 %v3659
  %v3661 = vpop.xlane.xlu0 %3660
  %v3662 = vsel %vm560, %v3658, -inf
  %3663 = vmax.xlane.f32.xlu0 %v3662
  %v3664 = vpop.xlane.xlu0 %3663
  %v3665 = vsub.f32 %v3657, %v3661
  %v3666 = vsub.f32 %v3658, %v3664
  %v3667 = vmul.f32 %v3665, 1.442695
  %v3668 = vpow.pop %v3667
  %v3669 = vmul.f32 %v3666, 1.442695
  %v3670 = vpow.pop %v3669
  %v3671 = vsel %vm556, %v3668, 0.0
  %3672 = vadd.xlane.f32.xlu0 %v3671
  %v3673 = vpop.xlane.xlu0 %3672
  %v3674 = vsel %vm560, %v3670, 0.0
  %3675 = vadd.xlane.f32.xlu0 %v3674
  %v3676 = vpop.xlane.xlu0 %3675
  %v3677 = vrcp.pop %v3673
  %v3678 = vmul.f32 %v3673, %v3677
  %v3679 = vsub.f32 1.0, %v3678
  %v3680 = vmul.f32 %v3677, %v3679
  %v3681 = vadd.f32 %v3677, %v3680
  %vm3682 = vweird.f32 %v3673
  %vm3683 = vweird.f32 %v3677
  %vm3684 = vmor %vm3682, %vm3683
  %v3685 = vsel %vm3684, %v3677, %v3681
  %v3686 = vand.u32 2147483647, %v3673
  %vm3687 = vcmp.eq.f32.partialorder %v3686, 8.507059e+37
  %v3688 = vand.u32 %v3673, 2147483648
  %v3689 = vor.u32 1.1754944e-38, %v3688
  %v3690 = vsel %vm3687, %v3689, %v3685
  %v3691 = vmul.f32 %v3668, %v3690
  %v3692 = vrcp.pop %v3676
  %v3693 = vmul.f32 %v3676, %v3692
  %v3694 = vsub.f32 1.0, %v3693
  %v3695 = vmul.f32 %v3692, %v3694
  %v3696 = vadd.f32 %v3692, %v3695
  %vm3697 = vweird.f32 %v3676
  %vm3698 = vweird.f32 %v3692
  %vm3699 = vmor %vm3697, %vm3698
  %v3700 = vsel %vm3699, %v3692, %v3696
  %v3701 = vand.u32 2147483647, %v3676
  %vm3702 = vcmp.eq.f32.partialorder %v3701, 8.507059e+37
  %v3703 = vand.u32 %v3676, 2147483648
  %v3704 = vor.u32 1.1754944e-38, %v3703
  %v3705 = vsel %vm3702, %v3704, %v3700
  %v3706 = vmul.f32 %v3670, %v3705
  %v3708 = vsel %vm556, %v3691, 0
  %v3711 = vsel %vm556, %v3706, 0
  %v3714 = vsel %vm612, %v3618, 0
  %3716 = vmatpush.msra.mxu0 0.0
  %3717 = vmatpush.msra.mxu0 0.0
  %3718 = vmatpush.msra.mxu0 0.0
  %3719 = vmatpush.msra.mxu0 0.0
  %3720 = vmatpush.msra.mxu0 0.0
  %3721 = vmatpush.msra.mxu0 0.0
  %3722 = vmatpush.msra.mxu0 0.0
  %3723 = vmatpush.msra.mxu0 0.0
  %3724 = vmatpush.msra.mxu0 0.0
  %3725 = vmatpush.msra.mxu0 0.0
  %3726 = vmatpush.msra.mxu0 0.0
  %3727 = vmatpush.msra.mxu0 0.0
  %3728 = vmatpush.msra.mxu0 0.0
  %3729 = vmatpush.msra.mxu0 0.0
  %3730 = vmatpush.msra.mxu0 %v3714
  %3731 = vmatpush.msra.mxu0 %v3615
  %3732 = vmatmul.f32.gmra.mxu0 %v3708
  %v3733 = vpop.f32.mrf.mxu0
  %v3734 = vadd.f32 0.0, %v3733
  %3735 = vmatmul.f32.gmra.mxu0 %v3711
  %v3736 = vpop.f32.mrf.mxu0
  %v3737 = vadd.f32 0.0, %v3736
  %3738 = vdwg.mxu0
  %s3739 = scalar_lea.vmem %s12, 80
  %v3740 = vld [vmem:[%s3739] sm:$0xff]
  %v3742 = vsel %vm516, %v3734, 0
  %v3745 = vsel %vm516, %v3737, 0
  %3747 = vmatpush.msra.mxu0 0.0
  %3748 = vmatpush.msra.mxu0 0.0
  %3749 = vmatpush.msra.mxu0 0.0
  %3750 = vmatpush.msra.mxu0 0.0
  %3751 = vmatpush.msra.mxu0 0.0
  %3752 = vmatpush.msra.mxu0 0.0
  %3753 = vmatpush.msra.mxu0 0.0
  %3754 = vmatpush.msra.mxu0 0.0
  %3755 = vmatpush.msra.mxu0 0.0
  %3756 = vmatpush.msra.mxu0 0.0
  %3757 = vmatpush.msra.mxu0 0.0
  %3758 = vmatpush.msra.mxu0 0.0
  %3759 = vmatpush.msra.mxu0 0.0
  %3760 = vmatpush.msra.mxu0 0.0
  %3761 = vmatpush.msra.mxu0 0.0
  %3762 = vmatpush.msra.mxu0 %v3740
  %3763 = vmatmul.f32.gmra.mxu0 %v3742
  %v3764 = vpop.f32.mrf.mxu0
  %v3765 = vadd.f32 0.0, %v3764
  %3766 = vmatmul.f32.gmra.mxu0 %v3745
  %v3767 = vpop.f32.mrf.mxu0
  %v3768 = vadd.f32 0.0, %v3767
  %3769 = vdwg.mxu0
  %v3770 = vadd.f32 %v3516, %v3765
  %v3771 = vadd.f32 %v3519, %v3768
  %s3772 = scalar_lea.vmem %s6, 352
  %v3773 = vld [vmem:[%s3772] sm:$0xff]
  %v3774 = vld [vmem:[%s3772 + $0x8] sm:$0xff]
  %v3775 = vld [vmem:[%s3772 + $0x10] sm:$0xff]
  %v3776 = vld [vmem:[%s3772 + $0x18] sm:$0xff]
  %s3777 = scalar_lea.vmem %s7, 11
  %v3778 = vld [vmem:[%s3777] sm:$0x1]
  %v3780 = vperm.slane %v3778, 0
  %3782 = vmatpush.msra.mxu0 0.0
  %3783 = vmatpush.msra.mxu0 0.0
  %3784 = vmatpush.msra.mxu0 0.0
  %3785 = vmatpush.msra.mxu0 0.0
  %3786 = vmatpush.msra.mxu0 0.0
  %3787 = vmatpush.msra.mxu0 0.0
  %3788 = vmatpush.msra.mxu0 0.0
  %3789 = vmatpush.msra.mxu0 0.0
  %3790 = vmatpush.msra.mxu0 0.0
  %3791 = vmatpush.msra.mxu0 0.0
  %3792 = vmatpush.msra.mxu0 0.0
  %3793 = vmatpush.msra.mxu0 0.0
  %3794 = vmatpush.msra.mxu0 %v3776
  %3795 = vmatpush.msra.mxu0 %v3775
  %3796 = vmatpush.msra.mxu0 %v3774
  %3797 = vmatpush.msra.mxu0 %v3773
  %3798 = vmatmul.f32.gmra.mxu0 %v3028
  %v3799 = vpop.f32.mrf.mxu0
  %v3800 = vadd.f32 %v3780, %v3799
  %3801 = vmatmul.f32.gmra.mxu0 %v3031
  %v3802 = vpop.f32.mrf.mxu0
  %v3803 = vadd.f32 %v3780, %v3802
  %3804 = vdwg.mxu0
  %s3805 = scalar_lea.vmem %s8, 352
  %v3806 = vld [vmem:[%s3805] sm:$0xff]
  %v3807 = vld [vmem:[%s3805 + $0x8] sm:$0xff]
  %v3808 = vld [vmem:[%s3805 + $0x10] sm:$0xff]
  %v3809 = vld [vmem:[%s3805 + $0x18] sm:$0xff]
  %s3810 = scalar_lea.vmem %s9, 11
  %v3811 = vld [vmem:[%s3810] sm:$0x1]
  %v3813 = vperm.slane %v3811, 0
  %3815 = vmatpush.msra.mxu0 0.0
  %3816 = vmatpush.msra.mxu0 0.0
  %3817 = vmatpush.msra.mxu0 0.0
  %3818 = vmatpush.msra.mxu0 0.0
  %3819 = vmatpush.msra.mxu0 0.0
  %3820 = vmatpush.msra.mxu0 0.0
  %3821 = vmatpush.msra.mxu0 0.0
  %3822 = vmatpush.msra.mxu0 0.0
  %3823 = vmatpush.msra.mxu0 0.0
  %3824 = vmatpush.msra.mxu0 0.0
  %3825 = vmatpush.msra.mxu0 0.0
  %3826 = vmatpush.msra.mxu0 0.0
  %3827 = vmatpush.msra.mxu0 %v3809
  %3828 = vmatpush.msra.mxu0 %v3808
  %3829 = vmatpush.msra.mxu0 %v3807
  %3830 = vmatpush.msra.mxu0 %v3806
  %3831 = vmatmul.f32.gmra.mxu0 %v3028
  %v3832 = vpop.f32.mrf.mxu0
  %v3833 = vadd.f32 %v3813, %v3832
  %3834 = vmatmul.f32.gmra.mxu0 %v3031
  %v3835 = vpop.f32.mrf.mxu0
  %v3836 = vadd.f32 %v3813, %v3835
  %3837 = vdwg.mxu0
  %s3838 = scalar_lea.vmem %s10, 352
  %v3839 = vld [vmem:[%s3838] sm:$0xff]
  %v3840 = vld [vmem:[%s3838 + $0x8] sm:$0xff]
  %v3841 = vld [vmem:[%s3838 + $0x10] sm:$0xff]
  %v3842 = vld [vmem:[%s3838 + $0x18] sm:$0xff]
  %s3843 = scalar_lea.vmem %s11, 11
  %v3844 = vld [vmem:[%s3843] sm:$0x1]
  %v3846 = vperm.slane %v3844, 0
  %3848 = vmatpush.msra.mxu0 0.0
  %3849 = vmatpush.msra.mxu0 0.0
  %3850 = vmatpush.msra.mxu0 0.0
  %3851 = vmatpush.msra.mxu0 0.0
  %3852 = vmatpush.msra.mxu0 0.0
  %3853 = vmatpush.msra.mxu0 0.0
  %3854 = vmatpush.msra.mxu0 0.0
  %3855 = vmatpush.msra.mxu0 0.0
  %3856 = vmatpush.msra.mxu0 0.0
  %3857 = vmatpush.msra.mxu0 0.0
  %3858 = vmatpush.msra.mxu0 0.0
  %3859 = vmatpush.msra.mxu0 0.0
  %3860 = vmatpush.msra.mxu0 %v3842
  %3861 = vmatpush.msra.mxu0 %v3841
  %3862 = vmatpush.msra.mxu0 %v3840
  %3863 = vmatpush.msra.mxu0 %v3839
  %3864 = vmatmul.f32.gmra.mxu0 %v3028
  %v3865 = vpop.f32.mrf.mxu0
  %v3866 = vadd.f32 %v3846, %v3865
  %3867 = vmatmul.f32.gmra.mxu0 %v3031
  %v3868 = vpop.f32.mrf.mxu0
  %v3869 = vadd.f32 %v3846, %v3868
  %3870 = vdwg.mxu0
  %v3872 = vsel %vm516, %v3800, 0
  %v3875 = vsel %vm516, %v3803, 0
  %v3878 = vsel %vm516, %v3833, 0
  %v3881 = vsel %vm516, %v3836, 0
  %3883 = vmatpush.xpose.msra.mxu0 0.0
  %3884 = vmatpush.xpose.msra.mxu0 0.0
  %3885 = vmatpush.xpose.msra.mxu0 0.0
  %3886 = vmatpush.xpose.msra.mxu0 0.0
  %3887 = vmatpush.xpose.msra.mxu0 0.0
  %3888 = vmatpush.xpose.msra.mxu0 0.0
  %3889 = vmatpush.xpose.msra.mxu0 0.0
  %3890 = vmatpush.xpose.msra.mxu0 0.0
  %3891 = vmatpush.xpose.msra.mxu0 0.0
  %3892 = vmatpush.xpose.msra.mxu0 0.0
  %3893 = vmatpush.xpose.msra.mxu0 0.0
  %3894 = vmatpush.xpose.msra.mxu0 0.0
  %3895 = vmatpush.xpose.msra.mxu0 0.0
  %3896 = vmatpush.xpose.msra.mxu0 0.0
  %3897 = vmatpush.xpose.msra.mxu0 %v3881
  %3898 = vmatpush.xpose.msra.mxu0 %v3878
  %3899 = vmatmul.f32.gmra.mxu0 %v3872
  %v3900 = vpop.f32.mrf.mxu0
  %v3901 = vadd.f32 0.0, %v3900
  %3902 = vmatmul.f32.gmra.mxu0 %v3875
  %v3903 = vpop.f32.mrf.mxu0
  %v3904 = vadd.f32 0.0, %v3903
  %3905 = vdwg.mxu0
  %v3906 = vmul.f32 %v3901, 0.35355338
  %v3907 = vmul.f32 %v3904, 0.35355338
  %v3908 = vadd.f32 %v3906, %v350
  %v3909 = vadd.f32 %v3907, %v351
  %v3910 = vsel %vm556, %v3908, -inf
  %3911 = vmax.xlane.f32.xlu0 %v3910
  %v3912 = vpop.xlane.xlu0 %3911
  %v3913 = vsel %vm560, %v3909, -inf
  %3914 = vmax.xlane.f32.xlu0 %v3913
  %v3915 = vpop.xlane.xlu0 %3914
  %v3916 = vsub.f32 %v3908, %v3912
  %v3917 = vsub.f32 %v3909, %v3915
  %v3918 = vmul.f32 %v3916, 1.442695
  %v3919 = vpow.pop %v3918
  %v3920 = vmul.f32 %v3917, 1.442695
  %v3921 = vpow.pop %v3920
  %v3922 = vsel %vm556, %v3919, 0.0
  %3923 = vadd.xlane.f32.xlu0 %v3922
  %v3924 = vpop.xlane.xlu0 %3923
  %v3925 = vsel %vm560, %v3921, 0.0
  %3926 = vadd.xlane.f32.xlu0 %v3925
  %v3927 = vpop.xlane.xlu0 %3926
  %v3928 = vrcp.pop %v3924
  %v3929 = vmul.f32 %v3924, %v3928
  %v3930 = vsub.f32 1.0, %v3929
  %v3931 = vmul.f32 %v3928, %v3930
  %v3932 = vadd.f32 %v3928, %v3931
  %vm3933 = vweird.f32 %v3924
  %vm3934 = vweird.f32 %v3928
  %vm3935 = vmor %vm3933, %vm3934
  %v3936 = vsel %vm3935, %v3928, %v3932
  %v3937 = vand.u32 2147483647, %v3924
  %vm3938 = vcmp.eq.f32.partialorder %v3937, 8.507059e+37
  %v3939 = vand.u32 %v3924, 2147483648
  %v3940 = vor.u32 1.1754944e-38, %v3939
  %v3941 = vsel %vm3938, %v3940, %v3936
  %v3942 = vmul.f32 %v3919, %v3941
  %v3943 = vrcp.pop %v3927
  %v3944 = vmul.f32 %v3927, %v3943
  %v3945 = vsub.f32 1.0, %v3944
  %v3946 = vmul.f32 %v3943, %v3945
  %v3947 = vadd.f32 %v3943, %v3946
  %vm3948 = vweird.f32 %v3927
  %vm3949 = vweird.f32 %v3943
  %vm3950 = vmor %vm3948, %vm3949
  %v3951 = vsel %vm3950, %v3943, %v3947
  %v3952 = vand.u32 2147483647, %v3927
  %vm3953 = vcmp.eq.f32.partialorder %v3952, 8.507059e+37
  %v3954 = vand.u32 %v3927, 2147483648
  %v3955 = vor.u32 1.1754944e-38, %v3954
  %v3956 = vsel %vm3953, %v3955, %v3951
  %v3957 = vmul.f32 %v3921, %v3956
  %v3959 = vsel %vm556, %v3942, 0
  %v3962 = vsel %vm556, %v3957, 0
  %v3965 = vsel %vm612, %v3869, 0
  %3967 = vmatpush.msra.mxu0 0.0
  %3968 = vmatpush.msra.mxu0 0.0
  %3969 = vmatpush.msra.mxu0 0.0
  %3970 = vmatpush.msra.mxu0 0.0
  %3971 = vmatpush.msra.mxu0 0.0
  %3972 = vmatpush.msra.mxu0 0.0
  %3973 = vmatpush.msra.mxu0 0.0
  %3974 = vmatpush.msra.mxu0 0.0
  %3975 = vmatpush.msra.mxu0 0.0
  %3976 = vmatpush.msra.mxu0 0.0
  %3977 = vmatpush.msra.mxu0 0.0
  %3978 = vmatpush.msra.mxu0 0.0
  %3979 = vmatpush.msra.mxu0 0.0
  %3980 = vmatpush.msra.mxu0 0.0
  %3981 = vmatpush.msra.mxu0 %v3965
  %3982 = vmatpush.msra.mxu0 %v3866
  %3983 = vmatmul.f32.gmra.mxu0 %v3959
  %v3984 = vpop.f32.mrf.mxu0
  %v3985 = vadd.f32 0.0, %v3984
  %3986 = vmatmul.f32.gmra.mxu0 %v3962
  %v3987 = vpop.f32.mrf.mxu0
  %v3988 = vadd.f32 0.0, %v3987
  %3989 = vdwg.mxu0
  %s3990 = scalar_lea.vmem %s12, 88
  %v3991 = vld [vmem:[%s3990] sm:$0xff]
  %v3993 = vsel %vm516, %v3985, 0
  %v3996 = vsel %vm516, %v3988, 0
  %3998 = vmatpush.msra.mxu0 0.0
  %3999 = vmatpush.msra.mxu0 0.0
  %4000 = vmatpush.msra.mxu0 0.0
  %4001 = vmatpush.msra.mxu0 0.0
  %4002 = vmatpush.msra.mxu0 0.0
  %4003 = vmatpush.msra.mxu0 0.0
  %4004 = vmatpush.msra.mxu0 0.0
  %4005 = vmatpush.msra.mxu0 0.0
  %4006 = vmatpush.msra.mxu0 0.0
  %4007 = vmatpush.msra.mxu0 0.0
  %4008 = vmatpush.msra.mxu0 0.0
  %4009 = vmatpush.msra.mxu0 0.0
  %4010 = vmatpush.msra.mxu0 0.0
  %4011 = vmatpush.msra.mxu0 0.0
  %4012 = vmatpush.msra.mxu0 0.0
  %4013 = vmatpush.msra.mxu0 %v3991
  %4014 = vmatmul.f32.gmra.mxu0 %v3993
  %v4015 = vpop.f32.mrf.mxu0
  %v4016 = vadd.f32 0.0, %v4015
  %4017 = vmatmul.f32.gmra.mxu0 %v3996
  %v4018 = vpop.f32.mrf.mxu0
  %v4019 = vadd.f32 0.0, %v4018
  %4020 = vdwg.mxu0
  %v4021 = vadd.f32 %v3770, %v4016
  %v4022 = vadd.f32 %v3771, %v4019
  %v4023 = vadd.f32 %v2957, %v4021
  %v4024 = vadd.f32 %v2958, %v4022
  %s4025 = scalar_lea.vmem %s13, 2
  %v4026 = vld [vmem:[%s4025] sm:$0x1]
  %v4028 = vperm.slane %v4026, 0
  %v4030 = vadd.f32 %v4023, %v4028
  %v4031 = vadd.f32 %v4024, %v4028
  %s4032 = scalar_lea.vmem %s14, 2
  %v4033 = vld [vmem:[%s4032] sm:$0x1]
  %s4034 = scalar_lea.vmem %s15, 2
  %v4035 = vld [vmem:[%s4034] sm:$0x1]
  %v4036 = vsel %vm354, %v4030, 0.0
  %4037 = vadd.xlane.f32.xlu0 %v4036
  %v4038 = vpop.xlane.xlu0 %4037
  %v4039 = vsel %vm358, %v4031, 0.0
  %4040 = vadd.xlane.f32.xlu0 %v4039
  %v4041 = vpop.xlane.xlu0 %4040
  %v4042 = vmul.f32 %v4038, %v368
  %v4043 = vmul.f32 %v4041, %v368
  %v4044 = vsub.f32 %v4030, %v4042
  %v4045 = vsub.f32 %v4031, %v4043
  %v4046 = vmul.f32 %v4044, %v4044
  %v4047 = vmul.f32 %v4045, %v4045
  %v4048 = vsel %vm354, %v4046, 0.0
  %4049 = vadd.xlane.f32.xlu0 %v4048
  %v4050 = vpop.xlane.xlu0 %4049
  %v4051 = vsel %vm358, %v4047, 0.0
  %4052 = vadd.xlane.f32.xlu0 %v4051
  %v4053 = vpop.xlane.xlu0 %4052
  %v4054 = vmul.f32 %v4050, %v368
  %v4055 = vmul.f32 %v4053, %v368
  %v4056 = vadd.f32 %v4054, 1e-06
  %v4057 = vadd.f32 %v4055, 1e-06
  %v4058 = vrsqrt.pop %v4056
  %v4059 = vmul.f32 %v4058, %v4056
  %v4060 = vmul.f32 %v4059, %v4058
  %v4061 = vmul.f32 0.5, %v4060
  %v4062 = vsub.f32 1.5, %v4061
  %v4063 = vmul.f32 %v4058, %v4062
  %vm4064 = vweird.f32 %v4056
  %vm4065 = vweird.f32 %v4058
  %vm4066 = vmor %vm4064, %vm4065
  %v4067 = vsel %vm4066, %v4058, %v4063
  %v4068 = vrsqrt.pop %v4057
  %v4069 = vmul.f32 %v4068, %v4057
  %v4070 = vmul.f32 %v4069, %v4068
  %v4071 = vmul.f32 0.5, %v4070
  %v4072 = vsub.f32 1.5, %v4071
  %v4073 = vmul.f32 %v4068, %v4072
  %vm4074 = vweird.f32 %v4057
  %vm4075 = vweird.f32 %v4068
  %vm4076 = vmor %vm4074, %vm4075
  %v4077 = vsel %vm4076, %v4068, %v4073
  %v4078 = vmul.f32 %v4044, %v4067
  %v4079 = vmul.f32 %v4045, %v4077
  %v4081 = vperm.slane %v4033, 0
  %v4083 = vmul.f32 %v4078, %v4081
  %v4084 = vmul.f32 %v4079, %v4081
  %v4086 = vperm.slane %v4035, 0
  %v4088 = vadd.f32 %v4083, %v4086
  %v4089 = vadd.f32 %v4084, %v4086
  %s4090 = scalar_lea.vmem %s16, 64
  %v4091 = vld [vmem:[%s4090] sm:$0xff]
  %v4092 = vld [vmem:[%s4090 + $0x8] sm:$0xff]
  %v4093 = vld [vmem:[%s4090 + $0x10] sm:$0xff]
  %v4094 = vld [vmem:[%s4090 + $0x18] sm:$0xff]
  %s4095 = scalar_lea.vmem %s17, 2
  %v4096 = vld [vmem:[%s4095] sm:$0x1]
  %v4098 = vperm.slane %v4096, 0
  %v4101 = vsel %vm354, %v4088, 0
  %v4104 = vsel %vm354, %v4089, 0
  %4106 = vmatpush.msra.mxu0 0.0
  %4107 = vmatpush.msra.mxu0 0.0
  %4108 = vmatpush.msra.mxu0 0.0
  %4109 = vmatpush.msra.mxu0 0.0
  %4110 = vmatpush.msra.mxu0 0.0
  %4111 = vmatpush.msra.mxu0 0.0
  %4112 = vmatpush.msra.mxu0 0.0
  %4113 = vmatpush.msra.mxu0 0.0
  %4114 = vmatpush.msra.mxu0 0.0
  %4115 = vmatpush.msra.mxu0 0.0
  %4116 = vmatpush.msra.mxu0 0.0
  %4117 = vmatpush.msra.mxu0 0.0
  %4118 = vmatpush.msra.mxu0 %v4094
  %4119 = vmatpush.msra.mxu0 %v4093
  %4120 = vmatpush.msra.mxu0 %v4092
  %4121 = vmatpush.msra.mxu0 %v4091
  %4122 = vmatmul.f32.gmra.mxu0 %v4101
  %v4123 = vpop.f32.mrf.mxu0
  %v4124 = vadd.f32 %v4098, %v4123
  %4125 = vmatmul.f32.gmra.mxu0 %v4104
  %v4126 = vpop.f32.mrf.mxu0
  %v4127 = vadd.f32 %v4098, %v4126
  %4128 = vdwg.mxu0
  %v4129 = vmul.f32 %v4124, 0.5
  %v4130 = vmul.f32 %v4127, 0.5
  %v4131 = vmul.f32 %v4124, 0.70710677
  %v4132 = vmul.f32 %v4127, 0.70710677
  %v4133 = vmul.f32 %v4131, %v4131
  %v4134 = vmin.f32 16.0, %v4133
  %v4135 = vmul.f32 %v4134, 2.1237322e-06
  %v4136 = vadd.f32 %v4135, 0.00028619796
  %v4137 = vmul.f32 %v4134, %v4136
  %v4138 = vadd.f32 %v4137, 0.0036580483
  %v4139 = vmul.f32 %v4134, %v4138
  %v4140 = vadd.f32 %v4139, 0.05243302
  %v4141 = vmul.f32 %v4134, %v4140
  %v4142 = vadd.f32 %v4141, 0.18741608
  %v4143 = vmul.f32 %v4134, %v4142
  %v4144 = vadd.f32 %v4143, 1.1283791
  %v4145 = vmul.f32 %v4131, %v4144
  %v4146 = vmul.f32 %v4134, 3.8918573e-05
  %v4147 = vadd.f32 %v4146, 0.001143296
  %v4148 = vmul.f32 %v4134, %v4147
  %v4149 = vadd.f32 %v4148, 0.014752088
  %v4150 = vmul.f32 %v4134, %v4149
  %v4151 = vadd.f32 %v4150, 0.112945676
  %v4152 = vmul.f32 %v4134, %v4151
  %v4153 = vadd.f32 %v4152, 0.4994258
  %v4154 = vmul.f32 %v4134, %v4153
  %v4155 = vadd.f32 %v4154, 1.0
  %v4156 = vrcp.pop %v4155
  %v4157 = vmul.f32 %v4155, %v4156
  %v4158 = vsub.f32 1.0, %v4157
  %v4159 = vmul.f32 %v4156, %v4158
  %v4160 = vadd.f32 %v4156, %v4159
  %vm4161 = vweird.f32 %v4155
  %vm4162 = vweird.f32 %v4156
  %vm4163 = vmor %vm4161, %vm4162
  %v4164 = vsel %vm4163, %v4156, %v4160
  %v4165 = vand.u32 2147483647, %v4155
  %vm4166 = vcmp.eq.f32.partialorder %v4165, 8.507059e+37
  %v4167 = vand.u32 %v4155, 2147483648
  %v4168 = vor.u32 1.1754944e-38, %v4167
  %v4169 = vsel %vm4166, %v4168, %v4164
  %v4170 = vmul.f32 %v4145, %v4169
  %v4171 = vmin.f32 %v4170, 1.0
  %v4172 = vmax.f32 %v4171, -1.0
  %v4173 = vmul.f32 %v4132, %v4132
  %v4174 = vmin.f32 16.0, %v4173
  %v4175 = vmul.f32 %v4174, 2.1237322e-06
  %v4176 = vadd.f32 %v4175, 0.00028619796
  %v4177 = vmul.f32 %v4174, %v4176
  %v4178 = vadd.f32 %v4177, 0.0036580483
  %v4179 = vmul.f32 %v4174, %v4178
  %v4180 = vadd.f32 %v4179, 0.05243302
  %v4181 = vmul.f32 %v4174, %v4180
  %v4182 = vadd.f32 %v4181, 0.18741608
  %v4183 = vmul.f32 %v4174, %v4182
  %v4184 = vadd.f32 %v4183, 1.1283791
  %v4185 = vmul.f32 %v4132, %v4184
  %v4186 = vmul.f32 %v4174, 3.8918573e-05
  %v4187 = vadd.f32 %v4186, 0.001143296
  %v4188 = vmul.f32 %v4174, %v4187
  %v4189 = vadd.f32 %v4188, 0.014752088
  %v4190 = vmul.f32 %v4174, %v4189
  %v4191 = vadd.f32 %v4190, 0.112945676
  %v4192 = vmul.f32 %v4174, %v4191
  %v4193 = vadd.f32 %v4192, 0.4994258
  %v4194 = vmul.f32 %v4174, %v4193
  %v4195 = vadd.f32 %v4194, 1.0
  %v4196 = vrcp.pop %v4195
  %v4197 = vmul.f32 %v4195, %v4196
  %v4198 = vsub.f32 1.0, %v4197
  %v4199 = vmul.f32 %v4196, %v4198
  %v4200 = vadd.f32 %v4196, %v4199
  %vm4201 = vweird.f32 %v4195
  %vm4202 = vweird.f32 %v4196
  %vm4203 = vmor %vm4201, %vm4202
  %v4204 = vsel %vm4203, %v4196, %v4200
  %v4205 = vand.u32 2147483647, %v4195
  %vm4206 = vcmp.eq.f32.partialorder %v4205, 8.507059e+37
  %v4207 = vand.u32 %v4195, 2147483648
  %v4208 = vor.u32 1.1754944e-38, %v4207
  %v4209 = vsel %vm4206, %v4208, %v4204
  %v4210 = vmul.f32 %v4185, %v4209
  %v4211 = vmin.f32 %v4210, 1.0
  %v4212 = vmax.f32 %v4211, -1.0
  %v4213 = vadd.f32 %v4172, 1.0
  %v4214 = vadd.f32 %v4212, 1.0
  %v4215 = vmul.f32 %v4129, %v4213
  %v4216 = vmul.f32 %v4130, %v4214
  %s4217 = scalar_lea.vmem %s18, 256
  %v4218 = vld [vmem:[%s4217] sm:$0xff]
  %v4219 = vld [vmem:[%s4217 + $0x8] sm:$0xff]
  %v4220 = vld [vmem:[%s4217 + $0x10] sm:$0xff]
  %v4221 = vld [vmem:[%s4217 + $0x18] sm:$0xff]
  %v4222 = vld [vmem:[%s4217 + $0x20] sm:$0xff]
  %v4223 = vld [vmem:[%s4217 + $0x28] sm:$0xff]
  %v4224 = vld [vmem:[%s4217 + $0x30] sm:$0xff]
  %v4225 = vld [vmem:[%s4217 + $0x38] sm:$0xff]
  %v4226 = vld [vmem:[%s4217 + $0x40] sm:$0xff]
  %v4227 = vld [vmem:[%s4217 + $0x48] sm:$0xff]
  %v4228 = vld [vmem:[%s4217 + $0x50] sm:$0xff]
  %v4229 = vld [vmem:[%s4217 + $0x58] sm:$0xff]
  %v4230 = vld [vmem:[%s4217 + $0x60] sm:$0xff]
  %v4231 = vld [vmem:[%s4217 + $0x68] sm:$0xff]
  %v4232 = vld [vmem:[%s4217 + $0x70] sm:$0xff]
  %v4233 = vld [vmem:[%s4217 + $0x78] sm:$0xff]
  %s4234 = scalar_lea.vmem %s19, 2
  %v4235 = vld [vmem:[%s4234] sm:$0x1]
  %v4237 = vperm.slane %v4235, 0
  %4239 = vmatpush.msra.mxu0 %v4233
  %4240 = vmatpush.msra.mxu0 %v4232
  %4241 = vmatpush.msra.mxu0 %v4231
  %4242 = vmatpush.msra.mxu0 %v4230
  %4243 = vmatpush.msra.mxu0 %v4229
  %4244 = vmatpush.msra.mxu0 %v4228
  %4245 = vmatpush.msra.mxu0 %v4227
  %4246 = vmatpush.msra.mxu0 %v4226
  %4247 = vmatpush.msra.mxu0 %v4225
  %4248 = vmatpush.msra.mxu0 %v4224
  %4249 = vmatpush.msra.mxu0 %v4223
  %4250 = vmatpush.msra.mxu0 %v4222
  %4251 = vmatpush.msra.mxu0 %v4221
  %4252 = vmatpush.msra.mxu0 %v4220
  %4253 = vmatpush.msra.mxu0 %v4219
  %4254 = vmatpush.msra.mxu0 %v4218
  %4255 = vmatmul.f32.gmra.mxu0 %v4215
  %v4256 = vpop.f32.mrf.mxu0
  %v4257 = vadd.f32 %v4237, %v4256
  %4258 = vmatmul.f32.gmra.mxu0 %v4216
  %v4259 = vpop.f32.mrf.mxu0
  %v4260 = vadd.f32 %v4237, %v4259
  %4261 = vdwg.mxu0
  %v4262 = vadd.f32 %v4030, %v4257
  %v4263 = vadd.f32 %v4031, %v4260
  %s4264 = scalar_lea.vmem %s4, 3
  %v4265 = vld [vmem:[%s4264] sm:$0x1]
  %s4266 = scalar_lea.vmem %s5, 3
  %v4267 = vld [vmem:[%s4266] sm:$0x1]
  %v4268 = vsel %vm354, %v4262, 0.0
  %4269 = vadd.xlane.f32.xlu0 %v4268
  %v4270 = vpop.xlane.xlu0 %4269
  %v4271 = vsel %vm358, %v4263, 0.0
  %4272 = vadd.xlane.f32.xlu0 %v4271
  %v4273 = vpop.xlane.xlu0 %4272
  %v4274 = vmul.f32 %v4270, %v368
  %v4275 = vmul.f32 %v4273, %v368
  %v4276 = vsub.f32 %v4262, %v4274
  %v4277 = vsub.f32 %v4263, %v4275
  %v4278 = vmul.f32 %v4276, %v4276
  %v4279 = vmul.f32 %v4277, %v4277
  %v4280 = vsel %vm354, %v4278, 0.0
  %4281 = vadd.xlane.f32.xlu0 %v4280
  %v4282 = vpop.xlane.xlu0 %4281
  %v4283 = vsel %vm358, %v4279, 0.0
  %4284 = vadd.xlane.f32.xlu0 %v4283
  %v4285 = vpop.xlane.xlu0 %4284
  %v4286 = vmul.f32 %v4282, %v368
  %v4287 = vmul.f32 %v4285, %v368
  %v4288 = vadd.f32 %v4286, 1e-06
  %v4289 = vadd.f32 %v4287, 1e-06
  %v4290 = vrsqrt.pop %v4288
  %v4291 = vmul.f32 %v4290, %v4288
  %v4292 = vmul.f32 %v4291, %v4290
  %v4293 = vmul.f32 0.5, %v4292
  %v4294 = vsub.f32 1.5, %v4293
  %v4295 = vmul.f32 %v4290, %v4294
  %vm4296 = vweird.f32 %v4288
  %vm4297 = vweird.f32 %v4290
  %vm4298 = vmor %vm4296, %vm4297
  %v4299 = vsel %vm4298, %v4290, %v4295
  %v4300 = vrsqrt.pop %v4289
  %v4301 = vmul.f32 %v4300, %v4289
  %v4302 = vmul.f32 %v4301, %v4300
  %v4303 = vmul.f32 0.5, %v4302
  %v4304 = vsub.f32 1.5, %v4303
  %v4305 = vmul.f32 %v4300, %v4304
  %vm4306 = vweird.f32 %v4289
  %vm4307 = vweird.f32 %v4300
  %vm4308 = vmor %vm4306, %vm4307
  %v4309 = vsel %vm4308, %v4300, %v4305
  %v4310 = vmul.f32 %v4276, %v4299
  %v4311 = vmul.f32 %v4277, %v4309
  %v4313 = vperm.slane %v4265, 0
  %v4315 = vmul.f32 %v4310, %v4313
  %v4316 = vmul.f32 %v4311, %v4313
  %v4318 = vperm.slane %v4267, 0
  %v4320 = vadd.f32 %v4315, %v4318
  %v4321 = vadd.f32 %v4316, %v4318
  %s4322 = scalar_lea.vmem %s6, 384
  %v4323 = vld [vmem:[%s4322] sm:$0xff]
  %v4324 = vld [vmem:[%s4322 + $0x8] sm:$0xff]
  %v4325 = vld [vmem:[%s4322 + $0x10] sm:$0xff]
  %v4326 = vld [vmem:[%s4322 + $0x18] sm:$0xff]
  %s4327 = scalar_lea.vmem %s7, 12
  %v4328 = vld [vmem:[%s4327] sm:$0x1]
  %v4330 = vperm.slane %v4328, 0
  %v4333 = vsel %vm354, %v4320, 0
  %v4336 = vsel %vm354, %v4321, 0
  %4338 = vmatpush.msra.mxu0 0.0
  %4339 = vmatpush.msra.mxu0 0.0
  %4340 = vmatpush.msra.mxu0 0.0
  %4341 = vmatpush.msra.mxu0 0.0
  %4342 = vmatpush.msra.mxu0 0.0
  %4343 = vmatpush.msra.mxu0 0.0
  %4344 = vmatpush.msra.mxu0 0.0
  %4345 = vmatpush.msra.mxu0 0.0
  %4346 = vmatpush.msra.mxu0 0.0
  %4347 = vmatpush.msra.mxu0 0.0
  %4348 = vmatpush.msra.mxu0 0.0
  %4349 = vmatpush.msra.mxu0 0.0
  %4350 = vmatpush.msra.mxu0 %v4326
  %4351 = vmatpush.msra.mxu0 %v4325
  %4352 = vmatpush.msra.mxu0 %v4324
  %4353 = vmatpush.msra.mxu0 %v4323
  %4354 = vmatmul.f32.gmra.mxu0 %v4333
  %v4355 = vpop.f32.mrf.mxu0
  %v4356 = vadd.f32 %v4330, %v4355
  %4357 = vmatmul.f32.gmra.mxu0 %v4336
  %v4358 = vpop.f32.mrf.mxu0
  %v4359 = vadd.f32 %v4330, %v4358
  %4360 = vdwg.mxu0
  %s4361 = scalar_lea.vmem %s8, 384
  %v4362 = vld [vmem:[%s4361] sm:$0xff]
  %v4363 = vld [vmem:[%s4361 + $0x8] sm:$0xff]
  %v4364 = vld [vmem:[%s4361 + $0x10] sm:$0xff]
  %v4365 = vld [vmem:[%s4361 + $0x18] sm:$0xff]
  %s4366 = scalar_lea.vmem %s9, 12
  %v4367 = vld [vmem:[%s4366] sm:$0x1]
  %v4369 = vperm.slane %v4367, 0
  %4371 = vmatpush.msra.mxu0 0.0
  %4372 = vmatpush.msra.mxu0 0.0
  %4373 = vmatpush.msra.mxu0 0.0
  %4374 = vmatpush.msra.mxu0 0.0
  %4375 = vmatpush.msra.mxu0 0.0
  %4376 = vmatpush.msra.mxu0 0.0
  %4377 = vmatpush.msra.mxu0 0.0
  %4378 = vmatpush.msra.mxu0 0.0
  %4379 = vmatpush.msra.mxu0 0.0
  %4380 = vmatpush.msra.mxu0 0.0
  %4381 = vmatpush.msra.mxu0 0.0
  %4382 = vmatpush.msra.mxu0 0.0
  %4383 = vmatpush.msra.mxu0 %v4365
  %4384 = vmatpush.msra.mxu0 %v4364
  %4385 = vmatpush.msra.mxu0 %v4363
  %4386 = vmatpush.msra.mxu0 %v4362
  %4387 = vmatmul.f32.gmra.mxu0 %v4333
  %v4388 = vpop.f32.mrf.mxu0
  %v4389 = vadd.f32 %v4369, %v4388
  %4390 = vmatmul.f32.gmra.mxu0 %v4336
  %v4391 = vpop.f32.mrf.mxu0
  %v4392 = vadd.f32 %v4369, %v4391
  %4393 = vdwg.mxu0
  %s4394 = scalar_lea.vmem %s10, 384
  %v4395 = vld [vmem:[%s4394] sm:$0xff]
  %v4396 = vld [vmem:[%s4394 + $0x8] sm:$0xff]
  %v4397 = vld [vmem:[%s4394 + $0x10] sm:$0xff]
  %v4398 = vld [vmem:[%s4394 + $0x18] sm:$0xff]
  %s4399 = scalar_lea.vmem %s11, 12
  %v4400 = vld [vmem:[%s4399] sm:$0x1]
  %v4402 = vperm.slane %v4400, 0
  %4404 = vmatpush.msra.mxu0 0.0
  %4405 = vmatpush.msra.mxu0 0.0
  %4406 = vmatpush.msra.mxu0 0.0
  %4407 = vmatpush.msra.mxu0 0.0
  %4408 = vmatpush.msra.mxu0 0.0
  %4409 = vmatpush.msra.mxu0 0.0
  %4410 = vmatpush.msra.mxu0 0.0
  %4411 = vmatpush.msra.mxu0 0.0
  %4412 = vmatpush.msra.mxu0 0.0
  %4413 = vmatpush.msra.mxu0 0.0
  %4414 = vmatpush.msra.mxu0 0.0
  %4415 = vmatpush.msra.mxu0 0.0
  %4416 = vmatpush.msra.mxu0 %v4398
  %4417 = vmatpush.msra.mxu0 %v4397
  %4418 = vmatpush.msra.mxu0 %v4396
  %4419 = vmatpush.msra.mxu0 %v4395
  %4420 = vmatmul.f32.gmra.mxu0 %v4333
  %v4421 = vpop.f32.mrf.mxu0
  %v4422 = vadd.f32 %v4402, %v4421
  %4423 = vmatmul.f32.gmra.mxu0 %v4336
  %v4424 = vpop.f32.mrf.mxu0
  %v4425 = vadd.f32 %v4402, %v4424
  %4426 = vdwg.mxu0
  %v4428 = vsel %vm516, %v4356, 0
  %v4431 = vsel %vm516, %v4359, 0
  %v4434 = vsel %vm516, %v4389, 0
  %v4437 = vsel %vm516, %v4392, 0
  %4439 = vmatpush.xpose.msra.mxu0 0.0
  %4440 = vmatpush.xpose.msra.mxu0 0.0
  %4441 = vmatpush.xpose.msra.mxu0 0.0
  %4442 = vmatpush.xpose.msra.mxu0 0.0
  %4443 = vmatpush.xpose.msra.mxu0 0.0
  %4444 = vmatpush.xpose.msra.mxu0 0.0
  %4445 = vmatpush.xpose.msra.mxu0 0.0
  %4446 = vmatpush.xpose.msra.mxu0 0.0
  %4447 = vmatpush.xpose.msra.mxu0 0.0
  %4448 = vmatpush.xpose.msra.mxu0 0.0
  %4449 = vmatpush.xpose.msra.mxu0 0.0
  %4450 = vmatpush.xpose.msra.mxu0 0.0
  %4451 = vmatpush.xpose.msra.mxu0 0.0
  %4452 = vmatpush.xpose.msra.mxu0 0.0
  %4453 = vmatpush.xpose.msra.mxu0 %v4437
  %4454 = vmatpush.xpose.msra.mxu0 %v4434
  %4455 = vmatmul.f32.gmra.mxu0 %v4428
  %v4456 = vpop.f32.mrf.mxu0
  %v4457 = vadd.f32 0.0, %v4456
  %4458 = vmatmul.f32.gmra.mxu0 %v4431
  %v4459 = vpop.f32.mrf.mxu0
  %v4460 = vadd.f32 0.0, %v4459
  %4461 = vdwg.mxu0
  %v4462 = vmul.f32 %v4457, 0.35355338
  %v4463 = vmul.f32 %v4460, 0.35355338
  %v4464 = vadd.f32 %v4462, %v350
  %v4465 = vadd.f32 %v4463, %v351
  %v4466 = vsel %vm556, %v4464, -inf
  %4467 = vmax.xlane.f32.xlu0 %v4466
  %v4468 = vpop.xlane.xlu0 %4467
  %v4469 = vsel %vm560, %v4465, -inf
  %4470 = vmax.xlane.f32.xlu0 %v4469
  %v4471 = vpop.xlane.xlu0 %4470
  %v4472 = vsub.f32 %v4464, %v4468
  %v4473 = vsub.f32 %v4465, %v4471
  %v4474 = vmul.f32 %v4472, 1.442695
  %v4475 = vpow.pop %v4474
  %v4476 = vmul.f32 %v4473, 1.442695
  %v4477 = vpow.pop %v4476
  %v4478 = vsel %vm556, %v4475, 0.0
  %4479 = vadd.xlane.f32.xlu0 %v4478
  %v4480 = vpop.xlane.xlu0 %4479
  %v4481 = vsel %vm560, %v4477, 0.0
  %4482 = vadd.xlane.f32.xlu0 %v4481
  %v4483 = vpop.xlane.xlu0 %4482
  %v4484 = vrcp.pop %v4480
  %v4485 = vmul.f32 %v4480, %v4484
  %v4486 = vsub.f32 1.0, %v4485
  %v4487 = vmul.f32 %v4484, %v4486
  %v4488 = vadd.f32 %v4484, %v4487
  %vm4489 = vweird.f32 %v4480
  %vm4490 = vweird.f32 %v4484
  %vm4491 = vmor %vm4489, %vm4490
  %v4492 = vsel %vm4491, %v4484, %v4488
  %v4493 = vand.u32 2147483647, %v4480
  %vm4494 = vcmp.eq.f32.partialorder %v4493, 8.507059e+37
  %v4495 = vand.u32 %v4480, 2147483648
  %v4496 = vor.u32 1.1754944e-38, %v4495
  %v4497 = vsel %vm4494, %v4496, %v4492
  %v4498 = vmul.f32 %v4475, %v4497
  %v4499 = vrcp.pop %v4483
  %v4500 = vmul.f32 %v4483, %v4499
  %v4501 = vsub.f32 1.0, %v4500
  %v4502 = vmul.f32 %v4499, %v4501
  %v4503 = vadd.f32 %v4499, %v4502
  %vm4504 = vweird.f32 %v4483
  %vm4505 = vweird.f32 %v4499
  %vm4506 = vmor %vm4504, %vm4505
  %v4507 = vsel %vm4506, %v4499, %v4503
  %v4508 = vand.u32 2147483647, %v4483
  %vm4509 = vcmp.eq.f32.partialorder %v4508, 8.507059e+37
  %v4510 = vand.u32 %v4483, 2147483648
  %v4511 = vor.u32 1.1754944e-38, %v4510
  %v4512 = vsel %vm4509, %v4511, %v4507
  %v4513 = vmul.f32 %v4477, %v4512
  %v4515 = vsel %vm556, %v4498, 0
  %v4518 = vsel %vm556, %v4513, 0
  %v4521 = vsel %vm612, %v4425, 0
  %4523 = vmatpush.msra.mxu0 0.0
  %4524 = vmatpush.msra.mxu0 0.0
  %4525 = vmatpush.msra.mxu0 0.0
  %4526 = vmatpush.msra.mxu0 0.0
  %4527 = vmatpush.msra.mxu0 0.0
  %4528 = vmatpush.msra.mxu0 0.0
  %4529 = vmatpush.msra.mxu0 0.0
  %4530 = vmatpush.msra.mxu0 0.0
  %4531 = vmatpush.msra.mxu0 0.0
  %4532 = vmatpush.msra.mxu0 0.0
  %4533 = vmatpush.msra.mxu0 0.0
  %4534 = vmatpush.msra.mxu0 0.0
  %4535 = vmatpush.msra.mxu0 0.0
  %4536 = vmatpush.msra.mxu0 0.0
  %4537 = vmatpush.msra.mxu0 %v4521
  %4538 = vmatpush.msra.mxu0 %v4422
  %4539 = vmatmul.f32.gmra.mxu0 %v4515
  %v4540 = vpop.f32.mrf.mxu0
  %v4541 = vadd.f32 0.0, %v4540
  %4542 = vmatmul.f32.gmra.mxu0 %v4518
  %v4543 = vpop.f32.mrf.mxu0
  %v4544 = vadd.f32 0.0, %v4543
  %4545 = vdwg.mxu0
  %s4546 = scalar_lea.vmem %s12, 96
  %v4547 = vld [vmem:[%s4546] sm:$0xff]
  %s4548 = scalar_lea.vmem %s6, 416
  %v4549 = vld [vmem:[%s4548] sm:$0xff]
  %v4550 = vld [vmem:[%s4548 + $0x8] sm:$0xff]
  %v4551 = vld [vmem:[%s4548 + $0x10] sm:$0xff]
  %v4552 = vld [vmem:[%s4548 + $0x18] sm:$0xff]
  %s4553 = scalar_lea.vmem %s7, 13
  %v4554 = vld [vmem:[%s4553] sm:$0x1]
  %v4556 = vperm.slane %v4554, 0
  %4558 = vmatpush.msra.mxu0 0.0
  %4559 = vmatpush.msra.mxu0 0.0
  %4560 = vmatpush.msra.mxu0 0.0
  %4561 = vmatpush.msra.mxu0 0.0
  %4562 = vmatpush.msra.mxu0 0.0
  %4563 = vmatpush.msra.mxu0 0.0
  %4564 = vmatpush.msra.mxu0 0.0
  %4565 = vmatpush.msra.mxu0 0.0
  %4566 = vmatpush.msra.mxu0 0.0
  %4567 = vmatpush.msra.mxu0 0.0
  %4568 = vmatpush.msra.mxu0 0.0
  %4569 = vmatpush.msra.mxu0 0.0
  %4570 = vmatpush.msra.mxu0 %v4552
  %4571 = vmatpush.msra.mxu0 %v4551
  %4572 = vmatpush.msra.mxu0 %v4550
  %4573 = vmatpush.msra.mxu0 %v4549
  %4574 = vmatmul.f32.gmra.mxu0 %v4333
  %v4575 = vpop.f32.mrf.mxu0
  %v4576 = vadd.f32 %v4556, %v4575
  %4577 = vmatmul.f32.gmra.mxu0 %v4336
  %v4578 = vpop.f32.mrf.mxu0
  %v4579 = vadd.f32 %v4556, %v4578
  %4580 = vdwg.mxu0
  %s4581 = scalar_lea.vmem %s8, 416
  %v4582 = vld [vmem:[%s4581] sm:$0xff]
  %v4583 = vld [vmem:[%s4581 + $0x8] sm:$0xff]
  %v4584 = vld [vmem:[%s4581 + $0x10] sm:$0xff]
  %v4585 = vld [vmem:[%s4581 + $0x18] sm:$0xff]
  %s4586 = scalar_lea.vmem %s9, 13
  %v4587 = vld [vmem:[%s4586] sm:$0x1]
  %v4589 = vperm.slane %v4587, 0
  %4591 = vmatpush.msra.mxu0 0.0
  %4592 = vmatpush.msra.mxu0 0.0
  %4593 = vmatpush.msra.mxu0 0.0
  %4594 = vmatpush.msra.mxu0 0.0
  %4595 = vmatpush.msra.mxu0 0.0
  %4596 = vmatpush.msra.mxu0 0.0
  %4597 = vmatpush.msra.mxu0 0.0
  %4598 = vmatpush.msra.mxu0 0.0
  %4599 = vmatpush.msra.mxu0 0.0
  %4600 = vmatpush.msra.mxu0 0.0
  %4601 = vmatpush.msra.mxu0 0.0
  %4602 = vmatpush.msra.mxu0 0.0
  %4603 = vmatpush.msra.mxu0 %v4585
  %4604 = vmatpush.msra.mxu0 %v4584
  %4605 = vmatpush.msra.mxu0 %v4583
  %4606 = vmatpush.msra.mxu0 %v4582
  %4607 = vmatmul.f32.gmra.mxu0 %v4333
  %v4608 = vpop.f32.mrf.mxu0
  %v4609 = vadd.f32 %v4589, %v4608
  %4610 = vmatmul.f32.gmra.mxu0 %v4336
  %v4611 = vpop.f32.mrf.mxu0
  %v4612 = vadd.f32 %v4589, %v4611
  %4613 = vdwg.mxu0
  %s4614 = scalar_lea.vmem %s10, 416
  %v4615 = vld [vmem:[%s4614] sm:$0xff]
  %v4616 = vld [vmem:[%s4614 + $0x8] sm:$0xff]
  %v4617 = vld [vmem:[%s4614 + $0x10] sm:$0xff]
  %v4618 = vld [vmem:[%s4614 + $0x18] sm:$0xff]
  %s4619 = scalar_lea.vmem %s11, 13
  %v4620 = vld [vmem:[%s4619] sm:$0x1]
  %v4622 = vperm.slane %v4620, 0
  %4624 = vmatpush.msra.mxu0 0.0
  %4625 = vmatpush.msra.mxu0 0.0
  %4626 = vmatpush.msra.mxu0 0.0
  %4627 = vmatpush.msra.mxu0 0.0
  %4628 = vmatpush.msra.mxu0 0.0
  %4629 = vmatpush.msra.mxu0 0.0
  %4630 = vmatpush.msra.mxu0 0.0
  %4631 = vmatpush.msra.mxu0 0.0
  %4632 = vmatpush.msra.mxu0 0.0
  %4633 = vmatpush.msra.mxu0 0.0
  %4634 = vmatpush.msra.mxu0 0.0
  %4635 = vmatpush.msra.mxu0 0.0
  %4636 = vmatpush.msra.mxu0 %v4618
  %4637 = vmatpush.msra.mxu0 %v4617
  %4638 = vmatpush.msra.mxu0 %v4616
  %4639 = vmatpush.msra.mxu0 %v4615
  %4640 = vmatmul.f32.gmra.mxu0 %v4333
  %v4641 = vpop.f32.mrf.mxu0
  %v4642 = vadd.f32 %v4622, %v4641
  %4643 = vmatmul.f32.gmra.mxu0 %v4336
  %v4644 = vpop.f32.mrf.mxu0
  %v4645 = vadd.f32 %v4622, %v4644
  %4646 = vdwg.mxu0
  %v4648 = vsel %vm516, %v4576, 0
  %v4651 = vsel %vm516, %v4579, 0
  %v4654 = vsel %vm516, %v4609, 0
  %v4657 = vsel %vm516, %v4612, 0
  %4659 = vmatpush.xpose.msra.mxu0 0.0
  %4660 = vmatpush.xpose.msra.mxu0 0.0
  %4661 = vmatpush.xpose.msra.mxu0 0.0
  %4662 = vmatpush.xpose.msra.mxu0 0.0
  %4663 = vmatpush.xpose.msra.mxu0 0.0
  %4664 = vmatpush.xpose.msra.mxu0 0.0
  %4665 = vmatpush.xpose.msra.mxu0 0.0
  %4666 = vmatpush.xpose.msra.mxu0 0.0
  %4667 = vmatpush.xpose.msra.mxu0 0.0
  %4668 = vmatpush.xpose.msra.mxu0 0.0
  %4669 = vmatpush.xpose.msra.mxu0 0.0
  %4670 = vmatpush.xpose.msra.mxu0 0.0
  %4671 = vmatpush.xpose.msra.mxu0 0.0
  %4672 = vmatpush.xpose.msra.mxu0 0.0
  %4673 = vmatpush.xpose.msra.mxu0 %v4657
  %4674 = vmatpush.xpose.msra.mxu0 %v4654
  %4675 = vmatmul.f32.gmra.mxu0 %v4648
  %v4676 = vpop.f32.mrf.mxu0
  %v4677 = vadd.f32 0.0, %v4676
  %4678 = vmatmul.f32.gmra.mxu0 %v4651
  %v4679 = vpop.f32.mrf.mxu0
  %v4680 = vadd.f32 0.0, %v4679
  %4681 = vdwg.mxu0
  %v4682 = vmul.f32 %v4677, 0.35355338
  %v4683 = vmul.f32 %v4680, 0.35355338
  %v4684 = vadd.f32 %v4682, %v350
  %v4685 = vadd.f32 %v4683, %v351
  %v4686 = vsel %vm556, %v4684, -inf
  %4687 = vmax.xlane.f32.xlu0 %v4686
  %v4688 = vpop.xlane.xlu0 %4687
  %v4689 = vsel %vm560, %v4685, -inf
  %4690 = vmax.xlane.f32.xlu0 %v4689
  %v4691 = vpop.xlane.xlu0 %4690
  %v4692 = vsub.f32 %v4684, %v4688
  %v4693 = vsub.f32 %v4685, %v4691
  %v4694 = vmul.f32 %v4692, 1.442695
  %v4695 = vpow.pop %v4694
  %v4696 = vmul.f32 %v4693, 1.442695
  %v4697 = vpow.pop %v4696
  %v4698 = vsel %vm556, %v4695, 0.0
  %4699 = vadd.xlane.f32.xlu0 %v4698
  %v4700 = vpop.xlane.xlu0 %4699
  %v4701 = vsel %vm560, %v4697, 0.0
  %4702 = vadd.xlane.f32.xlu0 %v4701
  %v4703 = vpop.xlane.xlu0 %4702
  %v4704 = vrcp.pop %v4700
  %v4705 = vmul.f32 %v4700, %v4704
  %v4706 = vsub.f32 1.0, %v4705
  %v4707 = vmul.f32 %v4704, %v4706
  %v4708 = vadd.f32 %v4704, %v4707
  %vm4709 = vweird.f32 %v4700
  %vm4710 = vweird.f32 %v4704
  %vm4711 = vmor %vm4709, %vm4710
  %v4712 = vsel %vm4711, %v4704, %v4708
  %v4713 = vand.u32 2147483647, %v4700
  %vm4714 = vcmp.eq.f32.partialorder %v4713, 8.507059e+37
  %v4715 = vand.u32 %v4700, 2147483648
  %v4716 = vor.u32 1.1754944e-38, %v4715
  %v4717 = vsel %vm4714, %v4716, %v4712
  %v4718 = vmul.f32 %v4695, %v4717
  %v4719 = vrcp.pop %v4703
  %v4720 = vmul.f32 %v4703, %v4719
  %v4721 = vsub.f32 1.0, %v4720
  %v4722 = vmul.f32 %v4719, %v4721
  %v4723 = vadd.f32 %v4719, %v4722
  %vm4724 = vweird.f32 %v4703
  %vm4725 = vweird.f32 %v4719
  %vm4726 = vmor %vm4724, %vm4725
  %v4727 = vsel %vm4726, %v4719, %v4723
  %v4728 = vand.u32 2147483647, %v4703
  %vm4729 = vcmp.eq.f32.partialorder %v4728, 8.507059e+37
  %v4730 = vand.u32 %v4703, 2147483648
  %v4731 = vor.u32 1.1754944e-38, %v4730
  %v4732 = vsel %vm4729, %v4731, %v4727
  %v4733 = vmul.f32 %v4697, %v4732
  %v4735 = vsel %vm556, %v4718, 0
  %v4738 = vsel %vm556, %v4733, 0
  %v4741 = vsel %vm612, %v4645, 0
  %4743 = vmatpush.msra.mxu0 0.0
  %4744 = vmatpush.msra.mxu0 0.0
  %4745 = vmatpush.msra.mxu0 0.0
  %4746 = vmatpush.msra.mxu0 0.0
  %4747 = vmatpush.msra.mxu0 0.0
  %4748 = vmatpush.msra.mxu0 0.0
  %4749 = vmatpush.msra.mxu0 0.0
  %4750 = vmatpush.msra.mxu0 0.0
  %4751 = vmatpush.msra.mxu0 0.0
  %4752 = vmatpush.msra.mxu0 0.0
  %4753 = vmatpush.msra.mxu0 0.0
  %4754 = vmatpush.msra.mxu0 0.0
  %4755 = vmatpush.msra.mxu0 0.0
  %4756 = vmatpush.msra.mxu0 0.0
  %4757 = vmatpush.msra.mxu0 %v4741
  %4758 = vmatpush.msra.mxu0 %v4642
  %4759 = vmatmul.f32.gmra.mxu0 %v4735
  %v4760 = vpop.f32.mrf.mxu0
  %v4761 = vadd.f32 0.0, %v4760
  %4762 = vmatmul.f32.gmra.mxu0 %v4738
  %v4763 = vpop.f32.mrf.mxu0
  %v4764 = vadd.f32 0.0, %v4763
  %4765 = vdwg.mxu0
  %s4766 = scalar_lea.vmem %s12, 104
  %v4767 = vld [vmem:[%s4766] sm:$0xff]
  %v4769 = vsel %vm516, %v4761, 0
  %v4772 = vsel %vm516, %v4764, 0
  %4774 = vmatpush.msra.mxu0 0.0
  %4775 = vmatpush.msra.mxu0 0.0
  %4776 = vmatpush.msra.mxu0 0.0
  %4777 = vmatpush.msra.mxu0 0.0
  %4778 = vmatpush.msra.mxu0 0.0
  %4779 = vmatpush.msra.mxu0 0.0
  %4780 = vmatpush.msra.mxu0 0.0
  %4781 = vmatpush.msra.mxu0 0.0
  %4782 = vmatpush.msra.mxu0 0.0
  %4783 = vmatpush.msra.mxu0 0.0
  %4784 = vmatpush.msra.mxu0 0.0
  %4785 = vmatpush.msra.mxu0 0.0
  %4786 = vmatpush.msra.mxu0 0.0
  %4787 = vmatpush.msra.mxu0 0.0
  %4788 = vmatpush.msra.mxu0 0.0
  %4789 = vmatpush.msra.mxu0 %v4767
  %4790 = vmatmul.f32.gmra.mxu0 %v4769
  %v4791 = vpop.f32.mrf.mxu0
  %v4792 = vadd.f32 0.0, %v4791
  %4793 = vmatmul.f32.gmra.mxu0 %v4772
  %v4794 = vpop.f32.mrf.mxu0
  %v4795 = vadd.f32 0.0, %v4794
  %4796 = vdwg.mxu0
  %v4798 = vsel %vm516, %v4541, 0
  %v4801 = vsel %vm516, %v4544, 0
  %4803 = vmatpush.msra.mxu0 0.0
  %4804 = vmatpush.msra.mxu0 0.0
  %4805 = vmatpush.msra.mxu0 0.0
  %4806 = vmatpush.msra.mxu0 0.0
  %4807 = vmatpush.msra.mxu0 0.0
  %4808 = vmatpush.msra.mxu0 0.0
  %4809 = vmatpush.msra.mxu0 0.0
  %4810 = vmatpush.msra.mxu0 0.0
  %4811 = vmatpush.msra.mxu0 0.0
  %4812 = vmatpush.msra.mxu0 0.0
  %4813 = vmatpush.msra.mxu0 0.0
  %4814 = vmatpush.msra.mxu0 0.0
  %4815 = vmatpush.msra.mxu0 0.0
  %4816 = vmatpush.msra.mxu0 0.0
  %4817 = vmatpush.msra.mxu0 0.0
  %4818 = vmatpush.msra.mxu0 %v4547
  %4819 = vmatmul.f32.gmra.mxu0 %v4798
  %v4820 = vpop.f32.mrf.mxu0
  %v4821 = vadd.f32 %v4792, %v4820
  %4822 = vmatmul.f32.gmra.mxu0 %v4801
  %v4823 = vpop.f32.mrf.mxu0
  %v4824 = vadd.f32 %v4795, %v4823
  %4825 = vdwg.mxu0
  %s4826 = scalar_lea.vmem %s6, 448
  %v4827 = vld [vmem:[%s4826] sm:$0xff]
  %v4828 = vld [vmem:[%s4826 + $0x8] sm:$0xff]
  %v4829 = vld [vmem:[%s4826 + $0x10] sm:$0xff]
  %v4830 = vld [vmem:[%s4826 + $0x18] sm:$0xff]
  %s4831 = scalar_lea.vmem %s7, 14
  %v4832 = vld [vmem:[%s4831] sm:$0x1]
  %v4834 = vperm.slane %v4832, 0
  %4836 = vmatpush.msra.mxu0 0.0
  %4837 = vmatpush.msra.mxu0 0.0
  %4838 = vmatpush.msra.mxu0 0.0
  %4839 = vmatpush.msra.mxu0 0.0
  %4840 = vmatpush.msra.mxu0 0.0
  %4841 = vmatpush.msra.mxu0 0.0
  %4842 = vmatpush.msra.mxu0 0.0
  %4843 = vmatpush.msra.mxu0 0.0
  %4844 = vmatpush.msra.mxu0 0.0
  %4845 = vmatpush.msra.mxu0 0.0
  %4846 = vmatpush.msra.mxu0 0.0
  %4847 = vmatpush.msra.mxu0 0.0
  %4848 = vmatpush.msra.mxu0 %v4830
  %4849 = vmatpush.msra.mxu0 %v4829
  %4850 = vmatpush.msra.mxu0 %v4828
  %4851 = vmatpush.msra.mxu0 %v4827
  %4852 = vmatmul.f32.gmra.mxu0 %v4333
  %v4853 = vpop.f32.mrf.mxu0
  %v4854 = vadd.f32 %v4834, %v4853
  %4855 = vmatmul.f32.gmra.mxu0 %v4336
  %v4856 = vpop.f32.mrf.mxu0
  %v4857 = vadd.f32 %v4834, %v4856
  %4858 = vdwg.mxu0
  %s4859 = scalar_lea.vmem %s8, 448
  %v4860 = vld [vmem:[%s4859] sm:$0xff]
  %v4861 = vld [vmem:[%s4859 + $0x8] sm:$0xff]
  %v4862 = vld [vmem:[%s4859 + $0x10] sm:$0xff]
  %v4863 = vld [vmem:[%s4859 + $0x18] sm:$0xff]
  %s4864 = scalar_lea.vmem %s9, 14
  %v4865 = vld [vmem:[%s4864] sm:$0x1]
  %v4867 = vperm.slane %v4865, 0
  %4869 = vmatpush.msra.mxu0 0.0
  %4870 = vmatpush.msra.mxu0 0.0
  %4871 = vmatpush.msra.mxu0 0.0
  %4872 = vmatpush.msra.mxu0 0.0
  %4873 = vmatpush.msra.mxu0 0.0
  %4874 = vmatpush.msra.mxu0 0.0
  %4875 = vmatpush.msra.mxu0 0.0
  %4876 = vmatpush.msra.mxu0 0.0
  %4877 = vmatpush.msra.mxu0 0.0
  %4878 = vmatpush.msra.mxu0 0.0
  %4879 = vmatpush.msra.mxu0 0.0
  %4880 = vmatpush.msra.mxu0 0.0
  %4881 = vmatpush.msra.mxu0 %v4863
  %4882 = vmatpush.msra.mxu0 %v4862
  %4883 = vmatpush.msra.mxu0 %v4861
  %4884 = vmatpush.msra.mxu0 %v4860
  %4885 = vmatmul.f32.gmra.mxu0 %v4333
  %v4886 = vpop.f32.mrf.mxu0
  %v4887 = vadd.f32 %v4867, %v4886
  %4888 = vmatmul.f32.gmra.mxu0 %v4336
  %v4889 = vpop.f32.mrf.mxu0
  %v4890 = vadd.f32 %v4867, %v4889
  %4891 = vdwg.mxu0
  %s4892 = scalar_lea.vmem %s10, 448
  %v4893 = vld [vmem:[%s4892] sm:$0xff]
  %v4894 = vld [vmem:[%s4892 + $0x8] sm:$0xff]
  %v4895 = vld [vmem:[%s4892 + $0x10] sm:$0xff]
  %v4896 = vld [vmem:[%s4892 + $0x18] sm:$0xff]
  %s4897 = scalar_lea.vmem %s11, 14
  %v4898 = vld [vmem:[%s4897] sm:$0x1]
  %v4900 = vperm.slane %v4898, 0
  %4902 = vmatpush.msra.mxu0 0.0
  %4903 = vmatpush.msra.mxu0 0.0
  %4904 = vmatpush.msra.mxu0 0.0
  %4905 = vmatpush.msra.mxu0 0.0
  %4906 = vmatpush.msra.mxu0 0.0
  %4907 = vmatpush.msra.mxu0 0.0
  %4908 = vmatpush.msra.mxu0 0.0
  %4909 = vmatpush.msra.mxu0 0.0
  %4910 = vmatpush.msra.mxu0 0.0
  %4911 = vmatpush.msra.mxu0 0.0
  %4912 = vmatpush.msra.mxu0 0.0
  %4913 = vmatpush.msra.mxu0 0.0
  %4914 = vmatpush.msra.mxu0 %v4896
  %4915 = vmatpush.msra.mxu0 %v4895
  %4916 = vmatpush.msra.mxu0 %v4894
  %4917 = vmatpush.msra.mxu0 %v4893
  %4918 = vmatmul.f32.gmra.mxu0 %v4333
  %v4919 = vpop.f32.mrf.mxu0
  %v4920 = vadd.f32 %v4900, %v4919
  %4921 = vmatmul.f32.gmra.mxu0 %v4336
  %v4922 = vpop.f32.mrf.mxu0
  %v4923 = vadd.f32 %v4900, %v4922
  %4924 = vdwg.mxu0
  %v4926 = vsel %vm516, %v4854, 0
  %v4929 = vsel %vm516, %v4857, 0
  %v4932 = vsel %vm516, %v4887, 0
  %v4935 = vsel %vm516, %v4890, 0
  %4937 = vmatpush.xpose.msra.mxu0 0.0
  %4938 = vmatpush.xpose.msra.mxu0 0.0
  %4939 = vmatpush.xpose.msra.mxu0 0.0
  %4940 = vmatpush.xpose.msra.mxu0 0.0
  %4941 = vmatpush.xpose.msra.mxu0 0.0
  %4942 = vmatpush.xpose.msra.mxu0 0.0
  %4943 = vmatpush.xpose.msra.mxu0 0.0
  %4944 = vmatpush.xpose.msra.mxu0 0.0
  %4945 = vmatpush.xpose.msra.mxu0 0.0
  %4946 = vmatpush.xpose.msra.mxu0 0.0
  %4947 = vmatpush.xpose.msra.mxu0 0.0
  %4948 = vmatpush.xpose.msra.mxu0 0.0
  %4949 = vmatpush.xpose.msra.mxu0 0.0
  %4950 = vmatpush.xpose.msra.mxu0 0.0
  %4951 = vmatpush.xpose.msra.mxu0 %v4935
  %4952 = vmatpush.xpose.msra.mxu0 %v4932
  %4953 = vmatmul.f32.gmra.mxu0 %v4926
  %v4954 = vpop.f32.mrf.mxu0
  %v4955 = vadd.f32 0.0, %v4954
  %4956 = vmatmul.f32.gmra.mxu0 %v4929
  %v4957 = vpop.f32.mrf.mxu0
  %v4958 = vadd.f32 0.0, %v4957
  %4959 = vdwg.mxu0
  %v4960 = vmul.f32 %v4955, 0.35355338
  %v4961 = vmul.f32 %v4958, 0.35355338
  %v4962 = vadd.f32 %v4960, %v350
  %v4963 = vadd.f32 %v4961, %v351
  %v4964 = vsel %vm556, %v4962, -inf
  %4965 = vmax.xlane.f32.xlu0 %v4964
  %v4966 = vpop.xlane.xlu0 %4965
  %v4967 = vsel %vm560, %v4963, -inf
  %4968 = vmax.xlane.f32.xlu0 %v4967
  %v4969 = vpop.xlane.xlu0 %4968
  %v4970 = vsub.f32 %v4962, %v4966
  %v4971 = vsub.f32 %v4963, %v4969
  %v4972 = vmul.f32 %v4970, 1.442695
  %v4973 = vpow.pop %v4972
  %v4974 = vmul.f32 %v4971, 1.442695
  %v4975 = vpow.pop %v4974
  %v4976 = vsel %vm556, %v4973, 0.0
  %4977 = vadd.xlane.f32.xlu0 %v4976
  %v4978 = vpop.xlane.xlu0 %4977
  %v4979 = vsel %vm560, %v4975, 0.0
  %4980 = vadd.xlane.f32.xlu0 %v4979
  %v4981 = vpop.xlane.xlu0 %4980
  %v4982 = vrcp.pop %v4978
  %v4983 = vmul.f32 %v4978, %v4982
  %v4984 = vsub.f32 1.0, %v4983
  %v4985 = vmul.f32 %v4982, %v4984
  %v4986 = vadd.f32 %v4982, %v4985
  %vm4987 = vweird.f32 %v4978
  %vm4988 = vweird.f32 %v4982
  %vm4989 = vmor %vm4987, %vm4988
  %v4990 = vsel %vm4989, %v4982, %v4986
  %v4991 = vand.u32 2147483647, %v4978
  %vm4992 = vcmp.eq.f32.partialorder %v4991, 8.507059e+37
  %v4993 = vand.u32 %v4978, 2147483648
  %v4994 = vor.u32 1.1754944e-38, %v4993
  %v4995 = vsel %vm4992, %v4994, %v4990
  %v4996 = vmul.f32 %v4973, %v4995
  %v4997 = vrcp.pop %v4981
  %v4998 = vmul.f32 %v4981, %v4997
  %v4999 = vsub.f32 1.0, %v4998
  %v5000 = vmul.f32 %v4997, %v4999
  %v5001 = vadd.f32 %v4997, %v5000
  %vm5002 = vweird.f32 %v4981
  %vm5003 = vweird.f32 %v4997
  %vm5004 = vmor %vm5002, %vm5003
  %v5005 = vsel %vm5004, %v4997, %v5001
  %v5006 = vand.u32 2147483647, %v4981
  %vm5007 = vcmp.eq.f32.partialorder %v5006, 8.507059e+37
  %v5008 = vand.u32 %v4981, 2147483648
  %v5009 = vor.u32 1.1754944e-38, %v5008
  %v5010 = vsel %vm5007, %v5009, %v5005
  %v5011 = vmul.f32 %v4975, %v5010
  %v5013 = vsel %vm556, %v4996, 0
  %v5016 = vsel %vm556, %v5011, 0
  %v5019 = vsel %vm612, %v4923, 0
  %5021 = vmatpush.msra.mxu0 0.0
  %5022 = vmatpush.msra.mxu0 0.0
  %5023 = vmatpush.msra.mxu0 0.0
  %5024 = vmatpush.msra.mxu0 0.0
  %5025 = vmatpush.msra.mxu0 0.0
  %5026 = vmatpush.msra.mxu0 0.0
  %5027 = vmatpush.msra.mxu0 0.0
  %5028 = vmatpush.msra.mxu0 0.0
  %5029 = vmatpush.msra.mxu0 0.0
  %5030 = vmatpush.msra.mxu0 0.0
  %5031 = vmatpush.msra.mxu0 0.0
  %5032 = vmatpush.msra.mxu0 0.0
  %5033 = vmatpush.msra.mxu0 0.0
  %5034 = vmatpush.msra.mxu0 0.0
  %5035 = vmatpush.msra.mxu0 %v5019
  %5036 = vmatpush.msra.mxu0 %v4920
  %5037 = vmatmul.f32.gmra.mxu0 %v5013
  %v5038 = vpop.f32.mrf.mxu0
  %v5039 = vadd.f32 0.0, %v5038
  %5040 = vmatmul.f32.gmra.mxu0 %v5016
  %v5041 = vpop.f32.mrf.mxu0
  %v5042 = vadd.f32 0.0, %v5041
  %5043 = vdwg.mxu0
  %s5044 = scalar_lea.vmem %s12, 112
  %v5045 = vld [vmem:[%s5044] sm:$0xff]
  %v5047 = vsel %vm516, %v5039, 0
  %v5050 = vsel %vm516, %v5042, 0
  %5052 = vmatpush.msra.mxu0 0.0
  %5053 = vmatpush.msra.mxu0 0.0
  %5054 = vmatpush.msra.mxu0 0.0
  %5055 = vmatpush.msra.mxu0 0.0
  %5056 = vmatpush.msra.mxu0 0.0
  %5057 = vmatpush.msra.mxu0 0.0
  %5058 = vmatpush.msra.mxu0 0.0
  %5059 = vmatpush.msra.mxu0 0.0
  %5060 = vmatpush.msra.mxu0 0.0
  %5061 = vmatpush.msra.mxu0 0.0
  %5062 = vmatpush.msra.mxu0 0.0
  %5063 = vmatpush.msra.mxu0 0.0
  %5064 = vmatpush.msra.mxu0 0.0
  %5065 = vmatpush.msra.mxu0 0.0
  %5066 = vmatpush.msra.mxu0 0.0
  %5067 = vmatpush.msra.mxu0 %v5045
  %5068 = vmatmul.f32.gmra.mxu0 %v5047
  %v5069 = vpop.f32.mrf.mxu0
  %v5070 = vadd.f32 0.0, %v5069
  %5071 = vmatmul.f32.gmra.mxu0 %v5050
  %v5072 = vpop.f32.mrf.mxu0
  %v5073 = vadd.f32 0.0, %v5072
  %5074 = vdwg.mxu0
  %v5075 = vadd.f32 %v4821, %v5070
  %v5076 = vadd.f32 %v4824, %v5073
  %s5077 = scalar_lea.vmem %s6, 480
  %v5078 = vld [vmem:[%s5077] sm:$0xff]
  %v5079 = vld [vmem:[%s5077 + $0x8] sm:$0xff]
  %v5080 = vld [vmem:[%s5077 + $0x10] sm:$0xff]
  %v5081 = vld [vmem:[%s5077 + $0x18] sm:$0xff]
  %s5082 = scalar_lea.vmem %s7, 15
  %v5083 = vld [vmem:[%s5082] sm:$0x1]
  %v5085 = vperm.slane %v5083, 0
  %5087 = vmatpush.msra.mxu0 0.0
  %5088 = vmatpush.msra.mxu0 0.0
  %5089 = vmatpush.msra.mxu0 0.0
  %5090 = vmatpush.msra.mxu0 0.0
  %5091 = vmatpush.msra.mxu0 0.0
  %5092 = vmatpush.msra.mxu0 0.0
  %5093 = vmatpush.msra.mxu0 0.0
  %5094 = vmatpush.msra.mxu0 0.0
  %5095 = vmatpush.msra.mxu0 0.0
  %5096 = vmatpush.msra.mxu0 0.0
  %5097 = vmatpush.msra.mxu0 0.0
  %5098 = vmatpush.msra.mxu0 0.0
  %5099 = vmatpush.msra.mxu0 %v5081
  %5100 = vmatpush.msra.mxu0 %v5080
  %5101 = vmatpush.msra.mxu0 %v5079
  %5102 = vmatpush.msra.mxu0 %v5078
  %5103 = vmatmul.f32.gmra.mxu0 %v4333
  %v5104 = vpop.f32.mrf.mxu0
  %v5105 = vadd.f32 %v5085, %v5104
  %5106 = vmatmul.f32.gmra.mxu0 %v4336
  %v5107 = vpop.f32.mrf.mxu0
  %v5108 = vadd.f32 %v5085, %v5107
  %5109 = vdwg.mxu0
  %s5110 = scalar_lea.vmem %s8, 480
  %v5111 = vld [vmem:[%s5110] sm:$0xff]
  %v5112 = vld [vmem:[%s5110 + $0x8] sm:$0xff]
  %v5113 = vld [vmem:[%s5110 + $0x10] sm:$0xff]
  %v5114 = vld [vmem:[%s5110 + $0x18] sm:$0xff]
  %s5115 = scalar_lea.vmem %s9, 15
  %v5116 = vld [vmem:[%s5115] sm:$0x1]
  %v5118 = vperm.slane %v5116, 0
  %5120 = vmatpush.msra.mxu0 0.0
  %5121 = vmatpush.msra.mxu0 0.0
  %5122 = vmatpush.msra.mxu0 0.0
  %5123 = vmatpush.msra.mxu0 0.0
  %5124 = vmatpush.msra.mxu0 0.0
  %5125 = vmatpush.msra.mxu0 0.0
  %5126 = vmatpush.msra.mxu0 0.0
  %5127 = vmatpush.msra.mxu0 0.0
  %5128 = vmatpush.msra.mxu0 0.0
  %5129 = vmatpush.msra.mxu0 0.0
  %5130 = vmatpush.msra.mxu0 0.0
  %5131 = vmatpush.msra.mxu0 0.0
  %5132 = vmatpush.msra.mxu0 %v5114
  %5133 = vmatpush.msra.mxu0 %v5113
  %5134 = vmatpush.msra.mxu0 %v5112
  %5135 = vmatpush.msra.mxu0 %v5111
  %5136 = vmatmul.f32.gmra.mxu0 %v4333
  %v5137 = vpop.f32.mrf.mxu0
  %v5138 = vadd.f32 %v5118, %v5137
  %5139 = vmatmul.f32.gmra.mxu0 %v4336
  %v5140 = vpop.f32.mrf.mxu0
  %v5141 = vadd.f32 %v5118, %v5140
  %5142 = vdwg.mxu0
  %s5143 = scalar_lea.vmem %s10, 480
  %v5144 = vld [vmem:[%s5143] sm:$0xff]
  %v5145 = vld [vmem:[%s5143 + $0x8] sm:$0xff]
  %v5146 = vld [vmem:[%s5143 + $0x10] sm:$0xff]
  %v5147 = vld [vmem:[%s5143 + $0x18] sm:$0xff]
  %s5148 = scalar_lea.vmem %s11, 15
  %v5149 = vld [vmem:[%s5148] sm:$0x1]
  %v5151 = vperm.slane %v5149, 0
  %5153 = vmatpush.msra.mxu0 0.0
  %5154 = vmatpush.msra.mxu0 0.0
  %5155 = vmatpush.msra.mxu0 0.0
  %5156 = vmatpush.msra.mxu0 0.0
  %5157 = vmatpush.msra.mxu0 0.0
  %5158 = vmatpush.msra.mxu0 0.0
  %5159 = vmatpush.msra.mxu0 0.0
  %5160 = vmatpush.msra.mxu0 0.0
  %5161 = vmatpush.msra.mxu0 0.0
  %5162 = vmatpush.msra.mxu0 0.0
  %5163 = vmatpush.msra.mxu0 0.0
  %5164 = vmatpush.msra.mxu0 0.0
  %5165 = vmatpush.msra.mxu0 %v5147
  %5166 = vmatpush.msra.mxu0 %v5146
  %5167 = vmatpush.msra.mxu0 %v5145
  %5168 = vmatpush.msra.mxu0 %v5144
  %5169 = vmatmul.f32.gmra.mxu0 %v4333
  %v5170 = vpop.f32.mrf.mxu0
  %v5171 = vadd.f32 %v5151, %v5170
  %5172 = vmatmul.f32.gmra.mxu0 %v4336
  %v5173 = vpop.f32.mrf.mxu0
  %v5174 = vadd.f32 %v5151, %v5173
  %5175 = vdwg.mxu0
  %v5177 = vsel %vm516, %v5105, 0
  %v5180 = vsel %vm516, %v5108, 0
  %v5183 = vsel %vm516, %v5138, 0
  %v5186 = vsel %vm516, %v5141, 0
  %5188 = vmatpush.xpose.msra.mxu0 0.0
  %5189 = vmatpush.xpose.msra.mxu0 0.0
  %5190 = vmatpush.xpose.msra.mxu0 0.0
  %5191 = vmatpush.xpose.msra.mxu0 0.0
  %5192 = vmatpush.xpose.msra.mxu0 0.0
  %5193 = vmatpush.xpose.msra.mxu0 0.0
  %5194 = vmatpush.xpose.msra.mxu0 0.0
  %5195 = vmatpush.xpose.msra.mxu0 0.0
  %5196 = vmatpush.xpose.msra.mxu0 0.0
  %5197 = vmatpush.xpose.msra.mxu0 0.0
  %5198 = vmatpush.xpose.msra.mxu0 0.0
  %5199 = vmatpush.xpose.msra.mxu0 0.0
  %5200 = vmatpush.xpose.msra.mxu0 0.0
  %5201 = vmatpush.xpose.msra.mxu0 0.0
  %5202 = vmatpush.xpose.msra.mxu0 %v5186
  %5203 = vmatpush.xpose.msra.mxu0 %v5183
  %5204 = vmatmul.f32.gmra.mxu0 %v5177
  %v5205 = vpop.f32.mrf.mxu0
  %v5206 = vadd.f32 0.0, %v5205
  %5207 = vmatmul.f32.gmra.mxu0 %v5180
  %v5208 = vpop.f32.mrf.mxu0
  %v5209 = vadd.f32 0.0, %v5208
  %5210 = vdwg.mxu0
  %v5211 = vmul.f32 %v5206, 0.35355338
  %v5212 = vmul.f32 %v5209, 0.35355338
  %v5213 = vadd.f32 %v5211, %v350
  %v5214 = vadd.f32 %v5212, %v351
  %v5215 = vsel %vm556, %v5213, -inf
  %5216 = vmax.xlane.f32.xlu0 %v5215
  %v5217 = vpop.xlane.xlu0 %5216
  %v5218 = vsel %vm560, %v5214, -inf
  %5219 = vmax.xlane.f32.xlu0 %v5218
  %v5220 = vpop.xlane.xlu0 %5219
  %v5221 = vsub.f32 %v5213, %v5217
  %v5222 = vsub.f32 %v5214, %v5220
  %v5223 = vmul.f32 %v5221, 1.442695
  %v5224 = vpow.pop %v5223
  %v5225 = vmul.f32 %v5222, 1.442695
  %v5226 = vpow.pop %v5225
  %v5227 = vsel %vm556, %v5224, 0.0
  %5228 = vadd.xlane.f32.xlu0 %v5227
  %v5229 = vpop.xlane.xlu0 %5228
  %v5230 = vsel %vm560, %v5226, 0.0
  %5231 = vadd.xlane.f32.xlu0 %v5230
  %v5232 = vpop.xlane.xlu0 %5231
  %v5233 = vrcp.pop %v5229
  %v5234 = vmul.f32 %v5229, %v5233
  %v5235 = vsub.f32 1.0, %v5234
  %v5236 = vmul.f32 %v5233, %v5235
  %v5237 = vadd.f32 %v5233, %v5236
  %vm5238 = vweird.f32 %v5229
  %vm5239 = vweird.f32 %v5233
  %vm5240 = vmor %vm5238, %vm5239
  %v5241 = vsel %vm5240, %v5233, %v5237
  %v5242 = vand.u32 2147483647, %v5229
  %vm5243 = vcmp.eq.f32.partialorder %v5242, 8.507059e+37
  %v5244 = vand.u32 %v5229, 2147483648
  %v5245 = vor.u32 1.1754944e-38, %v5244
  %v5246 = vsel %vm5243, %v5245, %v5241
  %v5247 = vmul.f32 %v5224, %v5246
  %v5248 = vrcp.pop %v5232
  %v5249 = vmul.f32 %v5232, %v5248
  %v5250 = vsub.f32 1.0, %v5249
  %v5251 = vmul.f32 %v5248, %v5250
  %v5252 = vadd.f32 %v5248, %v5251
  %vm5253 = vweird.f32 %v5232
  %vm5254 = vweird.f32 %v5248
  %vm5255 = vmor %vm5253, %vm5254
  %v5256 = vsel %vm5255, %v5248, %v5252
  %v5257 = vand.u32 2147483647, %v5232
  %vm5258 = vcmp.eq.f32.partialorder %v5257, 8.507059e+37
  %v5259 = vand.u32 %v5232, 2147483648
  %v5260 = vor.u32 1.1754944e-38, %v5259
  %v5261 = vsel %vm5258, %v5260, %v5256
  %v5262 = vmul.f32 %v5226, %v5261
  %v5264 = vsel %vm556, %v5247, 0
  %v5267 = vsel %vm556, %v5262, 0
  %v5270 = vsel %vm612, %v5174, 0
  %5272 = vmatpush.msra.mxu0 0.0
  %5273 = vmatpush.msra.mxu0 0.0
  %5274 = vmatpush.msra.mxu0 0.0
  %5275 = vmatpush.msra.mxu0 0.0
  %5276 = vmatpush.msra.mxu0 0.0
  %5277 = vmatpush.msra.mxu0 0.0
  %5278 = vmatpush.msra.mxu0 0.0
  %5279 = vmatpush.msra.mxu0 0.0
  %5280 = vmatpush.msra.mxu0 0.0
  %5281 = vmatpush.msra.mxu0 0.0
  %5282 = vmatpush.msra.mxu0 0.0
  %5283 = vmatpush.msra.mxu0 0.0
  %5284 = vmatpush.msra.mxu0 0.0
  %5285 = vmatpush.msra.mxu0 0.0
  %5286 = vmatpush.msra.mxu0 %v5270
  %5287 = vmatpush.msra.mxu0 %v5171
  %5288 = vmatmul.f32.gmra.mxu0 %v5264
  %v5289 = vpop.f32.mrf.mxu0
  %v5290 = vadd.f32 0.0, %v5289
  %5291 = vmatmul.f32.gmra.mxu0 %v5267
  %v5292 = vpop.f32.mrf.mxu0
  %v5293 = vadd.f32 0.0, %v5292
  %5294 = vdwg.mxu0
  %s5295 = scalar_lea.vmem %s12, 120
  %v5296 = vld [vmem:[%s5295] sm:$0xff]
  %v5298 = vsel %vm516, %v5290, 0
  %v5301 = vsel %vm516, %v5293, 0
  %5303 = vmatpush.msra.mxu0 0.0
  %5304 = vmatpush.msra.mxu0 0.0
  %5305 = vmatpush.msra.mxu0 0.0
  %5306 = vmatpush.msra.mxu0 0.0
  %5307 = vmatpush.msra.mxu0 0.0
  %5308 = vmatpush.msra.mxu0 0.0
  %5309 = vmatpush.msra.mxu0 0.0
  %5310 = vmatpush.msra.mxu0 0.0
  %5311 = vmatpush.msra.mxu0 0.0
  %5312 = vmatpush.msra.mxu0 0.0
  %5313 = vmatpush.msra.mxu0 0.0
  %5314 = vmatpush.msra.mxu0 0.0
  %5315 = vmatpush.msra.mxu0 0.0
  %5316 = vmatpush.msra.mxu0 0.0
  %5317 = vmatpush.msra.mxu0 0.0
  %5318 = vmatpush.msra.mxu0 %v5296
  %5319 = vmatmul.f32.gmra.mxu0 %v5298
  %v5320 = vpop.f32.mrf.mxu0
  %v5321 = vadd.f32 0.0, %v5320
  %5322 = vmatmul.f32.gmra.mxu0 %v5301
  %v5323 = vpop.f32.mrf.mxu0
  %v5324 = vadd.f32 0.0, %v5323
  %5325 = vdwg.mxu0
  %v5326 = vadd.f32 %v5075, %v5321
  %v5327 = vadd.f32 %v5076, %v5324
  %v5328 = vadd.f32 %v4262, %v5326
  %v5329 = vadd.f32 %v4263, %v5327
  %s5330 = scalar_lea.vmem %s13, 3
  %v5331 = vld [vmem:[%s5330] sm:$0x1]
  %v5333 = vperm.slane %v5331, 0
  %v5335 = vadd.f32 %v5328, %v5333
  %v5336 = vadd.f32 %v5329, %v5333
  %s5337 = scalar_lea.vmem %s14, 3
  %v5338 = vld [vmem:[%s5337] sm:$0x1]
  %s5339 = scalar_lea.vmem %s15, 3
  %v5340 = vld [vmem:[%s5339] sm:$0x1]
  %v5341 = vsel %vm354, %v5335, 0.0
  %5342 = vadd.xlane.f32.xlu0 %v5341
  %v5343 = vpop.xlane.xlu0 %5342
  %v5344 = vsel %vm358, %v5336, 0.0
  %5345 = vadd.xlane.f32.xlu0 %v5344
  %v5346 = vpop.xlane.xlu0 %5345
  %v5347 = vmul.f32 %v5343, %v368
  %v5348 = vmul.f32 %v5346, %v368
  %v5349 = vsub.f32 %v5335, %v5347
  %v5350 = vsub.f32 %v5336, %v5348
  %v5351 = vmul.f32 %v5349, %v5349
  %v5352 = vmul.f32 %v5350, %v5350
  %v5353 = vsel %vm354, %v5351, 0.0
  %5354 = vadd.xlane.f32.xlu0 %v5353
  %v5355 = vpop.xlane.xlu0 %5354
  %v5356 = vsel %vm358, %v5352, 0.0
  %5357 = vadd.xlane.f32.xlu0 %v5356
  %v5358 = vpop.xlane.xlu0 %5357
  %v5359 = vmul.f32 %v5355, %v368
  %v5360 = vmul.f32 %v5358, %v368
  %v5361 = vadd.f32 %v5359, 1e-06
  %v5362 = vadd.f32 %v5360, 1e-06
  %v5363 = vrsqrt.pop %v5361
  %v5364 = vmul.f32 %v5363, %v5361
  %v5365 = vmul.f32 %v5364, %v5363
  %v5366 = vmul.f32 0.5, %v5365
  %v5367 = vsub.f32 1.5, %v5366
  %v5368 = vmul.f32 %v5363, %v5367
  %vm5369 = vweird.f32 %v5361
  %vm5370 = vweird.f32 %v5363
  %vm5371 = vmor %vm5369, %vm5370
  %v5372 = vsel %vm5371, %v5363, %v5368
  %v5373 = vrsqrt.pop %v5362
  %v5374 = vmul.f32 %v5373, %v5362
  %v5375 = vmul.f32 %v5374, %v5373
  %v5376 = vmul.f32 0.5, %v5375
  %v5377 = vsub.f32 1.5, %v5376
  %v5378 = vmul.f32 %v5373, %v5377
  %vm5379 = vweird.f32 %v5362
  %vm5380 = vweird.f32 %v5373
  %vm5381 = vmor %vm5379, %vm5380
  %v5382 = vsel %vm5381, %v5373, %v5378
  %v5383 = vmul.f32 %v5349, %v5372
  %v5384 = vmul.f32 %v5350, %v5382
  %v5386 = vperm.slane %v5338, 0
  %v5388 = vmul.f32 %v5383, %v5386
  %v5389 = vmul.f32 %v5384, %v5386
  %v5391 = vperm.slane %v5340, 0
  %v5393 = vadd.f32 %v5388, %v5391
  %v5394 = vadd.f32 %v5389, %v5391
  %s5395 = scalar_lea.vmem %s16, 96
  %v5396 = vld [vmem:[%s5395] sm:$0xff]
  %v5397 = vld [vmem:[%s5395 + $0x8] sm:$0xff]
  %v5398 = vld [vmem:[%s5395 + $0x10] sm:$0xff]
  %v5399 = vld [vmem:[%s5395 + $0x18] sm:$0xff]
  %s5400 = scalar_lea.vmem %s17, 3
  %v5401 = vld [vmem:[%s5400] sm:$0x1]
  %v5403 = vperm.slane %v5401, 0
  %v5406 = vsel %vm354, %v5393, 0
  %v5409 = vsel %vm354, %v5394, 0
  %5411 = vmatpush.msra.mxu0 0.0
  %5412 = vmatpush.msra.mxu0 0.0
  %5413 = vmatpush.msra.mxu0 0.0
  %5414 = vmatpush.msra.mxu0 0.0
  %5415 = vmatpush.msra.mxu0 0.0
  %5416 = vmatpush.msra.mxu0 0.0
  %5417 = vmatpush.msra.mxu0 0.0
  %5418 = vmatpush.msra.mxu0 0.0
  %5419 = vmatpush.msra.mxu0 0.0
  %5420 = vmatpush.msra.mxu0 0.0
  %5421 = vmatpush.msra.mxu0 0.0
  %5422 = vmatpush.msra.mxu0 0.0
  %5423 = vmatpush.msra.mxu0 %v5399
  %5424 = vmatpush.msra.mxu0 %v5398
  %5425 = vmatpush.msra.mxu0 %v5397
  %5426 = vmatpush.msra.mxu0 %v5396
  %5427 = vmatmul.f32.gmra.mxu0 %v5406
  %v5428 = vpop.f32.mrf.mxu0
  %v5429 = vadd.f32 %v5403, %v5428
  %5430 = vmatmul.f32.gmra.mxu0 %v5409
  %v5431 = vpop.f32.mrf.mxu0
  %v5432 = vadd.f32 %v5403, %v5431
  %5433 = vdwg.mxu0
  %v5434 = vmul.f32 %v5429, 0.5
  %v5435 = vmul.f32 %v5432, 0.5
  %v5436 = vmul.f32 %v5429, 0.70710677
  %v5437 = vmul.f32 %v5432, 0.70710677
  %v5438 = vmul.f32 %v5436, %v5436
  %v5439 = vmin.f32 16.0, %v5438
  %v5440 = vmul.f32 %v5439, 2.1237322e-06
  %v5441 = vadd.f32 %v5440, 0.00028619796
  %v5442 = vmul.f32 %v5439, %v5441
  %v5443 = vadd.f32 %v5442, 0.0036580483
  %v5444 = vmul.f32 %v5439, %v5443
  %v5445 = vadd.f32 %v5444, 0.05243302
  %v5446 = vmul.f32 %v5439, %v5445
  %v5447 = vadd.f32 %v5446, 0.18741608
  %v5448 = vmul.f32 %v5439, %v5447
  %v5449 = vadd.f32 %v5448, 1.1283791
  %v5450 = vmul.f32 %v5436, %v5449
  %v5451 = vmul.f32 %v5439, 3.8918573e-05
  %v5452 = vadd.f32 %v5451, 0.001143296
  %v5453 = vmul.f32 %v5439, %v5452
  %v5454 = vadd.f32 %v5453, 0.014752088
  %v5455 = vmul.f32 %v5439, %v5454
  %v5456 = vadd.f32 %v5455, 0.112945676
  %v5457 = vmul.f32 %v5439, %v5456
  %v5458 = vadd.f32 %v5457, 0.4994258
  %v5459 = vmul.f32 %v5439, %v5458
  %v5460 = vadd.f32 %v5459, 1.0
  %v5461 = vrcp.pop %v5460
  %v5462 = vmul.f32 %v5460, %v5461
  %v5463 = vsub.f32 1.0, %v5462
  %v5464 = vmul.f32 %v5461, %v5463
  %v5465 = vadd.f32 %v5461, %v5464
  %vm5466 = vweird.f32 %v5460
  %vm5467 = vweird.f32 %v5461
  %vm5468 = vmor %vm5466, %vm5467
  %v5469 = vsel %vm5468, %v5461, %v5465
  %v5470 = vand.u32 2147483647, %v5460
  %vm5471 = vcmp.eq.f32.partialorder %v5470, 8.507059e+37
  %v5472 = vand.u32 %v5460, 2147483648
  %v5473 = vor.u32 1.1754944e-38, %v5472
  %v5474 = vsel %vm5471, %v5473, %v5469
  %v5475 = vmul.f32 %v5450, %v5474
  %v5476 = vmin.f32 %v5475, 1.0
  %v5477 = vmax.f32 %v5476, -1.0
  %v5478 = vmul.f32 %v5437, %v5437
  %v5479 = vmin.f32 16.0, %v5478
  %v5480 = vmul.f32 %v5479, 2.1237322e-06
  %v5481 = vadd.f32 %v5480, 0.00028619796
  %v5482 = vmul.f32 %v5479, %v5481
  %v5483 = vadd.f32 %v5482, 0.0036580483
  %v5484 = vmul.f32 %v5479, %v5483
  %v5485 = vadd.f32 %v5484, 0.05243302
  %v5486 = vmul.f32 %v5479, %v5485
  %v5487 = vadd.f32 %v5486, 0.18741608
  %v5488 = vmul.f32 %v5479, %v5487
  %v5489 = vadd.f32 %v5488, 1.1283791
  %v5490 = vmul.f32 %v5437, %v5489
  %v5491 = vmul.f32 %v5479, 3.8918573e-05
  %v5492 = vadd.f32 %v5491, 0.001143296
  %v5493 = vmul.f32 %v5479, %v5492
  %v5494 = vadd.f32 %v5493, 0.014752088
  %v5495 = vmul.f32 %v5479, %v5494
  %v5496 = vadd.f32 %v5495, 0.112945676
  %v5497 = vmul.f32 %v5479, %v5496
  %v5498 = vadd.f32 %v5497, 0.4994258
  %v5499 = vmul.f32 %v5479, %v5498
  %v5500 = vadd.f32 %v5499, 1.0
  %v5501 = vrcp.pop %v5500
  %v5502 = vmul.f32 %v5500, %v5501
  %v5503 = vsub.f32 1.0, %v5502
  %v5504 = vmul.f32 %v5501, %v5503
  %v5505 = vadd.f32 %v5501, %v5504
  %vm5506 = vweird.f32 %v5500
  %vm5507 = vweird.f32 %v5501
  %vm5508 = vmor %vm5506, %vm5507
  %v5509 = vsel %vm5508, %v5501, %v5505
  %v5510 = vand.u32 2147483647, %v5500
  %vm5511 = vcmp.eq.f32.partialorder %v5510, 8.507059e+37
  %v5512 = vand.u32 %v5500, 2147483648
  %v5513 = vor.u32 1.1754944e-38, %v5512
  %v5514 = vsel %vm5511, %v5513, %v5509
  %v5515 = vmul.f32 %v5490, %v5514
  %v5516 = vmin.f32 %v5515, 1.0
  %v5517 = vmax.f32 %v5516, -1.0
  %v5518 = vadd.f32 %v5477, 1.0
  %v5519 = vadd.f32 %v5517, 1.0
  %v5520 = vmul.f32 %v5434, %v5518
  %v5521 = vmul.f32 %v5435, %v5519
  %s5522 = scalar_lea.vmem %s18, 384
  %v5523 = vld [vmem:[%s5522] sm:$0xff]
  %v5524 = vld [vmem:[%s5522 + $0x8] sm:$0xff]
  %v5525 = vld [vmem:[%s5522 + $0x10] sm:$0xff]
  %v5526 = vld [vmem:[%s5522 + $0x18] sm:$0xff]
  %v5527 = vld [vmem:[%s5522 + $0x20] sm:$0xff]
  %v5528 = vld [vmem:[%s5522 + $0x28] sm:$0xff]
  %v5529 = vld [vmem:[%s5522 + $0x30] sm:$0xff]
  %v5530 = vld [vmem:[%s5522 + $0x38] sm:$0xff]
  %v5531 = vld [vmem:[%s5522 + $0x40] sm:$0xff]
  %v5532 = vld [vmem:[%s5522 + $0x48] sm:$0xff]
  %v5533 = vld [vmem:[%s5522 + $0x50] sm:$0xff]
  %v5534 = vld [vmem:[%s5522 + $0x58] sm:$0xff]
  %v5535 = vld [vmem:[%s5522 + $0x60] sm:$0xff]
  %v5536 = vld [vmem:[%s5522 + $0x68] sm:$0xff]
  %v5537 = vld [vmem:[%s5522 + $0x70] sm:$0xff]
  %v5538 = vld [vmem:[%s5522 + $0x78] sm:$0xff]
  %s5539 = scalar_lea.vmem %s19, 3
  %v5540 = vld [vmem:[%s5539] sm:$0x1]
  %v5542 = vperm.slane %v5540, 0
  %5544 = vmatpush.msra.mxu0 %v5538
  %5545 = vmatpush.msra.mxu0 %v5537
  %5546 = vmatpush.msra.mxu0 %v5536
  %5547 = vmatpush.msra.mxu0 %v5535
  %5548 = vmatpush.msra.mxu0 %v5534
  %5549 = vmatpush.msra.mxu0 %v5533
  %5550 = vmatpush.msra.mxu0 %v5532
  %5551 = vmatpush.msra.mxu0 %v5531
  %5552 = vmatpush.msra.mxu0 %v5530
  %5553 = vmatpush.msra.mxu0 %v5529
  %5554 = vmatpush.msra.mxu0 %v5528
  %5555 = vmatpush.msra.mxu0 %v5527
  %5556 = vmatpush.msra.mxu0 %v5526
  %5557 = vmatpush.msra.mxu0 %v5525
  %5558 = vmatpush.msra.mxu0 %v5524
  %5559 = vmatpush.msra.mxu0 %v5523
  %5560 = vmatmul.f32.gmra.mxu0 %v5520
  %v5561 = vpop.f32.mrf.mxu0
  %v5562 = vadd.f32 %v5542, %v5561
  %5563 = vmatmul.f32.gmra.mxu0 %v5521
  %v5564 = vpop.f32.mrf.mxu0
  %v5565 = vadd.f32 %v5542, %v5564
  %5566 = vdwg.mxu0
  %v5567 = vadd.f32 %v5335, %v5562
  %v5568 = vadd.f32 %v5336, %v5565
  %5569 = vst.msk [vmem:[%s20] sm:$0xff] %vm354, %v5567
  %5570 = vst.msk [vmem:[%s20 + $0x8] sm:$0x3] %vm358, %v5568
  // Predicated region
  $region82: #{ibot_forward_pallas.1} parent=0 // pred_check
    _
  $region83: #{ibot_forward_pallas.1} parent=0 // pred_check_branch
    %5572 = sbr.rel (0) target = $region85
  $region84: #{ibot_forward_pallas.1} parent=0 // pred_region
    _
  $region85: #{ibot_forward_pallas.1} parent=0 // pred_fallthru
    _
  // Predicated region
  $region86: #{ibot_forward_pallas.1} parent=0 // pred_check
    _
  $region87: #{ibot_forward_pallas.1} parent=0 // pred_check_branch
    %5574 = sbr.rel (0) target = $region89
  $region88: #{ibot_forward_pallas.1} parent=0 // pred_region
    _
  $region89: #{ibot_forward_pallas.1} parent=0 // pred_fallthru
    _

</llo_original>
